<compile_context>
chip_gen: v7x
topology: tpu7x:2x2x1
jax: 0.10.0
libtpu: 0.0.40
codegen_flags: <defaults>
</compile_context>

<pallas_src>
import functools

import jax
import jax.numpy as jnp
from jax import lax
from jax.experimental import pallas as pl
from jax.experimental.pallas import tpu as pltpu  # noqa: F401  (kept for TPU backend)


# ----------------------------------------------------------------------------
# Pallas kernel: one full DMSA block (embedding + pos-enc + L encoder layers)
# ----------------------------------------------------------------------------
def _dmsa_block_kernel(
    xcat_ref,      # (B*S, 2F)  f32   concat([X, mask]) flattened
    posb_ref,      # (B*S, D)   f32   positional encoding + embedding bias
    maskadd_ref,   # (S, S)     f32   additive diagonal mask (-1e9 on diag)
    wemb_ref,      # (2F, D)    f32   embedding weight
    wq_ref,        # (L, H, D, d_k)  bf16   (1/temperature already folded in)
    wk_ref,        # (L, H, D, d_k)  bf16
    wv_ref,        # (L, H, D, d_v)  bf16
    wo_ref,        # (L, H, d_v, D)  bf16
    w1_ref,        # (L, D, d_ffn)   bf16
    w2_ref,        # (L, d_ffn, D)   bf16
    sp_ref,        # (L, 6, D) f32: rows = [ln1_g, ln1_b, ln2_g, ln2_b, b1(pad), b2]
    y_ref,         # (B*S, D)  f32   block output
    attn_ref,      # (H, B, S, S) f32  attention of the LAST layer
    *, n_layers, n_heads, d_k, d_v, d_ffn, batch, seq,
):
    BS = batch * seq

    # Embedding + (bias + positional encoding), accumulate in f32.
    x = (jnp.dot(xcat_ref[...], wemb_ref[...], preferred_element_type=jnp.float32)
         + posb_ref[...])                                    # (B*S, D)
    mask_add = maskadd_ref[...][None]                        # (1, S, S)

    for l in range(n_layers):
        x_bf = x.astype(jnp.bfloat16)

        # ---- multi-head self-attention (heads selected via leading-dim index) ----
        attn_out = None
        for h in range(n_heads):
            qh = jnp.dot(x_bf, wq_ref[l, h], preferred_element_type=jnp.float32)
            kh = jnp.dot(x_bf, wk_ref[l, h], preferred_element_type=jnp.float32)
            vh = jnp.dot(x_bf, wv_ref[l, h], preferred_element_type=jnp.float32)

            q3 = qh.reshape(batch, seq, d_k).astype(jnp.bfloat16)
            k3 = kh.reshape(batch, seq, d_k).astype(jnp.bfloat16)
            v3 = vh.reshape(batch, seq, d_v).astype(jnp.bfloat16)

            s3 = jnp.einsum("bqd,bkd->bqk", q3, k3,
                            preferred_element_type=jnp.float32) + mask_add
            m = jnp.max(s3, axis=-1, keepdims=True)
            e = jnp.exp(s3 - m)
            denom = jnp.sum(e, axis=-1, keepdims=True)
            attn3 = e * pl.reciprocal(denom, approx=True)    # (B, S, S) f32

            if l == n_layers - 1:
                attn_ref[h] = attn3                          # only last layer is consumed

            ctx3 = jnp.einsum("bqk,bkd->bqd", attn3.astype(jnp.bfloat16), v3,
                              preferred_element_type=jnp.float32)
            ctx = ctx3.reshape(BS, d_v).astype(jnp.bfloat16)
            contrib = jnp.dot(ctx, wo_ref[l, h], preferred_element_type=jnp.float32)
            attn_out = contrib if attn_out is None else attn_out + contrib

        out = attn_out + x                                   # residual (f32)

        # ---- small per-layer params (packed) ----
        sp = sp_ref[l]                                       # (6, D) f32
        ln1_g = sp[0:1, :]
        ln1_b = sp[1:2, :]
        ln2_g = sp[2:3, :]
        ln2_b = sp[3:4, :]
        b1 = sp[4:5, :d_ffn]
        b2 = sp[5:6, :]

        # ---- LayerNorm 1 (eps = 1e-6, f32 stats) ----
        mu = jnp.mean(out, axis=-1, keepdims=True)
        var = jnp.mean((out - mu) ** 2, axis=-1, keepdims=True)
        x1 = (out - mu) * lax.rsqrt(var + 1e-6) * ln1_g + ln1_b

        # ---- position-wise FFN (post-norm) ----
        h1 = jnp.dot(x1.astype(jnp.bfloat16), w1_ref[l],
                     preferred_element_type=jnp.float32) + b1
        h1 = jnp.maximum(h1, 0.0)
        h2 = jnp.dot(h1.astype(jnp.bfloat16), w2_ref[l],
                     preferred_element_type=jnp.float32) + b2
        h2 = h2 + x1                                         # residual

        # ---- LayerNorm 2 ----
        mu2 = jnp.mean(h2, axis=-1, keepdims=True)
        var2 = jnp.mean((h2 - mu2) ** 2, axis=-1, keepdims=True)
        x = (h2 - mu2) * lax.rsqrt(var2 + 1e-6) * ln2_g + ln2_b

    y_ref[...] = x


def dmsa_block(xcat, pos_plus_bias, mask_add, emb_w, blk,
               *, n_layers, n_heads, d_k, d_v, d_ffn, batch, seq, d_model):
    """Run embedding + pos-enc + n_layers encoder layers in ONE pallas_call."""
    BS = batch * seq
    kernel = functools.partial(
        _dmsa_block_kernel,
        n_layers=n_layers, n_heads=n_heads, d_k=d_k, d_v=d_v, d_ffn=d_ffn,
        batch=batch, seq=seq,
    )
    y, attn_hb = pl.pallas_call(
        kernel,
        out_shape=(
            jax.ShapeDtypeStruct((BS, d_model), jnp.float32),
            jax.ShapeDtypeStruct((n_heads, batch, seq, seq), jnp.float32),
        ),
    )(xcat, pos_plus_bias, mask_add, emb_w,
      blk["wq"], blk["wk"], blk["wv"], blk["wo"], blk["w1"], blk["w2"], blk["small"])
    return y, attn_hb


# ----------------------------------------------------------------------------
# Parameter construction (deterministic, in-script)
# ----------------------------------------------------------------------------
def sinusoid_table(n_positions, d_hid):
    pos = jnp.arange(n_positions, dtype=jnp.float32)[:, None]
    i = jnp.arange(d_hid, dtype=jnp.float32)[None, :]
    angle = pos / jnp.power(10000.0, 2.0 * jnp.floor(i / 2.0) / d_hid)
    return jnp.where(jnp.arange(d_hid)[None, :] % 2 == 0, jnp.sin(angle), jnp.cos(angle))


def init_params(key, *, n_layers, n_steps, n_features, d_model, d_ffn, n_heads, d_k, d_v):
    assert d_ffn <= d_model, "packed small-param slab assumes d_ffn <= d_model"
    keys = iter(jax.random.split(key, 256))

    def dense(din, dout):
        w = jax.random.normal(next(keys), (din, dout), jnp.float32) / jnp.sqrt(float(din))
        b = jax.random.normal(next(keys), (dout,), jnp.float32) * 0.01
        return w, b

    def rand(shape, scale):
        return jax.random.normal(next(keys), shape, jnp.float32) * scale

    temperature = float(d_k) ** 0.5
    D = d_model

    def enc_block():
        # per-head-stacked projection weights; 1/temperature folded into Wq
        wq = rand((n_layers, n_heads, D, d_k), 1.0 / (float(D) ** 0.5)) / temperature
        wk = rand((n_layers, n_heads, D, d_k), 1.0 / (float(D) ** 0.5))
        wv = rand((n_layers, n_heads, D, d_v), 1.0 / (float(D) ** 0.5))
        wo = rand((n_layers, n_heads, d_v, D), 1.0 / (float(n_heads * d_v) ** 0.5))
        w1 = rand((n_layers, D, d_ffn), 1.0 / (float(D) ** 0.5))
        w2 = rand((n_layers, d_ffn, D), 1.0 / (float(d_ffn) ** 0.5))
        b1 = rand((n_layers, d_ffn), 0.01)
        b2 = rand((n_layers, D), 0.01)
        # pack small per-layer params into one (L, 6, D) f32 slab:
        #   rows 0..3 = ln1_g, ln1_b, ln2_g, ln2_b ; row 4 = b1 (zero-padded) ; row 5 = b2
        small = jnp.zeros((n_layers, 6, D), jnp.float32)
        small = small.at[:, 0, :].set(1.0)
        small = small.at[:, 2, :].set(1.0)
        small = small.at[:, 4, :d_ffn].set(b1)
        small = small.at[:, 5, :].set(b2)
        return {
            "wq": wq.astype(jnp.bfloat16), "wk": wk.astype(jnp.bfloat16),
            "wv": wv.astype(jnp.bfloat16), "wo": wo.astype(jnp.bfloat16),
            "w1": w1.astype(jnp.bfloat16), "w2": w2.astype(jnp.bfloat16),
            "small": small,
        }

    actual_n_features = n_features * 2
    params = {
        "block1": enc_block(),
        "block2": enc_block(),
        "emb1": dense(actual_n_features, d_model),
        "emb2": dense(actual_n_features, d_model),
        "reduce_z": dense(d_model, n_features),
        "reduce_beta": dense(d_model, n_features),
        "reduce_gamma": dense(n_features, n_features),
        "weight_combine": dense(n_features + n_steps, n_features),
        "pos_table": sinusoid_table(n_steps, d_model),
    }
    return params


# ----------------------------------------------------------------------------
# SAITS forward
# ----------------------------------------------------------------------------
def calc_mae(pred, target, mask):
    return jnp.sum(jnp.abs(pred - target) * mask) / (jnp.sum(mask) + 1e-12)


def saits_forward(params, X, missing_mask, X_ori, indicating_mask,
                  *, n_layers, n_heads, d_k, d_v, d_ffn):
    B, S, F = X.shape
    D = params["emb1"][0].shape[1]
    mask_add = -1e9 * jnp.eye(S, dtype=jnp.float32)                 # additive diagonal mask
    pos = params["pos_table"][:S]                                   # (S, D)
    pos_bsd = jnp.broadcast_to(pos[None], (B, S, D)).reshape(B * S, D)

    blk_kw = dict(n_layers=n_layers, n_heads=n_heads, d_k=d_k, d_v=d_v,
                  d_ffn=d_ffn, batch=B, seq=S, d_model=D)

    # ---- first DMSA block (one fused Pallas kernel) ----
    emb1_w, emb1_b = params["emb1"]
    cat1 = jnp.concatenate([X, missing_mask], axis=2).reshape(B * S, 2 * F)
    enc1, attn1_hb = dmsa_block(cat1, pos_bsd + emb1_b[None, :], mask_add,
                                emb1_w, params["block1"], **blk_kw)
    first_attn = jnp.transpose(attn1_hb, (1, 0, 2, 3))              # (B, H, S, S)
    rz_w, rz_b = params["reduce_z"]
    X_tilde_1 = (enc1 @ rz_w + rz_b).reshape(B, S, F)               # tiny N=6 GEMM -> XLA

    # ---- second DMSA block ----
    X_prime = missing_mask * X + (1.0 - missing_mask) * X_tilde_1
    emb2_w, emb2_b = params["emb2"]
    cat2 = jnp.concatenate([X_prime, missing_mask], axis=2).reshape(B * S, 2 * F)
    enc2, attn2_hb = dmsa_block(cat2, pos_bsd + emb2_b[None, :], mask_add,
                                emb2_w, params["block2"], **blk_kw)
    second_attn = jnp.transpose(attn2_hb, (1, 0, 2, 3))             # (B, H, S, S)

    rb_w, rb_b = params["reduce_beta"]
    rg_w, rg_b = params["reduce_gamma"]
    beta = jnp.maximum(enc2 @ rb_w + rb_b, 0.0)
    X_tilde_2 = (beta @ rg_w + rg_b).reshape(B, S, F)

    # ---- attention-weighted combination ----
    # squeeze(1) is a no-op for n_heads>1; transpose/mean/transpose == mean over heads.
    attn_avg = jnp.mean(second_attn, axis=1)                        # (B, S, S)
    comb_in = jnp.concatenate([missing_mask, attn_avg], axis=2).reshape(B * S, F + S)
    wc_w, wc_b = params["weight_combine"]
    combining_weights = jax.nn.sigmoid(comb_in @ wc_w + wc_b).reshape(B, S, F)
    X_tilde_3 = (1.0 - combining_weights) * X_tilde_2 + combining_weights * X_tilde_1

    imputed_data = missing_mask * X + (1.0 - missing_mask) * X_tilde_3

    # ---- training losses (ORT / MIT) ----
    ORT_loss = (calc_mae(X_tilde_1, X, missing_mask)
                + calc_mae(X_tilde_2, X, missing_mask)
                + calc_mae(X_tilde_3, X, missing_mask)) / 3.0
    MIT_loss = calc_mae(X_tilde_3, X_ori, indicating_mask)
    loss = ORT_loss + MIT_loss

    return {
        "first_DMSA_attn_weights": first_attn,
        "second_DMSA_attn_weights": second_attn,
        "combining_weights": combining_weights,
        "imputed_data": imputed_data,
        "ORT_loss": ORT_loss,
        "MIT_loss": MIT_loss,
        "loss": loss,
    }


# ----------------------------------------------------------------------------
if __name__ == "__main__":
    # small shapes: batch=2, seq_len=8, enc_in=6; SAITS fixes d_model=256, d_ffn=128,
    # n_heads=4, d_k=d_v=64, n_layers=2.
    B, S, F = 2, 8, 6
    D_MODEL, D_FFN, N_HEADS, D_K, D_V, N_LAYERS = 256, 128, 4, 64, 64, 2

    key = jax.random.PRNGKey(0)
    k1, k2, k3, kp = jax.random.split(key, 4)

    X_ori = jax.random.normal(k1, (B, S, F), jnp.float32)
    missing_mask = (jax.random.uniform(k2, (B, S, F)) > 0.2).astype(jnp.float32)
    indicating_mask = ((jax.random.uniform(k3, (B, S, F)) > 0.7).astype(jnp.float32)
                       * missing_mask)
    X = X_ori * missing_mask

    params = init_params(kp, n_layers=N_LAYERS, n_steps=S, n_features=F,
                         d_model=D_MODEL, d_ffn=D_FFN, n_heads=N_HEADS,
                         d_k=D_K, d_v=D_V)

    fwd = jax.jit(functools.partial(saits_forward, n_layers=N_LAYERS, n_heads=N_HEADS,
                                    d_k=D_K, d_v=D_V, d_ffn=D_FFN))
    results = fwd(params, X, missing_mask, X_ori, indicating_mask)
    jax.block_until_ready(results)

    assert results["imputed_data"].shape == (B, S, F)
    assert results["first_DMSA_attn_weights"].shape == (B, N_HEADS, S, S)
    assert results["second_DMSA_attn_weights"].shape == (B, N_HEADS, S, S)
    assert results["combining_weights"].shape == (B, S, F)
    assert bool(jnp.isfinite(results["loss"]))
    print("KERNEL_OK")
</pallas_src>

<mosaic_0001>
module attributes {stable_mosaic.version = 11 : i64} {
  func.func @_dmsa_block_kernel(%arg0: memref<16x12xf32, #tpu.memory_space<vmem>>, %arg1: memref<16x256xf32, #tpu.memory_space<vmem>>, %arg2: memref<8x8xf32, #tpu.memory_space<vmem>>, %arg3: memref<12x256xf32, #tpu.memory_space<vmem>>, %arg4: memref<2x4x256x64xbf16, #tpu.memory_space<vmem>>, %arg5: memref<2x4x256x64xbf16, #tpu.memory_space<vmem>>, %arg6: memref<2x4x256x64xbf16, #tpu.memory_space<vmem>>, %arg7: memref<2x4x64x256xbf16, #tpu.memory_space<vmem>>, %arg8: memref<2x256x128xbf16, #tpu.memory_space<vmem>>, %arg9: memref<2x128x256xbf16, #tpu.memory_space<vmem>>, %arg10: memref<2x6x256xf32, #tpu.memory_space<vmem>>, %arg11: memref<16x256xf32, #tpu.memory_space<vmem>>, %arg12: memref<4x2x8x8xf32, #tpu.memory_space<vmem>>) attributes {dimension_semantics = [], scalar_prefetch = 0 : i64, scratch_operands = 0 : i64, tpu.core_type = #tpu.core_type<tc>} {
    %c0 = arith.constant 0 : index
    %c0_0 = arith.constant 0 : index
    %0 = vector.load %arg0[%c0, %c0_0] : memref<16x12xf32, #tpu.memory_space<vmem>>, vector<16x12xf32>
    %c0_1 = arith.constant 0 : index
    %c0_2 = arith.constant 0 : index
    %1 = vector.load %arg3[%c0_1, %c0_2] : memref<12x256xf32, #tpu.memory_space<vmem>>, vector<12x256xf32>
    %cst = arith.constant dense<0.000000e+00> : vector<16x256xf32>
    %2 = tpu.matmul %0, %1, %cst {dimension_numbers = #tpu.dot_dimension_numbers<[1], [0], [0], [1], [0, 0, 1, 1], [], []>} : vector<16x12xf32>, vector<12x256xf32>, vector<16x256xf32> -> vector<16x256xf32>
    %c0_3 = arith.constant 0 : index
    %c0_4 = arith.constant 0 : index
    %3 = vector.load %arg1[%c0_3, %c0_4] : memref<16x256xf32, #tpu.memory_space<vmem>>, vector<16x256xf32>
    %4 = arith.addf %2, %3 : vector<16x256xf32>
    %c0_5 = arith.constant 0 : index
    %c0_6 = arith.constant 0 : index
    %5 = vector.load %arg2[%c0_5, %c0_6] : memref<8x8xf32, #tpu.memory_space<vmem>>, vector<8x8xf32>
    %6 = vector.shape_cast %5 : vector<8x8xf32> to vector<1x8x8xf32>
    %7 = arith.truncf %4 : vector<16x256xf32> to vector<16x256xbf16>
    %c0_7 = arith.constant 0 : index
    %c0_8 = arith.constant 0 : index
    %c0_9 = arith.constant 0 : index
    %c0_10 = arith.constant 0 : index
    %8 = vector.load %arg4[%c0_7, %c0_8, %c0_9, %c0_10] : memref<2x4x256x64xbf16, #tpu.memory_space<vmem>>, vector<1x1x256x64xbf16>
    %9 = vector.shape_cast %8 : vector<1x1x256x64xbf16> to vector<256x64xbf16>
    %cst_11 = arith.constant dense<0.000000e+00> : vector<16x64xf32>
    %10 = tpu.matmul %7, %9, %cst_11 {dimension_numbers = #tpu.dot_dimension_numbers<[1], [0], [0], [1], [0, 0, 1, 1], [], []>} : vector<16x256xbf16>, vector<256x64xbf16>, vector<16x64xf32> -> vector<16x64xf32>
    %c0_12 = arith.constant 0 : index
    %c0_13 = arith.constant 0 : index
    %c0_14 = arith.constant 0 : index
    %c0_15 = arith.constant 0 : index
    %11 = vector.load %arg5[%c0_12, %c0_13, %c0_14, %c0_15] : memref<2x4x256x64xbf16, #tpu.memory_space<vmem>>, vector<1x1x256x64xbf16>
    %12 = vector.shape_cast %11 : vector<1x1x256x64xbf16> to vector<256x64xbf16>
    %cst_16 = arith.constant dense<0.000000e+00> : vector<16x64xf32>
    %13 = tpu.matmul %7, %12, %cst_16 {dimension_numbers = #tpu.dot_dimension_numbers<[1], [0], [0], [1], [0, 0, 1, 1], [], []>} : vector<16x256xbf16>, vector<256x64xbf16>, vector<16x64xf32> -> vector<16x64xf32>
    %c0_17 = arith.constant 0 : index
    %c0_18 = arith.constant 0 : index
    %c0_19 = arith.constant 0 : index
    %c0_20 = arith.constant 0 : index
    %14 = vector.load %arg6[%c0_17, %c0_18, %c0_19, %c0_20] : memref<2x4x256x64xbf16, #tpu.memory_space<vmem>>, vector<1x1x256x64xbf16>
    %15 = vector.shape_cast %14 : vector<1x1x256x64xbf16> to vector<256x64xbf16>
    %cst_21 = arith.constant dense<0.000000e+00> : vector<16x64xf32>
    %16 = tpu.matmul %7, %15, %cst_21 {dimension_numbers = #tpu.dot_dimension_numbers<[1], [0], [0], [1], [0, 0, 1, 1], [], []>} : vector<16x256xbf16>, vector<256x64xbf16>, vector<16x64xf32> -> vector<16x64xf32>
    %17 = vector.shape_cast %10 : vector<16x64xf32> to vector<2x8x64xf32>
    %18 = arith.truncf %17 : vector<2x8x64xf32> to vector<2x8x64xbf16>
    %19 = vector.shape_cast %13 : vector<16x64xf32> to vector<2x8x64xf32>
    %20 = arith.truncf %19 : vector<2x8x64xf32> to vector<2x8x64xbf16>
    %21 = vector.shape_cast %16 : vector<16x64xf32> to vector<2x8x64xf32>
    %22 = arith.truncf %21 : vector<2x8x64xf32> to vector<2x8x64xbf16>
    "tpu.trace_start"() <{level = 10 : i32, message = "bqd,bkd->bqk"}> : () -> ()
    %cst_22 = arith.constant dense<0.000000e+00> : vector<2x8x8xf32>
    %23 = tpu.matmul %18, %20, %cst_22 {dimension_numbers = #tpu.dot_dimension_numbers<[2], [2], [1], [1], [0, 0, 0, 1, 1, 1], [0], [0]>} : vector<2x8x64xbf16>, vector<2x8x64xbf16>, vector<2x8x8xf32> -> vector<2x8x8xf32>
    "tpu.trace_stop"() : () -> ()
    %24 = vector.broadcast %6 : vector<1x8x8xf32> to vector<2x8x8xf32>
    %25 = arith.addf %23, %24 : vector<2x8x8xf32>
    %cst_23 = arith.constant dense<0xFF800000> : vector<2x8xf32>
    %26 = vector.multi_reduction <maximumf>, %25, %cst_23 [2] : vector<2x8x8xf32> to vector<2x8xf32>
    %27 = vector.shape_cast %26 : vector<2x8xf32> to vector<2x8x1xf32>
    %28 = vector.broadcast %27 : vector<2x8x1xf32> to vector<2x8x8xf32>
    %29 = arith.subf %25, %28 : vector<2x8x8xf32>
    %30 = math.exp %29 : vector<2x8x8xf32>
    %cst_24 = arith.constant dense<0.000000e+00> : vector<2x8xf32>
    %31 = vector.multi_reduction <add>, %30, %cst_24 [2] : vector<2x8x8xf32> to vector<2x8xf32>
    %32 = vector.shape_cast %31 : vector<2x8xf32> to vector<2x8x1xf32>
    %33 = tpu.reciprocal %32 {approx = true} : vector<2x8x1xf32> -> vector<2x8x1xf32>
    %34 = vector.broadcast %33 : vector<2x8x1xf32> to vector<2x8x8xf32>
    %35 = arith.mulf %30, %34 : vector<2x8x8xf32>
    %36 = arith.truncf %35 : vector<2x8x8xf32> to vector<2x8x8xbf16>
    "tpu.trace_start"() <{level = 10 : i32, message = "bqk,bkd->bqd"}> : () -> ()
    %cst_25 = arith.constant dense<0.000000e+00> : vector<2x8x64xf32>
    %37 = tpu.matmul %36, %22, %cst_25 {dimension_numbers = #tpu.dot_dimension_numbers<[2], [1], [1], [2], [0, 0, 0, 1, 1, 2], [0], [0]>} : vector<2x8x8xbf16>, vector<2x8x64xbf16>, vector<2x8x64xf32> -> vector<2x8x64xf32>
    "tpu.trace_stop"() : () -> ()
    %38 = vector.shape_cast %37 : vector<2x8x64xf32> to vector<16x64xf32>
    %39 = arith.truncf %38 : vector<16x64xf32> to vector<16x64xbf16>
    %c0_26 = arith.constant 0 : index
    %c0_27 = arith.constant 0 : index
    %c0_28 = arith.constant 0 : index
    %c0_29 = arith.constant 0 : index
    %40 = vector.load %arg7[%c0_26, %c0_27, %c0_28, %c0_29] : memref<2x4x64x256xbf16, #tpu.memory_space<vmem>>, vector<1x1x64x256xbf16>
    %41 = vector.shape_cast %40 : vector<1x1x64x256xbf16> to vector<64x256xbf16>
    %cst_30 = arith.constant dense<0.000000e+00> : vector<16x256xf32>
    %42 = tpu.matmul %39, %41, %cst_30 {dimension_numbers = #tpu.dot_dimension_numbers<[1], [0], [0], [1], [0, 0, 1, 1], [], []>} : vector<16x64xbf16>, vector<64x256xbf16>, vector<16x256xf32> -> vector<16x256xf32>
    %c0_31 = arith.constant 0 : index
    %c1 = arith.constant 1 : index
    %c0_32 = arith.constant 0 : index
    %c0_33 = arith.constant 0 : index
    %43 = vector.load %arg4[%c0_31, %c1, %c0_32, %c0_33] : memref<2x4x256x64xbf16, #tpu.memory_space<vmem>>, vector<1x1x256x64xbf16>
    %44 = vector.shape_cast %43 : vector<1x1x256x64xbf16> to vector<256x64xbf16>
    %cst_34 = arith.constant dense<0.000000e+00> : vector<16x64xf32>
    %45 = tpu.matmul %7, %44, %cst_34 {dimension_numbers = #tpu.dot_dimension_numbers<[1], [0], [0], [1], [0, 0, 1, 1], [], []>} : vector<16x256xbf16>, vector<256x64xbf16>, vector<16x64xf32> -> vector<16x64xf32>
    %c0_35 = arith.constant 0 : index
    %c1_36 = arith.constant 1 : index
    %c0_37 = arith.constant 0 : index
    %c0_38 = arith.constant 0 : index
    %46 = vector.load %arg5[%c0_35, %c1_36, %c0_37, %c0_38] : memref<2x4x256x64xbf16, #tpu.memory_space<vmem>>, vector<1x1x256x64xbf16>
    %47 = vector.shape_cast %46 : vector<1x1x256x64xbf16> to vector<256x64xbf16>
    %cst_39 = arith.constant dense<0.000000e+00> : vector<16x64xf32>
    %48 = tpu.matmul %7, %47, %cst_39 {dimension_numbers = #tpu.dot_dimension_numbers<[1], [0], [0], [1], [0, 0, 1, 1], [], []>} : vector<16x256xbf16>, vector<256x64xbf16>, vector<16x64xf32> -> vector<16x64xf32>
    %c0_40 = arith.constant 0 : index
    %c1_41 = arith.constant 1 : index
    %c0_42 = arith.constant 0 : index
    %c0_43 = arith.constant 0 : index
    %49 = vector.load %arg6[%c0_40, %c1_41, %c0_42, %c0_43] : memref<2x4x256x64xbf16, #tpu.memory_space<vmem>>, vector<1x1x256x64xbf16>
    %50 = vector.shape_cast %49 : vector<1x1x256x64xbf16> to vector<256x64xbf16>
    %cst_44 = arith.constant dense<0.000000e+00> : vector<16x64xf32>
    %51 = tpu.matmul %7, %50, %cst_44 {dimension_numbers = #tpu.dot_dimension_numbers<[1], [0], [0], [1], [0, 0, 1, 1], [], []>} : vector<16x256xbf16>, vector<256x64xbf16>, vector<16x64xf32> -> vector<16x64xf32>
    %52 = vector.shape_cast %45 : vector<16x64xf32> to vector<2x8x64xf32>
    %53 = arith.truncf %52 : vector<2x8x64xf32> to vector<2x8x64xbf16>
    %54 = vector.shape_cast %48 : vector<16x64xf32> to vector<2x8x64xf32>
    %55 = arith.truncf %54 : vector<2x8x64xf32> to vector<2x8x64xbf16>
    %56 = vector.shape_cast %51 : vector<16x64xf32> to vector<2x8x64xf32>
    %57 = arith.truncf %56 : vector<2x8x64xf32> to vector<2x8x64xbf16>
    "tpu.trace_start"() <{level = 10 : i32, message = "bqd,bkd->bqk"}> : () -> ()
    %cst_45 = arith.constant dense<0.000000e+00> : vector<2x8x8xf32>
    %58 = tpu.matmul %53, %55, %cst_45 {dimension_numbers = #tpu.dot_dimension_numbers<[2], [2], [1], [1], [0, 0, 0, 1, 1, 1], [0], [0]>} : vector<2x8x64xbf16>, vector<2x8x64xbf16>, vector<2x8x8xf32> -> vector<2x8x8xf32>
    "tpu.trace_stop"() : () -> ()
    %59 = vector.broadcast %6 : vector<1x8x8xf32> to vector<2x8x8xf32>
    %60 = arith.addf %58, %59 : vector<2x8x8xf32>
    %cst_46 = arith.constant dense<0xFF800000> : vector<2x8xf32>
    %61 = vector.multi_reduction <maximumf>, %60, %cst_46 [2] : vector<2x8x8xf32> to vector<2x8xf32>
    %62 = vector.shape_cast %61 : vector<2x8xf32> to vector<2x8x1xf32>
    %63 = vector.broadcast %62 : vector<2x8x1xf32> to vector<2x8x8xf32>
    %64 = arith.subf %60, %63 : vector<2x8x8xf32>
    %65 = math.exp %64 : vector<2x8x8xf32>
    %cst_47 = arith.constant dense<0.000000e+00> : vector<2x8xf32>
    %66 = vector.multi_reduction <add>, %65, %cst_47 [2] : vector<2x8x8xf32> to vector<2x8xf32>
    %67 = vector.shape_cast %66 : vector<2x8xf32> to vector<2x8x1xf32>
    %68 = tpu.reciprocal %67 {approx = true} : vector<2x8x1xf32> -> vector<2x8x1xf32>
    %69 = vector.broadcast %68 : vector<2x8x1xf32> to vector<2x8x8xf32>
    %70 = arith.mulf %65, %69 : vector<2x8x8xf32>
    %71 = arith.truncf %70 : vector<2x8x8xf32> to vector<2x8x8xbf16>
    "tpu.trace_start"() <{level = 10 : i32, message = "bqk,bkd->bqd"}> : () -> ()
    %cst_48 = arith.constant dense<0.000000e+00> : vector<2x8x64xf32>
    %72 = tpu.matmul %71, %57, %cst_48 {dimension_numbers = #tpu.dot_dimension_numbers<[2], [1], [1], [2], [0, 0, 0, 1, 1, 2], [0], [0]>} : vector<2x8x8xbf16>, vector<2x8x64xbf16>, vector<2x8x64xf32> -> vector<2x8x64xf32>
    "tpu.trace_stop"() : () -> ()
    %73 = vector.shape_cast %72 : vector<2x8x64xf32> to vector<16x64xf32>
    %74 = arith.truncf %73 : vector<16x64xf32> to vector<16x64xbf16>
    %c0_49 = arith.constant 0 : index
    %c1_50 = arith.constant 1 : index
    %c0_51 = arith.constant 0 : index
    %c0_52 = arith.constant 0 : index
    %75 = vector.load %arg7[%c0_49, %c1_50, %c0_51, %c0_52] : memref<2x4x64x256xbf16, #tpu.memory_space<vmem>>, vector<1x1x64x256xbf16>
    %76 = vector.shape_cast %75 : vector<1x1x64x256xbf16> to vector<64x256xbf16>
    %cst_53 = arith.constant dense<0.000000e+00> : vector<16x256xf32>
    %77 = tpu.matmul %74, %76, %cst_53 {dimension_numbers = #tpu.dot_dimension_numbers<[1], [0], [0], [1], [0, 0, 1, 1], [], []>} : vector<16x64xbf16>, vector<64x256xbf16>, vector<16x256xf32> -> vector<16x256xf32>
    %78 = arith.addf %42, %77 : vector<16x256xf32>
    %c0_54 = arith.constant 0 : index
    %c2 = arith.constant 2 : index
    %c0_55 = arith.constant 0 : index
    %c0_56 = arith.constant 0 : index
    %79 = vector.load %arg4[%c0_54, %c2, %c0_55, %c0_56] : memref<2x4x256x64xbf16, #tpu.memory_space<vmem>>, vector<1x1x256x64xbf16>
    %80 = vector.shape_cast %79 : vector<1x1x256x64xbf16> to vector<256x64xbf16>
    %cst_57 = arith.constant dense<0.000000e+00> : vector<16x64xf32>
    %81 = tpu.matmul %7, %80, %cst_57 {dimension_numbers = #tpu.dot_dimension_numbers<[1], [0], [0], [1], [0, 0, 1, 1], [], []>} : vector<16x256xbf16>, vector<256x64xbf16>, vector<16x64xf32> -> vector<16x64xf32>
    %c0_58 = arith.constant 0 : index
    %c2_59 = arith.constant 2 : index
    %c0_60 = arith.constant 0 : index
    %c0_61 = arith.constant 0 : index
    %82 = vector.load %arg5[%c0_58, %c2_59, %c0_60, %c0_61] : memref<2x4x256x64xbf16, #tpu.memory_space<vmem>>, vector<1x1x256x64xbf16>
    %83 = vector.shape_cast %82 : vector<1x1x256x64xbf16> to vector<256x64xbf16>
    %cst_62 = arith.constant dense<0.000000e+00> : vector<16x64xf32>
    %84 = tpu.matmul %7, %83, %cst_62 {dimension_numbers = #tpu.dot_dimension_numbers<[1], [0], [0], [1], [0, 0, 1, 1], [], []>} : vector<16x256xbf16>, vector<256x64xbf16>, vector<16x64xf32> -> vector<16x64xf32>
    %c0_63 = arith.constant 0 : index
    %c2_64 = arith.constant 2 : index
    %c0_65 = arith.constant 0 : index
    %c0_66 = arith.constant 0 : index
    %85 = vector.load %arg6[%c0_63, %c2_64, %c0_65, %c0_66] : memref<2x4x256x64xbf16, #tpu.memory_space<vmem>>, vector<1x1x256x64xbf16>
    %86 = vector.shape_cast %85 : vector<1x1x256x64xbf16> to vector<256x64xbf16>
    %cst_67 = arith.constant dense<0.000000e+00> : vector<16x64xf32>
    %87 = tpu.matmul %7, %86, %cst_67 {dimension_numbers = #tpu.dot_dimension_numbers<[1], [0], [0], [1], [0, 0, 1, 1], [], []>} : vector<16x256xbf16>, vector<256x64xbf16>, vector<16x64xf32> -> vector<16x64xf32>
    %88 = vector.shape_cast %81 : vector<16x64xf32> to vector<2x8x64xf32>
    %89 = arith.truncf %88 : vector<2x8x64xf32> to vector<2x8x64xbf16>
    %90 = vector.shape_cast %84 : vector<16x64xf32> to vector<2x8x64xf32>
    %91 = arith.truncf %90 : vector<2x8x64xf32> to vector<2x8x64xbf16>
    %92 = vector.shape_cast %87 : vector<16x64xf32> to vector<2x8x64xf32>
    %93 = arith.truncf %92 : vector<2x8x64xf32> to vector<2x8x64xbf16>
    "tpu.trace_start"() <{level = 10 : i32, message = "bqd,bkd->bqk"}> : () -> ()
    %cst_68 = arith.constant dense<0.000000e+00> : vector<2x8x8xf32>
    %94 = tpu.matmul %89, %91, %cst_68 {dimension_numbers = #tpu.dot_dimension_numbers<[2], [2], [1], [1], [0, 0, 0, 1, 1, 1], [0], [0]>} : vector<2x8x64xbf16>, vector<2x8x64xbf16>, vector<2x8x8xf32> -> vector<2x8x8xf32>
    "tpu.trace_stop"() : () -> ()
    %95 = vector.broadcast %6 : vector<1x8x8xf32> to vector<2x8x8xf32>
    %96 = arith.addf %94, %95 : vector<2x8x8xf32>
    %cst_69 = arith.constant dense<0xFF800000> : vector<2x8xf32>
    %97 = vector.multi_reduction <maximumf>, %96, %cst_69 [2] : vector<2x8x8xf32> to vector<2x8xf32>
    %98 = vector.shape_cast %97 : vector<2x8xf32> to vector<2x8x1xf32>
    %99 = vector.broadcast %98 : vector<2x8x1xf32> to vector<2x8x8xf32>
    %100 = arith.subf %96, %99 : vector<2x8x8xf32>
    %101 = math.exp %100 : vector<2x8x8xf32>
    %cst_70 = arith.constant dense<0.000000e+00> : vector<2x8xf32>
    %102 = vector.multi_reduction <add>, %101, %cst_70 [2] : vector<2x8x8xf32> to vector<2x8xf32>
    %103 = vector.shape_cast %102 : vector<2x8xf32> to vector<2x8x1xf32>
    %104 = tpu.reciprocal %103 {approx = true} : vector<2x8x1xf32> -> vector<2x8x1xf32>
    %105 = vector.broadcast %104 : vector<2x8x1xf32> to vector<2x8x8xf32>
    %106 = arith.mulf %101, %105 : vector<2x8x8xf32>
    %107 = arith.truncf %106 : vector<2x8x8xf32> to vector<2x8x8xbf16>
    "tpu.trace_start"() <{level = 10 : i32, message = "bqk,bkd->bqd"}> : () -> ()
    %cst_71 = arith.constant dense<0.000000e+00> : vector<2x8x64xf32>
    %108 = tpu.matmul %107, %93, %cst_71 {dimension_numbers = #tpu.dot_dimension_numbers<[2], [1], [1], [2], [0, 0, 0, 1, 1, 2], [0], [0]>} : vector<2x8x8xbf16>, vector<2x8x64xbf16>, vector<2x8x64xf32> -> vector<2x8x64xf32>
    "tpu.trace_stop"() : () -> ()
    %109 = vector.shape_cast %108 : vector<2x8x64xf32> to vector<16x64xf32>
    %110 = arith.truncf %109 : vector<16x64xf32> to vector<16x64xbf16>
    %c0_72 = arith.constant 0 : index
    %c2_73 = arith.constant 2 : index
    %c0_74 = arith.constant 0 : index
    %c0_75 = arith.constant 0 : index
    %111 = vector.load %arg7[%c0_72, %c2_73, %c0_74, %c0_75] : memref<2x4x64x256xbf16, #tpu.memory_space<vmem>>, vector<1x1x64x256xbf16>
    %112 = vector.shape_cast %111 : vector<1x1x64x256xbf16> to vector<64x256xbf16>
    %cst_76 = arith.constant dense<0.000000e+00> : vector<16x256xf32>
    %113 = tpu.matmul %110, %112, %cst_76 {dimension_numbers = #tpu.dot_dimension_numbers<[1], [0], [0], [1], [0, 0, 1, 1], [], []>} : vector<16x64xbf16>, vector<64x256xbf16>, vector<16x256xf32> -> vector<16x256xf32>
    %114 = arith.addf %78, %113 : vector<16x256xf32>
    %c0_77 = arith.constant 0 : index
    %c3 = arith.constant 3 : index
    %c0_78 = arith.constant 0 : index
    %c0_79 = arith.constant 0 : index
    %115 = vector.load %arg4[%c0_77, %c3, %c0_78, %c0_79] : memref<2x4x256x64xbf16, #tpu.memory_space<vmem>>, vector<1x1x256x64xbf16>
    %116 = vector.shape_cast %115 : vector<1x1x256x64xbf16> to vector<256x64xbf16>
    %cst_80 = arith.constant dense<0.000000e+00> : vector<16x64xf32>
    %117 = tpu.matmul %7, %116, %cst_80 {dimension_numbers = #tpu.dot_dimension_numbers<[1], [0], [0], [1], [0, 0, 1, 1], [], []>} : vector<16x256xbf16>, vector<256x64xbf16>, vector<16x64xf32> -> vector<16x64xf32>
    %c0_81 = arith.constant 0 : index
    %c3_82 = arith.constant 3 : index
    %c0_83 = arith.constant 0 : index
    %c0_84 = arith.constant 0 : index
    %118 = vector.load %arg5[%c0_81, %c3_82, %c0_83, %c0_84] : memref<2x4x256x64xbf16, #tpu.memory_space<vmem>>, vector<1x1x256x64xbf16>
    %119 = vector.shape_cast %118 : vector<1x1x256x64xbf16> to vector<256x64xbf16>
    %cst_85 = arith.constant dense<0.000000e+00> : vector<16x64xf32>
    %120 = tpu.matmul %7, %119, %cst_85 {dimension_numbers = #tpu.dot_dimension_numbers<[1], [0], [0], [1], [0, 0, 1, 1], [], []>} : vector<16x256xbf16>, vector<256x64xbf16>, vector<16x64xf32> -> vector<16x64xf32>
    %c0_86 = arith.constant 0 : index
    %c3_87 = arith.constant 3 : index
    %c0_88 = arith.constant 0 : index
    %c0_89 = arith.constant 0 : index
    %121 = vector.load %arg6[%c0_86, %c3_87, %c0_88, %c0_89] : memref<2x4x256x64xbf16, #tpu.memory_space<vmem>>, vector<1x1x256x64xbf16>
    %122 = vector.shape_cast %121 : vector<1x1x256x64xbf16> to vector<256x64xbf16>
    %cst_90 = arith.constant dense<0.000000e+00> : vector<16x64xf32>
    %123 = tpu.matmul %7, %122, %cst_90 {dimension_numbers = #tpu.dot_dimension_numbers<[1], [0], [0], [1], [0, 0, 1, 1], [], []>} : vector<16x256xbf16>, vector<256x64xbf16>, vector<16x64xf32> -> vector<16x64xf32>
    %124 = vector.shape_cast %117 : vector<16x64xf32> to vector<2x8x64xf32>
    %125 = arith.truncf %124 : vector<2x8x64xf32> to vector<2x8x64xbf16>
    %126 = vector.shape_cast %120 : vector<16x64xf32> to vector<2x8x64xf32>
    %127 = arith.truncf %126 : vector<2x8x64xf32> to vector<2x8x64xbf16>
    %128 = vector.shape_cast %123 : vector<16x64xf32> to vector<2x8x64xf32>
    %129 = arith.truncf %128 : vector<2x8x64xf32> to vector<2x8x64xbf16>
    "tpu.trace_start"() <{level = 10 : i32, message = "bqd,bkd->bqk"}> : () -> ()
    %cst_91 = arith.constant dense<0.000000e+00> : vector<2x8x8xf32>
    %130 = tpu.matmul %125, %127, %cst_91 {dimension_numbers = #tpu.dot_dimension_numbers<[2], [2], [1], [1], [0, 0, 0, 1, 1, 1], [0], [0]>} : vector<2x8x64xbf16>, vector<2x8x64xbf16>, vector<2x8x8xf32> -> vector<2x8x8xf32>
    "tpu.trace_stop"() : () -> ()
    %131 = vector.broadcast %6 : vector<1x8x8xf32> to vector<2x8x8xf32>
    %132 = arith.addf %130, %131 : vector<2x8x8xf32>
    %cst_92 = arith.constant dense<0xFF800000> : vector<2x8xf32>
    %133 = vector.multi_reduction <maximumf>, %132, %cst_92 [2] : vector<2x8x8xf32> to vector<2x8xf32>
    %134 = vector.shape_cast %133 : vector<2x8xf32> to vector<2x8x1xf32>
    %135 = vector.broadcast %134 : vector<2x8x1xf32> to vector<2x8x8xf32>
    %136 = arith.subf %132, %135 : vector<2x8x8xf32>
    %137 = math.exp %136 : vector<2x8x8xf32>
    %cst_93 = arith.constant dense<0.000000e+00> : vector<2x8xf32>
    %138 = vector.multi_reduction <add>, %137, %cst_93 [2] : vector<2x8x8xf32> to vector<2x8xf32>
    %139 = vector.shape_cast %138 : vector<2x8xf32> to vector<2x8x1xf32>
    %140 = tpu.reciprocal %139 {approx = true} : vector<2x8x1xf32> -> vector<2x8x1xf32>
    %141 = vector.broadcast %140 : vector<2x8x1xf32> to vector<2x8x8xf32>
    %142 = arith.mulf %137, %141 : vector<2x8x8xf32>
    %143 = arith.truncf %142 : vector<2x8x8xf32> to vector<2x8x8xbf16>
    "tpu.trace_start"() <{level = 10 : i32, message = "bqk,bkd->bqd"}> : () -> ()
    %cst_94 = arith.constant dense<0.000000e+00> : vector<2x8x64xf32>
    %144 = tpu.matmul %143, %129, %cst_94 {dimension_numbers = #tpu.dot_dimension_numbers<[2], [1], [1], [2], [0, 0, 0, 1, 1, 2], [0], [0]>} : vector<2x8x8xbf16>, vector<2x8x64xbf16>, vector<2x8x64xf32> -> vector<2x8x64xf32>
    "tpu.trace_stop"() : () -> ()
    %145 = vector.shape_cast %144 : vector<2x8x64xf32> to vector<16x64xf32>
    %146 = arith.truncf %145 : vector<16x64xf32> to vector<16x64xbf16>
    %c0_95 = arith.constant 0 : index
    %c3_96 = arith.constant 3 : index
    %c0_97 = arith.constant 0 : index
    %c0_98 = arith.constant 0 : index
    %147 = vector.load %arg7[%c0_95, %c3_96, %c0_97, %c0_98] : memref<2x4x64x256xbf16, #tpu.memory_space<vmem>>, vector<1x1x64x256xbf16>
    %148 = vector.shape_cast %147 : vector<1x1x64x256xbf16> to vector<64x256xbf16>
    %cst_99 = arith.constant dense<0.000000e+00> : vector<16x256xf32>
    %149 = tpu.matmul %146, %148, %cst_99 {dimension_numbers = #tpu.dot_dimension_numbers<[1], [0], [0], [1], [0, 0, 1, 1], [], []>} : vector<16x64xbf16>, vector<64x256xbf16>, vector<16x256xf32> -> vector<16x256xf32>
    %150 = arith.addf %114, %149 : vector<16x256xf32>
    %151 = arith.addf %150, %4 : vector<16x256xf32>
    %c0_100 = arith.constant 0 : index
    %c0_101 = arith.constant 0 : index
    %c0_102 = arith.constant 0 : index
    %152 = vector.load %arg10[%c0_100, %c0_101, %c0_102] : memref<2x6x256xf32, #tpu.memory_space<vmem>>, vector<1x6x256xf32>
    %153 = vector.shape_cast %152 : vector<1x6x256xf32> to vector<6x256xf32>
    %154 = vector.extract_strided_slice %153 {offsets = [0, 0], sizes = [1, 256], strides = [1, 1]} : vector<6x256xf32> to vector<1x256xf32>
    %155 = vector.extract_strided_slice %153 {offsets = [1, 0], sizes = [1, 256], strides = [1, 1]} : vector<6x256xf32> to vector<1x256xf32>
    %156 = vector.extract_strided_slice %153 {offsets = [2, 0], sizes = [1, 256], strides = [1, 1]} : vector<6x256xf32> to vector<1x256xf32>
    %157 = vector.extract_strided_slice %153 {offsets = [3, 0], sizes = [1, 256], strides = [1, 1]} : vector<6x256xf32> to vector<1x256xf32>
    %158 = vector.extract_strided_slice %153 {offsets = [4, 0], sizes = [1, 128], strides = [1, 1]} : vector<6x256xf32> to vector<1x128xf32>
    %159 = vector.extract_strided_slice %153 {offsets = [5, 0], sizes = [1, 256], strides = [1, 1]} : vector<6x256xf32> to vector<1x256xf32>
    %cst_103 = arith.constant dense<0.000000e+00> : vector<16xf32>
    %160 = vector.multi_reduction <add>, %151, %cst_103 [1] : vector<16x256xf32> to vector<16xf32>
    %161 = vector.shape_cast %160 : vector<16xf32> to vector<16x1xf32>
    %cst_104 = arith.constant 2.560000e+02 : f32
    %162 = vector.broadcast %cst_104 : f32 to vector<16x1xf32>
    %163 = arith.divf %161, %162 : vector<16x1xf32>
    %164 = vector.broadcast %163 : vector<16x1xf32> to vector<16x256xf32>
    %165 = arith.subf %151, %164 : vector<16x256xf32>
    %166 = arith.mulf %165, %165 : vector<16x256xf32>
    %cst_105 = arith.constant dense<0.000000e+00> : vector<16xf32>
    %167 = vector.multi_reduction <add>, %166, %cst_105 [1] : vector<16x256xf32> to vector<16xf32>
    %168 = vector.shape_cast %167 : vector<16xf32> to vector<16x1xf32>
    %cst_106 = arith.constant 2.560000e+02 : f32
    %169 = vector.broadcast %cst_106 : f32 to vector<16x1xf32>
    %170 = arith.divf %168, %169 : vector<16x1xf32>
    %171 = vector.broadcast %163 : vector<16x1xf32> to vector<16x256xf32>
    %172 = arith.subf %151, %171 : vector<16x256xf32>
    %cst_107 = arith.constant 9.99999997E-7 : f32
    %173 = vector.broadcast %cst_107 : f32 to vector<16x1xf32>
    %174 = arith.addf %170, %173 : vector<16x1xf32>
    %175 = math.rsqrt %174 : vector<16x1xf32>
    %176 = vector.broadcast %175 : vector<16x1xf32> to vector<16x256xf32>
    %177 = arith.mulf %172, %176 : vector<16x256xf32>
    %178 = vector.broadcast %154 : vector<1x256xf32> to vector<16x256xf32>
    %179 = arith.mulf %177, %178 : vector<16x256xf32>
    %180 = vector.broadcast %155 : vector<1x256xf32> to vector<16x256xf32>
    %181 = arith.addf %179, %180 : vector<16x256xf32>
    %182 = arith.truncf %181 : vector<16x256xf32> to vector<16x256xbf16>
    %c0_108 = arith.constant 0 : index
    %c0_109 = arith.constant 0 : index
    %c0_110 = arith.constant 0 : index
    %183 = vector.load %arg8[%c0_108, %c0_109, %c0_110] : memref<2x256x128xbf16, #tpu.memory_space<vmem>>, vector<1x256x128xbf16>
    %184 = vector.shape_cast %183 : vector<1x256x128xbf16> to vector<256x128xbf16>
    %cst_111 = arith.constant dense<0.000000e+00> : vector<16x128xf32>
    %185 = tpu.matmul %182, %184, %cst_111 {dimension_numbers = #tpu.dot_dimension_numbers<[1], [0], [0], [1], [0, 0, 1, 1], [], []>} : vector<16x256xbf16>, vector<256x128xbf16>, vector<16x128xf32> -> vector<16x128xf32>
    %186 = vector.broadcast %158 : vector<1x128xf32> to vector<16x128xf32>
    %187 = arith.addf %185, %186 : vector<16x128xf32>
    %cst_112 = arith.constant 0.000000e+00 : f32
    %188 = vector.broadcast %cst_112 : f32 to vector<16x128xf32>
    %189 = arith.maximumf %187, %188 : vector<16x128xf32>
    %190 = arith.truncf %189 : vector<16x128xf32> to vector<16x128xbf16>
    %c0_113 = arith.constant 0 : index
    %c0_114 = arith.constant 0 : index
    %c0_115 = arith.constant 0 : index
    %191 = vector.load %arg9[%c0_113, %c0_114, %c0_115] : memref<2x128x256xbf16, #tpu.memory_space<vmem>>, vector<1x128x256xbf16>
    %192 = vector.shape_cast %191 : vector<1x128x256xbf16> to vector<128x256xbf16>
    %cst_116 = arith.constant dense<0.000000e+00> : vector<16x256xf32>
    %193 = tpu.matmul %190, %192, %cst_116 {dimension_numbers = #tpu.dot_dimension_numbers<[1], [0], [0], [1], [0, 0, 1, 1], [], []>} : vector<16x128xbf16>, vector<128x256xbf16>, vector<16x256xf32> -> vector<16x256xf32>
    %194 = vector.broadcast %159 : vector<1x256xf32> to vector<16x256xf32>
    %195 = arith.addf %193, %194 : vector<16x256xf32>
    %196 = arith.addf %195, %181 : vector<16x256xf32>
    %cst_117 = arith.constant dense<0.000000e+00> : vector<16xf32>
    %197 = vector.multi_reduction <add>, %196, %cst_117 [1] : vector<16x256xf32> to vector<16xf32>
    %198 = vector.shape_cast %197 : vector<16xf32> to vector<16x1xf32>
    %cst_118 = arith.constant 2.560000e+02 : f32
    %199 = vector.broadcast %cst_118 : f32 to vector<16x1xf32>
    %200 = arith.divf %198, %199 : vector<16x1xf32>
    %201 = vector.broadcast %200 : vector<16x1xf32> to vector<16x256xf32>
    %202 = arith.subf %196, %201 : vector<16x256xf32>
    %203 = arith.mulf %202, %202 : vector<16x256xf32>
    %cst_119 = arith.constant dense<0.000000e+00> : vector<16xf32>
    %204 = vector.multi_reduction <add>, %203, %cst_119 [1] : vector<16x256xf32> to vector<16xf32>
    %205 = vector.shape_cast %204 : vector<16xf32> to vector<16x1xf32>
    %cst_120 = arith.constant 2.560000e+02 : f32
    %206 = vector.broadcast %cst_120 : f32 to vector<16x1xf32>
    %207 = arith.divf %205, %206 : vector<16x1xf32>
    %208 = vector.broadcast %200 : vector<16x1xf32> to vector<16x256xf32>
    %209 = arith.subf %196, %208 : vector<16x256xf32>
    %cst_121 = arith.constant 9.99999997E-7 : f32
    %210 = vector.broadcast %cst_121 : f32 to vector<16x1xf32>
    %211 = arith.addf %207, %210 : vector<16x1xf32>
    %212 = math.rsqrt %211 : vector<16x1xf32>
    %213 = vector.broadcast %212 : vector<16x1xf32> to vector<16x256xf32>
    %214 = arith.mulf %209, %213 : vector<16x256xf32>
    %215 = vector.broadcast %156 : vector<1x256xf32> to vector<16x256xf32>
    %216 = arith.mulf %214, %215 : vector<16x256xf32>
    %217 = vector.broadcast %157 : vector<1x256xf32> to vector<16x256xf32>
    %218 = arith.addf %216, %217 : vector<16x256xf32>
    %219 = arith.truncf %218 : vector<16x256xf32> to vector<16x256xbf16>
    %c1_122 = arith.constant 1 : index
    %c0_123 = arith.constant 0 : index
    %c0_124 = arith.constant 0 : index
    %c0_125 = arith.constant 0 : index
    %220 = vector.load %arg4[%c1_122, %c0_123, %c0_124, %c0_125] : memref<2x4x256x64xbf16, #tpu.memory_space<vmem>>, vector<1x1x256x64xbf16>
    %221 = vector.shape_cast %220 : vector<1x1x256x64xbf16> to vector<256x64xbf16>
    %cst_126 = arith.constant dense<0.000000e+00> : vector<16x64xf32>
    %222 = tpu.matmul %219, %221, %cst_126 {dimension_numbers = #tpu.dot_dimension_numbers<[1], [0], [0], [1], [0, 0, 1, 1], [], []>} : vector<16x256xbf16>, vector<256x64xbf16>, vector<16x64xf32> -> vector<16x64xf32>
    %c1_127 = arith.constant 1 : index
    %c0_128 = arith.constant 0 : index
    %c0_129 = arith.constant 0 : index
    %c0_130 = arith.constant 0 : index
    %223 = vector.load %arg5[%c1_127, %c0_128, %c0_129, %c0_130] : memref<2x4x256x64xbf16, #tpu.memory_space<vmem>>, vector<1x1x256x64xbf16>
    %224 = vector.shape_cast %223 : vector<1x1x256x64xbf16> to vector<256x64xbf16>
    %cst_131 = arith.constant dense<0.000000e+00> : vector<16x64xf32>
    %225 = tpu.matmul %219, %224, %cst_131 {dimension_numbers = #tpu.dot_dimension_numbers<[1], [0], [0], [1], [0, 0, 1, 1], [], []>} : vector<16x256xbf16>, vector<256x64xbf16>, vector<16x64xf32> -> vector<16x64xf32>
    %c1_132 = arith.constant 1 : index
    %c0_133 = arith.constant 0 : index
    %c0_134 = arith.constant 0 : index
    %c0_135 = arith.constant 0 : index
    %226 = vector.load %arg6[%c1_132, %c0_133, %c0_134, %c0_135] : memref<2x4x256x64xbf16, #tpu.memory_space<vmem>>, vector<1x1x256x64xbf16>
    %227 = vector.shape_cast %226 : vector<1x1x256x64xbf16> to vector<256x64xbf16>
    %cst_136 = arith.constant dense<0.000000e+00> : vector<16x64xf32>
    %228 = tpu.matmul %219, %227, %cst_136 {dimension_numbers = #tpu.dot_dimension_numbers<[1], [0], [0], [1], [0, 0, 1, 1], [], []>} : vector<16x256xbf16>, vector<256x64xbf16>, vector<16x64xf32> -> vector<16x64xf32>
    %229 = vector.shape_cast %222 : vector<16x64xf32> to vector<2x8x64xf32>
    %230 = arith.truncf %229 : vector<2x8x64xf32> to vector<2x8x64xbf16>
    %231 = vector.shape_cast %225 : vector<16x64xf32> to vector<2x8x64xf32>
    %232 = arith.truncf %231 : vector<2x8x64xf32> to vector<2x8x64xbf16>
    %233 = vector.shape_cast %228 : vector<16x64xf32> to vector<2x8x64xf32>
    %234 = arith.truncf %233 : vector<2x8x64xf32> to vector<2x8x64xbf16>
    "tpu.trace_start"() <{level = 10 : i32, message = "bqd,bkd->bqk"}> : () -> ()
    %cst_137 = arith.constant dense<0.000000e+00> : vector<2x8x8xf32>
    %235 = tpu.matmul %230, %232, %cst_137 {dimension_numbers = #tpu.dot_dimension_numbers<[2], [2], [1], [1], [0, 0, 0, 1, 1, 1], [0], [0]>} : vector<2x8x64xbf16>, vector<2x8x64xbf16>, vector<2x8x8xf32> -> vector<2x8x8xf32>
    "tpu.trace_stop"() : () -> ()
    %236 = vector.broadcast %6 : vector<1x8x8xf32> to vector<2x8x8xf32>
    %237 = arith.addf %235, %236 : vector<2x8x8xf32>
    %cst_138 = arith.constant dense<0xFF800000> : vector<2x8xf32>
    %238 = vector.multi_reduction <maximumf>, %237, %cst_138 [2] : vector<2x8x8xf32> to vector<2x8xf32>
    %239 = vector.shape_cast %238 : vector<2x8xf32> to vector<2x8x1xf32>
    %240 = vector.broadcast %239 : vector<2x8x1xf32> to vector<2x8x8xf32>
    %241 = arith.subf %237, %240 : vector<2x8x8xf32>
    %242 = math.exp %241 : vector<2x8x8xf32>
    %cst_139 = arith.constant dense<0.000000e+00> : vector<2x8xf32>
    %243 = vector.multi_reduction <add>, %242, %cst_139 [2] : vector<2x8x8xf32> to vector<2x8xf32>
    %244 = vector.shape_cast %243 : vector<2x8xf32> to vector<2x8x1xf32>
    %245 = tpu.reciprocal %244 {approx = true} : vector<2x8x1xf32> -> vector<2x8x1xf32>
    %246 = vector.broadcast %245 : vector<2x8x1xf32> to vector<2x8x8xf32>
    %247 = arith.mulf %242, %246 : vector<2x8x8xf32>
    %c0_140 = arith.constant 0 : index
    %c0_141 = arith.constant 0 : index
    %c0_142 = arith.constant 0 : index
    %c0_143 = arith.constant 0 : index
    %248 = vector.load %arg12[%c0_140, %c0_141, %c0_142, %c0_143] : memref<4x2x8x8xf32, #tpu.memory_space<vmem>>, vector<1x2x8x8xf32>
    %249 = vector.shape_cast %248 : vector<1x2x8x8xf32> to vector<2x8x8xf32>
    %250 = vector.shape_cast %247 : vector<2x8x8xf32> to vector<1x2x8x8xf32>
    tpu.vector_store %arg12[%c0_140, %c0_141, %c0_142, %c0_143], %250 {strides = array<i32>} : memref<4x2x8x8xf32, #tpu.memory_space<vmem>>, vector<1x2x8x8xf32>,
    %251 = arith.truncf %247 : vector<2x8x8xf32> to vector<2x8x8xbf16>
    "tpu.trace_start"() <{level = 10 : i32, message = "bqk,bkd->bqd"}> : () -> ()
    %cst_144 = arith.constant dense<0.000000e+00> : vector<2x8x64xf32>
    %252 = tpu.matmul %251, %234, %cst_144 {dimension_numbers = #tpu.dot_dimension_numbers<[2], [1], [1], [2], [0, 0, 0, 1, 1, 2], [0], [0]>} : vector<2x8x8xbf16>, vector<2x8x64xbf16>, vector<2x8x64xf32> -> vector<2x8x64xf32>
    "tpu.trace_stop"() : () -> ()
    %253 = vector.shape_cast %252 : vector<2x8x64xf32> to vector<16x64xf32>
    %254 = arith.truncf %253 : vector<16x64xf32> to vector<16x64xbf16>
    %c1_145 = arith.constant 1 : index
    %c0_146 = arith.constant 0 : index
    %c0_147 = arith.constant 0 : index
    %c0_148 = arith.constant 0 : index
    %255 = vector.load %arg7[%c1_145, %c0_146, %c0_147, %c0_148] : memref<2x4x64x256xbf16, #tpu.memory_space<vmem>>, vector<1x1x64x256xbf16>
    %256 = vector.shape_cast %255 : vector<1x1x64x256xbf16> to vector<64x256xbf16>
    %cst_149 = arith.constant dense<0.000000e+00> : vector<16x256xf32>
    %257 = tpu.matmul %254, %256, %cst_149 {dimension_numbers = #tpu.dot_dimension_numbers<[1], [0], [0], [1], [0, 0, 1, 1], [], []>} : vector<16x64xbf16>, vector<64x256xbf16>, vector<16x256xf32> -> vector<16x256xf32>
    %c1_150 = arith.constant 1 : index
    %c1_151 = arith.constant 1 : index
    %c0_152 = arith.constant 0 : index
    %c0_153 = arith.constant 0 : index
    %258 = vector.load %arg4[%c1_150, %c1_151, %c0_152, %c0_153] : memref<2x4x256x64xbf16, #tpu.memory_space<vmem>>, vector<1x1x256x64xbf16>
    %259 = vector.shape_cast %258 : vector<1x1x256x64xbf16> to vector<256x64xbf16>
    %cst_154 = arith.constant dense<0.000000e+00> : vector<16x64xf32>
    %260 = tpu.matmul %219, %259, %cst_154 {dimension_numbers = #tpu.dot_dimension_numbers<[1], [0], [0], [1], [0, 0, 1, 1], [], []>} : vector<16x256xbf16>, vector<256x64xbf16>, vector<16x64xf32> -> vector<16x64xf32>
    %c1_155 = arith.constant 1 : index
    %c1_156 = arith.constant 1 : index
    %c0_157 = arith.constant 0 : index
    %c0_158 = arith.constant 0 : index
    %261 = vector.load %arg5[%c1_155, %c1_156, %c0_157, %c0_158] : memref<2x4x256x64xbf16, #tpu.memory_space<vmem>>, vector<1x1x256x64xbf16>
    %262 = vector.shape_cast %261 : vector<1x1x256x64xbf16> to vector<256x64xbf16>
    %cst_159 = arith.constant dense<0.000000e+00> : vector<16x64xf32>
    %263 = tpu.matmul %219, %262, %cst_159 {dimension_numbers = #tpu.dot_dimension_numbers<[1], [0], [0], [1], [0, 0, 1, 1], [], []>} : vector<16x256xbf16>, vector<256x64xbf16>, vector<16x64xf32> -> vector<16x64xf32>
    %c1_160 = arith.constant 1 : index
    %c1_161 = arith.constant 1 : index
    %c0_162 = arith.constant 0 : index
    %c0_163 = arith.constant 0 : index
    %264 = vector.load %arg6[%c1_160, %c1_161, %c0_162, %c0_163] : memref<2x4x256x64xbf16, #tpu.memory_space<vmem>>, vector<1x1x256x64xbf16>
    %265 = vector.shape_cast %264 : vector<1x1x256x64xbf16> to vector<256x64xbf16>
    %cst_164 = arith.constant dense<0.000000e+00> : vector<16x64xf32>
    %266 = tpu.matmul %219, %265, %cst_164 {dimension_numbers = #tpu.dot_dimension_numbers<[1], [0], [0], [1], [0, 0, 1, 1], [], []>} : vector<16x256xbf16>, vector<256x64xbf16>, vector<16x64xf32> -> vector<16x64xf32>
    %267 = vector.shape_cast %260 : vector<16x64xf32> to vector<2x8x64xf32>
    %268 = arith.truncf %267 : vector<2x8x64xf32> to vector<2x8x64xbf16>
    %269 = vector.shape_cast %263 : vector<16x64xf32> to vector<2x8x64xf32>
    %270 = arith.truncf %269 : vector<2x8x64xf32> to vector<2x8x64xbf16>
    %271 = vector.shape_cast %266 : vector<16x64xf32> to vector<2x8x64xf32>
    %272 = arith.truncf %271 : vector<2x8x64xf32> to vector<2x8x64xbf16>
    "tpu.trace_start"() <{level = 10 : i32, message = "bqd,bkd->bqk"}> : () -> ()
    %cst_165 = arith.constant dense<0.000000e+00> : vector<2x8x8xf32>
    %273 = tpu.matmul %268, %270, %cst_165 {dimension_numbers = #tpu.dot_dimension_numbers<[2], [2], [1], [1], [0, 0, 0, 1, 1, 1], [0], [0]>} : vector<2x8x64xbf16>, vector<2x8x64xbf16>, vector<2x8x8xf32> -> vector<2x8x8xf32>
    "tpu.trace_stop"() : () -> ()
    %274 = vector.broadcast %6 : vector<1x8x8xf32> to vector<2x8x8xf32>
    %275 = arith.addf %273, %274 : vector<2x8x8xf32>
    %cst_166 = arith.constant dense<0xFF800000> : vector<2x8xf32>
    %276 = vector.multi_reduction <maximumf>, %275, %cst_166 [2] : vector<2x8x8xf32> to vector<2x8xf32>
    %277 = vector.shape_cast %276 : vector<2x8xf32> to vector<2x8x1xf32>
    %278 = vector.broadcast %277 : vector<2x8x1xf32> to vector<2x8x8xf32>
    %279 = arith.subf %275, %278 : vector<2x8x8xf32>
    %280 = math.exp %279 : vector<2x8x8xf32>
    %cst_167 = arith.constant dense<0.000000e+00> : vector<2x8xf32>
    %281 = vector.multi_reduction <add>, %280, %cst_167 [2] : vector<2x8x8xf32> to vector<2x8xf32>
    %282 = vector.shape_cast %281 : vector<2x8xf32> to vector<2x8x1xf32>
    %283 = tpu.reciprocal %282 {approx = true} : vector<2x8x1xf32> -> vector<2x8x1xf32>
    %284 = vector.broadcast %283 : vector<2x8x1xf32> to vector<2x8x8xf32>
    %285 = arith.mulf %280, %284 : vector<2x8x8xf32>
    %c1_168 = arith.constant 1 : index
    %c0_169 = arith.constant 0 : index
    %c0_170 = arith.constant 0 : index
    %c0_171 = arith.constant 0 : index
    %286 = vector.load %arg12[%c1_168, %c0_169, %c0_170, %c0_171] : memref<4x2x8x8xf32, #tpu.memory_space<vmem>>, vector<1x2x8x8xf32>
    %287 = vector.shape_cast %286 : vector<1x2x8x8xf32> to vector<2x8x8xf32>
    %288 = vector.shape_cast %285 : vector<2x8x8xf32> to vector<1x2x8x8xf32>
    tpu.vector_store %arg12[%c1_168, %c0_169, %c0_170, %c0_171], %288 {strides = array<i32>} : memref<4x2x8x8xf32, #tpu.memory_space<vmem>>, vector<1x2x8x8xf32>,
    %289 = arith.truncf %285 : vector<2x8x8xf32> to vector<2x8x8xbf16>
    "tpu.trace_start"() <{level = 10 : i32, message = "bqk,bkd->bqd"}> : () -> ()
    %cst_172 = arith.constant dense<0.000000e+00> : vector<2x8x64xf32>
    %290 = tpu.matmul %289, %272, %cst_172 {dimension_numbers = #tpu.dot_dimension_numbers<[2], [1], [1], [2], [0, 0, 0, 1, 1, 2], [0], [0]>} : vector<2x8x8xbf16>, vector<2x8x64xbf16>, vector<2x8x64xf32> -> vector<2x8x64xf32>
    "tpu.trace_stop"() : () -> ()
    %291 = vector.shape_cast %290 : vector<2x8x64xf32> to vector<16x64xf32>
    %292 = arith.truncf %291 : vector<16x64xf32> to vector<16x64xbf16>
    %c1_173 = arith.constant 1 : index
    %c1_174 = arith.constant 1 : index
    %c0_175 = arith.constant 0 : index
    %c0_176 = arith.constant 0 : index
    %293 = vector.load %arg7[%c1_173, %c1_174, %c0_175, %c0_176] : memref<2x4x64x256xbf16, #tpu.memory_space<vmem>>, vector<1x1x64x256xbf16>
    %294 = vector.shape_cast %293 : vector<1x1x64x256xbf16> to vector<64x256xbf16>
    %cst_177 = arith.constant dense<0.000000e+00> : vector<16x256xf32>
    %295 = tpu.matmul %292, %294, %cst_177 {dimension_numbers = #tpu.dot_dimension_numbers<[1], [0], [0], [1], [0, 0, 1, 1], [], []>} : vector<16x64xbf16>, vector<64x256xbf16>, vector<16x256xf32> -> vector<16x256xf32>
    %296 = arith.addf %257, %295 : vector<16x256xf32>
    %c1_178 = arith.constant 1 : index
    %c2_179 = arith.constant 2 : index
    %c0_180 = arith.constant 0 : index
    %c0_181 = arith.constant 0 : index
    %297 = vector.load %arg4[%c1_178, %c2_179, %c0_180, %c0_181] : memref<2x4x256x64xbf16, #tpu.memory_space<vmem>>, vector<1x1x256x64xbf16>
    %298 = vector.shape_cast %297 : vector<1x1x256x64xbf16> to vector<256x64xbf16>
    %cst_182 = arith.constant dense<0.000000e+00> : vector<16x64xf32>
    %299 = tpu.matmul %219, %298, %cst_182 {dimension_numbers = #tpu.dot_dimension_numbers<[1], [0], [0], [1], [0, 0, 1, 1], [], []>} : vector<16x256xbf16>, vector<256x64xbf16>, vector<16x64xf32> -> vector<16x64xf32>
    %c1_183 = arith.constant 1 : index
    %c2_184 = arith.constant 2 : index
    %c0_185 = arith.constant 0 : index
    %c0_186 = arith.constant 0 : index
    %300 = vector.load %arg5[%c1_183, %c2_184, %c0_185, %c0_186] : memref<2x4x256x64xbf16, #tpu.memory_space<vmem>>, vector<1x1x256x64xbf16>
    %301 = vector.shape_cast %300 : vector<1x1x256x64xbf16> to vector<256x64xbf16>
    %cst_187 = arith.constant dense<0.000000e+00> : vector<16x64xf32>
    %302 = tpu.matmul %219, %301, %cst_187 {dimension_numbers = #tpu.dot_dimension_numbers<[1], [0], [0], [1], [0, 0, 1, 1], [], []>} : vector<16x256xbf16>, vector<256x64xbf16>, vector<16x64xf32> -> vector<16x64xf32>
    %c1_188 = arith.constant 1 : index
    %c2_189 = arith.constant 2 : index
    %c0_190 = arith.constant 0 : index
    %c0_191 = arith.constant 0 : index
    %303 = vector.load %arg6[%c1_188, %c2_189, %c0_190, %c0_191] : memref<2x4x256x64xbf16, #tpu.memory_space<vmem>>, vector<1x1x256x64xbf16>
    %304 = vector.shape_cast %303 : vector<1x1x256x64xbf16> to vector<256x64xbf16>
    %cst_192 = arith.constant dense<0.000000e+00> : vector<16x64xf32>
    %305 = tpu.matmul %219, %304, %cst_192 {dimension_numbers = #tpu.dot_dimension_numbers<[1], [0], [0], [1], [0, 0, 1, 1], [], []>} : vector<16x256xbf16>, vector<256x64xbf16>, vector<16x64xf32> -> vector<16x64xf32>
    %306 = vector.shape_cast %299 : vector<16x64xf32> to vector<2x8x64xf32>
    %307 = arith.truncf %306 : vector<2x8x64xf32> to vector<2x8x64xbf16>
    %308 = vector.shape_cast %302 : vector<16x64xf32> to vector<2x8x64xf32>
    %309 = arith.truncf %308 : vector<2x8x64xf32> to vector<2x8x64xbf16>
    %310 = vector.shape_cast %305 : vector<16x64xf32> to vector<2x8x64xf32>
    %311 = arith.truncf %310 : vector<2x8x64xf32> to vector<2x8x64xbf16>
    "tpu.trace_start"() <{level = 10 : i32, message = "bqd,bkd->bqk"}> : () -> ()
    %cst_193 = arith.constant dense<0.000000e+00> : vector<2x8x8xf32>
    %312 = tpu.matmul %307, %309, %cst_193 {dimension_numbers = #tpu.dot_dimension_numbers<[2], [2], [1], [1], [0, 0, 0, 1, 1, 1], [0], [0]>} : vector<2x8x64xbf16>, vector<2x8x64xbf16>, vector<2x8x8xf32> -> vector<2x8x8xf32>
    "tpu.trace_stop"() : () -> ()
    %313 = vector.broadcast %6 : vector<1x8x8xf32> to vector<2x8x8xf32>
    %314 = arith.addf %312, %313 : vector<2x8x8xf32>
    %cst_194 = arith.constant dense<0xFF800000> : vector<2x8xf32>
    %315 = vector.multi_reduction <maximumf>, %314, %cst_194 [2] : vector<2x8x8xf32> to vector<2x8xf32>
    %316 = vector.shape_cast %315 : vector<2x8xf32> to vector<2x8x1xf32>
    %317 = vector.broadcast %316 : vector<2x8x1xf32> to vector<2x8x8xf32>
    %318 = arith.subf %314, %317 : vector<2x8x8xf32>
    %319 = math.exp %318 : vector<2x8x8xf32>
    %cst_195 = arith.constant dense<0.000000e+00> : vector<2x8xf32>
    %320 = vector.multi_reduction <add>, %319, %cst_195 [2] : vector<2x8x8xf32> to vector<2x8xf32>
    %321 = vector.shape_cast %320 : vector<2x8xf32> to vector<2x8x1xf32>
    %322 = tpu.reciprocal %321 {approx = true} : vector<2x8x1xf32> -> vector<2x8x1xf32>
    %323 = vector.broadcast %322 : vector<2x8x1xf32> to vector<2x8x8xf32>
    %324 = arith.mulf %319, %323 : vector<2x8x8xf32>
    %c2_196 = arith.constant 2 : index
    %c0_197 = arith.constant 0 : index
    %c0_198 = arith.constant 0 : index
    %c0_199 = arith.constant 0 : index
    %325 = vector.load %arg12[%c2_196, %c0_197, %c0_198, %c0_199] : memref<4x2x8x8xf32, #tpu.memory_space<vmem>>, vector<1x2x8x8xf32>
    %326 = vector.shape_cast %325 : vector<1x2x8x8xf32> to vector<2x8x8xf32>
    %327 = vector.shape_cast %324 : vector<2x8x8xf32> to vector<1x2x8x8xf32>
    tpu.vector_store %arg12[%c2_196, %c0_197, %c0_198, %c0_199], %327 {strides = array<i32>} : memref<4x2x8x8xf32, #tpu.memory_space<vmem>>, vector<1x2x8x8xf32>,
    %328 = arith.truncf %324 : vector<2x8x8xf32> to vector<2x8x8xbf16>
    "tpu.trace_start"() <{level = 10 : i32, message = "bqk,bkd->bqd"}> : () -> ()
    %cst_200 = arith.constant dense<0.000000e+00> : vector<2x8x64xf32>
    %329 = tpu.matmul %328, %311, %cst_200 {dimension_numbers = #tpu.dot_dimension_numbers<[2], [1], [1], [2], [0, 0, 0, 1, 1, 2], [0], [0]>} : vector<2x8x8xbf16>, vector<2x8x64xbf16>, vector<2x8x64xf32> -> vector<2x8x64xf32>
    "tpu.trace_stop"() : () -> ()
    %330 = vector.shape_cast %329 : vector<2x8x64xf32> to vector<16x64xf32>
    %331 = arith.truncf %330 : vector<16x64xf32> to vector<16x64xbf16>
    %c1_201 = arith.constant 1 : index
    %c2_202 = arith.constant 2 : index
    %c0_203 = arith.constant 0 : index
    %c0_204 = arith.constant 0 : index
    %332 = vector.load %arg7[%c1_201, %c2_202, %c0_203, %c0_204] : memref<2x4x64x256xbf16, #tpu.memory_space<vmem>>, vector<1x1x64x256xbf16>
    %333 = vector.shape_cast %332 : vector<1x1x64x256xbf16> to vector<64x256xbf16>
    %cst_205 = arith.constant dense<0.000000e+00> : vector<16x256xf32>
    %334 = tpu.matmul %331, %333, %cst_205 {dimension_numbers = #tpu.dot_dimension_numbers<[1], [0], [0], [1], [0, 0, 1, 1], [], []>} : vector<16x64xbf16>, vector<64x256xbf16>, vector<16x256xf32> -> vector<16x256xf32>
    %335 = arith.addf %296, %334 : vector<16x256xf32>
    %c1_206 = arith.constant 1 : index
    %c3_207 = arith.constant 3 : index
    %c0_208 = arith.constant 0 : index
    %c0_209 = arith.constant 0 : index
    %336 = vector.load %arg4[%c1_206, %c3_207, %c0_208, %c0_209] : memref<2x4x256x64xbf16, #tpu.memory_space<vmem>>, vector<1x1x256x64xbf16>
    %337 = vector.shape_cast %336 : vector<1x1x256x64xbf16> to vector<256x64xbf16>
    %cst_210 = arith.constant dense<0.000000e+00> : vector<16x64xf32>
    %338 = tpu.matmul %219, %337, %cst_210 {dimension_numbers = #tpu.dot_dimension_numbers<[1], [0], [0], [1], [0, 0, 1, 1], [], []>} : vector<16x256xbf16>, vector<256x64xbf16>, vector<16x64xf32> -> vector<16x64xf32>
    %c1_211 = arith.constant 1 : index
    %c3_212 = arith.constant 3 : index
    %c0_213 = arith.constant 0 : index
    %c0_214 = arith.constant 0 : index
    %339 = vector.load %arg5[%c1_211, %c3_212, %c0_213, %c0_214] : memref<2x4x256x64xbf16, #tpu.memory_space<vmem>>, vector<1x1x256x64xbf16>
    %340 = vector.shape_cast %339 : vector<1x1x256x64xbf16> to vector<256x64xbf16>
    %cst_215 = arith.constant dense<0.000000e+00> : vector<16x64xf32>
    %341 = tpu.matmul %219, %340, %cst_215 {dimension_numbers = #tpu.dot_dimension_numbers<[1], [0], [0], [1], [0, 0, 1, 1], [], []>} : vector<16x256xbf16>, vector<256x64xbf16>, vector<16x64xf32> -> vector<16x64xf32>
    %c1_216 = arith.constant 1 : index
    %c3_217 = arith.constant 3 : index
    %c0_218 = arith.constant 0 : index
    %c0_219 = arith.constant 0 : index
    %342 = vector.load %arg6[%c1_216, %c3_217, %c0_218, %c0_219] : memref<2x4x256x64xbf16, #tpu.memory_space<vmem>>, vector<1x1x256x64xbf16>
    %343 = vector.shape_cast %342 : vector<1x1x256x64xbf16> to vector<256x64xbf16>
    %cst_220 = arith.constant dense<0.000000e+00> : vector<16x64xf32>
    %344 = tpu.matmul %219, %343, %cst_220 {dimension_numbers = #tpu.dot_dimension_numbers<[1], [0], [0], [1], [0, 0, 1, 1], [], []>} : vector<16x256xbf16>, vector<256x64xbf16>, vector<16x64xf32> -> vector<16x64xf32>
    %345 = vector.shape_cast %338 : vector<16x64xf32> to vector<2x8x64xf32>
    %346 = arith.truncf %345 : vector<2x8x64xf32> to vector<2x8x64xbf16>
    %347 = vector.shape_cast %341 : vector<16x64xf32> to vector<2x8x64xf32>
    %348 = arith.truncf %347 : vector<2x8x64xf32> to vector<2x8x64xbf16>
    %349 = vector.shape_cast %344 : vector<16x64xf32> to vector<2x8x64xf32>
    %350 = arith.truncf %349 : vector<2x8x64xf32> to vector<2x8x64xbf16>
    "tpu.trace_start"() <{level = 10 : i32, message = "bqd,bkd->bqk"}> : () -> ()
    %cst_221 = arith.constant dense<0.000000e+00> : vector<2x8x8xf32>
    %351 = tpu.matmul %346, %348, %cst_221 {dimension_numbers = #tpu.dot_dimension_numbers<[2], [2], [1], [1], [0, 0, 0, 1, 1, 1], [0], [0]>} : vector<2x8x64xbf16>, vector<2x8x64xbf16>, vector<2x8x8xf32> -> vector<2x8x8xf32>
    "tpu.trace_stop"() : () -> ()
    %352 = vector.broadcast %6 : vector<1x8x8xf32> to vector<2x8x8xf32>
    %353 = arith.addf %351, %352 : vector<2x8x8xf32>
    %cst_222 = arith.constant dense<0xFF800000> : vector<2x8xf32>
    %354 = vector.multi_reduction <maximumf>, %353, %cst_222 [2] : vector<2x8x8xf32> to vector<2x8xf32>
    %355 = vector.shape_cast %354 : vector<2x8xf32> to vector<2x8x1xf32>
    %356 = vector.broadcast %355 : vector<2x8x1xf32> to vector<2x8x8xf32>
    %357 = arith.subf %353, %356 : vector<2x8x8xf32>
    %358 = math.exp %357 : vector<2x8x8xf32>
    %cst_223 = arith.constant dense<0.000000e+00> : vector<2x8xf32>
    %359 = vector.multi_reduction <add>, %358, %cst_223 [2] : vector<2x8x8xf32> to vector<2x8xf32>
    %360 = vector.shape_cast %359 : vector<2x8xf32> to vector<2x8x1xf32>
    %361 = tpu.reciprocal %360 {approx = true} : vector<2x8x1xf32> -> vector<2x8x1xf32>
    %362 = vector.broadcast %361 : vector<2x8x1xf32> to vector<2x8x8xf32>
    %363 = arith.mulf %358, %362 : vector<2x8x8xf32>
    %c3_224 = arith.constant 3 : index
    %c0_225 = arith.constant 0 : index
    %c0_226 = arith.constant 0 : index
    %c0_227 = arith.constant 0 : index
    %364 = vector.load %arg12[%c3_224, %c0_225, %c0_226, %c0_227] : memref<4x2x8x8xf32, #tpu.memory_space<vmem>>, vector<1x2x8x8xf32>
    %365 = vector.shape_cast %364 : vector<1x2x8x8xf32> to vector<2x8x8xf32>
    %366 = vector.shape_cast %363 : vector<2x8x8xf32> to vector<1x2x8x8xf32>
    tpu.vector_store %arg12[%c3_224, %c0_225, %c0_226, %c0_227], %366 {strides = array<i32>} : memref<4x2x8x8xf32, #tpu.memory_space<vmem>>, vector<1x2x8x8xf32>,
    %367 = arith.truncf %363 : vector<2x8x8xf32> to vector<2x8x8xbf16>
    "tpu.trace_start"() <{level = 10 : i32, message = "bqk,bkd->bqd"}> : () -> ()
    %cst_228 = arith.constant dense<0.000000e+00> : vector<2x8x64xf32>
    %368 = tpu.matmul %367, %350, %cst_228 {dimension_numbers = #tpu.dot_dimension_numbers<[2], [1], [1], [2], [0, 0, 0, 1, 1, 2], [0], [0]>} : vector<2x8x8xbf16>, vector<2x8x64xbf16>, vector<2x8x64xf32> -> vector<2x8x64xf32>
    "tpu.trace_stop"() : () -> ()
    %369 = vector.shape_cast %368 : vector<2x8x64xf32> to vector<16x64xf32>
    %370 = arith.truncf %369 : vector<16x64xf32> to vector<16x64xbf16>
    %c1_229 = arith.constant 1 : index
    %c3_230 = arith.constant 3 : index
    %c0_231 = arith.constant 0 : index
    %c0_232 = arith.constant 0 : index
    %371 = vector.load %arg7[%c1_229, %c3_230, %c0_231, %c0_232] : memref<2x4x64x256xbf16, #tpu.memory_space<vmem>>, vector<1x1x64x256xbf16>
    %372 = vector.shape_cast %371 : vector<1x1x64x256xbf16> to vector<64x256xbf16>
    %cst_233 = arith.constant dense<0.000000e+00> : vector<16x256xf32>
    %373 = tpu.matmul %370, %372, %cst_233 {dimension_numbers = #tpu.dot_dimension_numbers<[1], [0], [0], [1], [0, 0, 1, 1], [], []>} : vector<16x64xbf16>, vector<64x256xbf16>, vector<16x256xf32> -> vector<16x256xf32>
    %374 = arith.addf %335, %373 : vector<16x256xf32>
    %375 = arith.addf %374, %218 : vector<16x256xf32>
    %c1_234 = arith.constant 1 : index
    %c0_235 = arith.constant 0 : index
    %c0_236 = arith.constant 0 : index
    %376 = vector.load %arg10[%c1_234, %c0_235, %c0_236] : memref<2x6x256xf32, #tpu.memory_space<vmem>>, vector<1x6x256xf32>
    %377 = vector.shape_cast %376 : vector<1x6x256xf32> to vector<6x256xf32>
    %378 = vector.extract_strided_slice %377 {offsets = [0, 0], sizes = [1, 256], strides = [1, 1]} : vector<6x256xf32> to vector<1x256xf32>
    %379 = vector.extract_strided_slice %377 {offsets = [1, 0], sizes = [1, 256], strides = [1, 1]} : vector<6x256xf32> to vector<1x256xf32>
    %380 = vector.extract_strided_slice %377 {offsets = [2, 0], sizes = [1, 256], strides = [1, 1]} : vector<6x256xf32> to vector<1x256xf32>
    %381 = vector.extract_strided_slice %377 {offsets = [3, 0], sizes = [1, 256], strides = [1, 1]} : vector<6x256xf32> to vector<1x256xf32>
    %382 = vector.extract_strided_slice %377 {offsets = [4, 0], sizes = [1, 128], strides = [1, 1]} : vector<6x256xf32> to vector<1x128xf32>
    %383 = vector.extract_strided_slice %377 {offsets = [5, 0], sizes = [1, 256], strides = [1, 1]} : vector<6x256xf32> to vector<1x256xf32>
    %cst_237 = arith.constant dense<0.000000e+00> : vector<16xf32>
    %384 = vector.multi_reduction <add>, %375, %cst_237 [1] : vector<16x256xf32> to vector<16xf32>
    %385 = vector.shape_cast %384 : vector<16xf32> to vector<16x1xf32>
    %cst_238 = arith.constant 2.560000e+02 : f32
    %386 = vector.broadcast %cst_238 : f32 to vector<16x1xf32>
    %387 = arith.divf %385, %386 : vector<16x1xf32>
    %388 = vector.broadcast %387 : vector<16x1xf32> to vector<16x256xf32>
    %389 = arith.subf %375, %388 : vector<16x256xf32>
    %390 = arith.mulf %389, %389 : vector<16x256xf32>
    %cst_239 = arith.constant dense<0.000000e+00> : vector<16xf32>
    %391 = vector.multi_reduction <add>, %390, %cst_239 [1] : vector<16x256xf32> to vector<16xf32>
    %392 = vector.shape_cast %391 : vector<16xf32> to vector<16x1xf32>
    %cst_240 = arith.constant 2.560000e+02 : f32
    %393 = vector.broadcast %cst_240 : f32 to vector<16x1xf32>
    %394 = arith.divf %392, %393 : vector<16x1xf32>
    %395 = vector.broadcast %387 : vector<16x1xf32> to vector<16x256xf32>
    %396 = arith.subf %375, %395 : vector<16x256xf32>
    %cst_241 = arith.constant 9.99999997E-7 : f32
    %397 = vector.broadcast %cst_241 : f32 to vector<16x1xf32>
    %398 = arith.addf %394, %397 : vector<16x1xf32>
    %399 = math.rsqrt %398 : vector<16x1xf32>
    %400 = vector.broadcast %399 : vector<16x1xf32> to vector<16x256xf32>
    %401 = arith.mulf %396, %400 : vector<16x256xf32>
    %402 = vector.broadcast %378 : vector<1x256xf32> to vector<16x256xf32>
    %403 = arith.mulf %401, %402 : vector<16x256xf32>
    %404 = vector.broadcast %379 : vector<1x256xf32> to vector<16x256xf32>
    %405 = arith.addf %403, %404 : vector<16x256xf32>
    %406 = arith.truncf %405 : vector<16x256xf32> to vector<16x256xbf16>
    %c1_242 = arith.constant 1 : index
    %c0_243 = arith.constant 0 : index
    %c0_244 = arith.constant 0 : index
    %407 = vector.load %arg8[%c1_242, %c0_243, %c0_244] : memref<2x256x128xbf16, #tpu.memory_space<vmem>>, vector<1x256x128xbf16>
    %408 = vector.shape_cast %407 : vector<1x256x128xbf16> to vector<256x128xbf16>
    %cst_245 = arith.constant dense<0.000000e+00> : vector<16x128xf32>
    %409 = tpu.matmul %406, %408, %cst_245 {dimension_numbers = #tpu.dot_dimension_numbers<[1], [0], [0], [1], [0, 0, 1, 1], [], []>} : vector<16x256xbf16>, vector<256x128xbf16>, vector<16x128xf32> -> vector<16x128xf32>
    %410 = vector.broadcast %382 : vector<1x128xf32> to vector<16x128xf32>
    %411 = arith.addf %409, %410 : vector<16x128xf32>
    %cst_246 = arith.constant 0.000000e+00 : f32
    %412 = vector.broadcast %cst_246 : f32 to vector<16x128xf32>
    %413 = arith.maximumf %411, %412 : vector<16x128xf32>
    %414 = arith.truncf %413 : vector<16x128xf32> to vector<16x128xbf16>
    %c1_247 = arith.constant 1 : index
    %c0_248 = arith.constant 0 : index
    %c0_249 = arith.constant 0 : index
    %415 = vector.load %arg9[%c1_247, %c0_248, %c0_249] : memref<2x128x256xbf16, #tpu.memory_space<vmem>>, vector<1x128x256xbf16>
    %416 = vector.shape_cast %415 : vector<1x128x256xbf16> to vector<128x256xbf16>
    %cst_250 = arith.constant dense<0.000000e+00> : vector<16x256xf32>
    %417 = tpu.matmul %414, %416, %cst_250 {dimension_numbers = #tpu.dot_dimension_numbers<[1], [0], [0], [1], [0, 0, 1, 1], [], []>} : vector<16x128xbf16>, vector<128x256xbf16>, vector<16x256xf32> -> vector<16x256xf32>
    %418 = vector.broadcast %383 : vector<1x256xf32> to vector<16x256xf32>
    %419 = arith.addf %417, %418 : vector<16x256xf32>
    %420 = arith.addf %419, %405 : vector<16x256xf32>
    %cst_251 = arith.constant dense<0.000000e+00> : vector<16xf32>
    %421 = vector.multi_reduction <add>, %420, %cst_251 [1] : vector<16x256xf32> to vector<16xf32>
    %422 = vector.shape_cast %421 : vector<16xf32> to vector<16x1xf32>
    %cst_252 = arith.constant 2.560000e+02 : f32
    %423 = vector.broadcast %cst_252 : f32 to vector<16x1xf32>
    %424 = arith.divf %422, %423 : vector<16x1xf32>
    %425 = vector.broadcast %424 : vector<16x1xf32> to vector<16x256xf32>
    %426 = arith.subf %420, %425 : vector<16x256xf32>
    %427 = arith.mulf %426, %426 : vector<16x256xf32>
    %cst_253 = arith.constant dense<0.000000e+00> : vector<16xf32>
    %428 = vector.multi_reduction <add>, %427, %cst_253 [1] : vector<16x256xf32> to vector<16xf32>
    %429 = vector.shape_cast %428 : vector<16xf32> to vector<16x1xf32>
    %cst_254 = arith.constant 2.560000e+02 : f32
    %430 = vector.broadcast %cst_254 : f32 to vector<16x1xf32>
    %431 = arith.divf %429, %430 : vector<16x1xf32>
    %432 = vector.broadcast %424 : vector<16x1xf32> to vector<16x256xf32>
    %433 = arith.subf %420, %432 : vector<16x256xf32>
    %cst_255 = arith.constant 9.99999997E-7 : f32
    %434 = vector.broadcast %cst_255 : f32 to vector<16x1xf32>
    %435 = arith.addf %431, %434 : vector<16x1xf32>
    %436 = math.rsqrt %435 : vector<16x1xf32>
    %437 = vector.broadcast %436 : vector<16x1xf32> to vector<16x256xf32>
    %438 = arith.mulf %433, %437 : vector<16x256xf32>
    %439 = vector.broadcast %380 : vector<1x256xf32> to vector<16x256xf32>
    %440 = arith.mulf %438, %439 : vector<16x256xf32>
    %441 = vector.broadcast %381 : vector<1x256xf32> to vector<16x256xf32>
    %442 = arith.addf %440, %441 : vector<16x256xf32>
    %c0_256 = arith.constant 0 : index
    %c0_257 = arith.constant 0 : index
    %443 = vector.load %arg11[%c0_256, %c0_257] : memref<16x256xf32, #tpu.memory_space<vmem>>, vector<16x256xf32>
    tpu.vector_store %arg11[%c0_256, %c0_257], %442 {strides = array<i32>} : memref<16x256xf32, #tpu.memory_space<vmem>>, vector<16x256xf32>,
    return
  }
}

</mosaic_0001>

<llo_original>
// kernel: saits_forward.2
$region0: #{saits_forward.2}
  #allocation0 [shape = 'u32[]', space=smem, size = 0x4, offset = 0x4, fixed_abs, tag = 'smem constant byte address 0x4 - core index']
  #allocation1 [shape = 'u32[144,128]{1,0:T(1,128)}', space=vmem, size = 0x12000, scoped, tag = 'internal scratch']
  %s0 = inlined_call_operand.vmem [shape: f32[16,12], index: 0, kind: input, shape index: {}]
  %s1 = inlined_call_operand.vmem [shape: f32[16,256], index: 1, kind: input, shape index: {}]
  %s2 = inlined_call_operand.vmem [shape: f32[8,8], index: 2, kind: input, shape index: {}]
  %s3 = inlined_call_operand.vmem [shape: f32[12,256], index: 3, kind: input, shape index: {}]
  %s4 = inlined_call_operand.vmem [shape: bf16[2,4,256,64], index: 4, kind: input, shape index: {}]
  %s5 = inlined_call_operand.vmem [shape: bf16[2,4,256,64], index: 5, kind: input, shape index: {}]
  %s6 = inlined_call_operand.vmem [shape: bf16[2,4,256,64], index: 6, kind: input, shape index: {}]
  %s7 = inlined_call_operand.vmem [shape: bf16[2,4,64,256], index: 7, kind: input, shape index: {}]
  %s8 = inlined_call_operand.vmem [shape: bf16[2,256,128], index: 8, kind: input, shape index: {}]
  %s9 = inlined_call_operand.vmem [shape: bf16[2,128,256], index: 9, kind: input, shape index: {}]
  %s10 = inlined_call_operand.vmem [shape: f32[2,6,256], index: 10, kind: input, shape index: {}]
  %s11 = inlined_call_operand.vmem [shape: f32[16,256], index: 11, kind: output, shape index: {0}]
  %s12 = inlined_call_operand.vmem [shape: f32[4,2,8,8], index: 12, kind: output, shape index: {1}]
  %13 = xla_tuple %s11, %s12
  %s14 = sld [smem:[#allocation0]]
  $region62: #{saits_forward.2} parent=0
    _
  %s16 = ssub.s32 1, %s14
  %s17 = scalar_select 0, %s16, %s14
  // Predicated region
  $region2: #{saits_forward.2} parent=0 // pred_check
    _
  $region3: #{saits_forward.2} parent=0 // pred_check_branch
    %19 = sbr.rel (0) target = $region5
  $region4: #{saits_forward.2} parent=0 // pred_region
    _
  $region5: #{saits_forward.2} parent=0 // pred_fallthru
    _
  // Predicated region
  $region6: #{saits_forward.2} parent=0 // pred_check
    _
  $region7: #{saits_forward.2} parent=0 // pred_check_branch
    %21 = sbr.rel (0) target = $region9
  $region8: #{saits_forward.2} parent=0 // pred_region
    _
  $region9: #{saits_forward.2} parent=0 // pred_fallthru
    _
  // Predicated region
  $region10: #{saits_forward.2} parent=0 // pred_check
    _
  $region11: #{saits_forward.2} parent=0 // pred_check_branch
    %23 = sbr.rel (0) target = $region13
  $region12: #{saits_forward.2} parent=0 // pred_region
    _
  $region13: #{saits_forward.2} parent=0 // pred_fallthru
    _
  // Predicated region
  $region14: #{saits_forward.2} parent=0 // pred_check
    _
  $region15: #{saits_forward.2} parent=0 // pred_check_branch
    %25 = sbr.rel (0) target = $region17
  $region16: #{saits_forward.2} parent=0 // pred_region
    _
  $region17: #{saits_forward.2} parent=0 // pred_fallthru
    _
  // Predicated region
  $region18: #{saits_forward.2} parent=0 // pred_check
    _
  $region19: #{saits_forward.2} parent=0 // pred_check_branch
    %27 = sbr.rel (0) target = $region21
  $region20: #{saits_forward.2} parent=0 // pred_region
    _
  $region21: #{saits_forward.2} parent=0 // pred_fallthru
    _
  // Predicated region
  $region22: #{saits_forward.2} parent=0 // pred_check
    _
  $region23: #{saits_forward.2} parent=0 // pred_check_branch
    %29 = sbr.rel (0) target = $region25
  $region24: #{saits_forward.2} parent=0 // pred_region
    _
  $region25: #{saits_forward.2} parent=0 // pred_fallthru
    _
  // Predicated region
  $region26: #{saits_forward.2} parent=0 // pred_check
    _
  $region27: #{saits_forward.2} parent=0 // pred_check_branch
    %31 = sbr.rel (0) target = $region29
  $region28: #{saits_forward.2} parent=0 // pred_region
    _
  $region29: #{saits_forward.2} parent=0 // pred_fallthru
    _
  // Predicated region
  $region30: #{saits_forward.2} parent=0 // pred_check
    _
  $region31: #{saits_forward.2} parent=0 // pred_check_branch
    %33 = sbr.rel (0) target = $region33
  $region32: #{saits_forward.2} parent=0 // pred_region
    _
  $region33: #{saits_forward.2} parent=0 // pred_fallthru
    _
  // Predicated region
  $region34: #{saits_forward.2} parent=0 // pred_check
    _
  $region35: #{saits_forward.2} parent=0 // pred_check_branch
    %35 = sbr.rel (0) target = $region37
  $region36: #{saits_forward.2} parent=0 // pred_region
    _
  $region37: #{saits_forward.2} parent=0 // pred_fallthru
    _
  // Predicated region
  $region38: #{saits_forward.2} parent=0 // pred_check
    _
  $region39: #{saits_forward.2} parent=0 // pred_check_branch
    %37 = sbr.rel (0) target = $region41
  $region40: #{saits_forward.2} parent=0 // pred_region
    _
  $region41: #{saits_forward.2} parent=0 // pred_fallthru
    _
  // Predicated region
  $region42: #{saits_forward.2} parent=0 // pred_check
    _
  $region43: #{saits_forward.2} parent=0 // pred_check_branch
    %39 = sbr.rel (0) target = $region45
  $region44: #{saits_forward.2} parent=0 // pred_region
    _
  $region45: #{saits_forward.2} parent=0 // pred_fallthru
    _
  %v41 = vld [vmem:[%s0] sm:$0xff]
  %v42 = vld [vmem:[%s0 + $0x8] sm:$0xff]
  %v43 = vld [vmem:[%s3] sm:$0xff]
  %v44 = vld [vmem:[%s3 + $0x8] sm:$0xff]
  %v45 = vld [vmem:[%s3 + $0x10] sm:$0xf]
  %v46 = vld [vmem:[%s3 + $0x18] sm:$0xf]
  %v47 = vld [vmem:[%s1] sm:$0xff]
  %v48 = vld [vmem:[%s1 + $0x8] sm:$0xff]
  %v49 = vld [vmem:[%s1 + $0x10] sm:$0xff]
  %v50 = vld [vmem:[%s1 + $0x18] sm:$0xff]
  %vm51 = vcmask 97280
  %v53 = vsel %vm51, %v41, 0
  %v56 = vsel %vm51, %v42, 0
  %vm58 = vcmask 1043456
  %v60 = vsel %vm58, %v45, 0
  %v63 = vsel %vm58, %v46, 0
  %65 = vmatprep.subr.mxu0 %v44
  %66 = vmatpush1.msra.mxu0 %v43
  %67 = vmatprep.subr.mxu0 %v63
  %68 = vmatpush1.msra.mxu0 %v60
  %69 = vmatprep.subr.mxu0 0.0
  %70 = vmatpush1.msra.mxu0 0.0
  %71 = vmatprep.subr.mxu0 0.0
  %72 = vmatpush1.msra.mxu0 0.0
  %73 = vmatprep.subr.mxu0 0.0
  %74 = vmatpush1.msra.mxu0 0.0
  %75 = vmatprep.subr.mxu0 0.0
  %76 = vmatpush1.msra.mxu0 0.0
  %77 = vmatprep.subr.mxu0 0.0
  %78 = vmatpush1.msra.mxu0 0.0
  %79 = vmatprep.subr.mxu0 0.0
  %80 = vmatpush1.msra.mxu0 0.0
  %81 = vmatprep.subr.mxu0 0.0
  %82 = vmatpush1.msra.mxu0 0.0
  %83 = vmatprep.subr.mxu0 0.0
  %84 = vmatpush1.msra.mxu0 0.0
  %85 = vmatprep.subr.mxu0 0.0
  %86 = vmatpush1.msra.mxu0 0.0
  %87 = vmatprep.subr.mxu0 0.0
  %88 = vmatpush1.msra.mxu0 0.0
  %89 = vmatprep.subr.mxu0 0.0
  %90 = vmatpush1.msra.mxu0 0.0
  %91 = vmatprep.subr.mxu0 0.0
  %92 = vmatpush1.msra.mxu0 0.0
  %93 = vmatprep.subr.mxu0 0.0
  %94 = vmatpush1.msra.mxu0 0.0
  %95 = vmatprep.subr.mxu0 0.0
  %96 = vmatpush1.msra.mxu0 0.0
  %97 = vmatprep.subr.mxu0 0.0
  %98 = vmatpush1.msra.mxu0 0.0
  %99 = vmatprep.subr.mxu0 0.0
  %100 = vmatpush1.msra.mxu0 0.0
  %101 = vmatprep.subr.mxu0 0.0
  %102 = vmatpush1.msra.mxu0 0.0
  %103 = vmatprep.subr.mxu0 0.0
  %104 = vmatpush1.msra.mxu0 0.0
  %105 = vmatprep.subr.mxu0 0.0
  %106 = vmatpush1.msra.mxu0 0.0
  %107 = vmatprep.subr.mxu0 0.0
  %108 = vmatpush1.msra.mxu0 0.0
  %109 = vmatprep.subr.mxu0 0.0
  %110 = vmatpush1.msra.mxu0 0.0
  %111 = vmatprep.subr.mxu0 0.0
  %112 = vmatpush1.msra.mxu0 0.0
  %113 = vmatprep.subr.mxu0 0.0
  %114 = vmatpush1.msra.mxu0 0.0
  %115 = vmatprep.subr.mxu0 0.0
  %116 = vmatpush1.msra.mxu0 0.0
  %117 = vmatprep.subr.mxu0 0.0
  %118 = vmatpush1.msra.mxu0 0.0
  %119 = vmatprep.subr.mxu0 0.0
  %120 = vmatpush1.msra.mxu0 0.0
  %121 = vmatprep.subr.mxu0 0.0
  %122 = vmatpush1.msra.mxu0 0.0
  %123 = vmatprep.subr.mxu0 0.0
  %124 = vmatpush1.msra.mxu0 0.0
  %125 = vmatprep.subr.mxu0 0.0
  %126 = vmatpush1.msra.mxu0 0.0
  %127 = vmatprep.subr.mxu0 0.0
  %128 = vmatpush1.msra.mxu0 0.0
  %129 = vmatprep.mubr.f32.mxu0 0.0
  %130 = vmatmul.mubr.f32.gmra.mrb[0].mxu0 %v53
  %v131 = vpop.f32.mrb[0].mxu0
  %v132 = vadd.f32 %v47, %v131
  %v133 = vpop.f32.mrb[0].mxu0
  %v134 = vadd.f32 %v48, %v133
  %135 = vmatprep.mubr.f32.mxu0 0.0
  %136 = vmatmul.mubr.f32.gmra.mrb[0].mxu0 %v56
  %v137 = vpop.f32.mrb[0].mxu0
  %v138 = vadd.f32 %v49, %v137
  %v139 = vpop.f32.mrb[0].mxu0
  %v140 = vadd.f32 %v50, %v139
  %141 = vdwg.mxu0
  %v142 = vld [vmem:[%s2] sm:$0xff]
  %v143 = vpack.c.bf16 %v138, %v132
  %v144 = vpack.c.bf16 %v140, %v134
  %v145 = vld [vmem:[%s4] sm:$0xf]
  %v146 = vld [vmem:[%s4 + $0x4] sm:$0xf]
  %v147 = vld [vmem:[%s4 + $0x8] sm:$0xf]
  %v148 = vld [vmem:[%s4 + $0xc] sm:$0xf]
  %v149 = vld [vmem:[%s4 + $0x10] sm:$0xf]
  %v150 = vld [vmem:[%s4 + $0x14] sm:$0xf]
  %v151 = vld [vmem:[%s4 + $0x18] sm:$0xf]
  %v152 = vld [vmem:[%s4 + $0x1c] sm:$0xf]
  %v153 = vld [vmem:[%s4 + $0x20] sm:$0xf]
  %v154 = vld [vmem:[%s4 + $0x24] sm:$0xf]
  %v155 = vld [vmem:[%s4 + $0x28] sm:$0xf]
  %v156 = vld [vmem:[%s4 + $0x2c] sm:$0xf]
  %v157 = vld [vmem:[%s4 + $0x30] sm:$0xf]
  %v158 = vld [vmem:[%s4 + $0x34] sm:$0xf]
  %v159 = vld [vmem:[%s4 + $0x38] sm:$0xf]
  %v160 = vld [vmem:[%s4 + $0x3c] sm:$0xf]
  %v161 = vld [vmem:[%s4 + $0x40] sm:$0xf]
  %v162 = vld [vmem:[%s4 + $0x44] sm:$0xf]
  %v163 = vld [vmem:[%s4 + $0x48] sm:$0xf]
  %v164 = vld [vmem:[%s4 + $0x4c] sm:$0xf]
  %v165 = vld [vmem:[%s4 + $0x50] sm:$0xf]
  %v166 = vld [vmem:[%s4 + $0x54] sm:$0xf]
  %v167 = vld [vmem:[%s4 + $0x58] sm:$0xf]
  %v168 = vld [vmem:[%s4 + $0x5c] sm:$0xf]
  %v169 = vld [vmem:[%s4 + $0x60] sm:$0xf]
  %v170 = vld [vmem:[%s4 + $0x64] sm:$0xf]
  %v171 = vld [vmem:[%s4 + $0x68] sm:$0xf]
  %v172 = vld [vmem:[%s4 + $0x6c] sm:$0xf]
  %v173 = vld [vmem:[%s4 + $0x70] sm:$0xf]
  %v174 = vld [vmem:[%s4 + $0x74] sm:$0xf]
  %v175 = vld [vmem:[%s4 + $0x78] sm:$0xf]
  %v176 = vld [vmem:[%s4 + $0x7c] sm:$0xf]
  %v209 = vunpack.c.l.b16 %v145
  %v210 = vunpack.c.l.b16 %v146
  %v211 = vunpack.c.l.b16 %v147
  %v212 = vunpack.c.l.b16 %v148
  %v213 = vunpack.c.l.b16 %v149
  %v214 = vunpack.c.l.b16 %v150
  %v215 = vunpack.c.l.b16 %v151
  %v216 = vunpack.c.l.b16 %v152
  %v217 = vunpack.c.l.b16 %v153
  %v218 = vunpack.c.l.b16 %v154
  %v219 = vunpack.c.l.b16 %v155
  %v220 = vunpack.c.l.b16 %v156
  %v221 = vunpack.c.l.b16 %v157
  %v222 = vunpack.c.l.b16 %v158
  %v223 = vunpack.c.l.b16 %v159
  %v224 = vunpack.c.l.b16 %v160
  %v225 = vunpack.c.l.b16 %v161
  %v226 = vunpack.c.l.b16 %v162
  %v227 = vunpack.c.l.b16 %v163
  %v228 = vunpack.c.l.b16 %v164
  %v229 = vunpack.c.l.b16 %v165
  %v230 = vunpack.c.l.b16 %v166
  %v231 = vunpack.c.l.b16 %v167
  %v232 = vunpack.c.l.b16 %v168
  %v233 = vunpack.c.l.b16 %v169
  %v234 = vunpack.c.l.b16 %v170
  %v235 = vunpack.c.l.b16 %v171
  %v236 = vunpack.c.l.b16 %v172
  %v237 = vunpack.c.l.b16 %v173
  %v238 = vunpack.c.l.b16 %v174
  %v239 = vunpack.c.l.b16 %v175
  %v240 = vunpack.c.l.b16 %v176
  %v241 = vpack.c.b16 %v210, %v209
  %v242 = vpack.c.b16 %v212, %v211
  %v243 = vpack.c.b16 %v214, %v213
  %v244 = vpack.c.b16 %v216, %v215
  %v245 = vpack.c.b16 %v218, %v217
  %v246 = vpack.c.b16 %v220, %v219
  %v247 = vpack.c.b16 %v222, %v221
  %v248 = vpack.c.b16 %v224, %v223
  %v249 = vpack.c.b16 %v226, %v225
  %v250 = vpack.c.b16 %v228, %v227
  %v251 = vpack.c.b16 %v230, %v229
  %v252 = vpack.c.b16 %v232, %v231
  %v253 = vpack.c.b16 %v234, %v233
  %v254 = vpack.c.b16 %v236, %v235
  %v255 = vpack.c.b16 %v238, %v237
  %v256 = vpack.c.b16 %v240, %v239
  %273 = vmatprep.subr.bf16.mxu0 0
  %274 = vmatpush1.bf16.msra.mxu0 %v241
  %275 = vmatprep.subr.bf16.mxu0 0
  %276 = vmatpush1.bf16.msra.mxu0 %v242
  %277 = vmatprep.subr.bf16.mxu0 0
  %278 = vmatpush1.bf16.msra.mxu0 %v243
  %279 = vmatprep.subr.bf16.mxu0 0
  %280 = vmatpush1.bf16.msra.mxu0 %v244
  %281 = vmatprep.subr.bf16.mxu0 0
  %282 = vmatpush1.bf16.msra.mxu0 %v245
  %283 = vmatprep.subr.bf16.mxu0 0
  %284 = vmatpush1.bf16.msra.mxu0 %v246
  %285 = vmatprep.subr.bf16.mxu0 0
  %286 = vmatpush1.bf16.msra.mxu0 %v247
  %287 = vmatprep.subr.bf16.mxu0 0
  %288 = vmatpush1.bf16.msra.mxu0 %v248
  %289 = vmatprep.subr.bf16.mxu0 0
  %290 = vmatpush1.bf16.msra.mxu0 %v249
  %291 = vmatprep.subr.bf16.mxu0 0
  %292 = vmatpush1.bf16.msra.mxu0 %v250
  %293 = vmatprep.subr.bf16.mxu0 0
  %294 = vmatpush1.bf16.msra.mxu0 %v251
  %295 = vmatprep.subr.bf16.mxu0 0
  %296 = vmatpush1.bf16.msra.mxu0 %v252
  %297 = vmatprep.subr.bf16.mxu0 0
  %298 = vmatpush1.bf16.msra.mxu0 %v253
  %299 = vmatprep.subr.bf16.mxu0 0
  %300 = vmatpush1.bf16.msra.mxu0 %v254
  %301 = vmatprep.subr.bf16.mxu0 0
  %302 = vmatpush1.bf16.msra.mxu0 %v255
  %303 = vmatprep.subr.bf16.mxu0 0
  %304 = vmatpush1.bf16.msra.mxu0 %v256
  %305 = vmatprep.mubr.bf16.mxu0 %v144
  %306 = vmatmul.mubr.bf16.gmra.mrb[0].mxu0 %v143
  %v307 = vpop.f32.mrb[0].mxu0
  %v308 = vadd.f32 0.0, %v307
  %v309 = vpop.f32.mrb[0].mxu0
  %v310 = vpop.f32.mrb[0].mxu0
  %v311 = vadd.f32 0.0, %v310
  %v312 = vpop.f32.mrb[0].mxu0
  %313 = vdwg.mxu0
  %v314 = vld [vmem:[%s5] sm:$0xf]
  %v315 = vld [vmem:[%s5 + $0x4] sm:$0xf]
  %v316 = vld [vmem:[%s5 + $0x8] sm:$0xf]
  %v317 = vld [vmem:[%s5 + $0xc] sm:$0xf]
  %v318 = vld [vmem:[%s5 + $0x10] sm:$0xf]
  %v319 = vld [vmem:[%s5 + $0x14] sm:$0xf]
  %v320 = vld [vmem:[%s5 + $0x18] sm:$0xf]
  %v321 = vld [vmem:[%s5 + $0x1c] sm:$0xf]
  %v322 = vld [vmem:[%s5 + $0x20] sm:$0xf]
  %v323 = vld [vmem:[%s5 + $0x24] sm:$0xf]
  %v324 = vld [vmem:[%s5 + $0x28] sm:$0xf]
  %v325 = vld [vmem:[%s5 + $0x2c] sm:$0xf]
  %v326 = vld [vmem:[%s5 + $0x30] sm:$0xf]
  %v327 = vld [vmem:[%s5 + $0x34] sm:$0xf]
  %v328 = vld [vmem:[%s5 + $0x38] sm:$0xf]
  %v329 = vld [vmem:[%s5 + $0x3c] sm:$0xf]
  %v330 = vld [vmem:[%s5 + $0x40] sm:$0xf]
  %v331 = vld [vmem:[%s5 + $0x44] sm:$0xf]
  %v332 = vld [vmem:[%s5 + $0x48] sm:$0xf]
  %v333 = vld [vmem:[%s5 + $0x4c] sm:$0xf]
  %v334 = vld [vmem:[%s5 + $0x50] sm:$0xf]
  %v335 = vld [vmem:[%s5 + $0x54] sm:$0xf]
  %v336 = vld [vmem:[%s5 + $0x58] sm:$0xf]
  %v337 = vld [vmem:[%s5 + $0x5c] sm:$0xf]
  %v338 = vld [vmem:[%s5 + $0x60] sm:$0xf]
  %v339 = vld [vmem:[%s5 + $0x64] sm:$0xf]
  %v340 = vld [vmem:[%s5 + $0x68] sm:$0xf]
  %v341 = vld [vmem:[%s5 + $0x6c] sm:$0xf]
  %v342 = vld [vmem:[%s5 + $0x70] sm:$0xf]
  %v343 = vld [vmem:[%s5 + $0x74] sm:$0xf]
  %v344 = vld [vmem:[%s5 + $0x78] sm:$0xf]
  %v345 = vld [vmem:[%s5 + $0x7c] sm:$0xf]
  %v378 = vunpack.c.l.b16 %v314
  %v379 = vunpack.c.l.b16 %v315
  %v380 = vunpack.c.l.b16 %v316
  %v381 = vunpack.c.l.b16 %v317
  %v382 = vunpack.c.l.b16 %v318
  %v383 = vunpack.c.l.b16 %v319
  %v384 = vunpack.c.l.b16 %v320
  %v385 = vunpack.c.l.b16 %v321
  %v386 = vunpack.c.l.b16 %v322
  %v387 = vunpack.c.l.b16 %v323
  %v388 = vunpack.c.l.b16 %v324
  %v389 = vunpack.c.l.b16 %v325
  %v390 = vunpack.c.l.b16 %v326
  %v391 = vunpack.c.l.b16 %v327
  %v392 = vunpack.c.l.b16 %v328
  %v393 = vunpack.c.l.b16 %v329
  %v394 = vunpack.c.l.b16 %v330
  %v395 = vunpack.c.l.b16 %v331
  %v396 = vunpack.c.l.b16 %v332
  %v397 = vunpack.c.l.b16 %v333
  %v398 = vunpack.c.l.b16 %v334
  %v399 = vunpack.c.l.b16 %v335
  %v400 = vunpack.c.l.b16 %v336
  %v401 = vunpack.c.l.b16 %v337
  %v402 = vunpack.c.l.b16 %v338
  %v403 = vunpack.c.l.b16 %v339
  %v404 = vunpack.c.l.b16 %v340
  %v405 = vunpack.c.l.b16 %v341
  %v406 = vunpack.c.l.b16 %v342
  %v407 = vunpack.c.l.b16 %v343
  %v408 = vunpack.c.l.b16 %v344
  %v409 = vunpack.c.l.b16 %v345
  %v410 = vpack.c.b16 %v379, %v378
  %v411 = vpack.c.b16 %v381, %v380
  %v412 = vpack.c.b16 %v383, %v382
  %v413 = vpack.c.b16 %v385, %v384
  %v414 = vpack.c.b16 %v387, %v386
  %v415 = vpack.c.b16 %v389, %v388
  %v416 = vpack.c.b16 %v391, %v390
  %v417 = vpack.c.b16 %v393, %v392
  %v418 = vpack.c.b16 %v395, %v394
  %v419 = vpack.c.b16 %v397, %v396
  %v420 = vpack.c.b16 %v399, %v398
  %v421 = vpack.c.b16 %v401, %v400
  %v422 = vpack.c.b16 %v403, %v402
  %v423 = vpack.c.b16 %v405, %v404
  %v424 = vpack.c.b16 %v407, %v406
  %v425 = vpack.c.b16 %v409, %v408
  %442 = vmatprep.subr.bf16.mxu0 0
  %443 = vmatpush1.bf16.msra.mxu0 %v410
  %444 = vmatprep.subr.bf16.mxu0 0
  %445 = vmatpush1.bf16.msra.mxu0 %v411
  %446 = vmatprep.subr.bf16.mxu0 0
  %447 = vmatpush1.bf16.msra.mxu0 %v412
  %448 = vmatprep.subr.bf16.mxu0 0
  %449 = vmatpush1.bf16.msra.mxu0 %v413
  %450 = vmatprep.subr.bf16.mxu0 0
  %451 = vmatpush1.bf16.msra.mxu0 %v414
  %452 = vmatprep.subr.bf16.mxu0 0
  %453 = vmatpush1.bf16.msra.mxu0 %v415
  %454 = vmatprep.subr.bf16.mxu0 0
  %455 = vmatpush1.bf16.msra.mxu0 %v416
  %456 = vmatprep.subr.bf16.mxu0 0
  %457 = vmatpush1.bf16.msra.mxu0 %v417
  %458 = vmatprep.subr.bf16.mxu0 0
  %459 = vmatpush1.bf16.msra.mxu0 %v418
  %460 = vmatprep.subr.bf16.mxu0 0
  %461 = vmatpush1.bf16.msra.mxu0 %v419
  %462 = vmatprep.subr.bf16.mxu0 0
  %463 = vmatpush1.bf16.msra.mxu0 %v420
  %464 = vmatprep.subr.bf16.mxu0 0
  %465 = vmatpush1.bf16.msra.mxu0 %v421
  %466 = vmatprep.subr.bf16.mxu0 0
  %467 = vmatpush1.bf16.msra.mxu0 %v422
  %468 = vmatprep.subr.bf16.mxu0 0
  %469 = vmatpush1.bf16.msra.mxu0 %v423
  %470 = vmatprep.subr.bf16.mxu0 0
  %471 = vmatpush1.bf16.msra.mxu0 %v424
  %472 = vmatprep.subr.bf16.mxu0 0
  %473 = vmatpush1.bf16.msra.mxu0 %v425
  %474 = vmatprep.mubr.bf16.mxu0 %v144
  %475 = vmatmul.mubr.bf16.gmra.mrb[0].mxu0 %v143
  %v476 = vpop.f32.mrb[0].mxu0
  %v477 = vadd.f32 0.0, %v476
  %v478 = vpop.f32.mrb[0].mxu0
  %v479 = vpop.f32.mrb[0].mxu0
  %v480 = vadd.f32 0.0, %v479
  %v481 = vpop.f32.mrb[0].mxu0
  %482 = vdwg.mxu0
  %v483 = vld [vmem:[%s6] sm:$0xf]
  %v484 = vld [vmem:[%s6 + $0x4] sm:$0xf]
  %v485 = vld [vmem:[%s6 + $0x8] sm:$0xf]
  %v486 = vld [vmem:[%s6 + $0xc] sm:$0xf]
  %v487 = vld [vmem:[%s6 + $0x10] sm:$0xf]
  %v488 = vld [vmem:[%s6 + $0x14] sm:$0xf]
  %v489 = vld [vmem:[%s6 + $0x18] sm:$0xf]
  %v490 = vld [vmem:[%s6 + $0x1c] sm:$0xf]
  %v491 = vld [vmem:[%s6 + $0x20] sm:$0xf]
  %v492 = vld [vmem:[%s6 + $0x24] sm:$0xf]
  %v493 = vld [vmem:[%s6 + $0x28] sm:$0xf]
  %v494 = vld [vmem:[%s6 + $0x2c] sm:$0xf]
  %v495 = vld [vmem:[%s6 + $0x30] sm:$0xf]
  %v496 = vld [vmem:[%s6 + $0x34] sm:$0xf]
  %v497 = vld [vmem:[%s6 + $0x38] sm:$0xf]
  %v498 = vld [vmem:[%s6 + $0x3c] sm:$0xf]
  %v499 = vld [vmem:[%s6 + $0x40] sm:$0xf]
  %v500 = vld [vmem:[%s6 + $0x44] sm:$0xf]
  %v501 = vld [vmem:[%s6 + $0x48] sm:$0xf]
  %v502 = vld [vmem:[%s6 + $0x4c] sm:$0xf]
  %v503 = vld [vmem:[%s6 + $0x50] sm:$0xf]
  %v504 = vld [vmem:[%s6 + $0x54] sm:$0xf]
  %v505 = vld [vmem:[%s6 + $0x58] sm:$0xf]
  %v506 = vld [vmem:[%s6 + $0x5c] sm:$0xf]
  %v507 = vld [vmem:[%s6 + $0x60] sm:$0xf]
  %v508 = vld [vmem:[%s6 + $0x64] sm:$0xf]
  %v509 = vld [vmem:[%s6 + $0x68] sm:$0xf]
  %v510 = vld [vmem:[%s6 + $0x6c] sm:$0xf]
  %v511 = vld [vmem:[%s6 + $0x70] sm:$0xf]
  %v512 = vld [vmem:[%s6 + $0x74] sm:$0xf]
  %v513 = vld [vmem:[%s6 + $0x78] sm:$0xf]
  %v514 = vld [vmem:[%s6 + $0x7c] sm:$0xf]
  %v547 = vunpack.c.l.b16 %v483
  %v548 = vunpack.c.l.b16 %v484
  %v549 = vunpack.c.l.b16 %v485
  %v550 = vunpack.c.l.b16 %v486
  %v551 = vunpack.c.l.b16 %v487
  %v552 = vunpack.c.l.b16 %v488
  %v553 = vunpack.c.l.b16 %v489
  %v554 = vunpack.c.l.b16 %v490
  %v555 = vunpack.c.l.b16 %v491
  %v556 = vunpack.c.l.b16 %v492
  %v557 = vunpack.c.l.b16 %v493
  %v558 = vunpack.c.l.b16 %v494
  %v559 = vunpack.c.l.b16 %v495
  %v560 = vunpack.c.l.b16 %v496
  %v561 = vunpack.c.l.b16 %v497
  %v562 = vunpack.c.l.b16 %v498
  %v563 = vunpack.c.l.b16 %v499
  %v564 = vunpack.c.l.b16 %v500
  %v565 = vunpack.c.l.b16 %v501
  %v566 = vunpack.c.l.b16 %v502
  %v567 = vunpack.c.l.b16 %v503
  %v568 = vunpack.c.l.b16 %v504
  %v569 = vunpack.c.l.b16 %v505
  %v570 = vunpack.c.l.b16 %v506
  %v571 = vunpack.c.l.b16 %v507
  %v572 = vunpack.c.l.b16 %v508
  %v573 = vunpack.c.l.b16 %v509
  %v574 = vunpack.c.l.b16 %v510
  %v575 = vunpack.c.l.b16 %v511
  %v576 = vunpack.c.l.b16 %v512
  %v577 = vunpack.c.l.b16 %v513
  %v578 = vunpack.c.l.b16 %v514
  %v579 = vpack.c.b16 %v548, %v547
  %v580 = vpack.c.b16 %v550, %v549
  %v581 = vpack.c.b16 %v552, %v551
  %v582 = vpack.c.b16 %v554, %v553
  %v583 = vpack.c.b16 %v556, %v555
  %v584 = vpack.c.b16 %v558, %v557
  %v585 = vpack.c.b16 %v560, %v559
  %v586 = vpack.c.b16 %v562, %v561
  %v587 = vpack.c.b16 %v564, %v563
  %v588 = vpack.c.b16 %v566, %v565
  %v589 = vpack.c.b16 %v568, %v567
  %v590 = vpack.c.b16 %v570, %v569
  %v591 = vpack.c.b16 %v572, %v571
  %v592 = vpack.c.b16 %v574, %v573
  %v593 = vpack.c.b16 %v576, %v575
  %v594 = vpack.c.b16 %v578, %v577
  %611 = vmatprep.subr.bf16.mxu0 0
  %612 = vmatpush1.bf16.msra.mxu0 %v579
  %613 = vmatprep.subr.bf16.mxu0 0
  %614 = vmatpush1.bf16.msra.mxu0 %v580
  %615 = vmatprep.subr.bf16.mxu0 0
  %616 = vmatpush1.bf16.msra.mxu0 %v581
  %617 = vmatprep.subr.bf16.mxu0 0
  %618 = vmatpush1.bf16.msra.mxu0 %v582
  %619 = vmatprep.subr.bf16.mxu0 0
  %620 = vmatpush1.bf16.msra.mxu0 %v583
  %621 = vmatprep.subr.bf16.mxu0 0
  %622 = vmatpush1.bf16.msra.mxu0 %v584
  %623 = vmatprep.subr.bf16.mxu0 0
  %624 = vmatpush1.bf16.msra.mxu0 %v585
  %625 = vmatprep.subr.bf16.mxu0 0
  %626 = vmatpush1.bf16.msra.mxu0 %v586
  %627 = vmatprep.subr.bf16.mxu0 0
  %628 = vmatpush1.bf16.msra.mxu0 %v587
  %629 = vmatprep.subr.bf16.mxu0 0
  %630 = vmatpush1.bf16.msra.mxu0 %v588
  %631 = vmatprep.subr.bf16.mxu0 0
  %632 = vmatpush1.bf16.msra.mxu0 %v589
  %633 = vmatprep.subr.bf16.mxu0 0
  %634 = vmatpush1.bf16.msra.mxu0 %v590
  %635 = vmatprep.subr.bf16.mxu0 0
  %636 = vmatpush1.bf16.msra.mxu0 %v591
  %637 = vmatprep.subr.bf16.mxu0 0
  %638 = vmatpush1.bf16.msra.mxu0 %v592
  %639 = vmatprep.subr.bf16.mxu0 0
  %640 = vmatpush1.bf16.msra.mxu0 %v593
  %641 = vmatprep.subr.bf16.mxu0 0
  %642 = vmatpush1.bf16.msra.mxu0 %v594
  %643 = vmatprep.mubr.bf16.mxu0 %v144
  %644 = vmatmul.mubr.bf16.gmra.mrb[0].mxu0 %v143
  %v645 = vpop.f32.mrb[0].mxu0
  %v646 = vadd.f32 0.0, %v645
  %v647 = vpop.f32.mrb[0].mxu0
  %v648 = vpop.f32.mrb[0].mxu0
  %v649 = vadd.f32 0.0, %v648
  %v650 = vpop.f32.mrb[0].mxu0
  %651 = vdwg.mxu0
  %v652 = vpack.c.bf16 %v308, %v308
  %v653 = vpack.c.bf16 %v311, %v311
  %v654 = vpack.c.bf16 %v477, %v477
  %v655 = vpack.c.bf16 %v480, %v480
  %v656 = vpack.c.bf16 %v646, %v646
  %v657 = vpack.c.bf16 %v649, %v649
  %vm658 = vcmask 523264
  %v660 = vsel %vm658, %v652, 0
  %v663 = vsel %vm658, %v654, 0
  %665 = vmatprep.subr.bf16.mxu0 0
  %666 = vmatpush1.bf16.xpose.msra.mxu0 %v663
  %667 = vmatprep.subr.bf16.mxu0 0
  %668 = vmatpush1.bf16.xpose.msra.mxu0 0
  %669 = vmatprep.subr.bf16.mxu0 0
  %670 = vmatpush1.bf16.xpose.msra.mxu0 0
  %671 = vmatprep.subr.bf16.mxu0 0
  %672 = vmatpush1.bf16.xpose.msra.mxu0 0
  %673 = vmatprep.subr.bf16.mxu0 0
  %674 = vmatpush1.bf16.xpose.msra.mxu0 0
  %675 = vmatprep.subr.bf16.mxu0 0
  %676 = vmatpush1.bf16.xpose.msra.mxu0 0
  %677 = vmatprep.subr.bf16.mxu0 0
  %678 = vmatpush1.bf16.xpose.msra.mxu0 0
  %679 = vmatprep.subr.bf16.mxu0 0
  %680 = vmatpush1.bf16.xpose.msra.mxu0 0
  %681 = vmatprep.subr.bf16.mxu0 0
  %682 = vmatpush1.bf16.xpose.msra.mxu0 0
  %683 = vmatprep.subr.bf16.mxu0 0
  %684 = vmatpush1.bf16.xpose.msra.mxu0 0
  %685 = vmatprep.subr.bf16.mxu0 0
  %686 = vmatpush1.bf16.xpose.msra.mxu0 0
  %687 = vmatprep.subr.bf16.mxu0 0
  %688 = vmatpush1.bf16.xpose.msra.mxu0 0
  %689 = vmatprep.subr.bf16.mxu0 0
  %690 = vmatpush1.bf16.xpose.msra.mxu0 0
  %691 = vmatprep.subr.bf16.mxu0 0
  %692 = vmatpush1.bf16.xpose.msra.mxu0 0
  %693 = vmatprep.subr.bf16.mxu0 0
  %694 = vmatpush1.bf16.xpose.msra.mxu0 0
  %695 = vmatprep.subr.bf16.mxu0 0
  %696 = vmatpush1.bf16.xpose.msra.mxu0 0
  %697 = vmatprep.mubr.bf16.mxu0 0
  %698 = vmatmul.mubr.bf16.gmra.mrb[0].mxu0 %v660
  %v699 = vpop.f32.mrb[0].mxu0
  %v700 = vadd.f32 %v142, %v699
  %v701 = vpop.f32.mrb[0].mxu0
  %v702 = vpop.f32.mrb[0].mxu0
  %v703 = vpop.f32.mrb[0].mxu0
  %704 = vdwg.mxu0
  %v706 = vsel %vm658, %v653, 0
  %v709 = vsel %vm658, %v655, 0
  %711 = vmatprep.subr.bf16.mxu0 0
  %712 = vmatpush1.bf16.xpose.msra.mxu0 %v709
  %713 = vmatprep.subr.bf16.mxu0 0
  %714 = vmatpush1.bf16.xpose.msra.mxu0 0
  %715 = vmatprep.subr.bf16.mxu0 0
  %716 = vmatpush1.bf16.xpose.msra.mxu0 0
  %717 = vmatprep.subr.bf16.mxu0 0
  %718 = vmatpush1.bf16.xpose.msra.mxu0 0
  %719 = vmatprep.subr.bf16.mxu0 0
  %720 = vmatpush1.bf16.xpose.msra.mxu0 0
  %721 = vmatprep.subr.bf16.mxu0 0
  %722 = vmatpush1.bf16.xpose.msra.mxu0 0
  %723 = vmatprep.subr.bf16.mxu0 0
  %724 = vmatpush1.bf16.xpose.msra.mxu0 0
  %725 = vmatprep.subr.bf16.mxu0 0
  %726 = vmatpush1.bf16.xpose.msra.mxu0 0
  %727 = vmatprep.subr.bf16.mxu0 0
  %728 = vmatpush1.bf16.xpose.msra.mxu0 0
  %729 = vmatprep.subr.bf16.mxu0 0
  %730 = vmatpush1.bf16.xpose.msra.mxu0 0
  %731 = vmatprep.subr.bf16.mxu0 0
  %732 = vmatpush1.bf16.xpose.msra.mxu0 0
  %733 = vmatprep.subr.bf16.mxu0 0
  %734 = vmatpush1.bf16.xpose.msra.mxu0 0
  %735 = vmatprep.subr.bf16.mxu0 0
  %736 = vmatpush1.bf16.xpose.msra.mxu0 0
  %737 = vmatprep.subr.bf16.mxu0 0
  %738 = vmatpush1.bf16.xpose.msra.mxu0 0
  %739 = vmatprep.subr.bf16.mxu0 0
  %740 = vmatpush1.bf16.xpose.msra.mxu0 0
  %741 = vmatprep.subr.bf16.mxu0 0
  %742 = vmatpush1.bf16.xpose.msra.mxu0 0
  %743 = vmatprep.mubr.bf16.mxu0 0
  %744 = vmatmul.mubr.bf16.gmra.mrb[0].mxu0 %v706
  %v745 = vpop.f32.mrb[0].mxu0
  %v746 = vadd.f32 %v142, %v745
  %v747 = vpop.f32.mrb[0].mxu0
  %v748 = vpop.f32.mrb[0].mxu0
  %v749 = vpop.f32.mrb[0].mxu0
  %750 = vdwg.mxu0
  %vm751 = vcmask 64512
  %v752 = vsel %vm751, %v700, -inf
  %753 = vmax.xlane.f32.xlu0 %v752
  %v754 = vpop.xlane.xlu0 %753
  %v755 = vsel %vm751, %v746, -inf
  %756 = vmax.xlane.f32.xlu0 %v755
  %v757 = vpop.xlane.xlu0 %756
  %v758 = vsub.f32 %v700, %v754
  %v759 = vsub.f32 %v746, %v757
  %v760 = vmul.f32 %v758, 1.442695
  %v761 = vpow.pop %v760
  %v762 = vmul.f32 %v759, 1.442695
  %v763 = vpow.pop %v762
  %v764 = vsel %vm751, %v761, 0.0
  %765 = vadd.xlane.f32.xlu0 %v764
  %v766 = vpop.xlane.xlu0 %765
  %v767 = vsel %vm751, %v763, 0.0
  %768 = vadd.xlane.f32.xlu0 %v767
  %v769 = vpop.xlane.xlu0 %768
  %v770 = vrcp.pop %v766
  %v771 = vrcp.pop %v769
  %v772 = vmul.f32 %v761, %v770
  %v773 = vmul.f32 %v763, %v771
  %v774 = vpack.c.bf16 %v772, %v772
  %v775 = vpack.c.bf16 %v773, %v773
  %v777 = vsel %vm751, %v774, 0
  %v780 = vsel %vm58, %v656, 0
  %782 = vmatprep.subr.bf16.mxu0 0
  %783 = vmatpush1.bf16.msra.mxu0 %v780
  %784 = vmatprep.subr.bf16.mxu0 0
  %785 = vmatpush1.bf16.msra.mxu0 0
  %786 = vmatprep.subr.bf16.mxu0 0
  %787 = vmatpush1.bf16.msra.mxu0 0
  %788 = vmatprep.subr.bf16.mxu0 0
  %789 = vmatpush1.bf16.msra.mxu0 0
  %790 = vmatprep.subr.bf16.mxu0 0
  %791 = vmatpush1.bf16.msra.mxu0 0
  %792 = vmatprep.subr.bf16.mxu0 0
  %793 = vmatpush1.bf16.msra.mxu0 0
  %794 = vmatprep.subr.bf16.mxu0 0
  %795 = vmatpush1.bf16.msra.mxu0 0
  %796 = vmatprep.subr.bf16.mxu0 0
  %797 = vmatpush1.bf16.msra.mxu0 0
  %798 = vmatprep.subr.bf16.mxu0 0
  %799 = vmatpush1.bf16.msra.mxu0 0
  %800 = vmatprep.subr.bf16.mxu0 0
  %801 = vmatpush1.bf16.msra.mxu0 0
  %802 = vmatprep.subr.bf16.mxu0 0
  %803 = vmatpush1.bf16.msra.mxu0 0
  %804 = vmatprep.subr.bf16.mxu0 0
  %805 = vmatpush1.bf16.msra.mxu0 0
  %806 = vmatprep.subr.bf16.mxu0 0
  %807 = vmatpush1.bf16.msra.mxu0 0
  %808 = vmatprep.subr.bf16.mxu0 0
  %809 = vmatpush1.bf16.msra.mxu0 0
  %810 = vmatprep.subr.bf16.mxu0 0
  %811 = vmatpush1.bf16.msra.mxu0 0
  %812 = vmatprep.subr.bf16.mxu0 0
  %813 = vmatpush1.bf16.msra.mxu0 0
  %814 = vmatprep.mubr.bf16.mxu0 0
  %815 = vmatmul.mubr.bf16.gmra.mrb[0].mxu0 %v777
  %v816 = vpop.f32.mrb[0].mxu0
  %v817 = vadd.f32 0.0, %v816
  %v818 = vpop.f32.mrb[0].mxu0
  %v819 = vpop.f32.mrb[0].mxu0
  %v820 = vpop.f32.mrb[0].mxu0
  %821 = vdwg.mxu0
  %v823 = vsel %vm751, %v775, 0
  %v826 = vsel %vm58, %v657, 0
  %828 = vmatprep.subr.bf16.mxu0 0
  %829 = vmatpush1.bf16.msra.mxu0 %v826
  %830 = vmatprep.subr.bf16.mxu0 0
  %831 = vmatpush1.bf16.msra.mxu0 0
  %832 = vmatprep.subr.bf16.mxu0 0
  %833 = vmatpush1.bf16.msra.mxu0 0
  %834 = vmatprep.subr.bf16.mxu0 0
  %835 = vmatpush1.bf16.msra.mxu0 0
  %836 = vmatprep.subr.bf16.mxu0 0
  %837 = vmatpush1.bf16.msra.mxu0 0
  %838 = vmatprep.subr.bf16.mxu0 0
  %839 = vmatpush1.bf16.msra.mxu0 0
  %840 = vmatprep.subr.bf16.mxu0 0
  %841 = vmatpush1.bf16.msra.mxu0 0
  %842 = vmatprep.subr.bf16.mxu0 0
  %843 = vmatpush1.bf16.msra.mxu0 0
  %844 = vmatprep.subr.bf16.mxu0 0
  %845 = vmatpush1.bf16.msra.mxu0 0
  %846 = vmatprep.subr.bf16.mxu0 0
  %847 = vmatpush1.bf16.msra.mxu0 0
  %848 = vmatprep.subr.bf16.mxu0 0
  %849 = vmatpush1.bf16.msra.mxu0 0
  %850 = vmatprep.subr.bf16.mxu0 0
  %851 = vmatpush1.bf16.msra.mxu0 0
  %852 = vmatprep.subr.bf16.mxu0 0
  %853 = vmatpush1.bf16.msra.mxu0 0
  %854 = vmatprep.subr.bf16.mxu0 0
  %855 = vmatpush1.bf16.msra.mxu0 0
  %856 = vmatprep.subr.bf16.mxu0 0
  %857 = vmatpush1.bf16.msra.mxu0 0
  %858 = vmatprep.subr.bf16.mxu0 0
  %859 = vmatpush1.bf16.msra.mxu0 0
  %860 = vmatprep.mubr.bf16.mxu0 0
  %861 = vmatmul.mubr.bf16.gmra.mrb[0].mxu0 %v823
  %v862 = vpop.f32.mrb[0].mxu0
  %v863 = vadd.f32 0.0, %v862
  %v864 = vpop.f32.mrb[0].mxu0
  %v865 = vpop.f32.mrb[0].mxu0
  %v866 = vpop.f32.mrb[0].mxu0
  %867 = vdwg.mxu0
  %v868 = vpack.c.bf16 %v863, %v817
  %v869 = vld [vmem:[%s7] sm:$0xff]
  %v870 = vld [vmem:[%s7 + $0x8] sm:$0xff]
  %v871 = vld [vmem:[%s7 + $0x10] sm:$0xff]
  %v872 = vld [vmem:[%s7 + $0x18] sm:$0xff]
  %v873 = vld [vmem:[%s7 + $0x20] sm:$0xff]
  %v874 = vld [vmem:[%s7 + $0x28] sm:$0xff]
  %v875 = vld [vmem:[%s7 + $0x30] sm:$0xff]
  %v876 = vld [vmem:[%s7 + $0x38] sm:$0xff]
  %s877 = scalar_lea.vmem %s4, 128
  %v878 = vld [vmem:[%s877] sm:$0xf]
  %v879 = vld [vmem:[%s877 + $0x4] sm:$0xf]
  %v880 = vld [vmem:[%s877 + $0x8] sm:$0xf]
  %v881 = vld [vmem:[%s877 + $0xc] sm:$0xf]
  %v882 = vld [vmem:[%s877 + $0x10] sm:$0xf]
  %v883 = vld [vmem:[%s877 + $0x14] sm:$0xf]
  %v884 = vld [vmem:[%s877 + $0x18] sm:$0xf]
  %v885 = vld [vmem:[%s877 + $0x1c] sm:$0xf]
  %v886 = vld [vmem:[%s877 + $0x20] sm:$0xf]
  %v887 = vld [vmem:[%s877 + $0x24] sm:$0xf]
  %v888 = vld [vmem:[%s877 + $0x28] sm:$0xf]
  %v889 = vld [vmem:[%s877 + $0x2c] sm:$0xf]
  %v890 = vld [vmem:[%s877 + $0x30] sm:$0xf]
  %v891 = vld [vmem:[%s877 + $0x34] sm:$0xf]
  %v892 = vld [vmem:[%s877 + $0x38] sm:$0xf]
  %v893 = vld [vmem:[%s877 + $0x3c] sm:$0xf]
  %v894 = vld [vmem:[%s877 + $0x40] sm:$0xf]
  %v895 = vld [vmem:[%s877 + $0x44] sm:$0xf]
  %v896 = vld [vmem:[%s877 + $0x48] sm:$0xf]
  %v897 = vld [vmem:[%s877 + $0x4c] sm:$0xf]
  %v898 = vld [vmem:[%s877 + $0x50] sm:$0xf]
  %v899 = vld [vmem:[%s877 + $0x54] sm:$0xf]
  %v900 = vld [vmem:[%s877 + $0x58] sm:$0xf]
  %v901 = vld [vmem:[%s877 + $0x5c] sm:$0xf]
  %v902 = vld [vmem:[%s877 + $0x60] sm:$0xf]
  %v903 = vld [vmem:[%s877 + $0x64] sm:$0xf]
  %v904 = vld [vmem:[%s877 + $0x68] sm:$0xf]
  %v905 = vld [vmem:[%s877 + $0x6c] sm:$0xf]
  %v906 = vld [vmem:[%s877 + $0x70] sm:$0xf]
  %v907 = vld [vmem:[%s877 + $0x74] sm:$0xf]
  %v908 = vld [vmem:[%s877 + $0x78] sm:$0xf]
  %v909 = vld [vmem:[%s877 + $0x7c] sm:$0xf]
  %v942 = vunpack.c.l.b16 %v878
  %v943 = vunpack.c.l.b16 %v879
  %v944 = vunpack.c.l.b16 %v880
  %v945 = vunpack.c.l.b16 %v881
  %v946 = vunpack.c.l.b16 %v882
  %v947 = vunpack.c.l.b16 %v883
  %v948 = vunpack.c.l.b16 %v884
  %v949 = vunpack.c.l.b16 %v885
  %v950 = vunpack.c.l.b16 %v886
  %v951 = vunpack.c.l.b16 %v887
  %v952 = vunpack.c.l.b16 %v888
  %v953 = vunpack.c.l.b16 %v889
  %v954 = vunpack.c.l.b16 %v890
  %v955 = vunpack.c.l.b16 %v891
  %v956 = vunpack.c.l.b16 %v892
  %v957 = vunpack.c.l.b16 %v893
  %v958 = vunpack.c.l.b16 %v894
  %v959 = vunpack.c.l.b16 %v895
  %v960 = vunpack.c.l.b16 %v896
  %v961 = vunpack.c.l.b16 %v897
  %v962 = vunpack.c.l.b16 %v898
  %v963 = vunpack.c.l.b16 %v899
  %v964 = vunpack.c.l.b16 %v900
  %v965 = vunpack.c.l.b16 %v901
  %v966 = vunpack.c.l.b16 %v902
  %v967 = vunpack.c.l.b16 %v903
  %v968 = vunpack.c.l.b16 %v904
  %v969 = vunpack.c.l.b16 %v905
  %v970 = vunpack.c.l.b16 %v906
  %v971 = vunpack.c.l.b16 %v907
  %v972 = vunpack.c.l.b16 %v908
  %v973 = vunpack.c.l.b16 %v909
  %v974 = vpack.c.b16 %v943, %v942
  %v975 = vpack.c.b16 %v945, %v944
  %v976 = vpack.c.b16 %v947, %v946
  %v977 = vpack.c.b16 %v949, %v948
  %v978 = vpack.c.b16 %v951, %v950
  %v979 = vpack.c.b16 %v953, %v952
  %v980 = vpack.c.b16 %v955, %v954
  %v981 = vpack.c.b16 %v957, %v956
  %v982 = vpack.c.b16 %v959, %v958
  %v983 = vpack.c.b16 %v961, %v960
  %v984 = vpack.c.b16 %v963, %v962
  %v985 = vpack.c.b16 %v965, %v964
  %v986 = vpack.c.b16 %v967, %v966
  %v987 = vpack.c.b16 %v969, %v968
  %v988 = vpack.c.b16 %v971, %v970
  %v989 = vpack.c.b16 %v973, %v972
  %1006 = vmatprep.subr.bf16.mxu0 0
  %1007 = vmatpush1.bf16.msra.mxu0 %v974
  %1008 = vmatprep.subr.bf16.mxu0 0
  %1009 = vmatpush1.bf16.msra.mxu0 %v975
  %1010 = vmatprep.subr.bf16.mxu0 0
  %1011 = vmatpush1.bf16.msra.mxu0 %v976
  %1012 = vmatprep.subr.bf16.mxu0 0
  %1013 = vmatpush1.bf16.msra.mxu0 %v977
  %1014 = vmatprep.subr.bf16.mxu0 0
  %1015 = vmatpush1.bf16.msra.mxu0 %v978
  %1016 = vmatprep.subr.bf16.mxu0 0
  %1017 = vmatpush1.bf16.msra.mxu0 %v979
  %1018 = vmatprep.subr.bf16.mxu0 0
  %1019 = vmatpush1.bf16.msra.mxu0 %v980
  %1020 = vmatprep.subr.bf16.mxu0 0
  %1021 = vmatpush1.bf16.msra.mxu0 %v981
  %1022 = vmatprep.subr.bf16.mxu0 0
  %1023 = vmatpush1.bf16.msra.mxu0 %v982
  %1024 = vmatprep.subr.bf16.mxu0 0
  %1025 = vmatpush1.bf16.msra.mxu0 %v983
  %1026 = vmatprep.subr.bf16.mxu0 0
  %1027 = vmatpush1.bf16.msra.mxu0 %v984
  %1028 = vmatprep.subr.bf16.mxu0 0
  %1029 = vmatpush1.bf16.msra.mxu0 %v985
  %1030 = vmatprep.subr.bf16.mxu0 0
  %1031 = vmatpush1.bf16.msra.mxu0 %v986
  %1032 = vmatprep.subr.bf16.mxu0 0
  %1033 = vmatpush1.bf16.msra.mxu0 %v987
  %1034 = vmatprep.subr.bf16.mxu0 0
  %1035 = vmatpush1.bf16.msra.mxu0 %v988
  %1036 = vmatprep.subr.bf16.mxu0 0
  %1037 = vmatpush1.bf16.msra.mxu0 %v989
  %1038 = vmatprep.mubr.bf16.mxu0 %v144
  %1039 = vmatmul.mubr.bf16.gmra.mrb[0].mxu0 %v143
  %v1040 = vpop.f32.mrb[0].mxu0
  %v1041 = vadd.f32 0.0, %v1040
  %v1042 = vpop.f32.mrb[0].mxu0
  %v1043 = vpop.f32.mrb[0].mxu0
  %v1044 = vadd.f32 0.0, %v1043
  %v1045 = vpop.f32.mrb[0].mxu0
  %1046 = vdwg.mxu0
  %s1047 = scalar_lea.vmem %s5, 128
  %v1048 = vld [vmem:[%s1047] sm:$0xf]
  %v1049 = vld [vmem:[%s1047 + $0x4] sm:$0xf]
  %v1050 = vld [vmem:[%s1047 + $0x8] sm:$0xf]
  %v1051 = vld [vmem:[%s1047 + $0xc] sm:$0xf]
  %v1052 = vld [vmem:[%s1047 + $0x10] sm:$0xf]
  %v1053 = vld [vmem:[%s1047 + $0x14] sm:$0xf]
  %v1054 = vld [vmem:[%s1047 + $0x18] sm:$0xf]
  %v1055 = vld [vmem:[%s1047 + $0x1c] sm:$0xf]
  %v1056 = vld [vmem:[%s1047 + $0x20] sm:$0xf]
  %v1057 = vld [vmem:[%s1047 + $0x24] sm:$0xf]
  %v1058 = vld [vmem:[%s1047 + $0x28] sm:$0xf]
  %v1059 = vld [vmem:[%s1047 + $0x2c] sm:$0xf]
  %v1060 = vld [vmem:[%s1047 + $0x30] sm:$0xf]
  %v1061 = vld [vmem:[%s1047 + $0x34] sm:$0xf]
  %v1062 = vld [vmem:[%s1047 + $0x38] sm:$0xf]
  %v1063 = vld [vmem:[%s1047 + $0x3c] sm:$0xf]
  %v1064 = vld [vmem:[%s1047 + $0x40] sm:$0xf]
  %v1065 = vld [vmem:[%s1047 + $0x44] sm:$0xf]
  %v1066 = vld [vmem:[%s1047 + $0x48] sm:$0xf]
  %v1067 = vld [vmem:[%s1047 + $0x4c] sm:$0xf]
  %v1068 = vld [vmem:[%s1047 + $0x50] sm:$0xf]
  %v1069 = vld [vmem:[%s1047 + $0x54] sm:$0xf]
  %v1070 = vld [vmem:[%s1047 + $0x58] sm:$0xf]
  %v1071 = vld [vmem:[%s1047 + $0x5c] sm:$0xf]
  %v1072 = vld [vmem:[%s1047 + $0x60] sm:$0xf]
  %v1073 = vld [vmem:[%s1047 + $0x64] sm:$0xf]
  %v1074 = vld [vmem:[%s1047 + $0x68] sm:$0xf]
  %v1075 = vld [vmem:[%s1047 + $0x6c] sm:$0xf]
  %v1076 = vld [vmem:[%s1047 + $0x70] sm:$0xf]
  %v1077 = vld [vmem:[%s1047 + $0x74] sm:$0xf]
  %v1078 = vld [vmem:[%s1047 + $0x78] sm:$0xf]
  %v1079 = vld [vmem:[%s1047 + $0x7c] sm:$0xf]
  %v1112 = vunpack.c.l.b16 %v1048
  %v1113 = vunpack.c.l.b16 %v1049
  %v1114 = vunpack.c.l.b16 %v1050
  %v1115 = vunpack.c.l.b16 %v1051
  %v1116 = vunpack.c.l.b16 %v1052
  %v1117 = vunpack.c.l.b16 %v1053
  %v1118 = vunpack.c.l.b16 %v1054
  %v1119 = vunpack.c.l.b16 %v1055
  %v1120 = vunpack.c.l.b16 %v1056
  %v1121 = vunpack.c.l.b16 %v1057
  %v1122 = vunpack.c.l.b16 %v1058
  %v1123 = vunpack.c.l.b16 %v1059
  %v1124 = vunpack.c.l.b16 %v1060
  %v1125 = vunpack.c.l.b16 %v1061
  %v1126 = vunpack.c.l.b16 %v1062
  %v1127 = vunpack.c.l.b16 %v1063
  %v1128 = vunpack.c.l.b16 %v1064
  %v1129 = vunpack.c.l.b16 %v1065
  %v1130 = vunpack.c.l.b16 %v1066
  %v1131 = vunpack.c.l.b16 %v1067
  %v1132 = vunpack.c.l.b16 %v1068
  %v1133 = vunpack.c.l.b16 %v1069
  %v1134 = vunpack.c.l.b16 %v1070
  %v1135 = vunpack.c.l.b16 %v1071
  %v1136 = vunpack.c.l.b16 %v1072
  %v1137 = vunpack.c.l.b16 %v1073
  %v1138 = vunpack.c.l.b16 %v1074
  %v1139 = vunpack.c.l.b16 %v1075
  %v1140 = vunpack.c.l.b16 %v1076
  %v1141 = vunpack.c.l.b16 %v1077
  %v1142 = vunpack.c.l.b16 %v1078
  %v1143 = vunpack.c.l.b16 %v1079
  %v1144 = vpack.c.b16 %v1113, %v1112
  %v1145 = vpack.c.b16 %v1115, %v1114
  %v1146 = vpack.c.b16 %v1117, %v1116
  %v1147 = vpack.c.b16 %v1119, %v1118
  %v1148 = vpack.c.b16 %v1121, %v1120
  %v1149 = vpack.c.b16 %v1123, %v1122
  %v1150 = vpack.c.b16 %v1125, %v1124
  %v1151 = vpack.c.b16 %v1127, %v1126
  %v1152 = vpack.c.b16 %v1129, %v1128
  %v1153 = vpack.c.b16 %v1131, %v1130
  %v1154 = vpack.c.b16 %v1133, %v1132
  %v1155 = vpack.c.b16 %v1135, %v1134
  %v1156 = vpack.c.b16 %v1137, %v1136
  %v1157 = vpack.c.b16 %v1139, %v1138
  %v1158 = vpack.c.b16 %v1141, %v1140
  %v1159 = vpack.c.b16 %v1143, %v1142
  %1176 = vmatprep.subr.bf16.mxu0 0
  %1177 = vmatpush1.bf16.msra.mxu0 %v1144
  %1178 = vmatprep.subr.bf16.mxu0 0
  %1179 = vmatpush1.bf16.msra.mxu0 %v1145
  %1180 = vmatprep.subr.bf16.mxu0 0
  %1181 = vmatpush1.bf16.msra.mxu0 %v1146
  %1182 = vmatprep.subr.bf16.mxu0 0
  %1183 = vmatpush1.bf16.msra.mxu0 %v1147
  %1184 = vmatprep.subr.bf16.mxu0 0
  %1185 = vmatpush1.bf16.msra.mxu0 %v1148
  %1186 = vmatprep.subr.bf16.mxu0 0
  %1187 = vmatpush1.bf16.msra.mxu0 %v1149
  %1188 = vmatprep.subr.bf16.mxu0 0
  %1189 = vmatpush1.bf16.msra.mxu0 %v1150
  %1190 = vmatprep.subr.bf16.mxu0 0
  %1191 = vmatpush1.bf16.msra.mxu0 %v1151
  %1192 = vmatprep.subr.bf16.mxu0 0
  %1193 = vmatpush1.bf16.msra.mxu0 %v1152
  %1194 = vmatprep.subr.bf16.mxu0 0
  %1195 = vmatpush1.bf16.msra.mxu0 %v1153
  %1196 = vmatprep.subr.bf16.mxu0 0
  %1197 = vmatpush1.bf16.msra.mxu0 %v1154
  %1198 = vmatprep.subr.bf16.mxu0 0
  %1199 = vmatpush1.bf16.msra.mxu0 %v1155
  %1200 = vmatprep.subr.bf16.mxu0 0
  %1201 = vmatpush1.bf16.msra.mxu0 %v1156
  %1202 = vmatprep.subr.bf16.mxu0 0
  %1203 = vmatpush1.bf16.msra.mxu0 %v1157
  %1204 = vmatprep.subr.bf16.mxu0 0
  %1205 = vmatpush1.bf16.msra.mxu0 %v1158
  %1206 = vmatprep.subr.bf16.mxu0 0
  %1207 = vmatpush1.bf16.msra.mxu0 %v1159
  %1208 = vmatprep.mubr.bf16.mxu0 %v144
  %1209 = vmatmul.mubr.bf16.gmra.mrb[0].mxu0 %v143
  %v1210 = vpop.f32.mrb[0].mxu0
  %v1211 = vadd.f32 0.0, %v1210
  %v1212 = vpop.f32.mrb[0].mxu0
  %v1213 = vpop.f32.mrb[0].mxu0
  %v1214 = vadd.f32 0.0, %v1213
  %v1215 = vpop.f32.mrb[0].mxu0
  %1216 = vdwg.mxu0
  %s1217 = scalar_lea.vmem %s6, 128
  %v1218 = vld [vmem:[%s1217] sm:$0xf]
  %v1219 = vld [vmem:[%s1217 + $0x4] sm:$0xf]
  %v1220 = vld [vmem:[%s1217 + $0x8] sm:$0xf]
  %v1221 = vld [vmem:[%s1217 + $0xc] sm:$0xf]
  %v1222 = vld [vmem:[%s1217 + $0x10] sm:$0xf]
  %v1223 = vld [vmem:[%s1217 + $0x14] sm:$0xf]
  %v1224 = vld [vmem:[%s1217 + $0x18] sm:$0xf]
  %v1225 = vld [vmem:[%s1217 + $0x1c] sm:$0xf]
  %v1226 = vld [vmem:[%s1217 + $0x20] sm:$0xf]
  %v1227 = vld [vmem:[%s1217 + $0x24] sm:$0xf]
  %v1228 = vld [vmem:[%s1217 + $0x28] sm:$0xf]
  %v1229 = vld [vmem:[%s1217 + $0x2c] sm:$0xf]
  %v1230 = vld [vmem:[%s1217 + $0x30] sm:$0xf]
  %v1231 = vld [vmem:[%s1217 + $0x34] sm:$0xf]
  %v1232 = vld [vmem:[%s1217 + $0x38] sm:$0xf]
  %v1233 = vld [vmem:[%s1217 + $0x3c] sm:$0xf]
  %v1234 = vld [vmem:[%s1217 + $0x40] sm:$0xf]
  %v1235 = vld [vmem:[%s1217 + $0x44] sm:$0xf]
  %v1236 = vld [vmem:[%s1217 + $0x48] sm:$0xf]
  %v1237 = vld [vmem:[%s1217 + $0x4c] sm:$0xf]
  %v1238 = vld [vmem:[%s1217 + $0x50] sm:$0xf]
  %v1239 = vld [vmem:[%s1217 + $0x54] sm:$0xf]
  %v1240 = vld [vmem:[%s1217 + $0x58] sm:$0xf]
  %v1241 = vld [vmem:[%s1217 + $0x5c] sm:$0xf]
  %v1242 = vld [vmem:[%s1217 + $0x60] sm:$0xf]
  %v1243 = vld [vmem:[%s1217 + $0x64] sm:$0xf]
  %v1244 = vld [vmem:[%s1217 + $0x68] sm:$0xf]
  %v1245 = vld [vmem:[%s1217 + $0x6c] sm:$0xf]
  %v1246 = vld [vmem:[%s1217 + $0x70] sm:$0xf]
  %v1247 = vld [vmem:[%s1217 + $0x74] sm:$0xf]
  %v1248 = vld [vmem:[%s1217 + $0x78] sm:$0xf]
  %v1249 = vld [vmem:[%s1217 + $0x7c] sm:$0xf]
  %v1282 = vunpack.c.l.b16 %v1218
  %v1283 = vunpack.c.l.b16 %v1219
  %v1284 = vunpack.c.l.b16 %v1220
  %v1285 = vunpack.c.l.b16 %v1221
  %v1286 = vunpack.c.l.b16 %v1222
  %v1287 = vunpack.c.l.b16 %v1223
  %v1288 = vunpack.c.l.b16 %v1224
  %v1289 = vunpack.c.l.b16 %v1225
  %v1290 = vunpack.c.l.b16 %v1226
  %v1291 = vunpack.c.l.b16 %v1227
  %v1292 = vunpack.c.l.b16 %v1228
  %v1293 = vunpack.c.l.b16 %v1229
  %v1294 = vunpack.c.l.b16 %v1230
  %v1295 = vunpack.c.l.b16 %v1231
  %v1296 = vunpack.c.l.b16 %v1232
  %v1297 = vunpack.c.l.b16 %v1233
  %v1298 = vunpack.c.l.b16 %v1234
  %v1299 = vunpack.c.l.b16 %v1235
  %v1300 = vunpack.c.l.b16 %v1236
  %v1301 = vunpack.c.l.b16 %v1237
  %v1302 = vunpack.c.l.b16 %v1238
  %v1303 = vunpack.c.l.b16 %v1239
  %v1304 = vunpack.c.l.b16 %v1240
  %v1305 = vunpack.c.l.b16 %v1241
  %v1306 = vunpack.c.l.b16 %v1242
  %v1307 = vunpack.c.l.b16 %v1243
  %v1308 = vunpack.c.l.b16 %v1244
  %v1309 = vunpack.c.l.b16 %v1245
  %v1310 = vunpack.c.l.b16 %v1246
  %v1311 = vunpack.c.l.b16 %v1247
  %v1312 = vunpack.c.l.b16 %v1248
  %v1313 = vunpack.c.l.b16 %v1249
  %v1314 = vpack.c.b16 %v1283, %v1282
  %v1315 = vpack.c.b16 %v1285, %v1284
  %v1316 = vpack.c.b16 %v1287, %v1286
  %v1317 = vpack.c.b16 %v1289, %v1288
  %v1318 = vpack.c.b16 %v1291, %v1290
  %v1319 = vpack.c.b16 %v1293, %v1292
  %v1320 = vpack.c.b16 %v1295, %v1294
  %v1321 = vpack.c.b16 %v1297, %v1296
  %v1322 = vpack.c.b16 %v1299, %v1298
  %v1323 = vpack.c.b16 %v1301, %v1300
  %v1324 = vpack.c.b16 %v1303, %v1302
  %v1325 = vpack.c.b16 %v1305, %v1304
  %v1326 = vpack.c.b16 %v1307, %v1306
  %v1327 = vpack.c.b16 %v1309, %v1308
  %v1328 = vpack.c.b16 %v1311, %v1310
  %v1329 = vpack.c.b16 %v1313, %v1312
  %1346 = vmatprep.subr.bf16.mxu0 0
  %1347 = vmatpush1.bf16.msra.mxu0 %v1314
  %1348 = vmatprep.subr.bf16.mxu0 0
  %1349 = vmatpush1.bf16.msra.mxu0 %v1315
  %1350 = vmatprep.subr.bf16.mxu0 0
  %1351 = vmatpush1.bf16.msra.mxu0 %v1316
  %1352 = vmatprep.subr.bf16.mxu0 0
  %1353 = vmatpush1.bf16.msra.mxu0 %v1317
  %1354 = vmatprep.subr.bf16.mxu0 0
  %1355 = vmatpush1.bf16.msra.mxu0 %v1318
  %1356 = vmatprep.subr.bf16.mxu0 0
  %1357 = vmatpush1.bf16.msra.mxu0 %v1319
  %1358 = vmatprep.subr.bf16.mxu0 0
  %1359 = vmatpush1.bf16.msra.mxu0 %v1320
  %1360 = vmatprep.subr.bf16.mxu0 0
  %1361 = vmatpush1.bf16.msra.mxu0 %v1321
  %1362 = vmatprep.subr.bf16.mxu0 0
  %1363 = vmatpush1.bf16.msra.mxu0 %v1322
  %1364 = vmatprep.subr.bf16.mxu0 0
  %1365 = vmatpush1.bf16.msra.mxu0 %v1323
  %1366 = vmatprep.subr.bf16.mxu0 0
  %1367 = vmatpush1.bf16.msra.mxu0 %v1324
  %1368 = vmatprep.subr.bf16.mxu0 0
  %1369 = vmatpush1.bf16.msra.mxu0 %v1325
  %1370 = vmatprep.subr.bf16.mxu0 0
  %1371 = vmatpush1.bf16.msra.mxu0 %v1326
  %1372 = vmatprep.subr.bf16.mxu0 0
  %1373 = vmatpush1.bf16.msra.mxu0 %v1327
  %1374 = vmatprep.subr.bf16.mxu0 0
  %1375 = vmatpush1.bf16.msra.mxu0 %v1328
  %1376 = vmatprep.subr.bf16.mxu0 0
  %1377 = vmatpush1.bf16.msra.mxu0 %v1329
  %1378 = vmatprep.mubr.bf16.mxu0 %v144
  %1379 = vmatmul.mubr.bf16.gmra.mrb[0].mxu0 %v143
  %v1380 = vpop.f32.mrb[0].mxu0
  %v1381 = vadd.f32 0.0, %v1380
  %v1382 = vpop.f32.mrb[0].mxu0
  %v1383 = vpop.f32.mrb[0].mxu0
  %v1384 = vadd.f32 0.0, %v1383
  %v1385 = vpop.f32.mrb[0].mxu0
  %1386 = vdwg.mxu0
  %v1387 = vpack.c.bf16 %v1041, %v1041
  %v1388 = vpack.c.bf16 %v1044, %v1044
  %v1389 = vpack.c.bf16 %v1211, %v1211
  %v1390 = vpack.c.bf16 %v1214, %v1214
  %v1391 = vpack.c.bf16 %v1381, %v1381
  %v1392 = vpack.c.bf16 %v1384, %v1384
  %v1394 = vsel %vm658, %v1387, 0
  %v1397 = vsel %vm658, %v1389, 0
  %1399 = vmatprep.subr.bf16.mxu0 0
  %1400 = vmatpush1.bf16.xpose.msra.mxu0 %v1397
  %1401 = vmatprep.subr.bf16.mxu0 0
  %1402 = vmatpush1.bf16.xpose.msra.mxu0 0
  %1403 = vmatprep.subr.bf16.mxu0 0
  %1404 = vmatpush1.bf16.xpose.msra.mxu0 0
  %1405 = vmatprep.subr.bf16.mxu0 0
  %1406 = vmatpush1.bf16.xpose.msra.mxu0 0
  %1407 = vmatprep.subr.bf16.mxu0 0
  %1408 = vmatpush1.bf16.xpose.msra.mxu0 0
  %1409 = vmatprep.subr.bf16.mxu0 0
  %1410 = vmatpush1.bf16.xpose.msra.mxu0 0
  %1411 = vmatprep.subr.bf16.mxu0 0
  %1412 = vmatpush1.bf16.xpose.msra.mxu0 0
  %1413 = vmatprep.subr.bf16.mxu0 0
  %1414 = vmatpush1.bf16.xpose.msra.mxu0 0
  %1415 = vmatprep.subr.bf16.mxu0 0
  %1416 = vmatpush1.bf16.xpose.msra.mxu0 0
  %1417 = vmatprep.subr.bf16.mxu0 0
  %1418 = vmatpush1.bf16.xpose.msra.mxu0 0
  %1419 = vmatprep.subr.bf16.mxu0 0
  %1420 = vmatpush1.bf16.xpose.msra.mxu0 0
  %1421 = vmatprep.subr.bf16.mxu0 0
  %1422 = vmatpush1.bf16.xpose.msra.mxu0 0
  %1423 = vmatprep.subr.bf16.mxu0 0
  %1424 = vmatpush1.bf16.xpose.msra.mxu0 0
  %1425 = vmatprep.subr.bf16.mxu0 0
  %1426 = vmatpush1.bf16.xpose.msra.mxu0 0
  %1427 = vmatprep.subr.bf16.mxu0 0
  %1428 = vmatpush1.bf16.xpose.msra.mxu0 0
  %1429 = vmatprep.subr.bf16.mxu0 0
  %1430 = vmatpush1.bf16.xpose.msra.mxu0 0
  %1431 = vmatprep.mubr.bf16.mxu0 0
  %1432 = vmatmul.mubr.bf16.gmra.mrb[0].mxu0 %v1394
  %v1433 = vpop.f32.mrb[0].mxu0
  %v1434 = vadd.f32 %v142, %v1433
  %v1435 = vpop.f32.mrb[0].mxu0
  %v1436 = vpop.f32.mrb[0].mxu0
  %v1437 = vpop.f32.mrb[0].mxu0
  %1438 = vdwg.mxu0
  %v1440 = vsel %vm658, %v1388, 0
  %v1443 = vsel %vm658, %v1390, 0
  %1445 = vmatprep.subr.bf16.mxu0 0
  %1446 = vmatpush1.bf16.xpose.msra.mxu0 %v1443
  %1447 = vmatprep.subr.bf16.mxu0 0
  %1448 = vmatpush1.bf16.xpose.msra.mxu0 0
  %1449 = vmatprep.subr.bf16.mxu0 0
  %1450 = vmatpush1.bf16.xpose.msra.mxu0 0
  %1451 = vmatprep.subr.bf16.mxu0 0
  %1452 = vmatpush1.bf16.xpose.msra.mxu0 0
  %1453 = vmatprep.subr.bf16.mxu0 0
  %1454 = vmatpush1.bf16.xpose.msra.mxu0 0
  %1455 = vmatprep.subr.bf16.mxu0 0
  %1456 = vmatpush1.bf16.xpose.msra.mxu0 0
  %1457 = vmatprep.subr.bf16.mxu0 0
  %1458 = vmatpush1.bf16.xpose.msra.mxu0 0
  %1459 = vmatprep.subr.bf16.mxu0 0
  %1460 = vmatpush1.bf16.xpose.msra.mxu0 0
  %1461 = vmatprep.subr.bf16.mxu0 0
  %1462 = vmatpush1.bf16.xpose.msra.mxu0 0
  %1463 = vmatprep.subr.bf16.mxu0 0
  %1464 = vmatpush1.bf16.xpose.msra.mxu0 0
  %1465 = vmatprep.subr.bf16.mxu0 0
  %1466 = vmatpush1.bf16.xpose.msra.mxu0 0
  %1467 = vmatprep.subr.bf16.mxu0 0
  %1468 = vmatpush1.bf16.xpose.msra.mxu0 0
  %1469 = vmatprep.subr.bf16.mxu0 0
  %1470 = vmatpush1.bf16.xpose.msra.mxu0 0
  %1471 = vmatprep.subr.bf16.mxu0 0
  %1472 = vmatpush1.bf16.xpose.msra.mxu0 0
  %1473 = vmatprep.subr.bf16.mxu0 0
  %1474 = vmatpush1.bf16.xpose.msra.mxu0 0
  %1475 = vmatprep.subr.bf16.mxu0 0
  %1476 = vmatpush1.bf16.xpose.msra.mxu0 0
  %1477 = vmatprep.mubr.bf16.mxu0 0
  %1478 = vmatmul.mubr.bf16.gmra.mrb[0].mxu0 %v1440
  %v1479 = vpop.f32.mrb[0].mxu0
  %v1480 = vadd.f32 %v142, %v1479
  %v1481 = vpop.f32.mrb[0].mxu0
  %v1482 = vpop.f32.mrb[0].mxu0
  %v1483 = vpop.f32.mrb[0].mxu0
  %1484 = vdwg.mxu0
  %v1485 = vsel %vm751, %v1434, -inf
  %1486 = vmax.xlane.f32.xlu0 %v1485
  %v1487 = vpop.xlane.xlu0 %1486
  %v1488 = vsel %vm751, %v1480, -inf
  %1489 = vmax.xlane.f32.xlu0 %v1488
  %v1490 = vpop.xlane.xlu0 %1489
  %v1491 = vsub.f32 %v1434, %v1487
  %v1492 = vsub.f32 %v1480, %v1490
  %v1493 = vmul.f32 %v1491, 1.442695
  %v1494 = vpow.pop %v1493
  %v1495 = vmul.f32 %v1492, 1.442695
  %v1496 = vpow.pop %v1495
  %v1497 = vsel %vm751, %v1494, 0.0
  %1498 = vadd.xlane.f32.xlu0 %v1497
  %v1499 = vpop.xlane.xlu0 %1498
  %v1500 = vsel %vm751, %v1496, 0.0
  %1501 = vadd.xlane.f32.xlu0 %v1500
  %v1502 = vpop.xlane.xlu0 %1501
  %v1503 = vrcp.pop %v1499
  %v1504 = vrcp.pop %v1502
  %v1505 = vmul.f32 %v1494, %v1503
  %v1506 = vmul.f32 %v1496, %v1504
  %v1507 = vpack.c.bf16 %v1505, %v1505
  %v1508 = vpack.c.bf16 %v1506, %v1506
  %v1510 = vsel %vm751, %v1507, 0
  %v1513 = vsel %vm58, %v1391, 0
  %1515 = vmatprep.subr.bf16.mxu0 0
  %1516 = vmatpush1.bf16.msra.mxu0 %v1513
  %1517 = vmatprep.subr.bf16.mxu0 0
  %1518 = vmatpush1.bf16.msra.mxu0 0
  %1519 = vmatprep.subr.bf16.mxu0 0
  %1520 = vmatpush1.bf16.msra.mxu0 0
  %1521 = vmatprep.subr.bf16.mxu0 0
  %1522 = vmatpush1.bf16.msra.mxu0 0
  %1523 = vmatprep.subr.bf16.mxu0 0
  %1524 = vmatpush1.bf16.msra.mxu0 0
  %1525 = vmatprep.subr.bf16.mxu0 0
  %1526 = vmatpush1.bf16.msra.mxu0 0
  %1527 = vmatprep.subr.bf16.mxu0 0
  %1528 = vmatpush1.bf16.msra.mxu0 0
  %1529 = vmatprep.subr.bf16.mxu0 0
  %1530 = vmatpush1.bf16.msra.mxu0 0
  %1531 = vmatprep.subr.bf16.mxu0 0
  %1532 = vmatpush1.bf16.msra.mxu0 0
  %1533 = vmatprep.subr.bf16.mxu0 0
  %1534 = vmatpush1.bf16.msra.mxu0 0
  %1535 = vmatprep.subr.bf16.mxu0 0
  %1536 = vmatpush1.bf16.msra.mxu0 0
  %1537 = vmatprep.subr.bf16.mxu0 0
  %1538 = vmatpush1.bf16.msra.mxu0 0
  %1539 = vmatprep.subr.bf16.mxu0 0
  %1540 = vmatpush1.bf16.msra.mxu0 0
  %1541 = vmatprep.subr.bf16.mxu0 0
  %1542 = vmatpush1.bf16.msra.mxu0 0
  %1543 = vmatprep.subr.bf16.mxu0 0
  %1544 = vmatpush1.bf16.msra.mxu0 0
  %1545 = vmatprep.subr.bf16.mxu0 0
  %1546 = vmatpush1.bf16.msra.mxu0 0
  %1547 = vmatprep.mubr.bf16.mxu0 0
  %1548 = vmatmul.mubr.bf16.gmra.mrb[0].mxu0 %v1510
  %v1549 = vpop.f32.mrb[0].mxu0
  %v1550 = vadd.f32 0.0, %v1549
  %v1551 = vpop.f32.mrb[0].mxu0
  %v1552 = vpop.f32.mrb[0].mxu0
  %v1553 = vpop.f32.mrb[0].mxu0
  %1554 = vdwg.mxu0
  %v1556 = vsel %vm751, %v1508, 0
  %v1559 = vsel %vm58, %v1392, 0
  %1561 = vmatprep.subr.bf16.mxu0 0
  %1562 = vmatpush1.bf16.msra.mxu0 %v1559
  %1563 = vmatprep.subr.bf16.mxu0 0
  %1564 = vmatpush1.bf16.msra.mxu0 0
  %1565 = vmatprep.subr.bf16.mxu0 0
  %1566 = vmatpush1.bf16.msra.mxu0 0
  %1567 = vmatprep.subr.bf16.mxu0 0
  %1568 = vmatpush1.bf16.msra.mxu0 0
  %1569 = vmatprep.subr.bf16.mxu0 0
  %1570 = vmatpush1.bf16.msra.mxu0 0
  %1571 = vmatprep.subr.bf16.mxu0 0
  %1572 = vmatpush1.bf16.msra.mxu0 0
  %1573 = vmatprep.subr.bf16.mxu0 0
  %1574 = vmatpush1.bf16.msra.mxu0 0
  %1575 = vmatprep.subr.bf16.mxu0 0
  %1576 = vmatpush1.bf16.msra.mxu0 0
  %1577 = vmatprep.subr.bf16.mxu0 0
  %1578 = vmatpush1.bf16.msra.mxu0 0
  %1579 = vmatprep.subr.bf16.mxu0 0
  %1580 = vmatpush1.bf16.msra.mxu0 0
  %1581 = vmatprep.subr.bf16.mxu0 0
  %1582 = vmatpush1.bf16.msra.mxu0 0
  %1583 = vmatprep.subr.bf16.mxu0 0
  %1584 = vmatpush1.bf16.msra.mxu0 0
  %1585 = vmatprep.subr.bf16.mxu0 0
  %1586 = vmatpush1.bf16.msra.mxu0 0
  %1587 = vmatprep.subr.bf16.mxu0 0
  %1588 = vmatpush1.bf16.msra.mxu0 0
  %1589 = vmatprep.subr.bf16.mxu0 0
  %1590 = vmatpush1.bf16.msra.mxu0 0
  %1591 = vmatprep.subr.bf16.mxu0 0
  %1592 = vmatpush1.bf16.msra.mxu0 0
  %1593 = vmatprep.mubr.bf16.mxu0 0
  %1594 = vmatmul.mubr.bf16.gmra.mrb[0].mxu0 %v1556
  %v1595 = vpop.f32.mrb[0].mxu0
  %v1596 = vadd.f32 0.0, %v1595
  %v1597 = vpop.f32.mrb[0].mxu0
  %v1598 = vpop.f32.mrb[0].mxu0
  %v1599 = vpop.f32.mrb[0].mxu0
  %1600 = vdwg.mxu0
  %v1601 = vpack.c.bf16 %v1596, %v1550
  %s1602 = scalar_lea.vmem %s7, 64
  %v1603 = vld [vmem:[%s1602] sm:$0xff]
  %v1604 = vld [vmem:[%s1602 + $0x8] sm:$0xff]
  %v1605 = vld [vmem:[%s1602 + $0x10] sm:$0xff]
  %v1606 = vld [vmem:[%s1602 + $0x18] sm:$0xff]
  %v1607 = vld [vmem:[%s1602 + $0x20] sm:$0xff]
  %v1608 = vld [vmem:[%s1602 + $0x28] sm:$0xff]
  %v1609 = vld [vmem:[%s1602 + $0x30] sm:$0xff]
  %v1610 = vld [vmem:[%s1602 + $0x38] sm:$0xff]
  %v1619 = vunpack.c.l.b16 %v1603
  %v1620 = vunpack.c.h.b16 %v1603
  %v1621 = vunpack.c.l.b16 %v1604
  %v1622 = vunpack.c.h.b16 %v1604
  %v1623 = vunpack.c.l.b16 %v1605
  %v1624 = vunpack.c.h.b16 %v1605
  %v1625 = vunpack.c.l.b16 %v1606
  %v1626 = vunpack.c.h.b16 %v1606
  %v1627 = vunpack.c.l.b16 %v1607
  %v1628 = vunpack.c.h.b16 %v1607
  %v1629 = vunpack.c.l.b16 %v1608
  %v1630 = vunpack.c.h.b16 %v1608
  %v1631 = vunpack.c.l.b16 %v1609
  %v1632 = vunpack.c.h.b16 %v1609
  %v1633 = vunpack.c.l.b16 %v1610
  %v1634 = vunpack.c.h.b16 %v1610
  %v1635 = vpack.c.b16 %v1621, %v1619
  %v1636 = vpack.c.b16 %v1622, %v1620
  %v1637 = vpack.c.b16 %v1625, %v1623
  %v1638 = vpack.c.b16 %v1626, %v1624
  %v1639 = vpack.c.b16 %v1629, %v1627
  %v1640 = vpack.c.b16 %v1630, %v1628
  %v1641 = vpack.c.b16 %v1633, %v1631
  %v1642 = vpack.c.b16 %v1634, %v1632
  %v1652 = vsel %vm658, %v1601, 0
  %1654 = vmatprep.subr.bf16.mxu0 %v1636
  %1655 = vmatpush1.bf16.msra.mxu0 %v1635
  %1656 = vmatprep.subr.bf16.mxu0 %v1638
  %1657 = vmatpush1.bf16.msra.mxu0 %v1637
  %1658 = vmatprep.subr.bf16.mxu0 %v1640
  %1659 = vmatpush1.bf16.msra.mxu0 %v1639
  %1660 = vmatprep.subr.bf16.mxu0 %v1642
  %1661 = vmatpush1.bf16.msra.mxu0 %v1641
  %1662 = vmatprep.subr.bf16.mxu0 0
  %1663 = vmatpush1.bf16.msra.mxu0 0
  %1664 = vmatprep.subr.bf16.mxu0 0
  %1665 = vmatpush1.bf16.msra.mxu0 0
  %1666 = vmatprep.subr.bf16.mxu0 0
  %1667 = vmatpush1.bf16.msra.mxu0 0
  %1668 = vmatprep.subr.bf16.mxu0 0
  %1669 = vmatpush1.bf16.msra.mxu0 0
  %1670 = vmatprep.subr.bf16.mxu0 0
  %1671 = vmatpush1.bf16.msra.mxu0 0
  %1672 = vmatprep.subr.bf16.mxu0 0
  %1673 = vmatpush1.bf16.msra.mxu0 0
  %1674 = vmatprep.subr.bf16.mxu0 0
  %1675 = vmatpush1.bf16.msra.mxu0 0
  %1676 = vmatprep.subr.bf16.mxu0 0
  %1677 = vmatpush1.bf16.msra.mxu0 0
  %1678 = vmatprep.subr.bf16.mxu0 0
  %1679 = vmatpush1.bf16.msra.mxu0 0
  %1680 = vmatprep.subr.bf16.mxu0 0
  %1681 = vmatpush1.bf16.msra.mxu0 0
  %1682 = vmatprep.subr.bf16.mxu0 0
  %1683 = vmatpush1.bf16.msra.mxu0 0
  %1684 = vmatprep.subr.bf16.mxu0 0
  %1685 = vmatpush1.bf16.msra.mxu0 0
  %1686 = vmatprep.mubr.bf16.mxu0 0
  %1687 = vmatmul.mubr.bf16.gmra.mrb[0].mxu0 %v1652
  %v1688 = vpop.f32.mrb[0].mxu0
  %v1689 = vadd.f32 0.0, %v1688
  %v1690 = vpop.f32.mrb[0].mxu0
  %v1691 = vadd.f32 0.0, %v1690
  %v1692 = vpop.f32.mrb[0].mxu0
  %v1693 = vadd.f32 0.0, %v1692
  %v1694 = vpop.f32.mrb[0].mxu0
  %v1695 = vadd.f32 0.0, %v1694
  %1696 = vdwg.mxu0
  %v1705 = vunpack.c.l.b16 %v869
  %v1706 = vunpack.c.h.b16 %v869
  %v1707 = vunpack.c.l.b16 %v870
  %v1708 = vunpack.c.h.b16 %v870
  %v1709 = vunpack.c.l.b16 %v871
  %v1710 = vunpack.c.h.b16 %v871
  %v1711 = vunpack.c.l.b16 %v872
  %v1712 = vunpack.c.h.b16 %v872
  %v1713 = vunpack.c.l.b16 %v873
  %v1714 = vunpack.c.h.b16 %v873
  %v1715 = vunpack.c.l.b16 %v874
  %v1716 = vunpack.c.h.b16 %v874
  %v1717 = vunpack.c.l.b16 %v875
  %v1718 = vunpack.c.h.b16 %v875
  %v1719 = vunpack.c.l.b16 %v876
  %v1720 = vunpack.c.h.b16 %v876
  %v1721 = vpack.c.b16 %v1707, %v1705
  %v1722 = vpack.c.b16 %v1708, %v1706
  %v1723 = vpack.c.b16 %v1711, %v1709
  %v1724 = vpack.c.b16 %v1712, %v1710
  %v1725 = vpack.c.b16 %v1715, %v1713
  %v1726 = vpack.c.b16 %v1716, %v1714
  %v1727 = vpack.c.b16 %v1719, %v1717
  %v1728 = vpack.c.b16 %v1720, %v1718
  %v1738 = vsel %vm658, %v868, 0
  %1740 = vmatprep.subr.bf16.mxu0 %v1722
  %1741 = vmatpush1.bf16.msra.mxu0 %v1721
  %1742 = vmatprep.subr.bf16.mxu0 %v1724
  %1743 = vmatpush1.bf16.msra.mxu0 %v1723
  %1744 = vmatprep.subr.bf16.mxu0 %v1726
  %1745 = vmatpush1.bf16.msra.mxu0 %v1725
  %1746 = vmatprep.subr.bf16.mxu0 %v1728
  %1747 = vmatpush1.bf16.msra.mxu0 %v1727
  %1748 = vmatprep.subr.bf16.mxu0 0
  %1749 = vmatpush1.bf16.msra.mxu0 0
  %1750 = vmatprep.subr.bf16.mxu0 0
  %1751 = vmatpush1.bf16.msra.mxu0 0
  %1752 = vmatprep.subr.bf16.mxu0 0
  %1753 = vmatpush1.bf16.msra.mxu0 0
  %1754 = vmatprep.subr.bf16.mxu0 0
  %1755 = vmatpush1.bf16.msra.mxu0 0
  %1756 = vmatprep.subr.bf16.mxu0 0
  %1757 = vmatpush1.bf16.msra.mxu0 0
  %1758 = vmatprep.subr.bf16.mxu0 0
  %1759 = vmatpush1.bf16.msra.mxu0 0
  %1760 = vmatprep.subr.bf16.mxu0 0
  %1761 = vmatpush1.bf16.msra.mxu0 0
  %1762 = vmatprep.subr.bf16.mxu0 0
  %1763 = vmatpush1.bf16.msra.mxu0 0
  %1764 = vmatprep.subr.bf16.mxu0 0
  %1765 = vmatpush1.bf16.msra.mxu0 0
  %1766 = vmatprep.subr.bf16.mxu0 0
  %1767 = vmatpush1.bf16.msra.mxu0 0
  %1768 = vmatprep.subr.bf16.mxu0 0
  %1769 = vmatpush1.bf16.msra.mxu0 0
  %1770 = vmatprep.subr.bf16.mxu0 0
  %1771 = vmatpush1.bf16.msra.mxu0 0
  %1772 = vmatprep.mubr.bf16.mxu0 0
  %1773 = vmatmul.mubr.bf16.gmra.mrb[0].mxu0 %v1738
  %v1774 = vpop.f32.mrb[0].mxu0
  %v1775 = vadd.f32 %v1689, %v1774
  %v1776 = vpop.f32.mrb[0].mxu0
  %v1777 = vadd.f32 %v1691, %v1776
  %v1778 = vpop.f32.mrb[0].mxu0
  %v1779 = vadd.f32 %v1693, %v1778
  %v1780 = vpop.f32.mrb[0].mxu0
  %v1781 = vadd.f32 %v1695, %v1780
  %1782 = vdwg.mxu0
  %s1783 = scalar_lea.vmem %s4, 256
  %v1784 = vld [vmem:[%s1783] sm:$0xf]
  %v1785 = vld [vmem:[%s1783 + $0x4] sm:$0xf]
  %v1786 = vld [vmem:[%s1783 + $0x8] sm:$0xf]
  %v1787 = vld [vmem:[%s1783 + $0xc] sm:$0xf]
  %v1788 = vld [vmem:[%s1783 + $0x10] sm:$0xf]
  %v1789 = vld [vmem:[%s1783 + $0x14] sm:$0xf]
  %v1790 = vld [vmem:[%s1783 + $0x18] sm:$0xf]
  %v1791 = vld [vmem:[%s1783 + $0x1c] sm:$0xf]
  %v1792 = vld [vmem:[%s1783 + $0x20] sm:$0xf]
  %v1793 = vld [vmem:[%s1783 + $0x24] sm:$0xf]
  %v1794 = vld [vmem:[%s1783 + $0x28] sm:$0xf]
  %v1795 = vld [vmem:[%s1783 + $0x2c] sm:$0xf]
  %v1796 = vld [vmem:[%s1783 + $0x30] sm:$0xf]
  %v1797 = vld [vmem:[%s1783 + $0x34] sm:$0xf]
  %v1798 = vld [vmem:[%s1783 + $0x38] sm:$0xf]
  %v1799 = vld [vmem:[%s1783 + $0x3c] sm:$0xf]
  %v1800 = vld [vmem:[%s1783 + $0x40] sm:$0xf]
  %v1801 = vld [vmem:[%s1783 + $0x44] sm:$0xf]
  %v1802 = vld [vmem:[%s1783 + $0x48] sm:$0xf]
  %v1803 = vld [vmem:[%s1783 + $0x4c] sm:$0xf]
  %v1804 = vld [vmem:[%s1783 + $0x50] sm:$0xf]
  %v1805 = vld [vmem:[%s1783 + $0x54] sm:$0xf]
  %v1806 = vld [vmem:[%s1783 + $0x58] sm:$0xf]
  %v1807 = vld [vmem:[%s1783 + $0x5c] sm:$0xf]
  %v1808 = vld [vmem:[%s1783 + $0x60] sm:$0xf]
  %v1809 = vld [vmem:[%s1783 + $0x64] sm:$0xf]
  %v1810 = vld [vmem:[%s1783 + $0x68] sm:$0xf]
  %v1811 = vld [vmem:[%s1783 + $0x6c] sm:$0xf]
  %v1812 = vld [vmem:[%s1783 + $0x70] sm:$0xf]
  %v1813 = vld [vmem:[%s1783 + $0x74] sm:$0xf]
  %v1814 = vld [vmem:[%s1783 + $0x78] sm:$0xf]
  %v1815 = vld [vmem:[%s1783 + $0x7c] sm:$0xf]
  %v1848 = vunpack.c.l.b16 %v1784
  %v1849 = vunpack.c.l.b16 %v1785
  %v1850 = vunpack.c.l.b16 %v1786
  %v1851 = vunpack.c.l.b16 %v1787
  %v1852 = vunpack.c.l.b16 %v1788
  %v1853 = vunpack.c.l.b16 %v1789
  %v1854 = vunpack.c.l.b16 %v1790
  %v1855 = vunpack.c.l.b16 %v1791
  %v1856 = vunpack.c.l.b16 %v1792
  %v1857 = vunpack.c.l.b16 %v1793
  %v1858 = vunpack.c.l.b16 %v1794
  %v1859 = vunpack.c.l.b16 %v1795
  %v1860 = vunpack.c.l.b16 %v1796
  %v1861 = vunpack.c.l.b16 %v1797
  %v1862 = vunpack.c.l.b16 %v1798
  %v1863 = vunpack.c.l.b16 %v1799
  %v1864 = vunpack.c.l.b16 %v1800
  %v1865 = vunpack.c.l.b16 %v1801
  %v1866 = vunpack.c.l.b16 %v1802
  %v1867 = vunpack.c.l.b16 %v1803
  %v1868 = vunpack.c.l.b16 %v1804
  %v1869 = vunpack.c.l.b16 %v1805
  %v1870 = vunpack.c.l.b16 %v1806
  %v1871 = vunpack.c.l.b16 %v1807
  %v1872 = vunpack.c.l.b16 %v1808
  %v1873 = vunpack.c.l.b16 %v1809
  %v1874 = vunpack.c.l.b16 %v1810
  %v1875 = vunpack.c.l.b16 %v1811
  %v1876 = vunpack.c.l.b16 %v1812
  %v1877 = vunpack.c.l.b16 %v1813
  %v1878 = vunpack.c.l.b16 %v1814
  %v1879 = vunpack.c.l.b16 %v1815
  %v1880 = vpack.c.b16 %v1849, %v1848
  %v1881 = vpack.c.b16 %v1851, %v1850
  %v1882 = vpack.c.b16 %v1853, %v1852
  %v1883 = vpack.c.b16 %v1855, %v1854
  %v1884 = vpack.c.b16 %v1857, %v1856
  %v1885 = vpack.c.b16 %v1859, %v1858
  %v1886 = vpack.c.b16 %v1861, %v1860
  %v1887 = vpack.c.b16 %v1863, %v1862
  %v1888 = vpack.c.b16 %v1865, %v1864
  %v1889 = vpack.c.b16 %v1867, %v1866
  %v1890 = vpack.c.b16 %v1869, %v1868
  %v1891 = vpack.c.b16 %v1871, %v1870
  %v1892 = vpack.c.b16 %v1873, %v1872
  %v1893 = vpack.c.b16 %v1875, %v1874
  %v1894 = vpack.c.b16 %v1877, %v1876
  %v1895 = vpack.c.b16 %v1879, %v1878
  %1912 = vmatprep.subr.bf16.mxu0 0
  %1913 = vmatpush1.bf16.msra.mxu0 %v1880
  %1914 = vmatprep.subr.bf16.mxu0 0
  %1915 = vmatpush1.bf16.msra.mxu0 %v1881
  %1916 = vmatprep.subr.bf16.mxu0 0
  %1917 = vmatpush1.bf16.msra.mxu0 %v1882
  %1918 = vmatprep.subr.bf16.mxu0 0
  %1919 = vmatpush1.bf16.msra.mxu0 %v1883
  %1920 = vmatprep.subr.bf16.mxu0 0
  %1921 = vmatpush1.bf16.msra.mxu0 %v1884
  %1922 = vmatprep.subr.bf16.mxu0 0
  %1923 = vmatpush1.bf16.msra.mxu0 %v1885
  %1924 = vmatprep.subr.bf16.mxu0 0
  %1925 = vmatpush1.bf16.msra.mxu0 %v1886
  %1926 = vmatprep.subr.bf16.mxu0 0
  %1927 = vmatpush1.bf16.msra.mxu0 %v1887
  %1928 = vmatprep.subr.bf16.mxu0 0
  %1929 = vmatpush1.bf16.msra.mxu0 %v1888
  %1930 = vmatprep.subr.bf16.mxu0 0
  %1931 = vmatpush1.bf16.msra.mxu0 %v1889
  %1932 = vmatprep.subr.bf16.mxu0 0
  %1933 = vmatpush1.bf16.msra.mxu0 %v1890
  %1934 = vmatprep.subr.bf16.mxu0 0
  %1935 = vmatpush1.bf16.msra.mxu0 %v1891
  %1936 = vmatprep.subr.bf16.mxu0 0
  %1937 = vmatpush1.bf16.msra.mxu0 %v1892
  %1938 = vmatprep.subr.bf16.mxu0 0
  %1939 = vmatpush1.bf16.msra.mxu0 %v1893
  %1940 = vmatprep.subr.bf16.mxu0 0
  %1941 = vmatpush1.bf16.msra.mxu0 %v1894
  %1942 = vmatprep.subr.bf16.mxu0 0
  %1943 = vmatpush1.bf16.msra.mxu0 %v1895
  %1944 = vmatprep.mubr.bf16.mxu0 %v144
  %1945 = vmatmul.mubr.bf16.gmra.mrb[0].mxu0 %v143
  %v1946 = vpop.f32.mrb[0].mxu0
  %v1947 = vadd.f32 0.0, %v1946
  %v1948 = vpop.f32.mrb[0].mxu0
  %v1949 = vpop.f32.mrb[0].mxu0
  %v1950 = vadd.f32 0.0, %v1949
  %v1951 = vpop.f32.mrb[0].mxu0
  %1952 = vdwg.mxu0
  %s1953 = scalar_lea.vmem %s5, 256
  %v1954 = vld [vmem:[%s1953] sm:$0xf]
  %v1955 = vld [vmem:[%s1953 + $0x4] sm:$0xf]
  %v1956 = vld [vmem:[%s1953 + $0x8] sm:$0xf]
  %v1957 = vld [vmem:[%s1953 + $0xc] sm:$0xf]
  %v1958 = vld [vmem:[%s1953 + $0x10] sm:$0xf]
  %v1959 = vld [vmem:[%s1953 + $0x14] sm:$0xf]
  %v1960 = vld [vmem:[%s1953 + $0x18] sm:$0xf]
  %v1961 = vld [vmem:[%s1953 + $0x1c] sm:$0xf]
  %v1962 = vld [vmem:[%s1953 + $0x20] sm:$0xf]
  %v1963 = vld [vmem:[%s1953 + $0x24] sm:$0xf]
  %v1964 = vld [vmem:[%s1953 + $0x28] sm:$0xf]
  %v1965 = vld [vmem:[%s1953 + $0x2c] sm:$0xf]
  %v1966 = vld [vmem:[%s1953 + $0x30] sm:$0xf]
  %v1967 = vld [vmem:[%s1953 + $0x34] sm:$0xf]
  %v1968 = vld [vmem:[%s1953 + $0x38] sm:$0xf]
  %v1969 = vld [vmem:[%s1953 + $0x3c] sm:$0xf]
  %v1970 = vld [vmem:[%s1953 + $0x40] sm:$0xf]
  %v1971 = vld [vmem:[%s1953 + $0x44] sm:$0xf]
  %v1972 = vld [vmem:[%s1953 + $0x48] sm:$0xf]
  %v1973 = vld [vmem:[%s1953 + $0x4c] sm:$0xf]
  %v1974 = vld [vmem:[%s1953 + $0x50] sm:$0xf]
  %v1975 = vld [vmem:[%s1953 + $0x54] sm:$0xf]
  %v1976 = vld [vmem:[%s1953 + $0x58] sm:$0xf]
  %v1977 = vld [vmem:[%s1953 + $0x5c] sm:$0xf]
  %v1978 = vld [vmem:[%s1953 + $0x60] sm:$0xf]
  %v1979 = vld [vmem:[%s1953 + $0x64] sm:$0xf]
  %v1980 = vld [vmem:[%s1953 + $0x68] sm:$0xf]
  %v1981 = vld [vmem:[%s1953 + $0x6c] sm:$0xf]
  %v1982 = vld [vmem:[%s1953 + $0x70] sm:$0xf]
  %v1983 = vld [vmem:[%s1953 + $0x74] sm:$0xf]
  %v1984 = vld [vmem:[%s1953 + $0x78] sm:$0xf]
  %v1985 = vld [vmem:[%s1953 + $0x7c] sm:$0xf]
  %v2018 = vunpack.c.l.b16 %v1954
  %v2019 = vunpack.c.l.b16 %v1955
  %v2020 = vunpack.c.l.b16 %v1956
  %v2021 = vunpack.c.l.b16 %v1957
  %v2022 = vunpack.c.l.b16 %v1958
  %v2023 = vunpack.c.l.b16 %v1959
  %v2024 = vunpack.c.l.b16 %v1960
  %v2025 = vunpack.c.l.b16 %v1961
  %v2026 = vunpack.c.l.b16 %v1962
  %v2027 = vunpack.c.l.b16 %v1963
  %v2028 = vunpack.c.l.b16 %v1964
  %v2029 = vunpack.c.l.b16 %v1965
  %v2030 = vunpack.c.l.b16 %v1966
  %v2031 = vunpack.c.l.b16 %v1967
  %v2032 = vunpack.c.l.b16 %v1968
  %v2033 = vunpack.c.l.b16 %v1969
  %v2034 = vunpack.c.l.b16 %v1970
  %v2035 = vunpack.c.l.b16 %v1971
  %v2036 = vunpack.c.l.b16 %v1972
  %v2037 = vunpack.c.l.b16 %v1973
  %v2038 = vunpack.c.l.b16 %v1974
  %v2039 = vunpack.c.l.b16 %v1975
  %v2040 = vunpack.c.l.b16 %v1976
  %v2041 = vunpack.c.l.b16 %v1977
  %v2042 = vunpack.c.l.b16 %v1978
  %v2043 = vunpack.c.l.b16 %v1979
  %v2044 = vunpack.c.l.b16 %v1980
  %v2045 = vunpack.c.l.b16 %v1981
  %v2046 = vunpack.c.l.b16 %v1982
  %v2047 = vunpack.c.l.b16 %v1983
  %v2048 = vunpack.c.l.b16 %v1984
  %v2049 = vunpack.c.l.b16 %v1985
  %v2050 = vpack.c.b16 %v2019, %v2018
  %v2051 = vpack.c.b16 %v2021, %v2020
  %v2052 = vpack.c.b16 %v2023, %v2022
  %v2053 = vpack.c.b16 %v2025, %v2024
  %v2054 = vpack.c.b16 %v2027, %v2026
  %v2055 = vpack.c.b16 %v2029, %v2028
  %v2056 = vpack.c.b16 %v2031, %v2030
  %v2057 = vpack.c.b16 %v2033, %v2032
  %v2058 = vpack.c.b16 %v2035, %v2034
  %v2059 = vpack.c.b16 %v2037, %v2036
  %v2060 = vpack.c.b16 %v2039, %v2038
  %v2061 = vpack.c.b16 %v2041, %v2040
  %v2062 = vpack.c.b16 %v2043, %v2042
  %v2063 = vpack.c.b16 %v2045, %v2044
  %v2064 = vpack.c.b16 %v2047, %v2046
  %v2065 = vpack.c.b16 %v2049, %v2048
  %2082 = vmatprep.subr.bf16.mxu0 0
  %2083 = vmatpush1.bf16.msra.mxu0 %v2050
  %2084 = vmatprep.subr.bf16.mxu0 0
  %2085 = vmatpush1.bf16.msra.mxu0 %v2051
  %2086 = vmatprep.subr.bf16.mxu0 0
  %2087 = vmatpush1.bf16.msra.mxu0 %v2052
  %2088 = vmatprep.subr.bf16.mxu0 0
  %2089 = vmatpush1.bf16.msra.mxu0 %v2053
  %2090 = vmatprep.subr.bf16.mxu0 0
  %2091 = vmatpush1.bf16.msra.mxu0 %v2054
  %2092 = vmatprep.subr.bf16.mxu0 0
  %2093 = vmatpush1.bf16.msra.mxu0 %v2055
  %2094 = vmatprep.subr.bf16.mxu0 0
  %2095 = vmatpush1.bf16.msra.mxu0 %v2056
  %2096 = vmatprep.subr.bf16.mxu0 0
  %2097 = vmatpush1.bf16.msra.mxu0 %v2057
  %2098 = vmatprep.subr.bf16.mxu0 0
  %2099 = vmatpush1.bf16.msra.mxu0 %v2058
  %2100 = vmatprep.subr.bf16.mxu0 0
  %2101 = vmatpush1.bf16.msra.mxu0 %v2059
  %2102 = vmatprep.subr.bf16.mxu0 0
  %2103 = vmatpush1.bf16.msra.mxu0 %v2060
  %2104 = vmatprep.subr.bf16.mxu0 0
  %2105 = vmatpush1.bf16.msra.mxu0 %v2061
  %2106 = vmatprep.subr.bf16.mxu0 0
  %2107 = vmatpush1.bf16.msra.mxu0 %v2062
  %2108 = vmatprep.subr.bf16.mxu0 0
  %2109 = vmatpush1.bf16.msra.mxu0 %v2063
  %2110 = vmatprep.subr.bf16.mxu0 0
  %2111 = vmatpush1.bf16.msra.mxu0 %v2064
  %2112 = vmatprep.subr.bf16.mxu0 0
  %2113 = vmatpush1.bf16.msra.mxu0 %v2065
  %2114 = vmatprep.mubr.bf16.mxu0 %v144
  %2115 = vmatmul.mubr.bf16.gmra.mrb[0].mxu0 %v143
  %v2116 = vpop.f32.mrb[0].mxu0
  %v2117 = vadd.f32 0.0, %v2116
  %v2118 = vpop.f32.mrb[0].mxu0
  %v2119 = vpop.f32.mrb[0].mxu0
  %v2120 = vadd.f32 0.0, %v2119
  %v2121 = vpop.f32.mrb[0].mxu0
  %2122 = vdwg.mxu0
  %s2123 = scalar_lea.vmem %s6, 256
  %v2124 = vld [vmem:[%s2123] sm:$0xf]
  %v2125 = vld [vmem:[%s2123 + $0x4] sm:$0xf]
  %v2126 = vld [vmem:[%s2123 + $0x8] sm:$0xf]
  %v2127 = vld [vmem:[%s2123 + $0xc] sm:$0xf]
  %v2128 = vld [vmem:[%s2123 + $0x10] sm:$0xf]
  %v2129 = vld [vmem:[%s2123 + $0x14] sm:$0xf]
  %v2130 = vld [vmem:[%s2123 + $0x18] sm:$0xf]
  %v2131 = vld [vmem:[%s2123 + $0x1c] sm:$0xf]
  %v2132 = vld [vmem:[%s2123 + $0x20] sm:$0xf]
  %v2133 = vld [vmem:[%s2123 + $0x24] sm:$0xf]
  %v2134 = vld [vmem:[%s2123 + $0x28] sm:$0xf]
  %v2135 = vld [vmem:[%s2123 + $0x2c] sm:$0xf]
  %v2136 = vld [vmem:[%s2123 + $0x30] sm:$0xf]
  %v2137 = vld [vmem:[%s2123 + $0x34] sm:$0xf]
  %v2138 = vld [vmem:[%s2123 + $0x38] sm:$0xf]
  %v2139 = vld [vmem:[%s2123 + $0x3c] sm:$0xf]
  %v2140 = vld [vmem:[%s2123 + $0x40] sm:$0xf]
  %v2141 = vld [vmem:[%s2123 + $0x44] sm:$0xf]
  %v2142 = vld [vmem:[%s2123 + $0x48] sm:$0xf]
  %v2143 = vld [vmem:[%s2123 + $0x4c] sm:$0xf]
  %v2144 = vld [vmem:[%s2123 + $0x50] sm:$0xf]
  %v2145 = vld [vmem:[%s2123 + $0x54] sm:$0xf]
  %v2146 = vld [vmem:[%s2123 + $0x58] sm:$0xf]
  %v2147 = vld [vmem:[%s2123 + $0x5c] sm:$0xf]
  %v2148 = vld [vmem:[%s2123 + $0x60] sm:$0xf]
  %v2149 = vld [vmem:[%s2123 + $0x64] sm:$0xf]
  %v2150 = vld [vmem:[%s2123 + $0x68] sm:$0xf]
  %v2151 = vld [vmem:[%s2123 + $0x6c] sm:$0xf]
  %v2152 = vld [vmem:[%s2123 + $0x70] sm:$0xf]
  %v2153 = vld [vmem:[%s2123 + $0x74] sm:$0xf]
  %v2154 = vld [vmem:[%s2123 + $0x78] sm:$0xf]
  %v2155 = vld [vmem:[%s2123 + $0x7c] sm:$0xf]
  %v2188 = vunpack.c.l.b16 %v2124
  %v2189 = vunpack.c.l.b16 %v2125
  %v2190 = vunpack.c.l.b16 %v2126
  %v2191 = vunpack.c.l.b16 %v2127
  %v2192 = vunpack.c.l.b16 %v2128
  %v2193 = vunpack.c.l.b16 %v2129
  %v2194 = vunpack.c.l.b16 %v2130
  %v2195 = vunpack.c.l.b16 %v2131
  %v2196 = vunpack.c.l.b16 %v2132
  %v2197 = vunpack.c.l.b16 %v2133
  %v2198 = vunpack.c.l.b16 %v2134
  %v2199 = vunpack.c.l.b16 %v2135
  %v2200 = vunpack.c.l.b16 %v2136
  %v2201 = vunpack.c.l.b16 %v2137
  %v2202 = vunpack.c.l.b16 %v2138
  %v2203 = vunpack.c.l.b16 %v2139
  %v2204 = vunpack.c.l.b16 %v2140
  %v2205 = vunpack.c.l.b16 %v2141
  %v2206 = vunpack.c.l.b16 %v2142
  %v2207 = vunpack.c.l.b16 %v2143
  %v2208 = vunpack.c.l.b16 %v2144
  %v2209 = vunpack.c.l.b16 %v2145
  %v2210 = vunpack.c.l.b16 %v2146
  %v2211 = vunpack.c.l.b16 %v2147
  %v2212 = vunpack.c.l.b16 %v2148
  %v2213 = vunpack.c.l.b16 %v2149
  %v2214 = vunpack.c.l.b16 %v2150
  %v2215 = vunpack.c.l.b16 %v2151
  %v2216 = vunpack.c.l.b16 %v2152
  %v2217 = vunpack.c.l.b16 %v2153
  %v2218 = vunpack.c.l.b16 %v2154
  %v2219 = vunpack.c.l.b16 %v2155
  %v2220 = vpack.c.b16 %v2189, %v2188
  %v2221 = vpack.c.b16 %v2191, %v2190
  %v2222 = vpack.c.b16 %v2193, %v2192
  %v2223 = vpack.c.b16 %v2195, %v2194
  %v2224 = vpack.c.b16 %v2197, %v2196
  %v2225 = vpack.c.b16 %v2199, %v2198
  %v2226 = vpack.c.b16 %v2201, %v2200
  %v2227 = vpack.c.b16 %v2203, %v2202
  %v2228 = vpack.c.b16 %v2205, %v2204
  %v2229 = vpack.c.b16 %v2207, %v2206
  %v2230 = vpack.c.b16 %v2209, %v2208
  %v2231 = vpack.c.b16 %v2211, %v2210
  %v2232 = vpack.c.b16 %v2213, %v2212
  %v2233 = vpack.c.b16 %v2215, %v2214
  %v2234 = vpack.c.b16 %v2217, %v2216
  %v2235 = vpack.c.b16 %v2219, %v2218
  %2252 = vmatprep.subr.bf16.mxu0 0
  %2253 = vmatpush1.bf16.msra.mxu0 %v2220
  %2254 = vmatprep.subr.bf16.mxu0 0
  %2255 = vmatpush1.bf16.msra.mxu0 %v2221
  %2256 = vmatprep.subr.bf16.mxu0 0
  %2257 = vmatpush1.bf16.msra.mxu0 %v2222
  %2258 = vmatprep.subr.bf16.mxu0 0
  %2259 = vmatpush1.bf16.msra.mxu0 %v2223
  %2260 = vmatprep.subr.bf16.mxu0 0
  %2261 = vmatpush1.bf16.msra.mxu0 %v2224
  %2262 = vmatprep.subr.bf16.mxu0 0
  %2263 = vmatpush1.bf16.msra.mxu0 %v2225
  %2264 = vmatprep.subr.bf16.mxu0 0
  %2265 = vmatpush1.bf16.msra.mxu0 %v2226
  %2266 = vmatprep.subr.bf16.mxu0 0
  %2267 = vmatpush1.bf16.msra.mxu0 %v2227
  %2268 = vmatprep.subr.bf16.mxu0 0
  %2269 = vmatpush1.bf16.msra.mxu0 %v2228
  %2270 = vmatprep.subr.bf16.mxu0 0
  %2271 = vmatpush1.bf16.msra.mxu0 %v2229
  %2272 = vmatprep.subr.bf16.mxu0 0
  %2273 = vmatpush1.bf16.msra.mxu0 %v2230
  %2274 = vmatprep.subr.bf16.mxu0 0
  %2275 = vmatpush1.bf16.msra.mxu0 %v2231
  %2276 = vmatprep.subr.bf16.mxu0 0
  %2277 = vmatpush1.bf16.msra.mxu0 %v2232
  %2278 = vmatprep.subr.bf16.mxu0 0
  %2279 = vmatpush1.bf16.msra.mxu0 %v2233
  %2280 = vmatprep.subr.bf16.mxu0 0
  %2281 = vmatpush1.bf16.msra.mxu0 %v2234
  %2282 = vmatprep.subr.bf16.mxu0 0
  %2283 = vmatpush1.bf16.msra.mxu0 %v2235
  %2284 = vmatprep.mubr.bf16.mxu0 %v144
  %2285 = vmatmul.mubr.bf16.gmra.mrb[0].mxu0 %v143
  %v2286 = vpop.f32.mrb[0].mxu0
  %v2287 = vadd.f32 0.0, %v2286
  %v2288 = vpop.f32.mrb[0].mxu0
  %v2289 = vpop.f32.mrb[0].mxu0
  %v2290 = vadd.f32 0.0, %v2289
  %v2291 = vpop.f32.mrb[0].mxu0
  %2292 = vdwg.mxu0
  %v2293 = vpack.c.bf16 %v1947, %v1947
  %v2294 = vpack.c.bf16 %v1950, %v1950
  %v2295 = vpack.c.bf16 %v2117, %v2117
  %v2296 = vpack.c.bf16 %v2120, %v2120
  %v2297 = vpack.c.bf16 %v2287, %v2287
  %v2298 = vpack.c.bf16 %v2290, %v2290
  %v2300 = vsel %vm658, %v2293, 0
  %v2303 = vsel %vm658, %v2295, 0
  %2305 = vmatprep.subr.bf16.mxu0 0
  %2306 = vmatpush1.bf16.xpose.msra.mxu0 %v2303
  %2307 = vmatprep.subr.bf16.mxu0 0
  %2308 = vmatpush1.bf16.xpose.msra.mxu0 0
  %2309 = vmatprep.subr.bf16.mxu0 0
  %2310 = vmatpush1.bf16.xpose.msra.mxu0 0
  %2311 = vmatprep.subr.bf16.mxu0 0
  %2312 = vmatpush1.bf16.xpose.msra.mxu0 0
  %2313 = vmatprep.subr.bf16.mxu0 0
  %2314 = vmatpush1.bf16.xpose.msra.mxu0 0
  %2315 = vmatprep.subr.bf16.mxu0 0
  %2316 = vmatpush1.bf16.xpose.msra.mxu0 0
  %2317 = vmatprep.subr.bf16.mxu0 0
  %2318 = vmatpush1.bf16.xpose.msra.mxu0 0
  %2319 = vmatprep.subr.bf16.mxu0 0
  %2320 = vmatpush1.bf16.xpose.msra.mxu0 0
  %2321 = vmatprep.subr.bf16.mxu0 0
  %2322 = vmatpush1.bf16.xpose.msra.mxu0 0
  %2323 = vmatprep.subr.bf16.mxu0 0
  %2324 = vmatpush1.bf16.xpose.msra.mxu0 0
  %2325 = vmatprep.subr.bf16.mxu0 0
  %2326 = vmatpush1.bf16.xpose.msra.mxu0 0
  %2327 = vmatprep.subr.bf16.mxu0 0
  %2328 = vmatpush1.bf16.xpose.msra.mxu0 0
  %2329 = vmatprep.subr.bf16.mxu0 0
  %2330 = vmatpush1.bf16.xpose.msra.mxu0 0
  %2331 = vmatprep.subr.bf16.mxu0 0
  %2332 = vmatpush1.bf16.xpose.msra.mxu0 0
  %2333 = vmatprep.subr.bf16.mxu0 0
  %2334 = vmatpush1.bf16.xpose.msra.mxu0 0
  %2335 = vmatprep.subr.bf16.mxu0 0
  %2336 = vmatpush1.bf16.xpose.msra.mxu0 0
  %2337 = vmatprep.mubr.bf16.mxu0 0
  %2338 = vmatmul.mubr.bf16.gmra.mrb[0].mxu0 %v2300
  %v2339 = vpop.f32.mrb[0].mxu0
  %v2340 = vadd.f32 %v142, %v2339
  %v2341 = vpop.f32.mrb[0].mxu0
  %v2342 = vpop.f32.mrb[0].mxu0
  %v2343 = vpop.f32.mrb[0].mxu0
  %2344 = vdwg.mxu0
  %v2346 = vsel %vm658, %v2294, 0
  %v2349 = vsel %vm658, %v2296, 0
  %2351 = vmatprep.subr.bf16.mxu0 0
  %2352 = vmatpush1.bf16.xpose.msra.mxu0 %v2349
  %2353 = vmatprep.subr.bf16.mxu0 0
  %2354 = vmatpush1.bf16.xpose.msra.mxu0 0
  %2355 = vmatprep.subr.bf16.mxu0 0
  %2356 = vmatpush1.bf16.xpose.msra.mxu0 0
  %2357 = vmatprep.subr.bf16.mxu0 0
  %2358 = vmatpush1.bf16.xpose.msra.mxu0 0
  %2359 = vmatprep.subr.bf16.mxu0 0
  %2360 = vmatpush1.bf16.xpose.msra.mxu0 0
  %2361 = vmatprep.subr.bf16.mxu0 0
  %2362 = vmatpush1.bf16.xpose.msra.mxu0 0
  %2363 = vmatprep.subr.bf16.mxu0 0
  %2364 = vmatpush1.bf16.xpose.msra.mxu0 0
  %2365 = vmatprep.subr.bf16.mxu0 0
  %2366 = vmatpush1.bf16.xpose.msra.mxu0 0
  %2367 = vmatprep.subr.bf16.mxu0 0
  %2368 = vmatpush1.bf16.xpose.msra.mxu0 0
  %2369 = vmatprep.subr.bf16.mxu0 0
  %2370 = vmatpush1.bf16.xpose.msra.mxu0 0
  %2371 = vmatprep.subr.bf16.mxu0 0
  %2372 = vmatpush1.bf16.xpose.msra.mxu0 0
  %2373 = vmatprep.subr.bf16.mxu0 0
  %2374 = vmatpush1.bf16.xpose.msra.mxu0 0
  %2375 = vmatprep.subr.bf16.mxu0 0
  %2376 = vmatpush1.bf16.xpose.msra.mxu0 0
  %2377 = vmatprep.subr.bf16.mxu0 0
  %2378 = vmatpush1.bf16.xpose.msra.mxu0 0
  %2379 = vmatprep.subr.bf16.mxu0 0
  %2380 = vmatpush1.bf16.xpose.msra.mxu0 0
  %2381 = vmatprep.subr.bf16.mxu0 0
  %2382 = vmatpush1.bf16.xpose.msra.mxu0 0
  %2383 = vmatprep.mubr.bf16.mxu0 0
  %2384 = vmatmul.mubr.bf16.gmra.mrb[0].mxu0 %v2346
  %v2385 = vpop.f32.mrb[0].mxu0
  %v2386 = vadd.f32 %v142, %v2385
  %v2387 = vpop.f32.mrb[0].mxu0
  %v2388 = vpop.f32.mrb[0].mxu0
  %v2389 = vpop.f32.mrb[0].mxu0
  %2390 = vdwg.mxu0
  %v2391 = vsel %vm751, %v2340, -inf
  %2392 = vmax.xlane.f32.xlu0 %v2391
  %v2393 = vpop.xlane.xlu0 %2392
  %v2394 = vsel %vm751, %v2386, -inf
  %2395 = vmax.xlane.f32.xlu0 %v2394
  %v2396 = vpop.xlane.xlu0 %2395
  %v2397 = vsub.f32 %v2340, %v2393
  %v2398 = vsub.f32 %v2386, %v2396
  %v2399 = vmul.f32 %v2397, 1.442695
  %v2400 = vpow.pop %v2399
  %v2401 = vmul.f32 %v2398, 1.442695
  %v2402 = vpow.pop %v2401
  %v2403 = vsel %vm751, %v2400, 0.0
  %2404 = vadd.xlane.f32.xlu0 %v2403
  %v2405 = vpop.xlane.xlu0 %2404
  %v2406 = vsel %vm751, %v2402, 0.0
  %2407 = vadd.xlane.f32.xlu0 %v2406
  %v2408 = vpop.xlane.xlu0 %2407
  %v2409 = vrcp.pop %v2405
  %v2410 = vrcp.pop %v2408
  %v2411 = vmul.f32 %v2400, %v2409
  %v2412 = vmul.f32 %v2402, %v2410
  %v2413 = vpack.c.bf16 %v2411, %v2411
  %v2414 = vpack.c.bf16 %v2412, %v2412
  %v2416 = vsel %vm751, %v2413, 0
  %v2419 = vsel %vm58, %v2297, 0
  %2421 = vmatprep.subr.bf16.mxu0 0
  %2422 = vmatpush1.bf16.msra.mxu0 %v2419
  %2423 = vmatprep.subr.bf16.mxu0 0
  %2424 = vmatpush1.bf16.msra.mxu0 0
  %2425 = vmatprep.subr.bf16.mxu0 0
  %2426 = vmatpush1.bf16.msra.mxu0 0
  %2427 = vmatprep.subr.bf16.mxu0 0
  %2428 = vmatpush1.bf16.msra.mxu0 0
  %2429 = vmatprep.subr.bf16.mxu0 0
  %2430 = vmatpush1.bf16.msra.mxu0 0
  %2431 = vmatprep.subr.bf16.mxu0 0
  %2432 = vmatpush1.bf16.msra.mxu0 0
  %2433 = vmatprep.subr.bf16.mxu0 0
  %2434 = vmatpush1.bf16.msra.mxu0 0
  %2435 = vmatprep.subr.bf16.mxu0 0
  %2436 = vmatpush1.bf16.msra.mxu0 0
  %2437 = vmatprep.subr.bf16.mxu0 0
  %2438 = vmatpush1.bf16.msra.mxu0 0
  %2439 = vmatprep.subr.bf16.mxu0 0
  %2440 = vmatpush1.bf16.msra.mxu0 0
  %2441 = vmatprep.subr.bf16.mxu0 0
  %2442 = vmatpush1.bf16.msra.mxu0 0
  %2443 = vmatprep.subr.bf16.mxu0 0
  %2444 = vmatpush1.bf16.msra.mxu0 0
  %2445 = vmatprep.subr.bf16.mxu0 0
  %2446 = vmatpush1.bf16.msra.mxu0 0
  %2447 = vmatprep.subr.bf16.mxu0 0
  %2448 = vmatpush1.bf16.msra.mxu0 0
  %2449 = vmatprep.subr.bf16.mxu0 0
  %2450 = vmatpush1.bf16.msra.mxu0 0
  %2451 = vmatprep.subr.bf16.mxu0 0
  %2452 = vmatpush1.bf16.msra.mxu0 0
  %2453 = vmatprep.mubr.bf16.mxu0 0
  %2454 = vmatmul.mubr.bf16.gmra.mrb[0].mxu0 %v2416
  %v2455 = vpop.f32.mrb[0].mxu0
  %v2456 = vadd.f32 0.0, %v2455
  %v2457 = vpop.f32.mrb[0].mxu0
  %v2458 = vpop.f32.mrb[0].mxu0
  %v2459 = vpop.f32.mrb[0].mxu0
  %2460 = vdwg.mxu0
  %v2462 = vsel %vm751, %v2414, 0
  %v2465 = vsel %vm58, %v2298, 0
  %2467 = vmatprep.subr.bf16.mxu0 0
  %2468 = vmatpush1.bf16.msra.mxu0 %v2465
  %2469 = vmatprep.subr.bf16.mxu0 0
  %2470 = vmatpush1.bf16.msra.mxu0 0
  %2471 = vmatprep.subr.bf16.mxu0 0
  %2472 = vmatpush1.bf16.msra.mxu0 0
  %2473 = vmatprep.subr.bf16.mxu0 0
  %2474 = vmatpush1.bf16.msra.mxu0 0
  %2475 = vmatprep.subr.bf16.mxu0 0
  %2476 = vmatpush1.bf16.msra.mxu0 0
  %2477 = vmatprep.subr.bf16.mxu0 0
  %2478 = vmatpush1.bf16.msra.mxu0 0
  %2479 = vmatprep.subr.bf16.mxu0 0
  %2480 = vmatpush1.bf16.msra.mxu0 0
  %2481 = vmatprep.subr.bf16.mxu0 0
  %2482 = vmatpush1.bf16.msra.mxu0 0
  %2483 = vmatprep.subr.bf16.mxu0 0
  %2484 = vmatpush1.bf16.msra.mxu0 0
  %2485 = vmatprep.subr.bf16.mxu0 0
  %2486 = vmatpush1.bf16.msra.mxu0 0
  %2487 = vmatprep.subr.bf16.mxu0 0
  %2488 = vmatpush1.bf16.msra.mxu0 0
  %2489 = vmatprep.subr.bf16.mxu0 0
  %2490 = vmatpush1.bf16.msra.mxu0 0
  %2491 = vmatprep.subr.bf16.mxu0 0
  %2492 = vmatpush1.bf16.msra.mxu0 0
  %2493 = vmatprep.subr.bf16.mxu0 0
  %2494 = vmatpush1.bf16.msra.mxu0 0
  %2495 = vmatprep.subr.bf16.mxu0 0
  %2496 = vmatpush1.bf16.msra.mxu0 0
  %2497 = vmatprep.subr.bf16.mxu0 0
  %2498 = vmatpush1.bf16.msra.mxu0 0
  %2499 = vmatprep.mubr.bf16.mxu0 0
  %2500 = vmatmul.mubr.bf16.gmra.mrb[0].mxu0 %v2462
  %v2501 = vpop.f32.mrb[0].mxu0
  %v2502 = vadd.f32 0.0, %v2501
  %v2503 = vpop.f32.mrb[0].mxu0
  %v2504 = vpop.f32.mrb[0].mxu0
  %v2505 = vpop.f32.mrb[0].mxu0
  %2506 = vdwg.mxu0
  %v2507 = vpack.c.bf16 %v2502, %v2456
  %s2508 = scalar_lea.vmem %s7, 128
  %v2509 = vld [vmem:[%s2508] sm:$0xff]
  %v2510 = vld [vmem:[%s2508 + $0x8] sm:$0xff]
  %v2511 = vld [vmem:[%s2508 + $0x10] sm:$0xff]
  %v2512 = vld [vmem:[%s2508 + $0x18] sm:$0xff]
  %v2513 = vld [vmem:[%s2508 + $0x20] sm:$0xff]
  %v2514 = vld [vmem:[%s2508 + $0x28] sm:$0xff]
  %v2515 = vld [vmem:[%s2508 + $0x30] sm:$0xff]
  %v2516 = vld [vmem:[%s2508 + $0x38] sm:$0xff]
  %v2525 = vunpack.c.l.b16 %v2509
  %v2526 = vunpack.c.h.b16 %v2509
  %v2527 = vunpack.c.l.b16 %v2510
  %v2528 = vunpack.c.h.b16 %v2510
  %v2529 = vunpack.c.l.b16 %v2511
  %v2530 = vunpack.c.h.b16 %v2511
  %v2531 = vunpack.c.l.b16 %v2512
  %v2532 = vunpack.c.h.b16 %v2512
  %v2533 = vunpack.c.l.b16 %v2513
  %v2534 = vunpack.c.h.b16 %v2513
  %v2535 = vunpack.c.l.b16 %v2514
  %v2536 = vunpack.c.h.b16 %v2514
  %v2537 = vunpack.c.l.b16 %v2515
  %v2538 = vunpack.c.h.b16 %v2515
  %v2539 = vunpack.c.l.b16 %v2516
  %v2540 = vunpack.c.h.b16 %v2516
  %v2541 = vpack.c.b16 %v2527, %v2525
  %v2542 = vpack.c.b16 %v2528, %v2526
  %v2543 = vpack.c.b16 %v2531, %v2529
  %v2544 = vpack.c.b16 %v2532, %v2530
  %v2545 = vpack.c.b16 %v2535, %v2533
  %v2546 = vpack.c.b16 %v2536, %v2534
  %v2547 = vpack.c.b16 %v2539, %v2537
  %v2548 = vpack.c.b16 %v2540, %v2538
  %v2558 = vsel %vm658, %v2507, 0
  %2560 = vmatprep.subr.bf16.mxu0 %v2542
  %2561 = vmatpush1.bf16.msra.mxu0 %v2541
  %2562 = vmatprep.subr.bf16.mxu0 %v2544
  %2563 = vmatpush1.bf16.msra.mxu0 %v2543
  %2564 = vmatprep.subr.bf16.mxu0 %v2546
  %2565 = vmatpush1.bf16.msra.mxu0 %v2545
  %2566 = vmatprep.subr.bf16.mxu0 %v2548
  %2567 = vmatpush1.bf16.msra.mxu0 %v2547
  %2568 = vmatprep.subr.bf16.mxu0 0
  %2569 = vmatpush1.bf16.msra.mxu0 0
  %2570 = vmatprep.subr.bf16.mxu0 0
  %2571 = vmatpush1.bf16.msra.mxu0 0
  %2572 = vmatprep.subr.bf16.mxu0 0
  %2573 = vmatpush1.bf16.msra.mxu0 0
  %2574 = vmatprep.subr.bf16.mxu0 0
  %2575 = vmatpush1.bf16.msra.mxu0 0
  %2576 = vmatprep.subr.bf16.mxu0 0
  %2577 = vmatpush1.bf16.msra.mxu0 0
  %2578 = vmatprep.subr.bf16.mxu0 0
  %2579 = vmatpush1.bf16.msra.mxu0 0
  %2580 = vmatprep.subr.bf16.mxu0 0
  %2581 = vmatpush1.bf16.msra.mxu0 0
  %2582 = vmatprep.subr.bf16.mxu0 0
  %2583 = vmatpush1.bf16.msra.mxu0 0
  %2584 = vmatprep.subr.bf16.mxu0 0
  %2585 = vmatpush1.bf16.msra.mxu0 0
  %2586 = vmatprep.subr.bf16.mxu0 0
  %2587 = vmatpush1.bf16.msra.mxu0 0
  %2588 = vmatprep.subr.bf16.mxu0 0
  %2589 = vmatpush1.bf16.msra.mxu0 0
  %2590 = vmatprep.subr.bf16.mxu0 0
  %2591 = vmatpush1.bf16.msra.mxu0 0
  %2592 = vmatprep.mubr.bf16.mxu0 0
  %2593 = vmatmul.mubr.bf16.gmra.mrb[0].mxu0 %v2558
  %v2594 = vpop.f32.mrb[0].mxu0
  %v2595 = vadd.f32 0.0, %v2594
  %v2596 = vpop.f32.mrb[0].mxu0
  %v2597 = vadd.f32 0.0, %v2596
  %v2598 = vpop.f32.mrb[0].mxu0
  %v2599 = vadd.f32 0.0, %v2598
  %v2600 = vpop.f32.mrb[0].mxu0
  %v2601 = vadd.f32 0.0, %v2600
  %2602 = vdwg.mxu0
  %v2603 = vadd.f32 %v1775, %v2595
  %v2604 = vadd.f32 %v1777, %v2597
  %v2605 = vadd.f32 %v1779, %v2599
  %v2606 = vadd.f32 %v1781, %v2601
  %s2607 = scalar_lea.vmem %s4, 384
  %v2608 = vld [vmem:[%s2607] sm:$0xf]
  %v2609 = vld [vmem:[%s2607 + $0x4] sm:$0xf]
  %v2610 = vld [vmem:[%s2607 + $0x8] sm:$0xf]
  %v2611 = vld [vmem:[%s2607 + $0xc] sm:$0xf]
  %v2612 = vld [vmem:[%s2607 + $0x10] sm:$0xf]
  %v2613 = vld [vmem:[%s2607 + $0x14] sm:$0xf]
  %v2614 = vld [vmem:[%s2607 + $0x18] sm:$0xf]
  %v2615 = vld [vmem:[%s2607 + $0x1c] sm:$0xf]
  %v2616 = vld [vmem:[%s2607 + $0x20] sm:$0xf]
  %v2617 = vld [vmem:[%s2607 + $0x24] sm:$0xf]
  %v2618 = vld [vmem:[%s2607 + $0x28] sm:$0xf]
  %v2619 = vld [vmem:[%s2607 + $0x2c] sm:$0xf]
  %v2620 = vld [vmem:[%s2607 + $0x30] sm:$0xf]
  %v2621 = vld [vmem:[%s2607 + $0x34] sm:$0xf]
  %v2622 = vld [vmem:[%s2607 + $0x38] sm:$0xf]
  %v2623 = vld [vmem:[%s2607 + $0x3c] sm:$0xf]
  %v2624 = vld [vmem:[%s2607 + $0x40] sm:$0xf]
  %v2625 = vld [vmem:[%s2607 + $0x44] sm:$0xf]
  %v2626 = vld [vmem:[%s2607 + $0x48] sm:$0xf]
  %v2627 = vld [vmem:[%s2607 + $0x4c] sm:$0xf]
  %v2628 = vld [vmem:[%s2607 + $0x50] sm:$0xf]
  %v2629 = vld [vmem:[%s2607 + $0x54] sm:$0xf]
  %v2630 = vld [vmem:[%s2607 + $0x58] sm:$0xf]
  %v2631 = vld [vmem:[%s2607 + $0x5c] sm:$0xf]
  %v2632 = vld [vmem:[%s2607 + $0x60] sm:$0xf]
  %v2633 = vld [vmem:[%s2607 + $0x64] sm:$0xf]
  %v2634 = vld [vmem:[%s2607 + $0x68] sm:$0xf]
  %v2635 = vld [vmem:[%s2607 + $0x6c] sm:$0xf]
  %v2636 = vld [vmem:[%s2607 + $0x70] sm:$0xf]
  %v2637 = vld [vmem:[%s2607 + $0x74] sm:$0xf]
  %v2638 = vld [vmem:[%s2607 + $0x78] sm:$0xf]
  %v2639 = vld [vmem:[%s2607 + $0x7c] sm:$0xf]
  %v2672 = vunpack.c.l.b16 %v2608
  %v2673 = vunpack.c.l.b16 %v2609
  %v2674 = vunpack.c.l.b16 %v2610
  %v2675 = vunpack.c.l.b16 %v2611
  %v2676 = vunpack.c.l.b16 %v2612
  %v2677 = vunpack.c.l.b16 %v2613
  %v2678 = vunpack.c.l.b16 %v2614
  %v2679 = vunpack.c.l.b16 %v2615
  %v2680 = vunpack.c.l.b16 %v2616
  %v2681 = vunpack.c.l.b16 %v2617
  %v2682 = vunpack.c.l.b16 %v2618
  %v2683 = vunpack.c.l.b16 %v2619
  %v2684 = vunpack.c.l.b16 %v2620
  %v2685 = vunpack.c.l.b16 %v2621
  %v2686 = vunpack.c.l.b16 %v2622
  %v2687 = vunpack.c.l.b16 %v2623
  %v2688 = vunpack.c.l.b16 %v2624
  %v2689 = vunpack.c.l.b16 %v2625
  %v2690 = vunpack.c.l.b16 %v2626
  %v2691 = vunpack.c.l.b16 %v2627
  %v2692 = vunpack.c.l.b16 %v2628
  %v2693 = vunpack.c.l.b16 %v2629
  %v2694 = vunpack.c.l.b16 %v2630
  %v2695 = vunpack.c.l.b16 %v2631
  %v2696 = vunpack.c.l.b16 %v2632
  %v2697 = vunpack.c.l.b16 %v2633
  %v2698 = vunpack.c.l.b16 %v2634
  %v2699 = vunpack.c.l.b16 %v2635
  %v2700 = vunpack.c.l.b16 %v2636
  %v2701 = vunpack.c.l.b16 %v2637
  %v2702 = vunpack.c.l.b16 %v2638
  %v2703 = vunpack.c.l.b16 %v2639
  %v2704 = vpack.c.b16 %v2673, %v2672
  %v2705 = vpack.c.b16 %v2675, %v2674
  %v2706 = vpack.c.b16 %v2677, %v2676
  %v2707 = vpack.c.b16 %v2679, %v2678
  %v2708 = vpack.c.b16 %v2681, %v2680
  %v2709 = vpack.c.b16 %v2683, %v2682
  %v2710 = vpack.c.b16 %v2685, %v2684
  %v2711 = vpack.c.b16 %v2687, %v2686
  %v2712 = vpack.c.b16 %v2689, %v2688
  %v2713 = vpack.c.b16 %v2691, %v2690
  %v2714 = vpack.c.b16 %v2693, %v2692
  %v2715 = vpack.c.b16 %v2695, %v2694
  %v2716 = vpack.c.b16 %v2697, %v2696
  %v2717 = vpack.c.b16 %v2699, %v2698
  %v2718 = vpack.c.b16 %v2701, %v2700
  %v2719 = vpack.c.b16 %v2703, %v2702
  %2736 = vmatprep.subr.bf16.mxu0 0
  %2737 = vmatpush1.bf16.msra.mxu0 %v2704
  %2738 = vmatprep.subr.bf16.mxu0 0
  %2739 = vmatpush1.bf16.msra.mxu0 %v2705
  %2740 = vmatprep.subr.bf16.mxu0 0
  %2741 = vmatpush1.bf16.msra.mxu0 %v2706
  %2742 = vmatprep.subr.bf16.mxu0 0
  %2743 = vmatpush1.bf16.msra.mxu0 %v2707
  %2744 = vmatprep.subr.bf16.mxu0 0
  %2745 = vmatpush1.bf16.msra.mxu0 %v2708
  %2746 = vmatprep.subr.bf16.mxu0 0
  %2747 = vmatpush1.bf16.msra.mxu0 %v2709
  %2748 = vmatprep.subr.bf16.mxu0 0
  %2749 = vmatpush1.bf16.msra.mxu0 %v2710
  %2750 = vmatprep.subr.bf16.mxu0 0
  %2751 = vmatpush1.bf16.msra.mxu0 %v2711
  %2752 = vmatprep.subr.bf16.mxu0 0
  %2753 = vmatpush1.bf16.msra.mxu0 %v2712
  %2754 = vmatprep.subr.bf16.mxu0 0
  %2755 = vmatpush1.bf16.msra.mxu0 %v2713
  %2756 = vmatprep.subr.bf16.mxu0 0
  %2757 = vmatpush1.bf16.msra.mxu0 %v2714
  %2758 = vmatprep.subr.bf16.mxu0 0
  %2759 = vmatpush1.bf16.msra.mxu0 %v2715
  %2760 = vmatprep.subr.bf16.mxu0 0
  %2761 = vmatpush1.bf16.msra.mxu0 %v2716
  %2762 = vmatprep.subr.bf16.mxu0 0
  %2763 = vmatpush1.bf16.msra.mxu0 %v2717
  %2764 = vmatprep.subr.bf16.mxu0 0
  %2765 = vmatpush1.bf16.msra.mxu0 %v2718
  %2766 = vmatprep.subr.bf16.mxu0 0
  %2767 = vmatpush1.bf16.msra.mxu0 %v2719
  %2768 = vmatprep.mubr.bf16.mxu0 %v144
  %2769 = vmatmul.mubr.bf16.gmra.mrb[0].mxu0 %v143
  %v2770 = vpop.f32.mrb[0].mxu0
  %v2771 = vadd.f32 0.0, %v2770
  %v2772 = vpop.f32.mrb[0].mxu0
  %v2773 = vpop.f32.mrb[0].mxu0
  %v2774 = vadd.f32 0.0, %v2773
  %v2775 = vpop.f32.mrb[0].mxu0
  %2776 = vdwg.mxu0
  %s2777 = scalar_lea.vmem %s5, 384
  %v2778 = vld [vmem:[%s2777] sm:$0xf]
  %v2779 = vld [vmem:[%s2777 + $0x4] sm:$0xf]
  %v2780 = vld [vmem:[%s2777 + $0x8] sm:$0xf]
  %v2781 = vld [vmem:[%s2777 + $0xc] sm:$0xf]
  %v2782 = vld [vmem:[%s2777 + $0x10] sm:$0xf]
  %v2783 = vld [vmem:[%s2777 + $0x14] sm:$0xf]
  %v2784 = vld [vmem:[%s2777 + $0x18] sm:$0xf]
  %v2785 = vld [vmem:[%s2777 + $0x1c] sm:$0xf]
  %v2786 = vld [vmem:[%s2777 + $0x20] sm:$0xf]
  %v2787 = vld [vmem:[%s2777 + $0x24] sm:$0xf]
  %v2788 = vld [vmem:[%s2777 + $0x28] sm:$0xf]
  %v2789 = vld [vmem:[%s2777 + $0x2c] sm:$0xf]
  %v2790 = vld [vmem:[%s2777 + $0x30] sm:$0xf]
  %v2791 = vld [vmem:[%s2777 + $0x34] sm:$0xf]
  %v2792 = vld [vmem:[%s2777 + $0x38] sm:$0xf]
  %v2793 = vld [vmem:[%s2777 + $0x3c] sm:$0xf]
  %v2794 = vld [vmem:[%s2777 + $0x40] sm:$0xf]
  %v2795 = vld [vmem:[%s2777 + $0x44] sm:$0xf]
  %v2796 = vld [vmem:[%s2777 + $0x48] sm:$0xf]
  %v2797 = vld [vmem:[%s2777 + $0x4c] sm:$0xf]
  %v2798 = vld [vmem:[%s2777 + $0x50] sm:$0xf]
  %v2799 = vld [vmem:[%s2777 + $0x54] sm:$0xf]
  %v2800 = vld [vmem:[%s2777 + $0x58] sm:$0xf]
  %v2801 = vld [vmem:[%s2777 + $0x5c] sm:$0xf]
  %v2802 = vld [vmem:[%s2777 + $0x60] sm:$0xf]
  %v2803 = vld [vmem:[%s2777 + $0x64] sm:$0xf]
  %v2804 = vld [vmem:[%s2777 + $0x68] sm:$0xf]
  %v2805 = vld [vmem:[%s2777 + $0x6c] sm:$0xf]
  %v2806 = vld [vmem:[%s2777 + $0x70] sm:$0xf]
  %v2807 = vld [vmem:[%s2777 + $0x74] sm:$0xf]
  %v2808 = vld [vmem:[%s2777 + $0x78] sm:$0xf]
  %v2809 = vld [vmem:[%s2777 + $0x7c] sm:$0xf]
  %v2842 = vunpack.c.l.b16 %v2778
  %v2843 = vunpack.c.l.b16 %v2779
  %v2844 = vunpack.c.l.b16 %v2780
  %v2845 = vunpack.c.l.b16 %v2781
  %v2846 = vunpack.c.l.b16 %v2782
  %v2847 = vunpack.c.l.b16 %v2783
  %v2848 = vunpack.c.l.b16 %v2784
  %v2849 = vunpack.c.l.b16 %v2785
  %v2850 = vunpack.c.l.b16 %v2786
  %v2851 = vunpack.c.l.b16 %v2787
  %v2852 = vunpack.c.l.b16 %v2788
  %v2853 = vunpack.c.l.b16 %v2789
  %v2854 = vunpack.c.l.b16 %v2790
  %v2855 = vunpack.c.l.b16 %v2791
  %v2856 = vunpack.c.l.b16 %v2792
  %v2857 = vunpack.c.l.b16 %v2793
  %v2858 = vunpack.c.l.b16 %v2794
  %v2859 = vunpack.c.l.b16 %v2795
  %v2860 = vunpack.c.l.b16 %v2796
  %v2861 = vunpack.c.l.b16 %v2797
  %v2862 = vunpack.c.l.b16 %v2798
  %v2863 = vunpack.c.l.b16 %v2799
  %v2864 = vunpack.c.l.b16 %v2800
  %v2865 = vunpack.c.l.b16 %v2801
  %v2866 = vunpack.c.l.b16 %v2802
  %v2867 = vunpack.c.l.b16 %v2803
  %v2868 = vunpack.c.l.b16 %v2804
  %v2869 = vunpack.c.l.b16 %v2805
  %v2870 = vunpack.c.l.b16 %v2806
  %v2871 = vunpack.c.l.b16 %v2807
  %v2872 = vunpack.c.l.b16 %v2808
  %v2873 = vunpack.c.l.b16 %v2809
  %v2874 = vpack.c.b16 %v2843, %v2842
  %v2875 = vpack.c.b16 %v2845, %v2844
  %v2876 = vpack.c.b16 %v2847, %v2846
  %v2877 = vpack.c.b16 %v2849, %v2848
  %v2878 = vpack.c.b16 %v2851, %v2850
  %v2879 = vpack.c.b16 %v2853, %v2852
  %v2880 = vpack.c.b16 %v2855, %v2854
  %v2881 = vpack.c.b16 %v2857, %v2856
  %v2882 = vpack.c.b16 %v2859, %v2858
  %v2883 = vpack.c.b16 %v2861, %v2860
  %v2884 = vpack.c.b16 %v2863, %v2862
  %v2885 = vpack.c.b16 %v2865, %v2864
  %v2886 = vpack.c.b16 %v2867, %v2866
  %v2887 = vpack.c.b16 %v2869, %v2868
  %v2888 = vpack.c.b16 %v2871, %v2870
  %v2889 = vpack.c.b16 %v2873, %v2872
  %2906 = vmatprep.subr.bf16.mxu0 0
  %2907 = vmatpush1.bf16.msra.mxu0 %v2874
  %2908 = vmatprep.subr.bf16.mxu0 0
  %2909 = vmatpush1.bf16.msra.mxu0 %v2875
  %2910 = vmatprep.subr.bf16.mxu0 0
  %2911 = vmatpush1.bf16.msra.mxu0 %v2876
  %2912 = vmatprep.subr.bf16.mxu0 0
  %2913 = vmatpush1.bf16.msra.mxu0 %v2877
  %2914 = vmatprep.subr.bf16.mxu0 0
  %2915 = vmatpush1.bf16.msra.mxu0 %v2878
  %2916 = vmatprep.subr.bf16.mxu0 0
  %2917 = vmatpush1.bf16.msra.mxu0 %v2879
  %2918 = vmatprep.subr.bf16.mxu0 0
  %2919 = vmatpush1.bf16.msra.mxu0 %v2880
  %2920 = vmatprep.subr.bf16.mxu0 0
  %2921 = vmatpush1.bf16.msra.mxu0 %v2881
  %2922 = vmatprep.subr.bf16.mxu0 0
  %2923 = vmatpush1.bf16.msra.mxu0 %v2882
  %2924 = vmatprep.subr.bf16.mxu0 0
  %2925 = vmatpush1.bf16.msra.mxu0 %v2883
  %2926 = vmatprep.subr.bf16.mxu0 0
  %2927 = vmatpush1.bf16.msra.mxu0 %v2884
  %2928 = vmatprep.subr.bf16.mxu0 0
  %2929 = vmatpush1.bf16.msra.mxu0 %v2885
  %2930 = vmatprep.subr.bf16.mxu0 0
  %2931 = vmatpush1.bf16.msra.mxu0 %v2886
  %2932 = vmatprep.subr.bf16.mxu0 0
  %2933 = vmatpush1.bf16.msra.mxu0 %v2887
  %2934 = vmatprep.subr.bf16.mxu0 0
  %2935 = vmatpush1.bf16.msra.mxu0 %v2888
  %2936 = vmatprep.subr.bf16.mxu0 0
  %2937 = vmatpush1.bf16.msra.mxu0 %v2889
  %2938 = vmatprep.mubr.bf16.mxu0 %v144
  %2939 = vmatmul.mubr.bf16.gmra.mrb[0].mxu0 %v143
  %v2940 = vpop.f32.mrb[0].mxu0
  %v2941 = vadd.f32 0.0, %v2940
  %v2942 = vpop.f32.mrb[0].mxu0
  %v2943 = vpop.f32.mrb[0].mxu0
  %v2944 = vadd.f32 0.0, %v2943
  %v2945 = vpop.f32.mrb[0].mxu0
  %2946 = vdwg.mxu0
  %s2947 = scalar_lea.vmem %s6, 384
  %v2948 = vld [vmem:[%s2947] sm:$0xf]
  %v2949 = vld [vmem:[%s2947 + $0x4] sm:$0xf]
  %v2950 = vld [vmem:[%s2947 + $0x8] sm:$0xf]
  %v2951 = vld [vmem:[%s2947 + $0xc] sm:$0xf]
  %v2952 = vld [vmem:[%s2947 + $0x10] sm:$0xf]
  %v2953 = vld [vmem:[%s2947 + $0x14] sm:$0xf]
  %v2954 = vld [vmem:[%s2947 + $0x18] sm:$0xf]
  %v2955 = vld [vmem:[%s2947 + $0x1c] sm:$0xf]
  %v2956 = vld [vmem:[%s2947 + $0x20] sm:$0xf]
  %v2957 = vld [vmem:[%s2947 + $0x24] sm:$0xf]
  %v2958 = vld [vmem:[%s2947 + $0x28] sm:$0xf]
  %v2959 = vld [vmem:[%s2947 + $0x2c] sm:$0xf]
  %v2960 = vld [vmem:[%s2947 + $0x30] sm:$0xf]
  %v2961 = vld [vmem:[%s2947 + $0x34] sm:$0xf]
  %v2962 = vld [vmem:[%s2947 + $0x38] sm:$0xf]
  %v2963 = vld [vmem:[%s2947 + $0x3c] sm:$0xf]
  %v2964 = vld [vmem:[%s2947 + $0x40] sm:$0xf]
  %v2965 = vld [vmem:[%s2947 + $0x44] sm:$0xf]
  %v2966 = vld [vmem:[%s2947 + $0x48] sm:$0xf]
  %v2967 = vld [vmem:[%s2947 + $0x4c] sm:$0xf]
  %v2968 = vld [vmem:[%s2947 + $0x50] sm:$0xf]
  %v2969 = vld [vmem:[%s2947 + $0x54] sm:$0xf]
  %v2970 = vld [vmem:[%s2947 + $0x58] sm:$0xf]
  %v2971 = vld [vmem:[%s2947 + $0x5c] sm:$0xf]
  %v2972 = vld [vmem:[%s2947 + $0x60] sm:$0xf]
  %v2973 = vld [vmem:[%s2947 + $0x64] sm:$0xf]
  %v2974 = vld [vmem:[%s2947 + $0x68] sm:$0xf]
  %v2975 = vld [vmem:[%s2947 + $0x6c] sm:$0xf]
  %v2976 = vld [vmem:[%s2947 + $0x70] sm:$0xf]
  %v2977 = vld [vmem:[%s2947 + $0x74] sm:$0xf]
  %v2978 = vld [vmem:[%s2947 + $0x78] sm:$0xf]
  %v2979 = vld [vmem:[%s2947 + $0x7c] sm:$0xf]
  %v3012 = vunpack.c.l.b16 %v2948
  %v3013 = vunpack.c.l.b16 %v2949
  %v3014 = vunpack.c.l.b16 %v2950
  %v3015 = vunpack.c.l.b16 %v2951
  %v3016 = vunpack.c.l.b16 %v2952
  %v3017 = vunpack.c.l.b16 %v2953
  %v3018 = vunpack.c.l.b16 %v2954
  %v3019 = vunpack.c.l.b16 %v2955
  %v3020 = vunpack.c.l.b16 %v2956
  %v3021 = vunpack.c.l.b16 %v2957
  %v3022 = vunpack.c.l.b16 %v2958
  %v3023 = vunpack.c.l.b16 %v2959
  %v3024 = vunpack.c.l.b16 %v2960
  %v3025 = vunpack.c.l.b16 %v2961
  %v3026 = vunpack.c.l.b16 %v2962
  %v3027 = vunpack.c.l.b16 %v2963
  %v3028 = vunpack.c.l.b16 %v2964
  %v3029 = vunpack.c.l.b16 %v2965
  %v3030 = vunpack.c.l.b16 %v2966
  %v3031 = vunpack.c.l.b16 %v2967
  %v3032 = vunpack.c.l.b16 %v2968
  %v3033 = vunpack.c.l.b16 %v2969
  %v3034 = vunpack.c.l.b16 %v2970
  %v3035 = vunpack.c.l.b16 %v2971
  %v3036 = vunpack.c.l.b16 %v2972
  %v3037 = vunpack.c.l.b16 %v2973
  %v3038 = vunpack.c.l.b16 %v2974
  %v3039 = vunpack.c.l.b16 %v2975
  %v3040 = vunpack.c.l.b16 %v2976
  %v3041 = vunpack.c.l.b16 %v2977
  %v3042 = vunpack.c.l.b16 %v2978
  %v3043 = vunpack.c.l.b16 %v2979
  %v3044 = vpack.c.b16 %v3013, %v3012
  %v3045 = vpack.c.b16 %v3015, %v3014
  %v3046 = vpack.c.b16 %v3017, %v3016
  %v3047 = vpack.c.b16 %v3019, %v3018
  %v3048 = vpack.c.b16 %v3021, %v3020
  %v3049 = vpack.c.b16 %v3023, %v3022
  %v3050 = vpack.c.b16 %v3025, %v3024
  %v3051 = vpack.c.b16 %v3027, %v3026
  %v3052 = vpack.c.b16 %v3029, %v3028
  %v3053 = vpack.c.b16 %v3031, %v3030
  %v3054 = vpack.c.b16 %v3033, %v3032
  %v3055 = vpack.c.b16 %v3035, %v3034
  %v3056 = vpack.c.b16 %v3037, %v3036
  %v3057 = vpack.c.b16 %v3039, %v3038
  %v3058 = vpack.c.b16 %v3041, %v3040
  %v3059 = vpack.c.b16 %v3043, %v3042
  %3076 = vmatprep.subr.bf16.mxu0 0
  %3077 = vmatpush1.bf16.msra.mxu0 %v3044
  %3078 = vmatprep.subr.bf16.mxu0 0
  %3079 = vmatpush1.bf16.msra.mxu0 %v3045
  %3080 = vmatprep.subr.bf16.mxu0 0
  %3081 = vmatpush1.bf16.msra.mxu0 %v3046
  %3082 = vmatprep.subr.bf16.mxu0 0
  %3083 = vmatpush1.bf16.msra.mxu0 %v3047
  %3084 = vmatprep.subr.bf16.mxu0 0
  %3085 = vmatpush1.bf16.msra.mxu0 %v3048
  %3086 = vmatprep.subr.bf16.mxu0 0
  %3087 = vmatpush1.bf16.msra.mxu0 %v3049
  %3088 = vmatprep.subr.bf16.mxu0 0
  %3089 = vmatpush1.bf16.msra.mxu0 %v3050
  %3090 = vmatprep.subr.bf16.mxu0 0
  %3091 = vmatpush1.bf16.msra.mxu0 %v3051
  %3092 = vmatprep.subr.bf16.mxu0 0
  %3093 = vmatpush1.bf16.msra.mxu0 %v3052
  %3094 = vmatprep.subr.bf16.mxu0 0
  %3095 = vmatpush1.bf16.msra.mxu0 %v3053
  %3096 = vmatprep.subr.bf16.mxu0 0
  %3097 = vmatpush1.bf16.msra.mxu0 %v3054
  %3098 = vmatprep.subr.bf16.mxu0 0
  %3099 = vmatpush1.bf16.msra.mxu0 %v3055
  %3100 = vmatprep.subr.bf16.mxu0 0
  %3101 = vmatpush1.bf16.msra.mxu0 %v3056
  %3102 = vmatprep.subr.bf16.mxu0 0
  %3103 = vmatpush1.bf16.msra.mxu0 %v3057
  %3104 = vmatprep.subr.bf16.mxu0 0
  %3105 = vmatpush1.bf16.msra.mxu0 %v3058
  %3106 = vmatprep.subr.bf16.mxu0 0
  %3107 = vmatpush1.bf16.msra.mxu0 %v3059
  %3108 = vmatprep.mubr.bf16.mxu0 %v144
  %3109 = vmatmul.mubr.bf16.gmra.mrb[0].mxu0 %v143
  %v3110 = vpop.f32.mrb[0].mxu0
  %v3111 = vadd.f32 0.0, %v3110
  %v3112 = vpop.f32.mrb[0].mxu0
  %v3113 = vpop.f32.mrb[0].mxu0
  %v3114 = vadd.f32 0.0, %v3113
  %v3115 = vpop.f32.mrb[0].mxu0
  %3116 = vdwg.mxu0
  %v3117 = vpack.c.bf16 %v2771, %v2771
  %v3118 = vpack.c.bf16 %v2774, %v2774
  %v3119 = vpack.c.bf16 %v2941, %v2941
  %v3120 = vpack.c.bf16 %v2944, %v2944
  %v3121 = vpack.c.bf16 %v3111, %v3111
  %v3122 = vpack.c.bf16 %v3114, %v3114
  %v3124 = vsel %vm658, %v3117, 0
  %v3127 = vsel %vm658, %v3119, 0
  %3129 = vmatprep.subr.bf16.mxu0 0
  %3130 = vmatpush1.bf16.xpose.msra.mxu0 %v3127
  %3131 = vmatprep.subr.bf16.mxu0 0
  %3132 = vmatpush1.bf16.xpose.msra.mxu0 0
  %3133 = vmatprep.subr.bf16.mxu0 0
  %3134 = vmatpush1.bf16.xpose.msra.mxu0 0
  %3135 = vmatprep.subr.bf16.mxu0 0
  %3136 = vmatpush1.bf16.xpose.msra.mxu0 0
  %3137 = vmatprep.subr.bf16.mxu0 0
  %3138 = vmatpush1.bf16.xpose.msra.mxu0 0
  %3139 = vmatprep.subr.bf16.mxu0 0
  %3140 = vmatpush1.bf16.xpose.msra.mxu0 0
  %3141 = vmatprep.subr.bf16.mxu0 0
  %3142 = vmatpush1.bf16.xpose.msra.mxu0 0
  %3143 = vmatprep.subr.bf16.mxu0 0
  %3144 = vmatpush1.bf16.xpose.msra.mxu0 0
  %3145 = vmatprep.subr.bf16.mxu0 0
  %3146 = vmatpush1.bf16.xpose.msra.mxu0 0
  %3147 = vmatprep.subr.bf16.mxu0 0
  %3148 = vmatpush1.bf16.xpose.msra.mxu0 0
  %3149 = vmatprep.subr.bf16.mxu0 0
  %3150 = vmatpush1.bf16.xpose.msra.mxu0 0
  %3151 = vmatprep.subr.bf16.mxu0 0
  %3152 = vmatpush1.bf16.xpose.msra.mxu0 0
  %3153 = vmatprep.subr.bf16.mxu0 0
  %3154 = vmatpush1.bf16.xpose.msra.mxu0 0
  %3155 = vmatprep.subr.bf16.mxu0 0
  %3156 = vmatpush1.bf16.xpose.msra.mxu0 0
  %3157 = vmatprep.subr.bf16.mxu0 0
  %3158 = vmatpush1.bf16.xpose.msra.mxu0 0
  %3159 = vmatprep.subr.bf16.mxu0 0
  %3160 = vmatpush1.bf16.xpose.msra.mxu0 0
  %3161 = vmatprep.mubr.bf16.mxu0 0
  %3162 = vmatmul.mubr.bf16.gmra.mrb[0].mxu0 %v3124
  %v3163 = vpop.f32.mrb[0].mxu0
  %v3164 = vadd.f32 %v142, %v3163
  %v3165 = vpop.f32.mrb[0].mxu0
  %v3166 = vpop.f32.mrb[0].mxu0
  %v3167 = vpop.f32.mrb[0].mxu0
  %3168 = vdwg.mxu0
  %v3170 = vsel %vm658, %v3118, 0
  %v3173 = vsel %vm658, %v3120, 0
  %3175 = vmatprep.subr.bf16.mxu0 0
  %3176 = vmatpush1.bf16.xpose.msra.mxu0 %v3173
  %3177 = vmatprep.subr.bf16.mxu0 0
  %3178 = vmatpush1.bf16.xpose.msra.mxu0 0
  %3179 = vmatprep.subr.bf16.mxu0 0
  %3180 = vmatpush1.bf16.xpose.msra.mxu0 0
  %3181 = vmatprep.subr.bf16.mxu0 0
  %3182 = vmatpush1.bf16.xpose.msra.mxu0 0
  %3183 = vmatprep.subr.bf16.mxu0 0
  %3184 = vmatpush1.bf16.xpose.msra.mxu0 0
  %3185 = vmatprep.subr.bf16.mxu0 0
  %3186 = vmatpush1.bf16.xpose.msra.mxu0 0
  %3187 = vmatprep.subr.bf16.mxu0 0
  %3188 = vmatpush1.bf16.xpose.msra.mxu0 0
  %3189 = vmatprep.subr.bf16.mxu0 0
  %3190 = vmatpush1.bf16.xpose.msra.mxu0 0
  %3191 = vmatprep.subr.bf16.mxu0 0
  %3192 = vmatpush1.bf16.xpose.msra.mxu0 0
  %3193 = vmatprep.subr.bf16.mxu0 0
  %3194 = vmatpush1.bf16.xpose.msra.mxu0 0
  %3195 = vmatprep.subr.bf16.mxu0 0
  %3196 = vmatpush1.bf16.xpose.msra.mxu0 0
  %3197 = vmatprep.subr.bf16.mxu0 0
  %3198 = vmatpush1.bf16.xpose.msra.mxu0 0
  %3199 = vmatprep.subr.bf16.mxu0 0
  %3200 = vmatpush1.bf16.xpose.msra.mxu0 0
  %3201 = vmatprep.subr.bf16.mxu0 0
  %3202 = vmatpush1.bf16.xpose.msra.mxu0 0
  %3203 = vmatprep.subr.bf16.mxu0 0
  %3204 = vmatpush1.bf16.xpose.msra.mxu0 0
  %3205 = vmatprep.subr.bf16.mxu0 0
  %3206 = vmatpush1.bf16.xpose.msra.mxu0 0
  %3207 = vmatprep.mubr.bf16.mxu0 0
  %3208 = vmatmul.mubr.bf16.gmra.mrb[0].mxu0 %v3170
  %v3209 = vpop.f32.mrb[0].mxu0
  %v3210 = vadd.f32 %v142, %v3209
  %v3211 = vpop.f32.mrb[0].mxu0
  %v3212 = vpop.f32.mrb[0].mxu0
  %v3213 = vpop.f32.mrb[0].mxu0
  %3214 = vdwg.mxu0
  %v3215 = vsel %vm751, %v3164, -inf
  %3216 = vmax.xlane.f32.xlu0 %v3215
  %v3217 = vpop.xlane.xlu0 %3216
  %v3218 = vsel %vm751, %v3210, -inf
  %3219 = vmax.xlane.f32.xlu0 %v3218
  %v3220 = vpop.xlane.xlu0 %3219
  %v3221 = vsub.f32 %v3164, %v3217
  %v3222 = vsub.f32 %v3210, %v3220
  %v3223 = vmul.f32 %v3221, 1.442695
  %v3224 = vpow.pop %v3223
  %v3225 = vmul.f32 %v3222, 1.442695
  %v3226 = vpow.pop %v3225
  %v3227 = vsel %vm751, %v3224, 0.0
  %3228 = vadd.xlane.f32.xlu0 %v3227
  %v3229 = vpop.xlane.xlu0 %3228
  %v3230 = vsel %vm751, %v3226, 0.0
  %3231 = vadd.xlane.f32.xlu0 %v3230
  %v3232 = vpop.xlane.xlu0 %3231
  %v3233 = vrcp.pop %v3229
  %v3234 = vrcp.pop %v3232
  %v3235 = vmul.f32 %v3224, %v3233
  %v3236 = vmul.f32 %v3226, %v3234
  %v3237 = vpack.c.bf16 %v3235, %v3235
  %v3238 = vpack.c.bf16 %v3236, %v3236
  %v3240 = vsel %vm751, %v3237, 0
  %v3243 = vsel %vm58, %v3121, 0
  %3245 = vmatprep.subr.bf16.mxu0 0
  %3246 = vmatpush1.bf16.msra.mxu0 %v3243
  %3247 = vmatprep.subr.bf16.mxu0 0
  %3248 = vmatpush1.bf16.msra.mxu0 0
  %3249 = vmatprep.subr.bf16.mxu0 0
  %3250 = vmatpush1.bf16.msra.mxu0 0
  %3251 = vmatprep.subr.bf16.mxu0 0
  %3252 = vmatpush1.bf16.msra.mxu0 0
  %3253 = vmatprep.subr.bf16.mxu0 0
  %3254 = vmatpush1.bf16.msra.mxu0 0
  %3255 = vmatprep.subr.bf16.mxu0 0
  %3256 = vmatpush1.bf16.msra.mxu0 0
  %3257 = vmatprep.subr.bf16.mxu0 0
  %3258 = vmatpush1.bf16.msra.mxu0 0
  %3259 = vmatprep.subr.bf16.mxu0 0
  %3260 = vmatpush1.bf16.msra.mxu0 0
  %3261 = vmatprep.subr.bf16.mxu0 0
  %3262 = vmatpush1.bf16.msra.mxu0 0
  %3263 = vmatprep.subr.bf16.mxu0 0
  %3264 = vmatpush1.bf16.msra.mxu0 0
  %3265 = vmatprep.subr.bf16.mxu0 0
  %3266 = vmatpush1.bf16.msra.mxu0 0
  %3267 = vmatprep.subr.bf16.mxu0 0
  %3268 = vmatpush1.bf16.msra.mxu0 0
  %3269 = vmatprep.subr.bf16.mxu0 0
  %3270 = vmatpush1.bf16.msra.mxu0 0
  %3271 = vmatprep.subr.bf16.mxu0 0
  %3272 = vmatpush1.bf16.msra.mxu0 0
  %3273 = vmatprep.subr.bf16.mxu0 0
  %3274 = vmatpush1.bf16.msra.mxu0 0
  %3275 = vmatprep.subr.bf16.mxu0 0
  %3276 = vmatpush1.bf16.msra.mxu0 0
  %3277 = vmatprep.mubr.bf16.mxu0 0
  %3278 = vmatmul.mubr.bf16.gmra.mrb[0].mxu0 %v3240
  %v3279 = vpop.f32.mrb[0].mxu0
  %v3280 = vadd.f32 0.0, %v3279
  %v3281 = vpop.f32.mrb[0].mxu0
  %v3282 = vpop.f32.mrb[0].mxu0
  %v3283 = vpop.f32.mrb[0].mxu0
  %3284 = vdwg.mxu0
  %v3286 = vsel %vm751, %v3238, 0
  %v3289 = vsel %vm58, %v3122, 0
  %3291 = vmatprep.subr.bf16.mxu0 0
  %3292 = vmatpush1.bf16.msra.mxu0 %v3289
  %3293 = vmatprep.subr.bf16.mxu0 0
  %3294 = vmatpush1.bf16.msra.mxu0 0
  %3295 = vmatprep.subr.bf16.mxu0 0
  %3296 = vmatpush1.bf16.msra.mxu0 0
  %3297 = vmatprep.subr.bf16.mxu0 0
  %3298 = vmatpush1.bf16.msra.mxu0 0
  %3299 = vmatprep.subr.bf16.mxu0 0
  %3300 = vmatpush1.bf16.msra.mxu0 0
  %3301 = vmatprep.subr.bf16.mxu0 0
  %3302 = vmatpush1.bf16.msra.mxu0 0
  %3303 = vmatprep.subr.bf16.mxu0 0
  %3304 = vmatpush1.bf16.msra.mxu0 0
  %3305 = vmatprep.subr.bf16.mxu0 0
  %3306 = vmatpush1.bf16.msra.mxu0 0
  %3307 = vmatprep.subr.bf16.mxu0 0
  %3308 = vmatpush1.bf16.msra.mxu0 0
  %3309 = vmatprep.subr.bf16.mxu0 0
  %3310 = vmatpush1.bf16.msra.mxu0 0
  %3311 = vmatprep.subr.bf16.mxu0 0
  %3312 = vmatpush1.bf16.msra.mxu0 0
  %3313 = vmatprep.subr.bf16.mxu0 0
  %3314 = vmatpush1.bf16.msra.mxu0 0
  %3315 = vmatprep.subr.bf16.mxu0 0
  %3316 = vmatpush1.bf16.msra.mxu0 0
  %3317 = vmatprep.subr.bf16.mxu0 0
  %3318 = vmatpush1.bf16.msra.mxu0 0
  %3319 = vmatprep.subr.bf16.mxu0 0
  %3320 = vmatpush1.bf16.msra.mxu0 0
  %3321 = vmatprep.subr.bf16.mxu0 0
  %3322 = vmatpush1.bf16.msra.mxu0 0
  %3323 = vmatprep.mubr.bf16.mxu0 0
  %3324 = vmatmul.mubr.bf16.gmra.mrb[0].mxu0 %v3286
  %v3325 = vpop.f32.mrb[0].mxu0
  %v3326 = vadd.f32 0.0, %v3325
  %v3327 = vpop.f32.mrb[0].mxu0
  %v3328 = vpop.f32.mrb[0].mxu0
  %v3329 = vpop.f32.mrb[0].mxu0
  %3330 = vdwg.mxu0
  %v3331 = vpack.c.bf16 %v3326, %v3280
  %s3332 = scalar_lea.vmem %s7, 192
  %v3333 = vld [vmem:[%s3332] sm:$0xff]
  %v3334 = vld [vmem:[%s3332 + $0x8] sm:$0xff]
  %v3335 = vld [vmem:[%s3332 + $0x10] sm:$0xff]
  %v3336 = vld [vmem:[%s3332 + $0x18] sm:$0xff]
  %v3337 = vld [vmem:[%s3332 + $0x20] sm:$0xff]
  %v3338 = vld [vmem:[%s3332 + $0x28] sm:$0xff]
  %v3339 = vld [vmem:[%s3332 + $0x30] sm:$0xff]
  %v3340 = vld [vmem:[%s3332 + $0x38] sm:$0xff]
  %v3349 = vunpack.c.l.b16 %v3333
  %v3350 = vunpack.c.h.b16 %v3333
  %v3351 = vunpack.c.l.b16 %v3334
  %v3352 = vunpack.c.h.b16 %v3334
  %v3353 = vunpack.c.l.b16 %v3335
  %v3354 = vunpack.c.h.b16 %v3335
  %v3355 = vunpack.c.l.b16 %v3336
  %v3356 = vunpack.c.h.b16 %v3336
  %v3357 = vunpack.c.l.b16 %v3337
  %v3358 = vunpack.c.h.b16 %v3337
  %v3359 = vunpack.c.l.b16 %v3338
  %v3360 = vunpack.c.h.b16 %v3338
  %v3361 = vunpack.c.l.b16 %v3339
  %v3362 = vunpack.c.h.b16 %v3339
  %v3363 = vunpack.c.l.b16 %v3340
  %v3364 = vunpack.c.h.b16 %v3340
  %v3365 = vpack.c.b16 %v3351, %v3349
  %v3366 = vpack.c.b16 %v3352, %v3350
  %v3367 = vpack.c.b16 %v3355, %v3353
  %v3368 = vpack.c.b16 %v3356, %v3354
  %v3369 = vpack.c.b16 %v3359, %v3357
  %v3370 = vpack.c.b16 %v3360, %v3358
  %v3371 = vpack.c.b16 %v3363, %v3361
  %v3372 = vpack.c.b16 %v3364, %v3362
  %v3382 = vsel %vm658, %v3331, 0
  %3384 = vmatprep.subr.bf16.mxu0 %v3366
  %3385 = vmatpush1.bf16.msra.mxu0 %v3365
  %3386 = vmatprep.subr.bf16.mxu0 %v3368
  %3387 = vmatpush1.bf16.msra.mxu0 %v3367
  %3388 = vmatprep.subr.bf16.mxu0 %v3370
  %3389 = vmatpush1.bf16.msra.mxu0 %v3369
  %3390 = vmatprep.subr.bf16.mxu0 %v3372
  %3391 = vmatpush1.bf16.msra.mxu0 %v3371
  %3392 = vmatprep.subr.bf16.mxu0 0
  %3393 = vmatpush1.bf16.msra.mxu0 0
  %3394 = vmatprep.subr.bf16.mxu0 0
  %3395 = vmatpush1.bf16.msra.mxu0 0
  %3396 = vmatprep.subr.bf16.mxu0 0
  %3397 = vmatpush1.bf16.msra.mxu0 0
  %3398 = vmatprep.subr.bf16.mxu0 0
  %3399 = vmatpush1.bf16.msra.mxu0 0
  %3400 = vmatprep.subr.bf16.mxu0 0
  %3401 = vmatpush1.bf16.msra.mxu0 0
  %3402 = vmatprep.subr.bf16.mxu0 0
  %3403 = vmatpush1.bf16.msra.mxu0 0
  %3404 = vmatprep.subr.bf16.mxu0 0
  %3405 = vmatpush1.bf16.msra.mxu0 0
  %3406 = vmatprep.subr.bf16.mxu0 0
  %3407 = vmatpush1.bf16.msra.mxu0 0
  %3408 = vmatprep.subr.bf16.mxu0 0
  %3409 = vmatpush1.bf16.msra.mxu0 0
  %3410 = vmatprep.subr.bf16.mxu0 0
  %3411 = vmatpush1.bf16.msra.mxu0 0
  %3412 = vmatprep.subr.bf16.mxu0 0
  %3413 = vmatpush1.bf16.msra.mxu0 0
  %3414 = vmatprep.subr.bf16.mxu0 0
  %3415 = vmatpush1.bf16.msra.mxu0 0
  %3416 = vmatprep.mubr.bf16.mxu0 0
  %3417 = vmatmul.mubr.bf16.gmra.mrb[0].mxu0 %v3382
  %v3418 = vpop.f32.mrb[0].mxu0
  %v3419 = vadd.f32 0.0, %v3418
  %v3420 = vpop.f32.mrb[0].mxu0
  %v3421 = vadd.f32 0.0, %v3420
  %v3422 = vpop.f32.mrb[0].mxu0
  %v3423 = vadd.f32 0.0, %v3422
  %v3424 = vpop.f32.mrb[0].mxu0
  %v3425 = vadd.f32 0.0, %v3424
  %3426 = vdwg.mxu0
  %v3427 = vadd.f32 %v2603, %v3419
  %v3428 = vadd.f32 %v2604, %v3421
  %v3429 = vadd.f32 %v2605, %v3423
  %v3430 = vadd.f32 %v2606, %v3425
  %v3431 = vadd.f32 %v3427, %v132
  %v3432 = vadd.f32 %v3428, %v134
  %v3433 = vadd.f32 %v3429, %v138
  %v3434 = vadd.f32 %v3430, %v140
  %v3435 = vld [vmem:[%s10] sm:$0x3f]
  %v3436 = vld [vmem:[%s10 + $0x8] sm:$0x3f]
  %v3437 = vadd.f32 %v3431, %v3432
  %3438 = vadd.xlane.f32.xlu0 %v3437
  %v3439 = vpop.xlane.xlu0 %3438
  %v3440 = vadd.f32 %v3433, %v3434
  %3441 = vadd.xlane.f32.xlu0 %v3440
  %v3442 = vpop.xlane.xlu0 %3441
  %v3443 = vrcp.pop 256.0
  %v3444 = vmul.f32 %v3439, %v3443
  %v3445 = vmul.f32 %v3442, %v3443
  %v3446 = vsub.f32 %v3431, %v3444
  %v3447 = vsub.f32 %v3432, %v3444
  %v3448 = vsub.f32 %v3433, %v3445
  %v3449 = vsub.f32 %v3434, %v3445
  %v3450 = vmul.f32 %v3446, %v3446
  %v3451 = vmul.f32 %v3447, %v3447
  %v3452 = vmul.f32 %v3448, %v3448
  %v3453 = vmul.f32 %v3449, %v3449
  %v3454 = vadd.f32 %v3450, %v3451
  %3455 = vadd.xlane.f32.xlu0 %v3454
  %v3456 = vpop.xlane.xlu0 %3455
  %v3457 = vadd.f32 %v3452, %v3453
  %3458 = vadd.xlane.f32.xlu0 %v3457
  %v3459 = vpop.xlane.xlu0 %3458
  %v3460 = vmul.f32 %v3456, %v3443
  %v3461 = vmul.f32 %v3459, %v3443
  %v3462 = vadd.f32 %v3460, 1e-06
  %v3463 = vadd.f32 %v3461, 1e-06
  %v3464 = vrsqrt.pop %v3462
  %v3465 = vrsqrt.pop %v3463
  %v3466 = vmul.f32 %v3446, %v3464
  %v3467 = vmul.f32 %v3447, %v3464
  %v3468 = vmul.f32 %v3448, %v3465
  %v3469 = vmul.f32 %v3449, %v3465
  %v3470 = vlaneseq
  %v3471 = vshrl.u32 %v3470, 7
  %v3472 = vsub.s32 0, %v3471
  %v3473 = vrot.slane %v3435, %v3472
  %v3474 = vlaneseq
  %v3475 = vshrl.u32 %v3474, 7
  %v3476 = vsub.s32 0, %v3475
  %v3477 = vrot.slane %v3436, %v3476
  %v3478 = vmul.f32 %v3466, %v3473
  %v3479 = vmul.f32 %v3467, %v3477
  %v3480 = vmul.f32 %v3468, %v3473
  %v3481 = vmul.f32 %v3469, %v3477
  %v3482 = vlaneseq
  %v3483 = vshrl.u32 %v3482, 7
  %v3484 = vsub.s32 1, %v3483
  %v3485 = vrot.slane %v3435, %v3484
  %v3486 = vlaneseq
  %v3487 = vshrl.u32 %v3486, 7
  %v3488 = vsub.s32 1, %v3487
  %v3489 = vrot.slane %v3436, %v3488
  %v3490 = vadd.f32 %v3478, %v3485
  %v3491 = vadd.f32 %v3479, %v3489
  %v3492 = vadd.f32 %v3480, %v3485
  %v3493 = vadd.f32 %v3481, %v3489
  %v3494 = vpack.c.bf16 %v3492, %v3490
  %v3495 = vpack.c.bf16 %v3493, %v3491
  %v3496 = vld [vmem:[%s8] sm:$0xf]
  %v3497 = vld [vmem:[%s8 + $0x4] sm:$0xf]
  %v3498 = vld [vmem:[%s8 + $0x8] sm:$0xf]
  %v3499 = vld [vmem:[%s8 + $0xc] sm:$0xf]
  %v3500 = vld [vmem:[%s8 + $0x10] sm:$0xf]
  %v3501 = vld [vmem:[%s8 + $0x14] sm:$0xf]
  %v3502 = vld [vmem:[%s8 + $0x18] sm:$0xf]
  %v3503 = vld [vmem:[%s8 + $0x1c] sm:$0xf]
  %v3504 = vld [vmem:[%s8 + $0x20] sm:$0xf]
  %v3505 = vld [vmem:[%s8 + $0x24] sm:$0xf]
  %v3506 = vld [vmem:[%s8 + $0x28] sm:$0xf]
  %v3507 = vld [vmem:[%s8 + $0x2c] sm:$0xf]
  %v3508 = vld [vmem:[%s8 + $0x30] sm:$0xf]
  %v3509 = vld [vmem:[%s8 + $0x34] sm:$0xf]
  %v3510 = vld [vmem:[%s8 + $0x38] sm:$0xf]
  %v3511 = vld [vmem:[%s8 + $0x3c] sm:$0xf]
  %v3512 = vld [vmem:[%s8 + $0x40] sm:$0xf]
  %v3513 = vld [vmem:[%s8 + $0x44] sm:$0xf]
  %v3514 = vld [vmem:[%s8 + $0x48] sm:$0xf]
  %v3515 = vld [vmem:[%s8 + $0x4c] sm:$0xf]
  %v3516 = vld [vmem:[%s8 + $0x50] sm:$0xf]
  %v3517 = vld [vmem:[%s8 + $0x54] sm:$0xf]
  %v3518 = vld [vmem:[%s8 + $0x58] sm:$0xf]
  %v3519 = vld [vmem:[%s8 + $0x5c] sm:$0xf]
  %v3520 = vld [vmem:[%s8 + $0x60] sm:$0xf]
  %v3521 = vld [vmem:[%s8 + $0x64] sm:$0xf]
  %v3522 = vld [vmem:[%s8 + $0x68] sm:$0xf]
  %v3523 = vld [vmem:[%s8 + $0x6c] sm:$0xf]
  %v3524 = vld [vmem:[%s8 + $0x70] sm:$0xf]
  %v3525 = vld [vmem:[%s8 + $0x74] sm:$0xf]
  %v3526 = vld [vmem:[%s8 + $0x78] sm:$0xf]
  %v3527 = vld [vmem:[%s8 + $0x7c] sm:$0xf]
  %v3528 = vlaneseq
  %v3529 = vshrl.u32 %v3528, 7
  %v3530 = vsub.s32 4, %v3529
  %v3531 = vrot.slane %v3435, %v3530
  %v3564 = vunpack.c.l.b16 %v3496
  %v3565 = vunpack.c.l.b16 %v3497
  %v3566 = vunpack.c.l.b16 %v3498
  %v3567 = vunpack.c.l.b16 %v3499
  %v3568 = vunpack.c.l.b16 %v3500
  %v3569 = vunpack.c.l.b16 %v3501
  %v3570 = vunpack.c.l.b16 %v3502
  %v3571 = vunpack.c.l.b16 %v3503
  %v3572 = vunpack.c.l.b16 %v3504
  %v3573 = vunpack.c.l.b16 %v3505
  %v3574 = vunpack.c.l.b16 %v3506
  %v3575 = vunpack.c.l.b16 %v3507
  %v3576 = vunpack.c.l.b16 %v3508
  %v3577 = vunpack.c.l.b16 %v3509
  %v3578 = vunpack.c.l.b16 %v3510
  %v3579 = vunpack.c.l.b16 %v3511
  %v3580 = vunpack.c.l.b16 %v3512
  %v3581 = vunpack.c.l.b16 %v3513
  %v3582 = vunpack.c.l.b16 %v3514
  %v3583 = vunpack.c.l.b16 %v3515
  %v3584 = vunpack.c.l.b16 %v3516
  %v3585 = vunpack.c.l.b16 %v3517
  %v3586 = vunpack.c.l.b16 %v3518
  %v3587 = vunpack.c.l.b16 %v3519
  %v3588 = vunpack.c.l.b16 %v3520
  %v3589 = vunpack.c.l.b16 %v3521
  %v3590 = vunpack.c.l.b16 %v3522
  %v3591 = vunpack.c.l.b16 %v3523
  %v3592 = vunpack.c.l.b16 %v3524
  %v3593 = vunpack.c.l.b16 %v3525
  %v3594 = vunpack.c.l.b16 %v3526
  %v3595 = vunpack.c.l.b16 %v3527
  %v3596 = vpack.c.b16 %v3565, %v3564
  %v3597 = vpack.c.b16 %v3567, %v3566
  %v3598 = vpack.c.b16 %v3569, %v3568
  %v3599 = vpack.c.b16 %v3571, %v3570
  %v3600 = vpack.c.b16 %v3573, %v3572
  %v3601 = vpack.c.b16 %v3575, %v3574
  %v3602 = vpack.c.b16 %v3577, %v3576
  %v3603 = vpack.c.b16 %v3579, %v3578
  %v3604 = vpack.c.b16 %v3581, %v3580
  %v3605 = vpack.c.b16 %v3583, %v3582
  %v3606 = vpack.c.b16 %v3585, %v3584
  %v3607 = vpack.c.b16 %v3587, %v3586
  %v3608 = vpack.c.b16 %v3589, %v3588
  %v3609 = vpack.c.b16 %v3591, %v3590
  %v3610 = vpack.c.b16 %v3593, %v3592
  %v3611 = vpack.c.b16 %v3595, %v3594
  %3628 = vmatprep.subr.bf16.mxu0 0
  %3629 = vmatpush1.bf16.msra.mxu0 %v3596
  %3630 = vmatprep.subr.bf16.mxu0 0
  %3631 = vmatpush1.bf16.msra.mxu0 %v3597
  %3632 = vmatprep.subr.bf16.mxu0 0
  %3633 = vmatpush1.bf16.msra.mxu0 %v3598
  %3634 = vmatprep.subr.bf16.mxu0 0
  %3635 = vmatpush1.bf16.msra.mxu0 %v3599
  %3636 = vmatprep.subr.bf16.mxu0 0
  %3637 = vmatpush1.bf16.msra.mxu0 %v3600
  %3638 = vmatprep.subr.bf16.mxu0 0
  %3639 = vmatpush1.bf16.msra.mxu0 %v3601
  %3640 = vmatprep.subr.bf16.mxu0 0
  %3641 = vmatpush1.bf16.msra.mxu0 %v3602
  %3642 = vmatprep.subr.bf16.mxu0 0
  %3643 = vmatpush1.bf16.msra.mxu0 %v3603
  %3644 = vmatprep.subr.bf16.mxu0 0
  %3645 = vmatpush1.bf16.msra.mxu0 %v3604
  %3646 = vmatprep.subr.bf16.mxu0 0
  %3647 = vmatpush1.bf16.msra.mxu0 %v3605
  %3648 = vmatprep.subr.bf16.mxu0 0
  %3649 = vmatpush1.bf16.msra.mxu0 %v3606
  %3650 = vmatprep.subr.bf16.mxu0 0
  %3651 = vmatpush1.bf16.msra.mxu0 %v3607
  %3652 = vmatprep.subr.bf16.mxu0 0
  %3653 = vmatpush1.bf16.msra.mxu0 %v3608
  %3654 = vmatprep.subr.bf16.mxu0 0
  %3655 = vmatpush1.bf16.msra.mxu0 %v3609
  %3656 = vmatprep.subr.bf16.mxu0 0
  %3657 = vmatpush1.bf16.msra.mxu0 %v3610
  %3658 = vmatprep.subr.bf16.mxu0 0
  %3659 = vmatpush1.bf16.msra.mxu0 %v3611
  %3660 = vmatprep.mubr.bf16.mxu0 %v3495
  %3661 = vmatmul.mubr.bf16.gmra.mrb[0].mxu0 %v3494
  %v3662 = vpop.f32.mrb[0].mxu0
  %v3663 = vadd.f32 %v3531, %v3662
  %v3664 = vpop.f32.mrb[0].mxu0
  %v3665 = vpop.f32.mrb[0].mxu0
  %v3666 = vadd.f32 %v3531, %v3665
  %v3667 = vpop.f32.mrb[0].mxu0
  %3668 = vdwg.mxu0
  %v3669 = vmax.f32 %v3663, 0.0
  %v3670 = vmax.f32 %v3666, 0.0
  %v3671 = vpack.c.bf16 %v3670, %v3669
  %v3672 = vld [vmem:[%s9] sm:$0xff]
  %v3673 = vld [vmem:[%s9 + $0x8] sm:$0xff]
  %v3674 = vld [vmem:[%s9 + $0x10] sm:$0xff]
  %v3675 = vld [vmem:[%s9 + $0x18] sm:$0xff]
  %v3676 = vld [vmem:[%s9 + $0x20] sm:$0xff]
  %v3677 = vld [vmem:[%s9 + $0x28] sm:$0xff]
  %v3678 = vld [vmem:[%s9 + $0x30] sm:$0xff]
  %v3679 = vld [vmem:[%s9 + $0x38] sm:$0xff]
  %v3680 = vld [vmem:[%s9 + $0x40] sm:$0xff]
  %v3681 = vld [vmem:[%s9 + $0x48] sm:$0xff]
  %v3682 = vld [vmem:[%s9 + $0x50] sm:$0xff]
  %v3683 = vld [vmem:[%s9 + $0x58] sm:$0xff]
  %v3684 = vld [vmem:[%s9 + $0x60] sm:$0xff]
  %v3685 = vld [vmem:[%s9 + $0x68] sm:$0xff]
  %v3686 = vld [vmem:[%s9 + $0x70] sm:$0xff]
  %v3687 = vld [vmem:[%s9 + $0x78] sm:$0xff]
  %v3688 = vlaneseq
  %v3689 = vshrl.u32 %v3688, 7
  %v3690 = vsub.s32 5, %v3689
  %v3691 = vrot.slane %v3435, %v3690
  %v3692 = vlaneseq
  %v3693 = vshrl.u32 %v3692, 7
  %v3694 = vsub.s32 5, %v3693
  %v3695 = vrot.slane %v3436, %v3694
  %v3712 = vunpack.c.l.b16 %v3672
  %v3713 = vunpack.c.h.b16 %v3672
  %v3714 = vunpack.c.l.b16 %v3673
  %v3715 = vunpack.c.h.b16 %v3673
  %v3716 = vunpack.c.l.b16 %v3674
  %v3717 = vunpack.c.h.b16 %v3674
  %v3718 = vunpack.c.l.b16 %v3675
  %v3719 = vunpack.c.h.b16 %v3675
  %v3720 = vunpack.c.l.b16 %v3676
  %v3721 = vunpack.c.h.b16 %v3676
  %v3722 = vunpack.c.l.b16 %v3677
  %v3723 = vunpack.c.h.b16 %v3677
  %v3724 = vunpack.c.l.b16 %v3678
  %v3725 = vunpack.c.h.b16 %v3678
  %v3726 = vunpack.c.l.b16 %v3679
  %v3727 = vunpack.c.h.b16 %v3679
  %v3728 = vunpack.c.l.b16 %v3680
  %v3729 = vunpack.c.h.b16 %v3680
  %v3730 = vunpack.c.l.b16 %v3681
  %v3731 = vunpack.c.h.b16 %v3681
  %v3732 = vunpack.c.l.b16 %v3682
  %v3733 = vunpack.c.h.b16 %v3682
  %v3734 = vunpack.c.l.b16 %v3683
  %v3735 = vunpack.c.h.b16 %v3683
  %v3736 = vunpack.c.l.b16 %v3684
  %v3737 = vunpack.c.h.b16 %v3684
  %v3738 = vunpack.c.l.b16 %v3685
  %v3739 = vunpack.c.h.b16 %v3685
  %v3740 = vunpack.c.l.b16 %v3686
  %v3741 = vunpack.c.h.b16 %v3686
  %v3742 = vunpack.c.l.b16 %v3687
  %v3743 = vunpack.c.h.b16 %v3687
  %v3744 = vpack.c.b16 %v3714, %v3712
  %v3745 = vpack.c.b16 %v3715, %v3713
  %v3746 = vpack.c.b16 %v3718, %v3716
  %v3747 = vpack.c.b16 %v3719, %v3717
  %v3748 = vpack.c.b16 %v3722, %v3720
  %v3749 = vpack.c.b16 %v3723, %v3721
  %v3750 = vpack.c.b16 %v3726, %v3724
  %v3751 = vpack.c.b16 %v3727, %v3725
  %v3752 = vpack.c.b16 %v3730, %v3728
  %v3753 = vpack.c.b16 %v3731, %v3729
  %v3754 = vpack.c.b16 %v3734, %v3732
  %v3755 = vpack.c.b16 %v3735, %v3733
  %v3756 = vpack.c.b16 %v3738, %v3736
  %v3757 = vpack.c.b16 %v3739, %v3737
  %v3758 = vpack.c.b16 %v3742, %v3740
  %v3759 = vpack.c.b16 %v3743, %v3741
  %3776 = vmatprep.subr.bf16.mxu0 %v3745
  %3777 = vmatpush1.bf16.msra.mxu0 %v3744
  %3778 = vmatprep.subr.bf16.mxu0 %v3747
  %3779 = vmatpush1.bf16.msra.mxu0 %v3746
  %3780 = vmatprep.subr.bf16.mxu0 %v3749
  %3781 = vmatpush1.bf16.msra.mxu0 %v3748
  %3782 = vmatprep.subr.bf16.mxu0 %v3751
  %3783 = vmatpush1.bf16.msra.mxu0 %v3750
  %3784 = vmatprep.subr.bf16.mxu0 %v3753
  %3785 = vmatpush1.bf16.msra.mxu0 %v3752
  %3786 = vmatprep.subr.bf16.mxu0 %v3755
  %3787 = vmatpush1.bf16.msra.mxu0 %v3754
  %3788 = vmatprep.subr.bf16.mxu0 %v3757
  %3789 = vmatpush1.bf16.msra.mxu0 %v3756
  %3790 = vmatprep.subr.bf16.mxu0 %v3759
  %3791 = vmatpush1.bf16.msra.mxu0 %v3758
  %3792 = vmatprep.subr.bf16.mxu0 0
  %3793 = vmatpush1.bf16.msra.mxu0 0
  %3794 = vmatprep.subr.bf16.mxu0 0
  %3795 = vmatpush1.bf16.msra.mxu0 0
  %3796 = vmatprep.subr.bf16.mxu0 0
  %3797 = vmatpush1.bf16.msra.mxu0 0
  %3798 = vmatprep.subr.bf16.mxu0 0
  %3799 = vmatpush1.bf16.msra.mxu0 0
  %3800 = vmatprep.subr.bf16.mxu0 0
  %3801 = vmatpush1.bf16.msra.mxu0 0
  %3802 = vmatprep.subr.bf16.mxu0 0
  %3803 = vmatpush1.bf16.msra.mxu0 0
  %3804 = vmatprep.subr.bf16.mxu0 0
  %3805 = vmatpush1.bf16.msra.mxu0 0
  %3806 = vmatprep.subr.bf16.mxu0 0
  %3807 = vmatpush1.bf16.msra.mxu0 0
  %3808 = vmatprep.mubr.bf16.mxu0 0
  %3809 = vmatmul.mubr.bf16.gmra.mrb[0].mxu0 %v3671
  %v3810 = vpop.f32.mrb[0].mxu0
  %v3811 = vadd.f32 %v3691, %v3810
  %v3812 = vpop.f32.mrb[0].mxu0
  %v3813 = vadd.f32 %v3695, %v3812
  %v3814 = vpop.f32.mrb[0].mxu0
  %v3815 = vadd.f32 %v3691, %v3814
  %v3816 = vpop.f32.mrb[0].mxu0
  %v3817 = vadd.f32 %v3695, %v3816
  %3818 = vdwg.mxu0
  %v3819 = vadd.f32 %v3811, %v3490
  %v3820 = vadd.f32 %v3813, %v3491
  %v3821 = vadd.f32 %v3815, %v3492
  %v3822 = vadd.f32 %v3817, %v3493
  %v3823 = vadd.f32 %v3819, %v3820
  %3824 = vadd.xlane.f32.xlu0 %v3823
  %v3825 = vpop.xlane.xlu0 %3824
  %v3826 = vadd.f32 %v3821, %v3822
  %3827 = vadd.xlane.f32.xlu0 %v3826
  %v3828 = vpop.xlane.xlu0 %3827
  %v3829 = vmul.f32 %v3825, %v3443
  %v3830 = vmul.f32 %v3828, %v3443
  %v3831 = vsub.f32 %v3819, %v3829
  %v3832 = vsub.f32 %v3820, %v3829
  %v3833 = vsub.f32 %v3821, %v3830
  %v3834 = vsub.f32 %v3822, %v3830
  %v3835 = vmul.f32 %v3831, %v3831
  %v3836 = vmul.f32 %v3832, %v3832
  %v3837 = vmul.f32 %v3833, %v3833
  %v3838 = vmul.f32 %v3834, %v3834
  %v3839 = vadd.f32 %v3835, %v3836
  %3840 = vadd.xlane.f32.xlu0 %v3839
  %v3841 = vpop.xlane.xlu0 %3840
  %v3842 = vadd.f32 %v3837, %v3838
  %3843 = vadd.xlane.f32.xlu0 %v3842
  %v3844 = vpop.xlane.xlu0 %3843
  %v3845 = vmul.f32 %v3841, %v3443
  %v3846 = vmul.f32 %v3844, %v3443
  %v3847 = vadd.f32 %v3845, 1e-06
  %v3848 = vadd.f32 %v3846, 1e-06
  %v3849 = vrsqrt.pop %v3847
  %v3850 = vrsqrt.pop %v3848
  %v3851 = vmul.f32 %v3831, %v3849
  %v3852 = vmul.f32 %v3832, %v3849
  %v3853 = vmul.f32 %v3833, %v3850
  %v3854 = vmul.f32 %v3834, %v3850
  %v3855 = vlaneseq
  %v3856 = vshrl.u32 %v3855, 7
  %v3857 = vsub.s32 2, %v3856
  %v3858 = vrot.slane %v3435, %v3857
  %v3859 = vlaneseq
  %v3860 = vshrl.u32 %v3859, 7
  %v3861 = vsub.s32 2, %v3860
  %v3862 = vrot.slane %v3436, %v3861
  %v3863 = vmul.f32 %v3851, %v3858
  %v3864 = vmul.f32 %v3852, %v3862
  %v3865 = vmul.f32 %v3853, %v3858
  %v3866 = vmul.f32 %v3854, %v3862
  %v3867 = vlaneseq
  %v3868 = vshrl.u32 %v3867, 7
  %v3869 = vsub.s32 3, %v3868
  %v3870 = vrot.slane %v3435, %v3869
  %v3871 = vlaneseq
  %v3872 = vshrl.u32 %v3871, 7
  %v3873 = vsub.s32 3, %v3872
  %v3874 = vrot.slane %v3436, %v3873
  %v3875 = vadd.f32 %v3863, %v3870
  %v3876 = vadd.f32 %v3864, %v3874
  %v3877 = vadd.f32 %v3865, %v3870
  %v3878 = vadd.f32 %v3866, %v3874
  %v3879 = vpack.c.bf16 %v3877, %v3875
  %v3880 = vpack.c.bf16 %v3878, %v3876
  %s3881 = scalar_lea.vmem %s4, 512
  %v3882 = vld [vmem:[%s3881] sm:$0xf]
  %v3883 = vld [vmem:[%s3881 + $0x4] sm:$0xf]
  %v3884 = vld [vmem:[%s3881 + $0x8] sm:$0xf]
  %v3885 = vld [vmem:[%s3881 + $0xc] sm:$0xf]
  %v3886 = vld [vmem:[%s3881 + $0x10] sm:$0xf]
  %v3887 = vld [vmem:[%s3881 + $0x14] sm:$0xf]
  %v3888 = vld [vmem:[%s3881 + $0x18] sm:$0xf]
  %v3889 = vld [vmem:[%s3881 + $0x1c] sm:$0xf]
  %v3890 = vld [vmem:[%s3881 + $0x20] sm:$0xf]
  %v3891 = vld [vmem:[%s3881 + $0x24] sm:$0xf]
  %v3892 = vld [vmem:[%s3881 + $0x28] sm:$0xf]
  %v3893 = vld [vmem:[%s3881 + $0x2c] sm:$0xf]
  %v3894 = vld [vmem:[%s3881 + $0x30] sm:$0xf]
  %v3895 = vld [vmem:[%s3881 + $0x34] sm:$0xf]
  %v3896 = vld [vmem:[%s3881 + $0x38] sm:$0xf]
  %v3897 = vld [vmem:[%s3881 + $0x3c] sm:$0xf]
  %v3898 = vld [vmem:[%s3881 + $0x40] sm:$0xf]
  %v3899 = vld [vmem:[%s3881 + $0x44] sm:$0xf]
  %v3900 = vld [vmem:[%s3881 + $0x48] sm:$0xf]
  %v3901 = vld [vmem:[%s3881 + $0x4c] sm:$0xf]
  %v3902 = vld [vmem:[%s3881 + $0x50] sm:$0xf]
  %v3903 = vld [vmem:[%s3881 + $0x54] sm:$0xf]
  %v3904 = vld [vmem:[%s3881 + $0x58] sm:$0xf]
  %v3905 = vld [vmem:[%s3881 + $0x5c] sm:$0xf]
  %v3906 = vld [vmem:[%s3881 + $0x60] sm:$0xf]
  %v3907 = vld [vmem:[%s3881 + $0x64] sm:$0xf]
  %v3908 = vld [vmem:[%s3881 + $0x68] sm:$0xf]
  %v3909 = vld [vmem:[%s3881 + $0x6c] sm:$0xf]
  %v3910 = vld [vmem:[%s3881 + $0x70] sm:$0xf]
  %v3911 = vld [vmem:[%s3881 + $0x74] sm:$0xf]
  %v3912 = vld [vmem:[%s3881 + $0x78] sm:$0xf]
  %v3913 = vld [vmem:[%s3881 + $0x7c] sm:$0xf]
  %v3946 = vunpack.c.l.b16 %v3882
  %v3947 = vunpack.c.l.b16 %v3883
  %v3948 = vunpack.c.l.b16 %v3884
  %v3949 = vunpack.c.l.b16 %v3885
  %v3950 = vunpack.c.l.b16 %v3886
  %v3951 = vunpack.c.l.b16 %v3887
  %v3952 = vunpack.c.l.b16 %v3888
  %v3953 = vunpack.c.l.b16 %v3889
  %v3954 = vunpack.c.l.b16 %v3890
  %v3955 = vunpack.c.l.b16 %v3891
  %v3956 = vunpack.c.l.b16 %v3892
  %v3957 = vunpack.c.l.b16 %v3893
  %v3958 = vunpack.c.l.b16 %v3894
  %v3959 = vunpack.c.l.b16 %v3895
  %v3960 = vunpack.c.l.b16 %v3896
  %v3961 = vunpack.c.l.b16 %v3897
  %v3962 = vunpack.c.l.b16 %v3898
  %v3963 = vunpack.c.l.b16 %v3899
  %v3964 = vunpack.c.l.b16 %v3900
  %v3965 = vunpack.c.l.b16 %v3901
  %v3966 = vunpack.c.l.b16 %v3902
  %v3967 = vunpack.c.l.b16 %v3903
  %v3968 = vunpack.c.l.b16 %v3904
  %v3969 = vunpack.c.l.b16 %v3905
  %v3970 = vunpack.c.l.b16 %v3906
  %v3971 = vunpack.c.l.b16 %v3907
  %v3972 = vunpack.c.l.b16 %v3908
  %v3973 = vunpack.c.l.b16 %v3909
  %v3974 = vunpack.c.l.b16 %v3910
  %v3975 = vunpack.c.l.b16 %v3911
  %v3976 = vunpack.c.l.b16 %v3912
  %v3977 = vunpack.c.l.b16 %v3913
  %v3978 = vpack.c.b16 %v3947, %v3946
  %v3979 = vpack.c.b16 %v3949, %v3948
  %v3980 = vpack.c.b16 %v3951, %v3950
  %v3981 = vpack.c.b16 %v3953, %v3952
  %v3982 = vpack.c.b16 %v3955, %v3954
  %v3983 = vpack.c.b16 %v3957, %v3956
  %v3984 = vpack.c.b16 %v3959, %v3958
  %v3985 = vpack.c.b16 %v3961, %v3960
  %v3986 = vpack.c.b16 %v3963, %v3962
  %v3987 = vpack.c.b16 %v3965, %v3964
  %v3988 = vpack.c.b16 %v3967, %v3966
  %v3989 = vpack.c.b16 %v3969, %v3968
  %v3990 = vpack.c.b16 %v3971, %v3970
  %v3991 = vpack.c.b16 %v3973, %v3972
  %v3992 = vpack.c.b16 %v3975, %v3974
  %v3993 = vpack.c.b16 %v3977, %v3976
  %4010 = vmatprep.subr.bf16.mxu0 0
  %4011 = vmatpush1.bf16.msra.mxu0 %v3978
  %4012 = vmatprep.subr.bf16.mxu0 0
  %4013 = vmatpush1.bf16.msra.mxu0 %v3979
  %4014 = vmatprep.subr.bf16.mxu0 0
  %4015 = vmatpush1.bf16.msra.mxu0 %v3980
  %4016 = vmatprep.subr.bf16.mxu0 0
  %4017 = vmatpush1.bf16.msra.mxu0 %v3981
  %4018 = vmatprep.subr.bf16.mxu0 0
  %4019 = vmatpush1.bf16.msra.mxu0 %v3982
  %4020 = vmatprep.subr.bf16.mxu0 0
  %4021 = vmatpush1.bf16.msra.mxu0 %v3983
  %4022 = vmatprep.subr.bf16.mxu0 0
  %4023 = vmatpush1.bf16.msra.mxu0 %v3984
  %4024 = vmatprep.subr.bf16.mxu0 0
  %4025 = vmatpush1.bf16.msra.mxu0 %v3985
  %4026 = vmatprep.subr.bf16.mxu0 0
  %4027 = vmatpush1.bf16.msra.mxu0 %v3986
  %4028 = vmatprep.subr.bf16.mxu0 0
  %4029 = vmatpush1.bf16.msra.mxu0 %v3987
  %4030 = vmatprep.subr.bf16.mxu0 0
  %4031 = vmatpush1.bf16.msra.mxu0 %v3988
  %4032 = vmatprep.subr.bf16.mxu0 0
  %4033 = vmatpush1.bf16.msra.mxu0 %v3989
  %4034 = vmatprep.subr.bf16.mxu0 0
  %4035 = vmatpush1.bf16.msra.mxu0 %v3990
  %4036 = vmatprep.subr.bf16.mxu0 0
  %4037 = vmatpush1.bf16.msra.mxu0 %v3991
  %4038 = vmatprep.subr.bf16.mxu0 0
  %4039 = vmatpush1.bf16.msra.mxu0 %v3992
  %4040 = vmatprep.subr.bf16.mxu0 0
  %4041 = vmatpush1.bf16.msra.mxu0 %v3993
  %4042 = vmatprep.mubr.bf16.mxu0 %v3880
  %4043 = vmatmul.mubr.bf16.gmra.mrb[0].mxu0 %v3879
  %v4044 = vpop.f32.mrb[0].mxu0
  %v4045 = vadd.f32 0.0, %v4044
  %v4046 = vpop.f32.mrb[0].mxu0
  %v4047 = vpop.f32.mrb[0].mxu0
  %v4048 = vadd.f32 0.0, %v4047
  %v4049 = vpop.f32.mrb[0].mxu0
  %4050 = vdwg.mxu0
  %s4051 = scalar_lea.vmem %s5, 512
  %v4052 = vld [vmem:[%s4051] sm:$0xf]
  %v4053 = vld [vmem:[%s4051 + $0x4] sm:$0xf]
  %v4054 = vld [vmem:[%s4051 + $0x8] sm:$0xf]
  %v4055 = vld [vmem:[%s4051 + $0xc] sm:$0xf]
  %v4056 = vld [vmem:[%s4051 + $0x10] sm:$0xf]
  %v4057 = vld [vmem:[%s4051 + $0x14] sm:$0xf]
  %v4058 = vld [vmem:[%s4051 + $0x18] sm:$0xf]
  %v4059 = vld [vmem:[%s4051 + $0x1c] sm:$0xf]
  %v4060 = vld [vmem:[%s4051 + $0x20] sm:$0xf]
  %v4061 = vld [vmem:[%s4051 + $0x24] sm:$0xf]
  %v4062 = vld [vmem:[%s4051 + $0x28] sm:$0xf]
  %v4063 = vld [vmem:[%s4051 + $0x2c] sm:$0xf]
  %v4064 = vld [vmem:[%s4051 + $0x30] sm:$0xf]
  %v4065 = vld [vmem:[%s4051 + $0x34] sm:$0xf]
  %v4066 = vld [vmem:[%s4051 + $0x38] sm:$0xf]
  %v4067 = vld [vmem:[%s4051 + $0x3c] sm:$0xf]
  %v4068 = vld [vmem:[%s4051 + $0x40] sm:$0xf]
  %v4069 = vld [vmem:[%s4051 + $0x44] sm:$0xf]
  %v4070 = vld [vmem:[%s4051 + $0x48] sm:$0xf]
  %v4071 = vld [vmem:[%s4051 + $0x4c] sm:$0xf]
  %v4072 = vld [vmem:[%s4051 + $0x50] sm:$0xf]
  %v4073 = vld [vmem:[%s4051 + $0x54] sm:$0xf]
  %v4074 = vld [vmem:[%s4051 + $0x58] sm:$0xf]
  %v4075 = vld [vmem:[%s4051 + $0x5c] sm:$0xf]
  %v4076 = vld [vmem:[%s4051 + $0x60] sm:$0xf]
  %v4077 = vld [vmem:[%s4051 + $0x64] sm:$0xf]
  %v4078 = vld [vmem:[%s4051 + $0x68] sm:$0xf]
  %v4079 = vld [vmem:[%s4051 + $0x6c] sm:$0xf]
  %v4080 = vld [vmem:[%s4051 + $0x70] sm:$0xf]
  %v4081 = vld [vmem:[%s4051 + $0x74] sm:$0xf]
  %v4082 = vld [vmem:[%s4051 + $0x78] sm:$0xf]
  %v4083 = vld [vmem:[%s4051 + $0x7c] sm:$0xf]
  %v4116 = vunpack.c.l.b16 %v4052
  %v4117 = vunpack.c.l.b16 %v4053
  %v4118 = vunpack.c.l.b16 %v4054
  %v4119 = vunpack.c.l.b16 %v4055
  %v4120 = vunpack.c.l.b16 %v4056
  %v4121 = vunpack.c.l.b16 %v4057
  %v4122 = vunpack.c.l.b16 %v4058
  %v4123 = vunpack.c.l.b16 %v4059
  %v4124 = vunpack.c.l.b16 %v4060
  %v4125 = vunpack.c.l.b16 %v4061
  %v4126 = vunpack.c.l.b16 %v4062
  %v4127 = vunpack.c.l.b16 %v4063
  %v4128 = vunpack.c.l.b16 %v4064
  %v4129 = vunpack.c.l.b16 %v4065
  %v4130 = vunpack.c.l.b16 %v4066
  %v4131 = vunpack.c.l.b16 %v4067
  %v4132 = vunpack.c.l.b16 %v4068
  %v4133 = vunpack.c.l.b16 %v4069
  %v4134 = vunpack.c.l.b16 %v4070
  %v4135 = vunpack.c.l.b16 %v4071
  %v4136 = vunpack.c.l.b16 %v4072
  %v4137 = vunpack.c.l.b16 %v4073
  %v4138 = vunpack.c.l.b16 %v4074
  %v4139 = vunpack.c.l.b16 %v4075
  %v4140 = vunpack.c.l.b16 %v4076
  %v4141 = vunpack.c.l.b16 %v4077
  %v4142 = vunpack.c.l.b16 %v4078
  %v4143 = vunpack.c.l.b16 %v4079
  %v4144 = vunpack.c.l.b16 %v4080
  %v4145 = vunpack.c.l.b16 %v4081
  %v4146 = vunpack.c.l.b16 %v4082
  %v4147 = vunpack.c.l.b16 %v4083
  %v4148 = vpack.c.b16 %v4117, %v4116
  %v4149 = vpack.c.b16 %v4119, %v4118
  %v4150 = vpack.c.b16 %v4121, %v4120
  %v4151 = vpack.c.b16 %v4123, %v4122
  %v4152 = vpack.c.b16 %v4125, %v4124
  %v4153 = vpack.c.b16 %v4127, %v4126
  %v4154 = vpack.c.b16 %v4129, %v4128
  %v4155 = vpack.c.b16 %v4131, %v4130
  %v4156 = vpack.c.b16 %v4133, %v4132
  %v4157 = vpack.c.b16 %v4135, %v4134
  %v4158 = vpack.c.b16 %v4137, %v4136
  %v4159 = vpack.c.b16 %v4139, %v4138
  %v4160 = vpack.c.b16 %v4141, %v4140
  %v4161 = vpack.c.b16 %v4143, %v4142
  %v4162 = vpack.c.b16 %v4145, %v4144
  %v4163 = vpack.c.b16 %v4147, %v4146
  %4180 = vmatprep.subr.bf16.mxu0 0
  %4181 = vmatpush1.bf16.msra.mxu0 %v4148
  %4182 = vmatprep.subr.bf16.mxu0 0
  %4183 = vmatpush1.bf16.msra.mxu0 %v4149
  %4184 = vmatprep.subr.bf16.mxu0 0
  %4185 = vmatpush1.bf16.msra.mxu0 %v4150
  %4186 = vmatprep.subr.bf16.mxu0 0
  %4187 = vmatpush1.bf16.msra.mxu0 %v4151
  %4188 = vmatprep.subr.bf16.mxu0 0
  %4189 = vmatpush1.bf16.msra.mxu0 %v4152
  %4190 = vmatprep.subr.bf16.mxu0 0
  %4191 = vmatpush1.bf16.msra.mxu0 %v4153
  %4192 = vmatprep.subr.bf16.mxu0 0
  %4193 = vmatpush1.bf16.msra.mxu0 %v4154
  %4194 = vmatprep.subr.bf16.mxu0 0
  %4195 = vmatpush1.bf16.msra.mxu0 %v4155
  %4196 = vmatprep.subr.bf16.mxu0 0
  %4197 = vmatpush1.bf16.msra.mxu0 %v4156
  %4198 = vmatprep.subr.bf16.mxu0 0
  %4199 = vmatpush1.bf16.msra.mxu0 %v4157
  %4200 = vmatprep.subr.bf16.mxu0 0
  %4201 = vmatpush1.bf16.msra.mxu0 %v4158
  %4202 = vmatprep.subr.bf16.mxu0 0
  %4203 = vmatpush1.bf16.msra.mxu0 %v4159
  %4204 = vmatprep.subr.bf16.mxu0 0
  %4205 = vmatpush1.bf16.msra.mxu0 %v4160
  %4206 = vmatprep.subr.bf16.mxu0 0
  %4207 = vmatpush1.bf16.msra.mxu0 %v4161
  %4208 = vmatprep.subr.bf16.mxu0 0
  %4209 = vmatpush1.bf16.msra.mxu0 %v4162
  %4210 = vmatprep.subr.bf16.mxu0 0
  %4211 = vmatpush1.bf16.msra.mxu0 %v4163
  %4212 = vmatprep.mubr.bf16.mxu0 %v3880
  %4213 = vmatmul.mubr.bf16.gmra.mrb[0].mxu0 %v3879
  %v4214 = vpop.f32.mrb[0].mxu0
  %v4215 = vadd.f32 0.0, %v4214
  %v4216 = vpop.f32.mrb[0].mxu0
  %v4217 = vpop.f32.mrb[0].mxu0
  %v4218 = vadd.f32 0.0, %v4217
  %v4219 = vpop.f32.mrb[0].mxu0
  %4220 = vdwg.mxu0
  %s4221 = scalar_lea.vmem %s6, 512
  %v4222 = vld [vmem:[%s4221] sm:$0xf]
  %v4223 = vld [vmem:[%s4221 + $0x4] sm:$0xf]
  %v4224 = vld [vmem:[%s4221 + $0x8] sm:$0xf]
  %v4225 = vld [vmem:[%s4221 + $0xc] sm:$0xf]
  %v4226 = vld [vmem:[%s4221 + $0x10] sm:$0xf]
  %v4227 = vld [vmem:[%s4221 + $0x14] sm:$0xf]
  %v4228 = vld [vmem:[%s4221 + $0x18] sm:$0xf]
  %v4229 = vld [vmem:[%s4221 + $0x1c] sm:$0xf]
  %v4230 = vld [vmem:[%s4221 + $0x20] sm:$0xf]
  %v4231 = vld [vmem:[%s4221 + $0x24] sm:$0xf]
  %v4232 = vld [vmem:[%s4221 + $0x28] sm:$0xf]
  %v4233 = vld [vmem:[%s4221 + $0x2c] sm:$0xf]
  %v4234 = vld [vmem:[%s4221 + $0x30] sm:$0xf]
  %v4235 = vld [vmem:[%s4221 + $0x34] sm:$0xf]
  %v4236 = vld [vmem:[%s4221 + $0x38] sm:$0xf]
  %v4237 = vld [vmem:[%s4221 + $0x3c] sm:$0xf]
  %v4238 = vld [vmem:[%s4221 + $0x40] sm:$0xf]
  %v4239 = vld [vmem:[%s4221 + $0x44] sm:$0xf]
  %v4240 = vld [vmem:[%s4221 + $0x48] sm:$0xf]
  %v4241 = vld [vmem:[%s4221 + $0x4c] sm:$0xf]
  %v4242 = vld [vmem:[%s4221 + $0x50] sm:$0xf]
  %v4243 = vld [vmem:[%s4221 + $0x54] sm:$0xf]
  %v4244 = vld [vmem:[%s4221 + $0x58] sm:$0xf]
  %v4245 = vld [vmem:[%s4221 + $0x5c] sm:$0xf]
  %v4246 = vld [vmem:[%s4221 + $0x60] sm:$0xf]
  %v4247 = vld [vmem:[%s4221 + $0x64] sm:$0xf]
  %v4248 = vld [vmem:[%s4221 + $0x68] sm:$0xf]
  %v4249 = vld [vmem:[%s4221 + $0x6c] sm:$0xf]
  %v4250 = vld [vmem:[%s4221 + $0x70] sm:$0xf]
  %v4251 = vld [vmem:[%s4221 + $0x74] sm:$0xf]
  %v4252 = vld [vmem:[%s4221 + $0x78] sm:$0xf]
  %v4253 = vld [vmem:[%s4221 + $0x7c] sm:$0xf]
  %v4286 = vunpack.c.l.b16 %v4222
  %v4287 = vunpack.c.l.b16 %v4223
  %v4288 = vunpack.c.l.b16 %v4224
  %v4289 = vunpack.c.l.b16 %v4225
  %v4290 = vunpack.c.l.b16 %v4226
  %v4291 = vunpack.c.l.b16 %v4227
  %v4292 = vunpack.c.l.b16 %v4228
  %v4293 = vunpack.c.l.b16 %v4229
  %v4294 = vunpack.c.l.b16 %v4230
  %v4295 = vunpack.c.l.b16 %v4231
  %v4296 = vunpack.c.l.b16 %v4232
  %v4297 = vunpack.c.l.b16 %v4233
  %v4298 = vunpack.c.l.b16 %v4234
  %v4299 = vunpack.c.l.b16 %v4235
  %v4300 = vunpack.c.l.b16 %v4236
  %v4301 = vunpack.c.l.b16 %v4237
  %v4302 = vunpack.c.l.b16 %v4238
  %v4303 = vunpack.c.l.b16 %v4239
  %v4304 = vunpack.c.l.b16 %v4240
  %v4305 = vunpack.c.l.b16 %v4241
  %v4306 = vunpack.c.l.b16 %v4242
  %v4307 = vunpack.c.l.b16 %v4243
  %v4308 = vunpack.c.l.b16 %v4244
  %v4309 = vunpack.c.l.b16 %v4245
  %v4310 = vunpack.c.l.b16 %v4246
  %v4311 = vunpack.c.l.b16 %v4247
  %v4312 = vunpack.c.l.b16 %v4248
  %v4313 = vunpack.c.l.b16 %v4249
  %v4314 = vunpack.c.l.b16 %v4250
  %v4315 = vunpack.c.l.b16 %v4251
  %v4316 = vunpack.c.l.b16 %v4252
  %v4317 = vunpack.c.l.b16 %v4253
  %v4318 = vpack.c.b16 %v4287, %v4286
  %v4319 = vpack.c.b16 %v4289, %v4288
  %v4320 = vpack.c.b16 %v4291, %v4290
  %v4321 = vpack.c.b16 %v4293, %v4292
  %v4322 = vpack.c.b16 %v4295, %v4294
  %v4323 = vpack.c.b16 %v4297, %v4296
  %v4324 = vpack.c.b16 %v4299, %v4298
  %v4325 = vpack.c.b16 %v4301, %v4300
  %v4326 = vpack.c.b16 %v4303, %v4302
  %v4327 = vpack.c.b16 %v4305, %v4304
  %v4328 = vpack.c.b16 %v4307, %v4306
  %v4329 = vpack.c.b16 %v4309, %v4308
  %v4330 = vpack.c.b16 %v4311, %v4310
  %v4331 = vpack.c.b16 %v4313, %v4312
  %v4332 = vpack.c.b16 %v4315, %v4314
  %v4333 = vpack.c.b16 %v4317, %v4316
  %4350 = vmatprep.subr.bf16.mxu0 0
  %4351 = vmatpush1.bf16.msra.mxu0 %v4318
  %4352 = vmatprep.subr.bf16.mxu0 0
  %4353 = vmatpush1.bf16.msra.mxu0 %v4319
  %4354 = vmatprep.subr.bf16.mxu0 0
  %4355 = vmatpush1.bf16.msra.mxu0 %v4320
  %4356 = vmatprep.subr.bf16.mxu0 0
  %4357 = vmatpush1.bf16.msra.mxu0 %v4321
  %4358 = vmatprep.subr.bf16.mxu0 0
  %4359 = vmatpush1.bf16.msra.mxu0 %v4322
  %4360 = vmatprep.subr.bf16.mxu0 0
  %4361 = vmatpush1.bf16.msra.mxu0 %v4323
  %4362 = vmatprep.subr.bf16.mxu0 0
  %4363 = vmatpush1.bf16.msra.mxu0 %v4324
  %4364 = vmatprep.subr.bf16.mxu0 0
  %4365 = vmatpush1.bf16.msra.mxu0 %v4325
  %4366 = vmatprep.subr.bf16.mxu0 0
  %4367 = vmatpush1.bf16.msra.mxu0 %v4326
  %4368 = vmatprep.subr.bf16.mxu0 0
  %4369 = vmatpush1.bf16.msra.mxu0 %v4327
  %4370 = vmatprep.subr.bf16.mxu0 0
  %4371 = vmatpush1.bf16.msra.mxu0 %v4328
  %4372 = vmatprep.subr.bf16.mxu0 0
  %4373 = vmatpush1.bf16.msra.mxu0 %v4329
  %4374 = vmatprep.subr.bf16.mxu0 0
  %4375 = vmatpush1.bf16.msra.mxu0 %v4330
  %4376 = vmatprep.subr.bf16.mxu0 0
  %4377 = vmatpush1.bf16.msra.mxu0 %v4331
  %4378 = vmatprep.subr.bf16.mxu0 0
  %4379 = vmatpush1.bf16.msra.mxu0 %v4332
  %4380 = vmatprep.subr.bf16.mxu0 0
  %4381 = vmatpush1.bf16.msra.mxu0 %v4333
  %4382 = vmatprep.mubr.bf16.mxu0 %v3880
  %4383 = vmatmul.mubr.bf16.gmra.mrb[0].mxu0 %v3879
  %v4384 = vpop.f32.mrb[0].mxu0
  %v4385 = vadd.f32 0.0, %v4384
  %v4386 = vpop.f32.mrb[0].mxu0
  %v4387 = vpop.f32.mrb[0].mxu0
  %v4388 = vadd.f32 0.0, %v4387
  %v4389 = vpop.f32.mrb[0].mxu0
  %4390 = vdwg.mxu0
  %v4391 = vpack.c.bf16 %v4045, %v4045
  %v4392 = vpack.c.bf16 %v4048, %v4048
  %v4393 = vpack.c.bf16 %v4215, %v4215
  %v4394 = vpack.c.bf16 %v4218, %v4218
  %v4395 = vpack.c.bf16 %v4385, %v4385
  %v4396 = vpack.c.bf16 %v4388, %v4388
  %v4398 = vsel %vm658, %v4391, 0
  %v4401 = vsel %vm658, %v4393, 0
  %4403 = vmatprep.subr.bf16.mxu0 0
  %4404 = vmatpush1.bf16.xpose.msra.mxu0 %v4401
  %4405 = vmatprep.subr.bf16.mxu0 0
  %4406 = vmatpush1.bf16.xpose.msra.mxu0 0
  %4407 = vmatprep.subr.bf16.mxu0 0
  %4408 = vmatpush1.bf16.xpose.msra.mxu0 0
  %4409 = vmatprep.subr.bf16.mxu0 0
  %4410 = vmatpush1.bf16.xpose.msra.mxu0 0
  %4411 = vmatprep.subr.bf16.mxu0 0
  %4412 = vmatpush1.bf16.xpose.msra.mxu0 0
  %4413 = vmatprep.subr.bf16.mxu0 0
  %4414 = vmatpush1.bf16.xpose.msra.mxu0 0
  %4415 = vmatprep.subr.bf16.mxu0 0
  %4416 = vmatpush1.bf16.xpose.msra.mxu0 0
  %4417 = vmatprep.subr.bf16.mxu0 0
  %4418 = vmatpush1.bf16.xpose.msra.mxu0 0
  %4419 = vmatprep.subr.bf16.mxu0 0
  %4420 = vmatpush1.bf16.xpose.msra.mxu0 0
  %4421 = vmatprep.subr.bf16.mxu0 0
  %4422 = vmatpush1.bf16.xpose.msra.mxu0 0
  %4423 = vmatprep.subr.bf16.mxu0 0
  %4424 = vmatpush1.bf16.xpose.msra.mxu0 0
  %4425 = vmatprep.subr.bf16.mxu0 0
  %4426 = vmatpush1.bf16.xpose.msra.mxu0 0
  %4427 = vmatprep.subr.bf16.mxu0 0
  %4428 = vmatpush1.bf16.xpose.msra.mxu0 0
  %4429 = vmatprep.subr.bf16.mxu0 0
  %4430 = vmatpush1.bf16.xpose.msra.mxu0 0
  %4431 = vmatprep.subr.bf16.mxu0 0
  %4432 = vmatpush1.bf16.xpose.msra.mxu0 0
  %4433 = vmatprep.subr.bf16.mxu0 0
  %4434 = vmatpush1.bf16.xpose.msra.mxu0 0
  %4435 = vmatprep.mubr.bf16.mxu0 0
  %4436 = vmatmul.mubr.bf16.gmra.mrb[0].mxu0 %v4398
  %v4437 = vpop.f32.mrb[0].mxu0
  %v4438 = vadd.f32 %v142, %v4437
  %v4439 = vpop.f32.mrb[0].mxu0
  %v4440 = vpop.f32.mrb[0].mxu0
  %v4441 = vpop.f32.mrb[0].mxu0
  %4442 = vdwg.mxu0
  %v4444 = vsel %vm658, %v4392, 0
  %v4447 = vsel %vm658, %v4394, 0
  %4449 = vmatprep.subr.bf16.mxu0 0
  %4450 = vmatpush1.bf16.xpose.msra.mxu0 %v4447
  %4451 = vmatprep.subr.bf16.mxu0 0
  %4452 = vmatpush1.bf16.xpose.msra.mxu0 0
  %4453 = vmatprep.subr.bf16.mxu0 0
  %4454 = vmatpush1.bf16.xpose.msra.mxu0 0
  %4455 = vmatprep.subr.bf16.mxu0 0
  %4456 = vmatpush1.bf16.xpose.msra.mxu0 0
  %4457 = vmatprep.subr.bf16.mxu0 0
  %4458 = vmatpush1.bf16.xpose.msra.mxu0 0
  %4459 = vmatprep.subr.bf16.mxu0 0
  %4460 = vmatpush1.bf16.xpose.msra.mxu0 0
  %4461 = vmatprep.subr.bf16.mxu0 0
  %4462 = vmatpush1.bf16.xpose.msra.mxu0 0
  %4463 = vmatprep.subr.bf16.mxu0 0
  %4464 = vmatpush1.bf16.xpose.msra.mxu0 0
  %4465 = vmatprep.subr.bf16.mxu0 0
  %4466 = vmatpush1.bf16.xpose.msra.mxu0 0
  %4467 = vmatprep.subr.bf16.mxu0 0
  %4468 = vmatpush1.bf16.xpose.msra.mxu0 0
  %4469 = vmatprep.subr.bf16.mxu0 0
  %4470 = vmatpush1.bf16.xpose.msra.mxu0 0
  %4471 = vmatprep.subr.bf16.mxu0 0
  %4472 = vmatpush1.bf16.xpose.msra.mxu0 0
  %4473 = vmatprep.subr.bf16.mxu0 0
  %4474 = vmatpush1.bf16.xpose.msra.mxu0 0
  %4475 = vmatprep.subr.bf16.mxu0 0
  %4476 = vmatpush1.bf16.xpose.msra.mxu0 0
  %4477 = vmatprep.subr.bf16.mxu0 0
  %4478 = vmatpush1.bf16.xpose.msra.mxu0 0
  %4479 = vmatprep.subr.bf16.mxu0 0
  %4480 = vmatpush1.bf16.xpose.msra.mxu0 0
  %4481 = vmatprep.mubr.bf16.mxu0 0
  %4482 = vmatmul.mubr.bf16.gmra.mrb[0].mxu0 %v4444
  %v4483 = vpop.f32.mrb[0].mxu0
  %v4484 = vadd.f32 %v142, %v4483
  %v4485 = vpop.f32.mrb[0].mxu0
  %v4486 = vpop.f32.mrb[0].mxu0
  %v4487 = vpop.f32.mrb[0].mxu0
  %4488 = vdwg.mxu0
  %v4489 = vsel %vm751, %v4438, -inf
  %4490 = vmax.xlane.f32.xlu0 %v4489
  %v4491 = vpop.xlane.xlu0 %4490
  %v4492 = vsel %vm751, %v4484, -inf
  %4493 = vmax.xlane.f32.xlu0 %v4492
  %v4494 = vpop.xlane.xlu0 %4493
  %v4495 = vsub.f32 %v4438, %v4491
  %v4496 = vsub.f32 %v4484, %v4494
  %v4497 = vmul.f32 %v4495, 1.442695
  %v4498 = vpow.pop %v4497
  %v4499 = vmul.f32 %v4496, 1.442695
  %v4500 = vpow.pop %v4499
  %v4501 = vsel %vm751, %v4498, 0.0
  %4502 = vadd.xlane.f32.xlu0 %v4501
  %v4503 = vpop.xlane.xlu0 %4502
  %v4504 = vsel %vm751, %v4500, 0.0
  %4505 = vadd.xlane.f32.xlu0 %v4504
  %v4506 = vpop.xlane.xlu0 %4505
  %v4507 = vrcp.pop %v4503
  %v4508 = vrcp.pop %v4506
  %v4509 = vmul.f32 %v4498, %v4507
  %v4510 = vmul.f32 %v4500, %v4508
  %4511 = vst.msk [vmem:[%s12] sm:$0xff] %vm751, %v4509
  %4512 = vst.msk [vmem:[%s12 + $0x8] sm:$0xff] %vm751, %v4510
  %v4513 = vpack.c.bf16 %v4509, %v4509
  %v4514 = vpack.c.bf16 %v4510, %v4510
  %v4516 = vsel %vm751, %v4513, 0
  %v4519 = vsel %vm58, %v4395, 0
  %4521 = vmatprep.subr.bf16.mxu0 0
  %4522 = vmatpush1.bf16.msra.mxu0 %v4519
  %4523 = vmatprep.subr.bf16.mxu0 0
  %4524 = vmatpush1.bf16.msra.mxu0 0
  %4525 = vmatprep.subr.bf16.mxu0 0
  %4526 = vmatpush1.bf16.msra.mxu0 0
  %4527 = vmatprep.subr.bf16.mxu0 0
  %4528 = vmatpush1.bf16.msra.mxu0 0
  %4529 = vmatprep.subr.bf16.mxu0 0
  %4530 = vmatpush1.bf16.msra.mxu0 0
  %4531 = vmatprep.subr.bf16.mxu0 0
  %4532 = vmatpush1.bf16.msra.mxu0 0
  %4533 = vmatprep.subr.bf16.mxu0 0
  %4534 = vmatpush1.bf16.msra.mxu0 0
  %4535 = vmatprep.subr.bf16.mxu0 0
  %4536 = vmatpush1.bf16.msra.mxu0 0
  %4537 = vmatprep.subr.bf16.mxu0 0
  %4538 = vmatpush1.bf16.msra.mxu0 0
  %4539 = vmatprep.subr.bf16.mxu0 0
  %4540 = vmatpush1.bf16.msra.mxu0 0
  %4541 = vmatprep.subr.bf16.mxu0 0
  %4542 = vmatpush1.bf16.msra.mxu0 0
  %4543 = vmatprep.subr.bf16.mxu0 0
  %4544 = vmatpush1.bf16.msra.mxu0 0
  %4545 = vmatprep.subr.bf16.mxu0 0
  %4546 = vmatpush1.bf16.msra.mxu0 0
  %4547 = vmatprep.subr.bf16.mxu0 0
  %4548 = vmatpush1.bf16.msra.mxu0 0
  %4549 = vmatprep.subr.bf16.mxu0 0
  %4550 = vmatpush1.bf16.msra.mxu0 0
  %4551 = vmatprep.subr.bf16.mxu0 0
  %4552 = vmatpush1.bf16.msra.mxu0 0
  %4553 = vmatprep.mubr.bf16.mxu0 0
  %4554 = vmatmul.mubr.bf16.gmra.mrb[0].mxu0 %v4516
  %v4555 = vpop.f32.mrb[0].mxu0
  %v4556 = vadd.f32 0.0, %v4555
  %v4557 = vpop.f32.mrb[0].mxu0
  %v4558 = vpop.f32.mrb[0].mxu0
  %v4559 = vpop.f32.mrb[0].mxu0
  %4560 = vdwg.mxu0
  %v4562 = vsel %vm751, %v4514, 0
  %v4565 = vsel %vm58, %v4396, 0
  %4567 = vmatprep.subr.bf16.mxu0 0
  %4568 = vmatpush1.bf16.msra.mxu0 %v4565
  %4569 = vmatprep.subr.bf16.mxu0 0
  %4570 = vmatpush1.bf16.msra.mxu0 0
  %4571 = vmatprep.subr.bf16.mxu0 0
  %4572 = vmatpush1.bf16.msra.mxu0 0
  %4573 = vmatprep.subr.bf16.mxu0 0
  %4574 = vmatpush1.bf16.msra.mxu0 0
  %4575 = vmatprep.subr.bf16.mxu0 0
  %4576 = vmatpush1.bf16.msra.mxu0 0
  %4577 = vmatprep.subr.bf16.mxu0 0
  %4578 = vmatpush1.bf16.msra.mxu0 0
  %4579 = vmatprep.subr.bf16.mxu0 0
  %4580 = vmatpush1.bf16.msra.mxu0 0
  %4581 = vmatprep.subr.bf16.mxu0 0
  %4582 = vmatpush1.bf16.msra.mxu0 0
  %4583 = vmatprep.subr.bf16.mxu0 0
  %4584 = vmatpush1.bf16.msra.mxu0 0
  %4585 = vmatprep.subr.bf16.mxu0 0
  %4586 = vmatpush1.bf16.msra.mxu0 0
  %4587 = vmatprep.subr.bf16.mxu0 0
  %4588 = vmatpush1.bf16.msra.mxu0 0
  %4589 = vmatprep.subr.bf16.mxu0 0
  %4590 = vmatpush1.bf16.msra.mxu0 0
  %4591 = vmatprep.subr.bf16.mxu0 0
  %4592 = vmatpush1.bf16.msra.mxu0 0
  %4593 = vmatprep.subr.bf16.mxu0 0
  %4594 = vmatpush1.bf16.msra.mxu0 0
  %4595 = vmatprep.subr.bf16.mxu0 0
  %4596 = vmatpush1.bf16.msra.mxu0 0
  %4597 = vmatprep.subr.bf16.mxu0 0
  %4598 = vmatpush1.bf16.msra.mxu0 0
  %4599 = vmatprep.mubr.bf16.mxu0 0
  %4600 = vmatmul.mubr.bf16.gmra.mrb[0].mxu0 %v4562
  %v4601 = vpop.f32.mrb[0].mxu0
  %v4602 = vadd.f32 0.0, %v4601
  %v4603 = vpop.f32.mrb[0].mxu0
  %v4604 = vpop.f32.mrb[0].mxu0
  %v4605 = vpop.f32.mrb[0].mxu0
  %4606 = vdwg.mxu0
  %v4607 = vpack.c.bf16 %v4602, %v4556
  %s4608 = scalar_lea.vmem %s7, 256
  %v4609 = vld [vmem:[%s4608] sm:$0xff]
  %v4610 = vld [vmem:[%s4608 + $0x8] sm:$0xff]
  %v4611 = vld [vmem:[%s4608 + $0x10] sm:$0xff]
  %v4612 = vld [vmem:[%s4608 + $0x18] sm:$0xff]
  %v4613 = vld [vmem:[%s4608 + $0x20] sm:$0xff]
  %v4614 = vld [vmem:[%s4608 + $0x28] sm:$0xff]
  %v4615 = vld [vmem:[%s4608 + $0x30] sm:$0xff]
  %v4616 = vld [vmem:[%s4608 + $0x38] sm:$0xff]
  %s4617 = scalar_lea.vmem %s4, 640
  %v4618 = vld [vmem:[%s4617] sm:$0xf]
  %v4619 = vld [vmem:[%s4617 + $0x4] sm:$0xf]
  %v4620 = vld [vmem:[%s4617 + $0x8] sm:$0xf]
  %v4621 = vld [vmem:[%s4617 + $0xc] sm:$0xf]
  %v4622 = vld [vmem:[%s4617 + $0x10] sm:$0xf]
  %v4623 = vld [vmem:[%s4617 + $0x14] sm:$0xf]
  %v4624 = vld [vmem:[%s4617 + $0x18] sm:$0xf]
  %v4625 = vld [vmem:[%s4617 + $0x1c] sm:$0xf]
  %v4626 = vld [vmem:[%s4617 + $0x20] sm:$0xf]
  %v4627 = vld [vmem:[%s4617 + $0x24] sm:$0xf]
  %v4628 = vld [vmem:[%s4617 + $0x28] sm:$0xf]
  %v4629 = vld [vmem:[%s4617 + $0x2c] sm:$0xf]
  %v4630 = vld [vmem:[%s4617 + $0x30] sm:$0xf]
  %v4631 = vld [vmem:[%s4617 + $0x34] sm:$0xf]
  %v4632 = vld [vmem:[%s4617 + $0x38] sm:$0xf]
  %v4633 = vld [vmem:[%s4617 + $0x3c] sm:$0xf]
  %v4634 = vld [vmem:[%s4617 + $0x40] sm:$0xf]
  %v4635 = vld [vmem:[%s4617 + $0x44] sm:$0xf]
  %v4636 = vld [vmem:[%s4617 + $0x48] sm:$0xf]
  %v4637 = vld [vmem:[%s4617 + $0x4c] sm:$0xf]
  %v4638 = vld [vmem:[%s4617 + $0x50] sm:$0xf]
  %v4639 = vld [vmem:[%s4617 + $0x54] sm:$0xf]
  %v4640 = vld [vmem:[%s4617 + $0x58] sm:$0xf]
  %v4641 = vld [vmem:[%s4617 + $0x5c] sm:$0xf]
  %v4642 = vld [vmem:[%s4617 + $0x60] sm:$0xf]
  %v4643 = vld [vmem:[%s4617 + $0x64] sm:$0xf]
  %v4644 = vld [vmem:[%s4617 + $0x68] sm:$0xf]
  %v4645 = vld [vmem:[%s4617 + $0x6c] sm:$0xf]
  %v4646 = vld [vmem:[%s4617 + $0x70] sm:$0xf]
  %v4647 = vld [vmem:[%s4617 + $0x74] sm:$0xf]
  %v4648 = vld [vmem:[%s4617 + $0x78] sm:$0xf]
  %v4649 = vld [vmem:[%s4617 + $0x7c] sm:$0xf]
  %v4682 = vunpack.c.l.b16 %v4618
  %v4683 = vunpack.c.l.b16 %v4619
  %v4684 = vunpack.c.l.b16 %v4620
  %v4685 = vunpack.c.l.b16 %v4621
  %v4686 = vunpack.c.l.b16 %v4622
  %v4687 = vunpack.c.l.b16 %v4623
  %v4688 = vunpack.c.l.b16 %v4624
  %v4689 = vunpack.c.l.b16 %v4625
  %v4690 = vunpack.c.l.b16 %v4626
  %v4691 = vunpack.c.l.b16 %v4627
  %v4692 = vunpack.c.l.b16 %v4628
  %v4693 = vunpack.c.l.b16 %v4629
  %v4694 = vunpack.c.l.b16 %v4630
  %v4695 = vunpack.c.l.b16 %v4631
  %v4696 = vunpack.c.l.b16 %v4632
  %v4697 = vunpack.c.l.b16 %v4633
  %v4698 = vunpack.c.l.b16 %v4634
  %v4699 = vunpack.c.l.b16 %v4635
  %v4700 = vunpack.c.l.b16 %v4636
  %v4701 = vunpack.c.l.b16 %v4637
  %v4702 = vunpack.c.l.b16 %v4638
  %v4703 = vunpack.c.l.b16 %v4639
  %v4704 = vunpack.c.l.b16 %v4640
  %v4705 = vunpack.c.l.b16 %v4641
  %v4706 = vunpack.c.l.b16 %v4642
  %v4707 = vunpack.c.l.b16 %v4643
  %v4708 = vunpack.c.l.b16 %v4644
  %v4709 = vunpack.c.l.b16 %v4645
  %v4710 = vunpack.c.l.b16 %v4646
  %v4711 = vunpack.c.l.b16 %v4647
  %v4712 = vunpack.c.l.b16 %v4648
  %v4713 = vunpack.c.l.b16 %v4649
  %v4714 = vpack.c.b16 %v4683, %v4682
  %v4715 = vpack.c.b16 %v4685, %v4684
  %v4716 = vpack.c.b16 %v4687, %v4686
  %v4717 = vpack.c.b16 %v4689, %v4688
  %v4718 = vpack.c.b16 %v4691, %v4690
  %v4719 = vpack.c.b16 %v4693, %v4692
  %v4720 = vpack.c.b16 %v4695, %v4694
  %v4721 = vpack.c.b16 %v4697, %v4696
  %v4722 = vpack.c.b16 %v4699, %v4698
  %v4723 = vpack.c.b16 %v4701, %v4700
  %v4724 = vpack.c.b16 %v4703, %v4702
  %v4725 = vpack.c.b16 %v4705, %v4704
  %v4726 = vpack.c.b16 %v4707, %v4706
  %v4727 = vpack.c.b16 %v4709, %v4708
  %v4728 = vpack.c.b16 %v4711, %v4710
  %v4729 = vpack.c.b16 %v4713, %v4712
  %4746 = vmatprep.subr.bf16.mxu0 0
  %4747 = vmatpush1.bf16.msra.mxu0 %v4714
  %4748 = vmatprep.subr.bf16.mxu0 0
  %4749 = vmatpush1.bf16.msra.mxu0 %v4715
  %4750 = vmatprep.subr.bf16.mxu0 0
  %4751 = vmatpush1.bf16.msra.mxu0 %v4716
  %4752 = vmatprep.subr.bf16.mxu0 0
  %4753 = vmatpush1.bf16.msra.mxu0 %v4717
  %4754 = vmatprep.subr.bf16.mxu0 0
  %4755 = vmatpush1.bf16.msra.mxu0 %v4718
  %4756 = vmatprep.subr.bf16.mxu0 0
  %4757 = vmatpush1.bf16.msra.mxu0 %v4719
  %4758 = vmatprep.subr.bf16.mxu0 0
  %4759 = vmatpush1.bf16.msra.mxu0 %v4720
  %4760 = vmatprep.subr.bf16.mxu0 0
  %4761 = vmatpush1.bf16.msra.mxu0 %v4721
  %4762 = vmatprep.subr.bf16.mxu0 0
  %4763 = vmatpush1.bf16.msra.mxu0 %v4722
  %4764 = vmatprep.subr.bf16.mxu0 0
  %4765 = vmatpush1.bf16.msra.mxu0 %v4723
  %4766 = vmatprep.subr.bf16.mxu0 0
  %4767 = vmatpush1.bf16.msra.mxu0 %v4724
  %4768 = vmatprep.subr.bf16.mxu0 0
  %4769 = vmatpush1.bf16.msra.mxu0 %v4725
  %4770 = vmatprep.subr.bf16.mxu0 0
  %4771 = vmatpush1.bf16.msra.mxu0 %v4726
  %4772 = vmatprep.subr.bf16.mxu0 0
  %4773 = vmatpush1.bf16.msra.mxu0 %v4727
  %4774 = vmatprep.subr.bf16.mxu0 0
  %4775 = vmatpush1.bf16.msra.mxu0 %v4728
  %4776 = vmatprep.subr.bf16.mxu0 0
  %4777 = vmatpush1.bf16.msra.mxu0 %v4729
  %4778 = vmatprep.mubr.bf16.mxu0 %v3880
  %4779 = vmatmul.mubr.bf16.gmra.mrb[0].mxu0 %v3879
  %v4780 = vpop.f32.mrb[0].mxu0
  %v4781 = vadd.f32 0.0, %v4780
  %v4782 = vpop.f32.mrb[0].mxu0
  %v4783 = vpop.f32.mrb[0].mxu0
  %v4784 = vadd.f32 0.0, %v4783
  %v4785 = vpop.f32.mrb[0].mxu0
  %4786 = vdwg.mxu0
  %s4787 = scalar_lea.vmem %s5, 640
  %v4788 = vld [vmem:[%s4787] sm:$0xf]
  %v4789 = vld [vmem:[%s4787 + $0x4] sm:$0xf]
  %v4790 = vld [vmem:[%s4787 + $0x8] sm:$0xf]
  %v4791 = vld [vmem:[%s4787 + $0xc] sm:$0xf]
  %v4792 = vld [vmem:[%s4787 + $0x10] sm:$0xf]
  %v4793 = vld [vmem:[%s4787 + $0x14] sm:$0xf]
  %v4794 = vld [vmem:[%s4787 + $0x18] sm:$0xf]
  %v4795 = vld [vmem:[%s4787 + $0x1c] sm:$0xf]
  %v4796 = vld [vmem:[%s4787 + $0x20] sm:$0xf]
  %v4797 = vld [vmem:[%s4787 + $0x24] sm:$0xf]
  %v4798 = vld [vmem:[%s4787 + $0x28] sm:$0xf]
  %v4799 = vld [vmem:[%s4787 + $0x2c] sm:$0xf]
  %v4800 = vld [vmem:[%s4787 + $0x30] sm:$0xf]
  %v4801 = vld [vmem:[%s4787 + $0x34] sm:$0xf]
  %v4802 = vld [vmem:[%s4787 + $0x38] sm:$0xf]
  %v4803 = vld [vmem:[%s4787 + $0x3c] sm:$0xf]
  %v4804 = vld [vmem:[%s4787 + $0x40] sm:$0xf]
  %v4805 = vld [vmem:[%s4787 + $0x44] sm:$0xf]
  %v4806 = vld [vmem:[%s4787 + $0x48] sm:$0xf]
  %v4807 = vld [vmem:[%s4787 + $0x4c] sm:$0xf]
  %v4808 = vld [vmem:[%s4787 + $0x50] sm:$0xf]
  %v4809 = vld [vmem:[%s4787 + $0x54] sm:$0xf]
  %v4810 = vld [vmem:[%s4787 + $0x58] sm:$0xf]
  %v4811 = vld [vmem:[%s4787 + $0x5c] sm:$0xf]
  %v4812 = vld [vmem:[%s4787 + $0x60] sm:$0xf]
  %v4813 = vld [vmem:[%s4787 + $0x64] sm:$0xf]
  %v4814 = vld [vmem:[%s4787 + $0x68] sm:$0xf]
  %v4815 = vld [vmem:[%s4787 + $0x6c] sm:$0xf]
  %v4816 = vld [vmem:[%s4787 + $0x70] sm:$0xf]
  %v4817 = vld [vmem:[%s4787 + $0x74] sm:$0xf]
  %v4818 = vld [vmem:[%s4787 + $0x78] sm:$0xf]
  %v4819 = vld [vmem:[%s4787 + $0x7c] sm:$0xf]
  %v4852 = vunpack.c.l.b16 %v4788
  %v4853 = vunpack.c.l.b16 %v4789
  %v4854 = vunpack.c.l.b16 %v4790
  %v4855 = vunpack.c.l.b16 %v4791
  %v4856 = vunpack.c.l.b16 %v4792
  %v4857 = vunpack.c.l.b16 %v4793
  %v4858 = vunpack.c.l.b16 %v4794
  %v4859 = vunpack.c.l.b16 %v4795
  %v4860 = vunpack.c.l.b16 %v4796
  %v4861 = vunpack.c.l.b16 %v4797
  %v4862 = vunpack.c.l.b16 %v4798
  %v4863 = vunpack.c.l.b16 %v4799
  %v4864 = vunpack.c.l.b16 %v4800
  %v4865 = vunpack.c.l.b16 %v4801
  %v4866 = vunpack.c.l.b16 %v4802
  %v4867 = vunpack.c.l.b16 %v4803
  %v4868 = vunpack.c.l.b16 %v4804
  %v4869 = vunpack.c.l.b16 %v4805
  %v4870 = vunpack.c.l.b16 %v4806
  %v4871 = vunpack.c.l.b16 %v4807
  %v4872 = vunpack.c.l.b16 %v4808
  %v4873 = vunpack.c.l.b16 %v4809
  %v4874 = vunpack.c.l.b16 %v4810
  %v4875 = vunpack.c.l.b16 %v4811
  %v4876 = vunpack.c.l.b16 %v4812
  %v4877 = vunpack.c.l.b16 %v4813
  %v4878 = vunpack.c.l.b16 %v4814
  %v4879 = vunpack.c.l.b16 %v4815
  %v4880 = vunpack.c.l.b16 %v4816
  %v4881 = vunpack.c.l.b16 %v4817
  %v4882 = vunpack.c.l.b16 %v4818
  %v4883 = vunpack.c.l.b16 %v4819
  %v4884 = vpack.c.b16 %v4853, %v4852
  %v4885 = vpack.c.b16 %v4855, %v4854
  %v4886 = vpack.c.b16 %v4857, %v4856
  %v4887 = vpack.c.b16 %v4859, %v4858
  %v4888 = vpack.c.b16 %v4861, %v4860
  %v4889 = vpack.c.b16 %v4863, %v4862
  %v4890 = vpack.c.b16 %v4865, %v4864
  %v4891 = vpack.c.b16 %v4867, %v4866
  %v4892 = vpack.c.b16 %v4869, %v4868
  %v4893 = vpack.c.b16 %v4871, %v4870
  %v4894 = vpack.c.b16 %v4873, %v4872
  %v4895 = vpack.c.b16 %v4875, %v4874
  %v4896 = vpack.c.b16 %v4877, %v4876
  %v4897 = vpack.c.b16 %v4879, %v4878
  %v4898 = vpack.c.b16 %v4881, %v4880
  %v4899 = vpack.c.b16 %v4883, %v4882
  %4916 = vmatprep.subr.bf16.mxu0 0
  %4917 = vmatpush1.bf16.msra.mxu0 %v4884
  %4918 = vmatprep.subr.bf16.mxu0 0
  %4919 = vmatpush1.bf16.msra.mxu0 %v4885
  %4920 = vmatprep.subr.bf16.mxu0 0
  %4921 = vmatpush1.bf16.msra.mxu0 %v4886
  %4922 = vmatprep.subr.bf16.mxu0 0
  %4923 = vmatpush1.bf16.msra.mxu0 %v4887
  %4924 = vmatprep.subr.bf16.mxu0 0
  %4925 = vmatpush1.bf16.msra.mxu0 %v4888
  %4926 = vmatprep.subr.bf16.mxu0 0
  %4927 = vmatpush1.bf16.msra.mxu0 %v4889
  %4928 = vmatprep.subr.bf16.mxu0 0
  %4929 = vmatpush1.bf16.msra.mxu0 %v4890
  %4930 = vmatprep.subr.bf16.mxu0 0
  %4931 = vmatpush1.bf16.msra.mxu0 %v4891
  %4932 = vmatprep.subr.bf16.mxu0 0
  %4933 = vmatpush1.bf16.msra.mxu0 %v4892
  %4934 = vmatprep.subr.bf16.mxu0 0
  %4935 = vmatpush1.bf16.msra.mxu0 %v4893
  %4936 = vmatprep.subr.bf16.mxu0 0
  %4937 = vmatpush1.bf16.msra.mxu0 %v4894
  %4938 = vmatprep.subr.bf16.mxu0 0
  %4939 = vmatpush1.bf16.msra.mxu0 %v4895
  %4940 = vmatprep.subr.bf16.mxu0 0
  %4941 = vmatpush1.bf16.msra.mxu0 %v4896
  %4942 = vmatprep.subr.bf16.mxu0 0
  %4943 = vmatpush1.bf16.msra.mxu0 %v4897
  %4944 = vmatprep.subr.bf16.mxu0 0
  %4945 = vmatpush1.bf16.msra.mxu0 %v4898
  %4946 = vmatprep.subr.bf16.mxu0 0
  %4947 = vmatpush1.bf16.msra.mxu0 %v4899
  %4948 = vmatprep.mubr.bf16.mxu0 %v3880
  %4949 = vmatmul.mubr.bf16.gmra.mrb[0].mxu0 %v3879
  %v4950 = vpop.f32.mrb[0].mxu0
  %v4951 = vadd.f32 0.0, %v4950
  %v4952 = vpop.f32.mrb[0].mxu0
  %v4953 = vpop.f32.mrb[0].mxu0
  %v4954 = vadd.f32 0.0, %v4953
  %v4955 = vpop.f32.mrb[0].mxu0
  %4956 = vdwg.mxu0
  %s4957 = scalar_lea.vmem %s6, 640
  %v4958 = vld [vmem:[%s4957] sm:$0xf]
  %v4959 = vld [vmem:[%s4957 + $0x4] sm:$0xf]
  %v4960 = vld [vmem:[%s4957 + $0x8] sm:$0xf]
  %v4961 = vld [vmem:[%s4957 + $0xc] sm:$0xf]
  %v4962 = vld [vmem:[%s4957 + $0x10] sm:$0xf]
  %v4963 = vld [vmem:[%s4957 + $0x14] sm:$0xf]
  %v4964 = vld [vmem:[%s4957 + $0x18] sm:$0xf]
  %v4965 = vld [vmem:[%s4957 + $0x1c] sm:$0xf]
  %v4966 = vld [vmem:[%s4957 + $0x20] sm:$0xf]
  %v4967 = vld [vmem:[%s4957 + $0x24] sm:$0xf]
  %v4968 = vld [vmem:[%s4957 + $0x28] sm:$0xf]
  %v4969 = vld [vmem:[%s4957 + $0x2c] sm:$0xf]
  %v4970 = vld [vmem:[%s4957 + $0x30] sm:$0xf]
  %v4971 = vld [vmem:[%s4957 + $0x34] sm:$0xf]
  %v4972 = vld [vmem:[%s4957 + $0x38] sm:$0xf]
  %v4973 = vld [vmem:[%s4957 + $0x3c] sm:$0xf]
  %v4974 = vld [vmem:[%s4957 + $0x40] sm:$0xf]
  %v4975 = vld [vmem:[%s4957 + $0x44] sm:$0xf]
  %v4976 = vld [vmem:[%s4957 + $0x48] sm:$0xf]
  %v4977 = vld [vmem:[%s4957 + $0x4c] sm:$0xf]
  %v4978 = vld [vmem:[%s4957 + $0x50] sm:$0xf]
  %v4979 = vld [vmem:[%s4957 + $0x54] sm:$0xf]
  %v4980 = vld [vmem:[%s4957 + $0x58] sm:$0xf]
  %v4981 = vld [vmem:[%s4957 + $0x5c] sm:$0xf]
  %v4982 = vld [vmem:[%s4957 + $0x60] sm:$0xf]
  %v4983 = vld [vmem:[%s4957 + $0x64] sm:$0xf]
  %v4984 = vld [vmem:[%s4957 + $0x68] sm:$0xf]
  %v4985 = vld [vmem:[%s4957 + $0x6c] sm:$0xf]
  %v4986 = vld [vmem:[%s4957 + $0x70] sm:$0xf]
  %v4987 = vld [vmem:[%s4957 + $0x74] sm:$0xf]
  %v4988 = vld [vmem:[%s4957 + $0x78] sm:$0xf]
  %v4989 = vld [vmem:[%s4957 + $0x7c] sm:$0xf]
  %v5022 = vunpack.c.l.b16 %v4958
  %v5023 = vunpack.c.l.b16 %v4959
  %v5024 = vunpack.c.l.b16 %v4960
  %v5025 = vunpack.c.l.b16 %v4961
  %v5026 = vunpack.c.l.b16 %v4962
  %v5027 = vunpack.c.l.b16 %v4963
  %v5028 = vunpack.c.l.b16 %v4964
  %v5029 = vunpack.c.l.b16 %v4965
  %v5030 = vunpack.c.l.b16 %v4966
  %v5031 = vunpack.c.l.b16 %v4967
  %v5032 = vunpack.c.l.b16 %v4968
  %v5033 = vunpack.c.l.b16 %v4969
  %v5034 = vunpack.c.l.b16 %v4970
  %v5035 = vunpack.c.l.b16 %v4971
  %v5036 = vunpack.c.l.b16 %v4972
  %v5037 = vunpack.c.l.b16 %v4973
  %v5038 = vunpack.c.l.b16 %v4974
  %v5039 = vunpack.c.l.b16 %v4975
  %v5040 = vunpack.c.l.b16 %v4976
  %v5041 = vunpack.c.l.b16 %v4977
  %v5042 = vunpack.c.l.b16 %v4978
  %v5043 = vunpack.c.l.b16 %v4979
  %v5044 = vunpack.c.l.b16 %v4980
  %v5045 = vunpack.c.l.b16 %v4981
  %v5046 = vunpack.c.l.b16 %v4982
  %v5047 = vunpack.c.l.b16 %v4983
  %v5048 = vunpack.c.l.b16 %v4984
  %v5049 = vunpack.c.l.b16 %v4985
  %v5050 = vunpack.c.l.b16 %v4986
  %v5051 = vunpack.c.l.b16 %v4987
  %v5052 = vunpack.c.l.b16 %v4988
  %v5053 = vunpack.c.l.b16 %v4989
  %v5054 = vpack.c.b16 %v5023, %v5022
  %v5055 = vpack.c.b16 %v5025, %v5024
  %v5056 = vpack.c.b16 %v5027, %v5026
  %v5057 = vpack.c.b16 %v5029, %v5028
  %v5058 = vpack.c.b16 %v5031, %v5030
  %v5059 = vpack.c.b16 %v5033, %v5032
  %v5060 = vpack.c.b16 %v5035, %v5034
  %v5061 = vpack.c.b16 %v5037, %v5036
  %v5062 = vpack.c.b16 %v5039, %v5038
  %v5063 = vpack.c.b16 %v5041, %v5040
  %v5064 = vpack.c.b16 %v5043, %v5042
  %v5065 = vpack.c.b16 %v5045, %v5044
  %v5066 = vpack.c.b16 %v5047, %v5046
  %v5067 = vpack.c.b16 %v5049, %v5048
  %v5068 = vpack.c.b16 %v5051, %v5050
  %v5069 = vpack.c.b16 %v5053, %v5052
  %5086 = vmatprep.subr.bf16.mxu0 0
  %5087 = vmatpush1.bf16.msra.mxu0 %v5054
  %5088 = vmatprep.subr.bf16.mxu0 0
  %5089 = vmatpush1.bf16.msra.mxu0 %v5055
  %5090 = vmatprep.subr.bf16.mxu0 0
  %5091 = vmatpush1.bf16.msra.mxu0 %v5056
  %5092 = vmatprep.subr.bf16.mxu0 0
  %5093 = vmatpush1.bf16.msra.mxu0 %v5057
  %5094 = vmatprep.subr.bf16.mxu0 0
  %5095 = vmatpush1.bf16.msra.mxu0 %v5058
  %5096 = vmatprep.subr.bf16.mxu0 0
  %5097 = vmatpush1.bf16.msra.mxu0 %v5059
  %5098 = vmatprep.subr.bf16.mxu0 0
  %5099 = vmatpush1.bf16.msra.mxu0 %v5060
  %5100 = vmatprep.subr.bf16.mxu0 0
  %5101 = vmatpush1.bf16.msra.mxu0 %v5061
  %5102 = vmatprep.subr.bf16.mxu0 0
  %5103 = vmatpush1.bf16.msra.mxu0 %v5062
  %5104 = vmatprep.subr.bf16.mxu0 0
  %5105 = vmatpush1.bf16.msra.mxu0 %v5063
  %5106 = vmatprep.subr.bf16.mxu0 0
  %5107 = vmatpush1.bf16.msra.mxu0 %v5064
  %5108 = vmatprep.subr.bf16.mxu0 0
  %5109 = vmatpush1.bf16.msra.mxu0 %v5065
  %5110 = vmatprep.subr.bf16.mxu0 0
  %5111 = vmatpush1.bf16.msra.mxu0 %v5066
  %5112 = vmatprep.subr.bf16.mxu0 0
  %5113 = vmatpush1.bf16.msra.mxu0 %v5067
  %5114 = vmatprep.subr.bf16.mxu0 0
  %5115 = vmatpush1.bf16.msra.mxu0 %v5068
  %5116 = vmatprep.subr.bf16.mxu0 0
  %5117 = vmatpush1.bf16.msra.mxu0 %v5069
  %5118 = vmatprep.mubr.bf16.mxu0 %v3880
  %5119 = vmatmul.mubr.bf16.gmra.mrb[0].mxu0 %v3879
  %v5120 = vpop.f32.mrb[0].mxu0
  %v5121 = vadd.f32 0.0, %v5120
  %v5122 = vpop.f32.mrb[0].mxu0
  %v5123 = vpop.f32.mrb[0].mxu0
  %v5124 = vadd.f32 0.0, %v5123
  %v5125 = vpop.f32.mrb[0].mxu0
  %5126 = vdwg.mxu0
  %v5127 = vpack.c.bf16 %v4781, %v4781
  %v5128 = vpack.c.bf16 %v4784, %v4784
  %v5129 = vpack.c.bf16 %v4951, %v4951
  %v5130 = vpack.c.bf16 %v4954, %v4954
  %v5131 = vpack.c.bf16 %v5121, %v5121
  %v5132 = vpack.c.bf16 %v5124, %v5124
  %v5134 = vsel %vm658, %v5127, 0
  %v5137 = vsel %vm658, %v5129, 0
  %5139 = vmatprep.subr.bf16.mxu0 0
  %5140 = vmatpush1.bf16.xpose.msra.mxu0 %v5137
  %5141 = vmatprep.subr.bf16.mxu0 0
  %5142 = vmatpush1.bf16.xpose.msra.mxu0 0
  %5143 = vmatprep.subr.bf16.mxu0 0
  %5144 = vmatpush1.bf16.xpose.msra.mxu0 0
  %5145 = vmatprep.subr.bf16.mxu0 0
  %5146 = vmatpush1.bf16.xpose.msra.mxu0 0
  %5147 = vmatprep.subr.bf16.mxu0 0
  %5148 = vmatpush1.bf16.xpose.msra.mxu0 0
  %5149 = vmatprep.subr.bf16.mxu0 0
  %5150 = vmatpush1.bf16.xpose.msra.mxu0 0
  %5151 = vmatprep.subr.bf16.mxu0 0
  %5152 = vmatpush1.bf16.xpose.msra.mxu0 0
  %5153 = vmatprep.subr.bf16.mxu0 0
  %5154 = vmatpush1.bf16.xpose.msra.mxu0 0
  %5155 = vmatprep.subr.bf16.mxu0 0
  %5156 = vmatpush1.bf16.xpose.msra.mxu0 0
  %5157 = vmatprep.subr.bf16.mxu0 0
  %5158 = vmatpush1.bf16.xpose.msra.mxu0 0
  %5159 = vmatprep.subr.bf16.mxu0 0
  %5160 = vmatpush1.bf16.xpose.msra.mxu0 0
  %5161 = vmatprep.subr.bf16.mxu0 0
  %5162 = vmatpush1.bf16.xpose.msra.mxu0 0
  %5163 = vmatprep.subr.bf16.mxu0 0
  %5164 = vmatpush1.bf16.xpose.msra.mxu0 0
  %5165 = vmatprep.subr.bf16.mxu0 0
  %5166 = vmatpush1.bf16.xpose.msra.mxu0 0
  %5167 = vmatprep.subr.bf16.mxu0 0
  %5168 = vmatpush1.bf16.xpose.msra.mxu0 0
  %5169 = vmatprep.subr.bf16.mxu0 0
  %5170 = vmatpush1.bf16.xpose.msra.mxu0 0
  %5171 = vmatprep.mubr.bf16.mxu0 0
  %5172 = vmatmul.mubr.bf16.gmra.mrb[0].mxu0 %v5134
  %v5173 = vpop.f32.mrb[0].mxu0
  %v5174 = vadd.f32 %v142, %v5173
  %v5175 = vpop.f32.mrb[0].mxu0
  %v5176 = vpop.f32.mrb[0].mxu0
  %v5177 = vpop.f32.mrb[0].mxu0
  %5178 = vdwg.mxu0
  %v5180 = vsel %vm658, %v5128, 0
  %v5183 = vsel %vm658, %v5130, 0
  %5185 = vmatprep.subr.bf16.mxu0 0
  %5186 = vmatpush1.bf16.xpose.msra.mxu0 %v5183
  %5187 = vmatprep.subr.bf16.mxu0 0
  %5188 = vmatpush1.bf16.xpose.msra.mxu0 0
  %5189 = vmatprep.subr.bf16.mxu0 0
  %5190 = vmatpush1.bf16.xpose.msra.mxu0 0
  %5191 = vmatprep.subr.bf16.mxu0 0
  %5192 = vmatpush1.bf16.xpose.msra.mxu0 0
  %5193 = vmatprep.subr.bf16.mxu0 0
  %5194 = vmatpush1.bf16.xpose.msra.mxu0 0
  %5195 = vmatprep.subr.bf16.mxu0 0
  %5196 = vmatpush1.bf16.xpose.msra.mxu0 0
  %5197 = vmatprep.subr.bf16.mxu0 0
  %5198 = vmatpush1.bf16.xpose.msra.mxu0 0
  %5199 = vmatprep.subr.bf16.mxu0 0
  %5200 = vmatpush1.bf16.xpose.msra.mxu0 0
  %5201 = vmatprep.subr.bf16.mxu0 0
  %5202 = vmatpush1.bf16.xpose.msra.mxu0 0
  %5203 = vmatprep.subr.bf16.mxu0 0
  %5204 = vmatpush1.bf16.xpose.msra.mxu0 0
  %5205 = vmatprep.subr.bf16.mxu0 0
  %5206 = vmatpush1.bf16.xpose.msra.mxu0 0
  %5207 = vmatprep.subr.bf16.mxu0 0
  %5208 = vmatpush1.bf16.xpose.msra.mxu0 0
  %5209 = vmatprep.subr.bf16.mxu0 0
  %5210 = vmatpush1.bf16.xpose.msra.mxu0 0
  %5211 = vmatprep.subr.bf16.mxu0 0
  %5212 = vmatpush1.bf16.xpose.msra.mxu0 0
  %5213 = vmatprep.subr.bf16.mxu0 0
  %5214 = vmatpush1.bf16.xpose.msra.mxu0 0
  %5215 = vmatprep.subr.bf16.mxu0 0
  %5216 = vmatpush1.bf16.xpose.msra.mxu0 0
  %5217 = vmatprep.mubr.bf16.mxu0 0
  %5218 = vmatmul.mubr.bf16.gmra.mrb[0].mxu0 %v5180
  %v5219 = vpop.f32.mrb[0].mxu0
  %v5220 = vadd.f32 %v142, %v5219
  %v5221 = vpop.f32.mrb[0].mxu0
  %v5222 = vpop.f32.mrb[0].mxu0
  %v5223 = vpop.f32.mrb[0].mxu0
  %5224 = vdwg.mxu0
  %v5225 = vsel %vm751, %v5174, -inf
  %5226 = vmax.xlane.f32.xlu0 %v5225
  %v5227 = vpop.xlane.xlu0 %5226
  %v5228 = vsel %vm751, %v5220, -inf
  %5229 = vmax.xlane.f32.xlu0 %v5228
  %v5230 = vpop.xlane.xlu0 %5229
  %v5231 = vsub.f32 %v5174, %v5227
  %v5232 = vsub.f32 %v5220, %v5230
  %v5233 = vmul.f32 %v5231, 1.442695
  %v5234 = vpow.pop %v5233
  %v5235 = vmul.f32 %v5232, 1.442695
  %v5236 = vpow.pop %v5235
  %v5237 = vsel %vm751, %v5234, 0.0
  %5238 = vadd.xlane.f32.xlu0 %v5237
  %v5239 = vpop.xlane.xlu0 %5238
  %v5240 = vsel %vm751, %v5236, 0.0
  %5241 = vadd.xlane.f32.xlu0 %v5240
  %v5242 = vpop.xlane.xlu0 %5241
  %v5243 = vrcp.pop %v5239
  %v5244 = vrcp.pop %v5242
  %v5245 = vmul.f32 %v5234, %v5243
  %v5246 = vmul.f32 %v5236, %v5244
  %s5247 = scalar_lea.vmem %s12, 16
  %5248 = vst.msk [vmem:[%s5247] sm:$0xff] %vm751, %v5245
  %5249 = vst.msk [vmem:[%s5247 + $0x8] sm:$0xff] %vm751, %v5246
  %v5250 = vpack.c.bf16 %v5245, %v5245
  %v5251 = vpack.c.bf16 %v5246, %v5246
  %v5253 = vsel %vm751, %v5250, 0
  %v5256 = vsel %vm58, %v5131, 0
  %5258 = vmatprep.subr.bf16.mxu0 0
  %5259 = vmatpush1.bf16.msra.mxu0 %v5256
  %5260 = vmatprep.subr.bf16.mxu0 0
  %5261 = vmatpush1.bf16.msra.mxu0 0
  %5262 = vmatprep.subr.bf16.mxu0 0
  %5263 = vmatpush1.bf16.msra.mxu0 0
  %5264 = vmatprep.subr.bf16.mxu0 0
  %5265 = vmatpush1.bf16.msra.mxu0 0
  %5266 = vmatprep.subr.bf16.mxu0 0
  %5267 = vmatpush1.bf16.msra.mxu0 0
  %5268 = vmatprep.subr.bf16.mxu0 0
  %5269 = vmatpush1.bf16.msra.mxu0 0
  %5270 = vmatprep.subr.bf16.mxu0 0
  %5271 = vmatpush1.bf16.msra.mxu0 0
  %5272 = vmatprep.subr.bf16.mxu0 0
  %5273 = vmatpush1.bf16.msra.mxu0 0
  %5274 = vmatprep.subr.bf16.mxu0 0
  %5275 = vmatpush1.bf16.msra.mxu0 0
  %5276 = vmatprep.subr.bf16.mxu0 0
  %5277 = vmatpush1.bf16.msra.mxu0 0
  %5278 = vmatprep.subr.bf16.mxu0 0
  %5279 = vmatpush1.bf16.msra.mxu0 0
  %5280 = vmatprep.subr.bf16.mxu0 0
  %5281 = vmatpush1.bf16.msra.mxu0 0
  %5282 = vmatprep.subr.bf16.mxu0 0
  %5283 = vmatpush1.bf16.msra.mxu0 0
  %5284 = vmatprep.subr.bf16.mxu0 0
  %5285 = vmatpush1.bf16.msra.mxu0 0
  %5286 = vmatprep.subr.bf16.mxu0 0
  %5287 = vmatpush1.bf16.msra.mxu0 0
  %5288 = vmatprep.subr.bf16.mxu0 0
  %5289 = vmatpush1.bf16.msra.mxu0 0
  %5290 = vmatprep.mubr.bf16.mxu0 0
  %5291 = vmatmul.mubr.bf16.gmra.mrb[0].mxu0 %v5253
  %v5292 = vpop.f32.mrb[0].mxu0
  %v5293 = vadd.f32 0.0, %v5292
  %v5294 = vpop.f32.mrb[0].mxu0
  %v5295 = vpop.f32.mrb[0].mxu0
  %v5296 = vpop.f32.mrb[0].mxu0
  %5297 = vdwg.mxu0
  %v5299 = vsel %vm751, %v5251, 0
  %v5302 = vsel %vm58, %v5132, 0
  %5304 = vmatprep.subr.bf16.mxu0 0
  %5305 = vmatpush1.bf16.msra.mxu0 %v5302
  %5306 = vmatprep.subr.bf16.mxu0 0
  %5307 = vmatpush1.bf16.msra.mxu0 0
  %5308 = vmatprep.subr.bf16.mxu0 0
  %5309 = vmatpush1.bf16.msra.mxu0 0
  %5310 = vmatprep.subr.bf16.mxu0 0
  %5311 = vmatpush1.bf16.msra.mxu0 0
  %5312 = vmatprep.subr.bf16.mxu0 0
  %5313 = vmatpush1.bf16.msra.mxu0 0
  %5314 = vmatprep.subr.bf16.mxu0 0
  %5315 = vmatpush1.bf16.msra.mxu0 0
  %5316 = vmatprep.subr.bf16.mxu0 0
  %5317 = vmatpush1.bf16.msra.mxu0 0
  %5318 = vmatprep.subr.bf16.mxu0 0
  %5319 = vmatpush1.bf16.msra.mxu0 0
  %5320 = vmatprep.subr.bf16.mxu0 0
  %5321 = vmatpush1.bf16.msra.mxu0 0
  %5322 = vmatprep.subr.bf16.mxu0 0
  %5323 = vmatpush1.bf16.msra.mxu0 0
  %5324 = vmatprep.subr.bf16.mxu0 0
  %5325 = vmatpush1.bf16.msra.mxu0 0
  %5326 = vmatprep.subr.bf16.mxu0 0
  %5327 = vmatpush1.bf16.msra.mxu0 0
  %5328 = vmatprep.subr.bf16.mxu0 0
  %5329 = vmatpush1.bf16.msra.mxu0 0
  %5330 = vmatprep.subr.bf16.mxu0 0
  %5331 = vmatpush1.bf16.msra.mxu0 0
  %5332 = vmatprep.subr.bf16.mxu0 0
  %5333 = vmatpush1.bf16.msra.mxu0 0
  %5334 = vmatprep.subr.bf16.mxu0 0
  %5335 = vmatpush1.bf16.msra.mxu0 0
  %5336 = vmatprep.mubr.bf16.mxu0 0
  %5337 = vmatmul.mubr.bf16.gmra.mrb[0].mxu0 %v5299
  %v5338 = vpop.f32.mrb[0].mxu0
  %v5339 = vadd.f32 0.0, %v5338
  %v5340 = vpop.f32.mrb[0].mxu0
  %v5341 = vpop.f32.mrb[0].mxu0
  %v5342 = vpop.f32.mrb[0].mxu0
  %5343 = vdwg.mxu0
  %v5344 = vpack.c.bf16 %v5339, %v5293
  %s5345 = scalar_lea.vmem %s7, 320
  %v5346 = vld [vmem:[%s5345] sm:$0xff]
  %v5347 = vld [vmem:[%s5345 + $0x8] sm:$0xff]
  %v5348 = vld [vmem:[%s5345 + $0x10] sm:$0xff]
  %v5349 = vld [vmem:[%s5345 + $0x18] sm:$0xff]
  %v5350 = vld [vmem:[%s5345 + $0x20] sm:$0xff]
  %v5351 = vld [vmem:[%s5345 + $0x28] sm:$0xff]
  %v5352 = vld [vmem:[%s5345 + $0x30] sm:$0xff]
  %v5353 = vld [vmem:[%s5345 + $0x38] sm:$0xff]
  %v5362 = vunpack.c.l.b16 %v5346
  %v5363 = vunpack.c.h.b16 %v5346
  %v5364 = vunpack.c.l.b16 %v5347
  %v5365 = vunpack.c.h.b16 %v5347
  %v5366 = vunpack.c.l.b16 %v5348
  %v5367 = vunpack.c.h.b16 %v5348
  %v5368 = vunpack.c.l.b16 %v5349
  %v5369 = vunpack.c.h.b16 %v5349
  %v5370 = vunpack.c.l.b16 %v5350
  %v5371 = vunpack.c.h.b16 %v5350
  %v5372 = vunpack.c.l.b16 %v5351
  %v5373 = vunpack.c.h.b16 %v5351
  %v5374 = vunpack.c.l.b16 %v5352
  %v5375 = vunpack.c.h.b16 %v5352
  %v5376 = vunpack.c.l.b16 %v5353
  %v5377 = vunpack.c.h.b16 %v5353
  %v5378 = vpack.c.b16 %v5364, %v5362
  %v5379 = vpack.c.b16 %v5365, %v5363
  %v5380 = vpack.c.b16 %v5368, %v5366
  %v5381 = vpack.c.b16 %v5369, %v5367
  %v5382 = vpack.c.b16 %v5372, %v5370
  %v5383 = vpack.c.b16 %v5373, %v5371
  %v5384 = vpack.c.b16 %v5376, %v5374
  %v5385 = vpack.c.b16 %v5377, %v5375
  %v5395 = vsel %vm658, %v5344, 0
  %5397 = vmatprep.subr.bf16.mxu0 %v5379
  %5398 = vmatpush1.bf16.msra.mxu0 %v5378
  %5399 = vmatprep.subr.bf16.mxu0 %v5381
  %5400 = vmatpush1.bf16.msra.mxu0 %v5380
  %5401 = vmatprep.subr.bf16.mxu0 %v5383
  %5402 = vmatpush1.bf16.msra.mxu0 %v5382
  %5403 = vmatprep.subr.bf16.mxu0 %v5385
  %5404 = vmatpush1.bf16.msra.mxu0 %v5384
  %5405 = vmatprep.subr.bf16.mxu0 0
  %5406 = vmatpush1.bf16.msra.mxu0 0
  %5407 = vmatprep.subr.bf16.mxu0 0
  %5408 = vmatpush1.bf16.msra.mxu0 0
  %5409 = vmatprep.subr.bf16.mxu0 0
  %5410 = vmatpush1.bf16.msra.mxu0 0
  %5411 = vmatprep.subr.bf16.mxu0 0
  %5412 = vmatpush1.bf16.msra.mxu0 0
  %5413 = vmatprep.subr.bf16.mxu0 0
  %5414 = vmatpush1.bf16.msra.mxu0 0
  %5415 = vmatprep.subr.bf16.mxu0 0
  %5416 = vmatpush1.bf16.msra.mxu0 0
  %5417 = vmatprep.subr.bf16.mxu0 0
  %5418 = vmatpush1.bf16.msra.mxu0 0
  %5419 = vmatprep.subr.bf16.mxu0 0
  %5420 = vmatpush1.bf16.msra.mxu0 0
  %5421 = vmatprep.subr.bf16.mxu0 0
  %5422 = vmatpush1.bf16.msra.mxu0 0
  %5423 = vmatprep.subr.bf16.mxu0 0
  %5424 = vmatpush1.bf16.msra.mxu0 0
  %5425 = vmatprep.subr.bf16.mxu0 0
  %5426 = vmatpush1.bf16.msra.mxu0 0
  %5427 = vmatprep.subr.bf16.mxu0 0
  %5428 = vmatpush1.bf16.msra.mxu0 0
  %5429 = vmatprep.mubr.bf16.mxu0 0
  %5430 = vmatmul.mubr.bf16.gmra.mrb[0].mxu0 %v5395
  %v5431 = vpop.f32.mrb[0].mxu0
  %v5432 = vadd.f32 0.0, %v5431
  %v5433 = vpop.f32.mrb[0].mxu0
  %v5434 = vadd.f32 0.0, %v5433
  %v5435 = vpop.f32.mrb[0].mxu0
  %v5436 = vadd.f32 0.0, %v5435
  %v5437 = vpop.f32.mrb[0].mxu0
  %v5438 = vadd.f32 0.0, %v5437
  %5439 = vdwg.mxu0
  %v5448 = vunpack.c.l.b16 %v4609
  %v5449 = vunpack.c.h.b16 %v4609
  %v5450 = vunpack.c.l.b16 %v4610
  %v5451 = vunpack.c.h.b16 %v4610
  %v5452 = vunpack.c.l.b16 %v4611
  %v5453 = vunpack.c.h.b16 %v4611
  %v5454 = vunpack.c.l.b16 %v4612
  %v5455 = vunpack.c.h.b16 %v4612
  %v5456 = vunpack.c.l.b16 %v4613
  %v5457 = vunpack.c.h.b16 %v4613
  %v5458 = vunpack.c.l.b16 %v4614
  %v5459 = vunpack.c.h.b16 %v4614
  %v5460 = vunpack.c.l.b16 %v4615
  %v5461 = vunpack.c.h.b16 %v4615
  %v5462 = vunpack.c.l.b16 %v4616
  %v5463 = vunpack.c.h.b16 %v4616
  %v5464 = vpack.c.b16 %v5450, %v5448
  %v5465 = vpack.c.b16 %v5451, %v5449
  %v5466 = vpack.c.b16 %v5454, %v5452
  %v5467 = vpack.c.b16 %v5455, %v5453
  %v5468 = vpack.c.b16 %v5458, %v5456
  %v5469 = vpack.c.b16 %v5459, %v5457
  %v5470 = vpack.c.b16 %v5462, %v5460
  %v5471 = vpack.c.b16 %v5463, %v5461
  %v5481 = vsel %vm658, %v4607, 0
  %5483 = vmatprep.subr.bf16.mxu0 %v5465
  %5484 = vmatpush1.bf16.msra.mxu0 %v5464
  %5485 = vmatprep.subr.bf16.mxu0 %v5467
  %5486 = vmatpush1.bf16.msra.mxu0 %v5466
  %5487 = vmatprep.subr.bf16.mxu0 %v5469
  %5488 = vmatpush1.bf16.msra.mxu0 %v5468
  %5489 = vmatprep.subr.bf16.mxu0 %v5471
  %5490 = vmatpush1.bf16.msra.mxu0 %v5470
  %5491 = vmatprep.subr.bf16.mxu0 0
  %5492 = vmatpush1.bf16.msra.mxu0 0
  %5493 = vmatprep.subr.bf16.mxu0 0
  %5494 = vmatpush1.bf16.msra.mxu0 0
  %5495 = vmatprep.subr.bf16.mxu0 0
  %5496 = vmatpush1.bf16.msra.mxu0 0
  %5497 = vmatprep.subr.bf16.mxu0 0
  %5498 = vmatpush1.bf16.msra.mxu0 0
  %5499 = vmatprep.subr.bf16.mxu0 0
  %5500 = vmatpush1.bf16.msra.mxu0 0
  %5501 = vmatprep.subr.bf16.mxu0 0
  %5502 = vmatpush1.bf16.msra.mxu0 0
  %5503 = vmatprep.subr.bf16.mxu0 0
  %5504 = vmatpush1.bf16.msra.mxu0 0
  %5505 = vmatprep.subr.bf16.mxu0 0
  %5506 = vmatpush1.bf16.msra.mxu0 0
  %5507 = vmatprep.subr.bf16.mxu0 0
  %5508 = vmatpush1.bf16.msra.mxu0 0
  %5509 = vmatprep.subr.bf16.mxu0 0
  %5510 = vmatpush1.bf16.msra.mxu0 0
  %5511 = vmatprep.subr.bf16.mxu0 0
  %5512 = vmatpush1.bf16.msra.mxu0 0
  %5513 = vmatprep.subr.bf16.mxu0 0
  %5514 = vmatpush1.bf16.msra.mxu0 0
  %5515 = vmatprep.mubr.bf16.mxu0 0
  %5516 = vmatmul.mubr.bf16.gmra.mrb[0].mxu0 %v5481
  %v5517 = vpop.f32.mrb[0].mxu0
  %v5518 = vadd.f32 %v5432, %v5517
  %v5519 = vpop.f32.mrb[0].mxu0
  %v5520 = vadd.f32 %v5434, %v5519
  %v5521 = vpop.f32.mrb[0].mxu0
  %v5522 = vadd.f32 %v5436, %v5521
  %v5523 = vpop.f32.mrb[0].mxu0
  %v5524 = vadd.f32 %v5438, %v5523
  %5525 = vdwg.mxu0
  %s5526 = scalar_lea.vmem %s4, 768
  %v5527 = vld [vmem:[%s5526] sm:$0xf]
  %v5528 = vld [vmem:[%s5526 + $0x4] sm:$0xf]
  %v5529 = vld [vmem:[%s5526 + $0x8] sm:$0xf]
  %v5530 = vld [vmem:[%s5526 + $0xc] sm:$0xf]
  %v5531 = vld [vmem:[%s5526 + $0x10] sm:$0xf]
  %v5532 = vld [vmem:[%s5526 + $0x14] sm:$0xf]
  %v5533 = vld [vmem:[%s5526 + $0x18] sm:$0xf]
  %v5534 = vld [vmem:[%s5526 + $0x1c] sm:$0xf]
  %v5535 = vld [vmem:[%s5526 + $0x20] sm:$0xf]
  %v5536 = vld [vmem:[%s5526 + $0x24] sm:$0xf]
  %v5537 = vld [vmem:[%s5526 + $0x28] sm:$0xf]
  %v5538 = vld [vmem:[%s5526 + $0x2c] sm:$0xf]
  %v5539 = vld [vmem:[%s5526 + $0x30] sm:$0xf]
  %v5540 = vld [vmem:[%s5526 + $0x34] sm:$0xf]
  %v5541 = vld [vmem:[%s5526 + $0x38] sm:$0xf]
  %v5542 = vld [vmem:[%s5526 + $0x3c] sm:$0xf]
  %v5543 = vld [vmem:[%s5526 + $0x40] sm:$0xf]
  %v5544 = vld [vmem:[%s5526 + $0x44] sm:$0xf]
  %v5545 = vld [vmem:[%s5526 + $0x48] sm:$0xf]
  %v5546 = vld [vmem:[%s5526 + $0x4c] sm:$0xf]
  %v5547 = vld [vmem:[%s5526 + $0x50] sm:$0xf]
  %v5548 = vld [vmem:[%s5526 + $0x54] sm:$0xf]
  %v5549 = vld [vmem:[%s5526 + $0x58] sm:$0xf]
  %v5550 = vld [vmem:[%s5526 + $0x5c] sm:$0xf]
  %v5551 = vld [vmem:[%s5526 + $0x60] sm:$0xf]
  %v5552 = vld [vmem:[%s5526 + $0x64] sm:$0xf]
  %v5553 = vld [vmem:[%s5526 + $0x68] sm:$0xf]
  %v5554 = vld [vmem:[%s5526 + $0x6c] sm:$0xf]
  %v5555 = vld [vmem:[%s5526 + $0x70] sm:$0xf]
  %v5556 = vld [vmem:[%s5526 + $0x74] sm:$0xf]
  %v5557 = vld [vmem:[%s5526 + $0x78] sm:$0xf]
  %v5558 = vld [vmem:[%s5526 + $0x7c] sm:$0xf]
  %v5591 = vunpack.c.l.b16 %v5527
  %v5592 = vunpack.c.l.b16 %v5528
  %v5593 = vunpack.c.l.b16 %v5529
  %v5594 = vunpack.c.l.b16 %v5530
  %v5595 = vunpack.c.l.b16 %v5531
  %v5596 = vunpack.c.l.b16 %v5532
  %v5597 = vunpack.c.l.b16 %v5533
  %v5598 = vunpack.c.l.b16 %v5534
  %v5599 = vunpack.c.l.b16 %v5535
  %v5600 = vunpack.c.l.b16 %v5536
  %v5601 = vunpack.c.l.b16 %v5537
  %v5602 = vunpack.c.l.b16 %v5538
  %v5603 = vunpack.c.l.b16 %v5539
  %v5604 = vunpack.c.l.b16 %v5540
  %v5605 = vunpack.c.l.b16 %v5541
  %v5606 = vunpack.c.l.b16 %v5542
  %v5607 = vunpack.c.l.b16 %v5543
  %v5608 = vunpack.c.l.b16 %v5544
  %v5609 = vunpack.c.l.b16 %v5545
  %v5610 = vunpack.c.l.b16 %v5546
  %v5611 = vunpack.c.l.b16 %v5547
  %v5612 = vunpack.c.l.b16 %v5548
  %v5613 = vunpack.c.l.b16 %v5549
  %v5614 = vunpack.c.l.b16 %v5550
  %v5615 = vunpack.c.l.b16 %v5551
  %v5616 = vunpack.c.l.b16 %v5552
  %v5617 = vunpack.c.l.b16 %v5553
  %v5618 = vunpack.c.l.b16 %v5554
  %v5619 = vunpack.c.l.b16 %v5555
  %v5620 = vunpack.c.l.b16 %v5556
  %v5621 = vunpack.c.l.b16 %v5557
  %v5622 = vunpack.c.l.b16 %v5558
  %v5623 = vpack.c.b16 %v5592, %v5591
  %v5624 = vpack.c.b16 %v5594, %v5593
  %v5625 = vpack.c.b16 %v5596, %v5595
  %v5626 = vpack.c.b16 %v5598, %v5597
  %v5627 = vpack.c.b16 %v5600, %v5599
  %v5628 = vpack.c.b16 %v5602, %v5601
  %v5629 = vpack.c.b16 %v5604, %v5603
  %v5630 = vpack.c.b16 %v5606, %v5605
  %v5631 = vpack.c.b16 %v5608, %v5607
  %v5632 = vpack.c.b16 %v5610, %v5609
  %v5633 = vpack.c.b16 %v5612, %v5611
  %v5634 = vpack.c.b16 %v5614, %v5613
  %v5635 = vpack.c.b16 %v5616, %v5615
  %v5636 = vpack.c.b16 %v5618, %v5617
  %v5637 = vpack.c.b16 %v5620, %v5619
  %v5638 = vpack.c.b16 %v5622, %v5621
  %5655 = vmatprep.subr.bf16.mxu0 0
  %5656 = vmatpush1.bf16.msra.mxu0 %v5623
  %5657 = vmatprep.subr.bf16.mxu0 0
  %5658 = vmatpush1.bf16.msra.mxu0 %v5624
  %5659 = vmatprep.subr.bf16.mxu0 0
  %5660 = vmatpush1.bf16.msra.mxu0 %v5625
  %5661 = vmatprep.subr.bf16.mxu0 0
  %5662 = vmatpush1.bf16.msra.mxu0 %v5626
  %5663 = vmatprep.subr.bf16.mxu0 0
  %5664 = vmatpush1.bf16.msra.mxu0 %v5627
  %5665 = vmatprep.subr.bf16.mxu0 0
  %5666 = vmatpush1.bf16.msra.mxu0 %v5628
  %5667 = vmatprep.subr.bf16.mxu0 0
  %5668 = vmatpush1.bf16.msra.mxu0 %v5629
  %5669 = vmatprep.subr.bf16.mxu0 0
  %5670 = vmatpush1.bf16.msra.mxu0 %v5630
  %5671 = vmatprep.subr.bf16.mxu0 0
  %5672 = vmatpush1.bf16.msra.mxu0 %v5631
  %5673 = vmatprep.subr.bf16.mxu0 0
  %5674 = vmatpush1.bf16.msra.mxu0 %v5632
  %5675 = vmatprep.subr.bf16.mxu0 0
  %5676 = vmatpush1.bf16.msra.mxu0 %v5633
  %5677 = vmatprep.subr.bf16.mxu0 0
  %5678 = vmatpush1.bf16.msra.mxu0 %v5634
  %5679 = vmatprep.subr.bf16.mxu0 0
  %5680 = vmatpush1.bf16.msra.mxu0 %v5635
  %5681 = vmatprep.subr.bf16.mxu0 0
  %5682 = vmatpush1.bf16.msra.mxu0 %v5636
  %5683 = vmatprep.subr.bf16.mxu0 0
  %5684 = vmatpush1.bf16.msra.mxu0 %v5637
  %5685 = vmatprep.subr.bf16.mxu0 0
  %5686 = vmatpush1.bf16.msra.mxu0 %v5638
  %5687 = vmatprep.mubr.bf16.mxu0 %v3880
  %5688 = vmatmul.mubr.bf16.gmra.mrb[0].mxu0 %v3879
  %v5689 = vpop.f32.mrb[0].mxu0
  %v5690 = vadd.f32 0.0, %v5689
  %v5691 = vpop.f32.mrb[0].mxu0
  %v5692 = vpop.f32.mrb[0].mxu0
  %v5693 = vadd.f32 0.0, %v5692
  %v5694 = vpop.f32.mrb[0].mxu0
  %5695 = vdwg.mxu0
  %s5696 = scalar_lea.vmem %s5, 768
  %v5697 = vld [vmem:[%s5696] sm:$0xf]
  %v5698 = vld [vmem:[%s5696 + $0x4] sm:$0xf]
  %v5699 = vld [vmem:[%s5696 + $0x8] sm:$0xf]
  %v5700 = vld [vmem:[%s5696 + $0xc] sm:$0xf]
  %v5701 = vld [vmem:[%s5696 + $0x10] sm:$0xf]
  %v5702 = vld [vmem:[%s5696 + $0x14] sm:$0xf]
  %v5703 = vld [vmem:[%s5696 + $0x18] sm:$0xf]
  %v5704 = vld [vmem:[%s5696 + $0x1c] sm:$0xf]
  %v5705 = vld [vmem:[%s5696 + $0x20] sm:$0xf]
  %v5706 = vld [vmem:[%s5696 + $0x24] sm:$0xf]
  %v5707 = vld [vmem:[%s5696 + $0x28] sm:$0xf]
  %v5708 = vld [vmem:[%s5696 + $0x2c] sm:$0xf]
  %v5709 = vld [vmem:[%s5696 + $0x30] sm:$0xf]
  %v5710 = vld [vmem:[%s5696 + $0x34] sm:$0xf]
  %v5711 = vld [vmem:[%s5696 + $0x38] sm:$0xf]
  %v5712 = vld [vmem:[%s5696 + $0x3c] sm:$0xf]
  %v5713 = vld [vmem:[%s5696 + $0x40] sm:$0xf]
  %v5714 = vld [vmem:[%s5696 + $0x44] sm:$0xf]
  %v5715 = vld [vmem:[%s5696 + $0x48] sm:$0xf]
  %v5716 = vld [vmem:[%s5696 + $0x4c] sm:$0xf]
  %v5717 = vld [vmem:[%s5696 + $0x50] sm:$0xf]
  %v5718 = vld [vmem:[%s5696 + $0x54] sm:$0xf]
  %v5719 = vld [vmem:[%s5696 + $0x58] sm:$0xf]
  %v5720 = vld [vmem:[%s5696 + $0x5c] sm:$0xf]
  %v5721 = vld [vmem:[%s5696 + $0x60] sm:$0xf]
  %v5722 = vld [vmem:[%s5696 + $0x64] sm:$0xf]
  %v5723 = vld [vmem:[%s5696 + $0x68] sm:$0xf]
  %v5724 = vld [vmem:[%s5696 + $0x6c] sm:$0xf]
  %v5725 = vld [vmem:[%s5696 + $0x70] sm:$0xf]
  %v5726 = vld [vmem:[%s5696 + $0x74] sm:$0xf]
  %v5727 = vld [vmem:[%s5696 + $0x78] sm:$0xf]
  %v5728 = vld [vmem:[%s5696 + $0x7c] sm:$0xf]
  %v5761 = vunpack.c.l.b16 %v5697
  %v5762 = vunpack.c.l.b16 %v5698
  %v5763 = vunpack.c.l.b16 %v5699
  %v5764 = vunpack.c.l.b16 %v5700
  %v5765 = vunpack.c.l.b16 %v5701
  %v5766 = vunpack.c.l.b16 %v5702
  %v5767 = vunpack.c.l.b16 %v5703
  %v5768 = vunpack.c.l.b16 %v5704
  %v5769 = vunpack.c.l.b16 %v5705
  %v5770 = vunpack.c.l.b16 %v5706
  %v5771 = vunpack.c.l.b16 %v5707
  %v5772 = vunpack.c.l.b16 %v5708
  %v5773 = vunpack.c.l.b16 %v5709
  %v5774 = vunpack.c.l.b16 %v5710
  %v5775 = vunpack.c.l.b16 %v5711
  %v5776 = vunpack.c.l.b16 %v5712
  %v5777 = vunpack.c.l.b16 %v5713
  %v5778 = vunpack.c.l.b16 %v5714
  %v5779 = vunpack.c.l.b16 %v5715
  %v5780 = vunpack.c.l.b16 %v5716
  %v5781 = vunpack.c.l.b16 %v5717
  %v5782 = vunpack.c.l.b16 %v5718
  %v5783 = vunpack.c.l.b16 %v5719
  %v5784 = vunpack.c.l.b16 %v5720
  %v5785 = vunpack.c.l.b16 %v5721
  %v5786 = vunpack.c.l.b16 %v5722
  %v5787 = vunpack.c.l.b16 %v5723
  %v5788 = vunpack.c.l.b16 %v5724
  %v5789 = vunpack.c.l.b16 %v5725
  %v5790 = vunpack.c.l.b16 %v5726
  %v5791 = vunpack.c.l.b16 %v5727
  %v5792 = vunpack.c.l.b16 %v5728
  %v5793 = vpack.c.b16 %v5762, %v5761
  %v5794 = vpack.c.b16 %v5764, %v5763
  %v5795 = vpack.c.b16 %v5766, %v5765
  %v5796 = vpack.c.b16 %v5768, %v5767
  %v5797 = vpack.c.b16 %v5770, %v5769
  %v5798 = vpack.c.b16 %v5772, %v5771
  %v5799 = vpack.c.b16 %v5774, %v5773
  %v5800 = vpack.c.b16 %v5776, %v5775
  %v5801 = vpack.c.b16 %v5778, %v5777
  %v5802 = vpack.c.b16 %v5780, %v5779
  %v5803 = vpack.c.b16 %v5782, %v5781
  %v5804 = vpack.c.b16 %v5784, %v5783
  %v5805 = vpack.c.b16 %v5786, %v5785
  %v5806 = vpack.c.b16 %v5788, %v5787
  %v5807 = vpack.c.b16 %v5790, %v5789
  %v5808 = vpack.c.b16 %v5792, %v5791
  %5825 = vmatprep.subr.bf16.mxu0 0
  %5826 = vmatpush1.bf16.msra.mxu0 %v5793
  %5827 = vmatprep.subr.bf16.mxu0 0
  %5828 = vmatpush1.bf16.msra.mxu0 %v5794
  %5829 = vmatprep.subr.bf16.mxu0 0
  %5830 = vmatpush1.bf16.msra.mxu0 %v5795
  %5831 = vmatprep.subr.bf16.mxu0 0
  %5832 = vmatpush1.bf16.msra.mxu0 %v5796
  %5833 = vmatprep.subr.bf16.mxu0 0
  %5834 = vmatpush1.bf16.msra.mxu0 %v5797
  %5835 = vmatprep.subr.bf16.mxu0 0
  %5836 = vmatpush1.bf16.msra.mxu0 %v5798
  %5837 = vmatprep.subr.bf16.mxu0 0
  %5838 = vmatpush1.bf16.msra.mxu0 %v5799
  %5839 = vmatprep.subr.bf16.mxu0 0
  %5840 = vmatpush1.bf16.msra.mxu0 %v5800
  %5841 = vmatprep.subr.bf16.mxu0 0
  %5842 = vmatpush1.bf16.msra.mxu0 %v5801
  %5843 = vmatprep.subr.bf16.mxu0 0
  %5844 = vmatpush1.bf16.msra.mxu0 %v5802
  %5845 = vmatprep.subr.bf16.mxu0 0
  %5846 = vmatpush1.bf16.msra.mxu0 %v5803
  %5847 = vmatprep.subr.bf16.mxu0 0
  %5848 = vmatpush1.bf16.msra.mxu0 %v5804
  %5849 = vmatprep.subr.bf16.mxu0 0
  %5850 = vmatpush1.bf16.msra.mxu0 %v5805
  %5851 = vmatprep.subr.bf16.mxu0 0
  %5852 = vmatpush1.bf16.msra.mxu0 %v5806
  %5853 = vmatprep.subr.bf16.mxu0 0
  %5854 = vmatpush1.bf16.msra.mxu0 %v5807
  %5855 = vmatprep.subr.bf16.mxu0 0
  %5856 = vmatpush1.bf16.msra.mxu0 %v5808
  %5857 = vmatprep.mubr.bf16.mxu0 %v3880
  %5858 = vmatmul.mubr.bf16.gmra.mrb[0].mxu0 %v3879
  %v5859 = vpop.f32.mrb[0].mxu0
  %v5860 = vadd.f32 0.0, %v5859
  %v5861 = vpop.f32.mrb[0].mxu0
  %v5862 = vpop.f32.mrb[0].mxu0
  %v5863 = vadd.f32 0.0, %v5862
  %v5864 = vpop.f32.mrb[0].mxu0
  %5865 = vdwg.mxu0
  %s5866 = scalar_lea.vmem %s6, 768
  %v5867 = vld [vmem:[%s5866] sm:$0xf]
  %v5868 = vld [vmem:[%s5866 + $0x4] sm:$0xf]
  %v5869 = vld [vmem:[%s5866 + $0x8] sm:$0xf]
  %v5870 = vld [vmem:[%s5866 + $0xc] sm:$0xf]
  %v5871 = vld [vmem:[%s5866 + $0x10] sm:$0xf]
  %v5872 = vld [vmem:[%s5866 + $0x14] sm:$0xf]
  %v5873 = vld [vmem:[%s5866 + $0x18] sm:$0xf]
  %v5874 = vld [vmem:[%s5866 + $0x1c] sm:$0xf]
  %v5875 = vld [vmem:[%s5866 + $0x20] sm:$0xf]
  %v5876 = vld [vmem:[%s5866 + $0x24] sm:$0xf]
  %v5877 = vld [vmem:[%s5866 + $0x28] sm:$0xf]
  %v5878 = vld [vmem:[%s5866 + $0x2c] sm:$0xf]
  %v5879 = vld [vmem:[%s5866 + $0x30] sm:$0xf]
  %v5880 = vld [vmem:[%s5866 + $0x34] sm:$0xf]
  %v5881 = vld [vmem:[%s5866 + $0x38] sm:$0xf]
  %v5882 = vld [vmem:[%s5866 + $0x3c] sm:$0xf]
  %v5883 = vld [vmem:[%s5866 + $0x40] sm:$0xf]
  %v5884 = vld [vmem:[%s5866 + $0x44] sm:$0xf]
  %v5885 = vld [vmem:[%s5866 + $0x48] sm:$0xf]
  %v5886 = vld [vmem:[%s5866 + $0x4c] sm:$0xf]
  %v5887 = vld [vmem:[%s5866 + $0x50] sm:$0xf]
  %v5888 = vld [vmem:[%s5866 + $0x54] sm:$0xf]
  %v5889 = vld [vmem:[%s5866 + $0x58] sm:$0xf]
  %v5890 = vld [vmem:[%s5866 + $0x5c] sm:$0xf]
  %v5891 = vld [vmem:[%s5866 + $0x60] sm:$0xf]
  %v5892 = vld [vmem:[%s5866 + $0x64] sm:$0xf]
  %v5893 = vld [vmem:[%s5866 + $0x68] sm:$0xf]
  %v5894 = vld [vmem:[%s5866 + $0x6c] sm:$0xf]
  %v5895 = vld [vmem:[%s5866 + $0x70] sm:$0xf]
  %v5896 = vld [vmem:[%s5866 + $0x74] sm:$0xf]
  %v5897 = vld [vmem:[%s5866 + $0x78] sm:$0xf]
  %v5898 = vld [vmem:[%s5866 + $0x7c] sm:$0xf]
  %v5931 = vunpack.c.l.b16 %v5867
  %v5932 = vunpack.c.l.b16 %v5868
  %v5933 = vunpack.c.l.b16 %v5869
  %v5934 = vunpack.c.l.b16 %v5870
  %v5935 = vunpack.c.l.b16 %v5871
  %v5936 = vunpack.c.l.b16 %v5872
  %v5937 = vunpack.c.l.b16 %v5873
  %v5938 = vunpack.c.l.b16 %v5874
  %v5939 = vunpack.c.l.b16 %v5875
  %v5940 = vunpack.c.l.b16 %v5876
  %v5941 = vunpack.c.l.b16 %v5877
  %v5942 = vunpack.c.l.b16 %v5878
  %v5943 = vunpack.c.l.b16 %v5879
  %v5944 = vunpack.c.l.b16 %v5880
  %v5945 = vunpack.c.l.b16 %v5881
  %v5946 = vunpack.c.l.b16 %v5882
  %v5947 = vunpack.c.l.b16 %v5883
  %v5948 = vunpack.c.l.b16 %v5884
  %v5949 = vunpack.c.l.b16 %v5885
  %v5950 = vunpack.c.l.b16 %v5886
  %v5951 = vunpack.c.l.b16 %v5887
  %v5952 = vunpack.c.l.b16 %v5888
  %v5953 = vunpack.c.l.b16 %v5889
  %v5954 = vunpack.c.l.b16 %v5890
  %v5955 = vunpack.c.l.b16 %v5891
  %v5956 = vunpack.c.l.b16 %v5892
  %v5957 = vunpack.c.l.b16 %v5893
  %v5958 = vunpack.c.l.b16 %v5894
  %v5959 = vunpack.c.l.b16 %v5895
  %v5960 = vunpack.c.l.b16 %v5896
  %v5961 = vunpack.c.l.b16 %v5897
  %v5962 = vunpack.c.l.b16 %v5898
  %v5963 = vpack.c.b16 %v5932, %v5931
  %v5964 = vpack.c.b16 %v5934, %v5933
  %v5965 = vpack.c.b16 %v5936, %v5935
  %v5966 = vpack.c.b16 %v5938, %v5937
  %v5967 = vpack.c.b16 %v5940, %v5939
  %v5968 = vpack.c.b16 %v5942, %v5941
  %v5969 = vpack.c.b16 %v5944, %v5943
  %v5970 = vpack.c.b16 %v5946, %v5945
  %v5971 = vpack.c.b16 %v5948, %v5947
  %v5972 = vpack.c.b16 %v5950, %v5949
  %v5973 = vpack.c.b16 %v5952, %v5951
  %v5974 = vpack.c.b16 %v5954, %v5953
  %v5975 = vpack.c.b16 %v5956, %v5955
  %v5976 = vpack.c.b16 %v5958, %v5957
  %v5977 = vpack.c.b16 %v5960, %v5959
  %v5978 = vpack.c.b16 %v5962, %v5961
  %5995 = vmatprep.subr.bf16.mxu0 0
  %5996 = vmatpush1.bf16.msra.mxu0 %v5963
  %5997 = vmatprep.subr.bf16.mxu0 0
  %5998 = vmatpush1.bf16.msra.mxu0 %v5964
  %5999 = vmatprep.subr.bf16.mxu0 0
  %6000 = vmatpush1.bf16.msra.mxu0 %v5965
  %6001 = vmatprep.subr.bf16.mxu0 0
  %6002 = vmatpush1.bf16.msra.mxu0 %v5966
  %6003 = vmatprep.subr.bf16.mxu0 0
  %6004 = vmatpush1.bf16.msra.mxu0 %v5967
  %6005 = vmatprep.subr.bf16.mxu0 0
  %6006 = vmatpush1.bf16.msra.mxu0 %v5968
  %6007 = vmatprep.subr.bf16.mxu0 0
  %6008 = vmatpush1.bf16.msra.mxu0 %v5969
  %6009 = vmatprep.subr.bf16.mxu0 0
  %6010 = vmatpush1.bf16.msra.mxu0 %v5970
  %6011 = vmatprep.subr.bf16.mxu0 0
  %6012 = vmatpush1.bf16.msra.mxu0 %v5971
  %6013 = vmatprep.subr.bf16.mxu0 0
  %6014 = vmatpush1.bf16.msra.mxu0 %v5972
  %6015 = vmatprep.subr.bf16.mxu0 0
  %6016 = vmatpush1.bf16.msra.mxu0 %v5973
  %6017 = vmatprep.subr.bf16.mxu0 0
  %6018 = vmatpush1.bf16.msra.mxu0 %v5974
  %6019 = vmatprep.subr.bf16.mxu0 0
  %6020 = vmatpush1.bf16.msra.mxu0 %v5975
  %6021 = vmatprep.subr.bf16.mxu0 0
  %6022 = vmatpush1.bf16.msra.mxu0 %v5976
  %6023 = vmatprep.subr.bf16.mxu0 0
  %6024 = vmatpush1.bf16.msra.mxu0 %v5977
  %6025 = vmatprep.subr.bf16.mxu0 0
  %6026 = vmatpush1.bf16.msra.mxu0 %v5978
  %6027 = vmatprep.mubr.bf16.mxu0 %v3880
  %6028 = vmatmul.mubr.bf16.gmra.mrb[0].mxu0 %v3879
  %v6029 = vpop.f32.mrb[0].mxu0
  %v6030 = vadd.f32 0.0, %v6029
  %v6031 = vpop.f32.mrb[0].mxu0
  %v6032 = vpop.f32.mrb[0].mxu0
  %v6033 = vadd.f32 0.0, %v6032
  %v6034 = vpop.f32.mrb[0].mxu0
  %6035 = vdwg.mxu0
  %v6036 = vpack.c.bf16 %v5690, %v5690
  %v6037 = vpack.c.bf16 %v5693, %v5693
  %v6038 = vpack.c.bf16 %v5860, %v5860
  %v6039 = vpack.c.bf16 %v5863, %v5863
  %v6040 = vpack.c.bf16 %v6030, %v6030
  %v6041 = vpack.c.bf16 %v6033, %v6033
  %v6043 = vsel %vm658, %v6036, 0
  %v6046 = vsel %vm658, %v6038, 0
  %6048 = vmatprep.subr.bf16.mxu0 0
  %6049 = vmatpush1.bf16.xpose.msra.mxu0 %v6046
  %6050 = vmatprep.subr.bf16.mxu0 0
  %6051 = vmatpush1.bf16.xpose.msra.mxu0 0
  %6052 = vmatprep.subr.bf16.mxu0 0
  %6053 = vmatpush1.bf16.xpose.msra.mxu0 0
  %6054 = vmatprep.subr.bf16.mxu0 0
  %6055 = vmatpush1.bf16.xpose.msra.mxu0 0
  %6056 = vmatprep.subr.bf16.mxu0 0
  %6057 = vmatpush1.bf16.xpose.msra.mxu0 0
  %6058 = vmatprep.subr.bf16.mxu0 0
  %6059 = vmatpush1.bf16.xpose.msra.mxu0 0
  %6060 = vmatprep.subr.bf16.mxu0 0
  %6061 = vmatpush1.bf16.xpose.msra.mxu0 0
  %6062 = vmatprep.subr.bf16.mxu0 0
  %6063 = vmatpush1.bf16.xpose.msra.mxu0 0
  %6064 = vmatprep.subr.bf16.mxu0 0
  %6065 = vmatpush1.bf16.xpose.msra.mxu0 0
  %6066 = vmatprep.subr.bf16.mxu0 0
  %6067 = vmatpush1.bf16.xpose.msra.mxu0 0
  %6068 = vmatprep.subr.bf16.mxu0 0
  %6069 = vmatpush1.bf16.xpose.msra.mxu0 0
  %6070 = vmatprep.subr.bf16.mxu0 0
  %6071 = vmatpush1.bf16.xpose.msra.mxu0 0
  %6072 = vmatprep.subr.bf16.mxu0 0
  %6073 = vmatpush1.bf16.xpose.msra.mxu0 0
  %6074 = vmatprep.subr.bf16.mxu0 0
  %6075 = vmatpush1.bf16.xpose.msra.mxu0 0
  %6076 = vmatprep.subr.bf16.mxu0 0
  %6077 = vmatpush1.bf16.xpose.msra.mxu0 0
  %6078 = vmatprep.subr.bf16.mxu0 0
  %6079 = vmatpush1.bf16.xpose.msra.mxu0 0
  %6080 = vmatprep.mubr.bf16.mxu0 0
  %6081 = vmatmul.mubr.bf16.gmra.mrb[0].mxu0 %v6043
  %v6082 = vpop.f32.mrb[0].mxu0
  %v6083 = vadd.f32 %v142, %v6082
  %v6084 = vpop.f32.mrb[0].mxu0
  %v6085 = vpop.f32.mrb[0].mxu0
  %v6086 = vpop.f32.mrb[0].mxu0
  %6087 = vdwg.mxu0
  %v6089 = vsel %vm658, %v6037, 0
  %v6092 = vsel %vm658, %v6039, 0
  %6094 = vmatprep.subr.bf16.mxu0 0
  %6095 = vmatpush1.bf16.xpose.msra.mxu0 %v6092
  %6096 = vmatprep.subr.bf16.mxu0 0
  %6097 = vmatpush1.bf16.xpose.msra.mxu0 0
  %6098 = vmatprep.subr.bf16.mxu0 0
  %6099 = vmatpush1.bf16.xpose.msra.mxu0 0
  %6100 = vmatprep.subr.bf16.mxu0 0
  %6101 = vmatpush1.bf16.xpose.msra.mxu0 0
  %6102 = vmatprep.subr.bf16.mxu0 0
  %6103 = vmatpush1.bf16.xpose.msra.mxu0 0
  %6104 = vmatprep.subr.bf16.mxu0 0
  %6105 = vmatpush1.bf16.xpose.msra.mxu0 0
  %6106 = vmatprep.subr.bf16.mxu0 0
  %6107 = vmatpush1.bf16.xpose.msra.mxu0 0
  %6108 = vmatprep.subr.bf16.mxu0 0
  %6109 = vmatpush1.bf16.xpose.msra.mxu0 0
  %6110 = vmatprep.subr.bf16.mxu0 0
  %6111 = vmatpush1.bf16.xpose.msra.mxu0 0
  %6112 = vmatprep.subr.bf16.mxu0 0
  %6113 = vmatpush1.bf16.xpose.msra.mxu0 0
  %6114 = vmatprep.subr.bf16.mxu0 0
  %6115 = vmatpush1.bf16.xpose.msra.mxu0 0
  %6116 = vmatprep.subr.bf16.mxu0 0
  %6117 = vmatpush1.bf16.xpose.msra.mxu0 0
  %6118 = vmatprep.subr.bf16.mxu0 0
  %6119 = vmatpush1.bf16.xpose.msra.mxu0 0
  %6120 = vmatprep.subr.bf16.mxu0 0
  %6121 = vmatpush1.bf16.xpose.msra.mxu0 0
  %6122 = vmatprep.subr.bf16.mxu0 0
  %6123 = vmatpush1.bf16.xpose.msra.mxu0 0
  %6124 = vmatprep.subr.bf16.mxu0 0
  %6125 = vmatpush1.bf16.xpose.msra.mxu0 0
  %6126 = vmatprep.mubr.bf16.mxu0 0
  %6127 = vmatmul.mubr.bf16.gmra.mrb[0].mxu0 %v6089
  %v6128 = vpop.f32.mrb[0].mxu0
  %v6129 = vadd.f32 %v142, %v6128
  %v6130 = vpop.f32.mrb[0].mxu0
  %v6131 = vpop.f32.mrb[0].mxu0
  %v6132 = vpop.f32.mrb[0].mxu0
  %6133 = vdwg.mxu0
  %v6134 = vsel %vm751, %v6083, -inf
  %6135 = vmax.xlane.f32.xlu0 %v6134
  %v6136 = vpop.xlane.xlu0 %6135
  %v6137 = vsel %vm751, %v6129, -inf
  %6138 = vmax.xlane.f32.xlu0 %v6137
  %v6139 = vpop.xlane.xlu0 %6138
  %v6140 = vsub.f32 %v6083, %v6136
  %v6141 = vsub.f32 %v6129, %v6139
  %v6142 = vmul.f32 %v6140, 1.442695
  %v6143 = vpow.pop %v6142
  %v6144 = vmul.f32 %v6141, 1.442695
  %v6145 = vpow.pop %v6144
  %v6146 = vsel %vm751, %v6143, 0.0
  %6147 = vadd.xlane.f32.xlu0 %v6146
  %v6148 = vpop.xlane.xlu0 %6147
  %v6149 = vsel %vm751, %v6145, 0.0
  %6150 = vadd.xlane.f32.xlu0 %v6149
  %v6151 = vpop.xlane.xlu0 %6150
  %v6152 = vrcp.pop %v6148
  %v6153 = vrcp.pop %v6151
  %v6154 = vmul.f32 %v6143, %v6152
  %v6155 = vmul.f32 %v6145, %v6153
  %s6156 = scalar_lea.vmem %s12, 32
  %6157 = vst.msk [vmem:[%s6156] sm:$0xff] %vm751, %v6154
  %6158 = vst.msk [vmem:[%s6156 + $0x8] sm:$0xff] %vm751, %v6155
  %v6159 = vpack.c.bf16 %v6154, %v6154
  %v6160 = vpack.c.bf16 %v6155, %v6155
  %v6162 = vsel %vm751, %v6159, 0
  %v6165 = vsel %vm58, %v6040, 0
  %6167 = vmatprep.subr.bf16.mxu0 0
  %6168 = vmatpush1.bf16.msra.mxu0 %v6165
  %6169 = vmatprep.subr.bf16.mxu0 0
  %6170 = vmatpush1.bf16.msra.mxu0 0
  %6171 = vmatprep.subr.bf16.mxu0 0
  %6172 = vmatpush1.bf16.msra.mxu0 0
  %6173 = vmatprep.subr.bf16.mxu0 0
  %6174 = vmatpush1.bf16.msra.mxu0 0
  %6175 = vmatprep.subr.bf16.mxu0 0
  %6176 = vmatpush1.bf16.msra.mxu0 0
  %6177 = vmatprep.subr.bf16.mxu0 0
  %6178 = vmatpush1.bf16.msra.mxu0 0
  %6179 = vmatprep.subr.bf16.mxu0 0
  %6180 = vmatpush1.bf16.msra.mxu0 0
  %6181 = vmatprep.subr.bf16.mxu0 0
  %6182 = vmatpush1.bf16.msra.mxu0 0
  %6183 = vmatprep.subr.bf16.mxu0 0
  %6184 = vmatpush1.bf16.msra.mxu0 0
  %6185 = vmatprep.subr.bf16.mxu0 0
  %6186 = vmatpush1.bf16.msra.mxu0 0
  %6187 = vmatprep.subr.bf16.mxu0 0
  %6188 = vmatpush1.bf16.msra.mxu0 0
  %6189 = vmatprep.subr.bf16.mxu0 0
  %6190 = vmatpush1.bf16.msra.mxu0 0
  %6191 = vmatprep.subr.bf16.mxu0 0
  %6192 = vmatpush1.bf16.msra.mxu0 0
  %6193 = vmatprep.subr.bf16.mxu0 0
  %6194 = vmatpush1.bf16.msra.mxu0 0
  %6195 = vmatprep.subr.bf16.mxu0 0
  %6196 = vmatpush1.bf16.msra.mxu0 0
  %6197 = vmatprep.subr.bf16.mxu0 0
  %6198 = vmatpush1.bf16.msra.mxu0 0
  %6199 = vmatprep.mubr.bf16.mxu0 0
  %6200 = vmatmul.mubr.bf16.gmra.mrb[0].mxu0 %v6162
  %v6201 = vpop.f32.mrb[0].mxu0
  %v6202 = vadd.f32 0.0, %v6201
  %v6203 = vpop.f32.mrb[0].mxu0
  %v6204 = vpop.f32.mrb[0].mxu0
  %v6205 = vpop.f32.mrb[0].mxu0
  %6206 = vdwg.mxu0
  %v6208 = vsel %vm751, %v6160, 0
  %v6211 = vsel %vm58, %v6041, 0
  %6213 = vmatprep.subr.bf16.mxu0 0
  %6214 = vmatpush1.bf16.msra.mxu0 %v6211
  %6215 = vmatprep.subr.bf16.mxu0 0
  %6216 = vmatpush1.bf16.msra.mxu0 0
  %6217 = vmatprep.subr.bf16.mxu0 0
  %6218 = vmatpush1.bf16.msra.mxu0 0
  %6219 = vmatprep.subr.bf16.mxu0 0
  %6220 = vmatpush1.bf16.msra.mxu0 0
  %6221 = vmatprep.subr.bf16.mxu0 0
  %6222 = vmatpush1.bf16.msra.mxu0 0
  %6223 = vmatprep.subr.bf16.mxu0 0
  %6224 = vmatpush1.bf16.msra.mxu0 0
  %6225 = vmatprep.subr.bf16.mxu0 0
  %6226 = vmatpush1.bf16.msra.mxu0 0
  %6227 = vmatprep.subr.bf16.mxu0 0
  %6228 = vmatpush1.bf16.msra.mxu0 0
  %6229 = vmatprep.subr.bf16.mxu0 0
  %6230 = vmatpush1.bf16.msra.mxu0 0
  %6231 = vmatprep.subr.bf16.mxu0 0
  %6232 = vmatpush1.bf16.msra.mxu0 0
  %6233 = vmatprep.subr.bf16.mxu0 0
  %6234 = vmatpush1.bf16.msra.mxu0 0
  %6235 = vmatprep.subr.bf16.mxu0 0
  %6236 = vmatpush1.bf16.msra.mxu0 0
  %6237 = vmatprep.subr.bf16.mxu0 0
  %6238 = vmatpush1.bf16.msra.mxu0 0
  %6239 = vmatprep.subr.bf16.mxu0 0
  %6240 = vmatpush1.bf16.msra.mxu0 0
  %6241 = vmatprep.subr.bf16.mxu0 0
  %6242 = vmatpush1.bf16.msra.mxu0 0
  %6243 = vmatprep.subr.bf16.mxu0 0
  %6244 = vmatpush1.bf16.msra.mxu0 0
  %6245 = vmatprep.mubr.bf16.mxu0 0
  %6246 = vmatmul.mubr.bf16.gmra.mrb[0].mxu0 %v6208
  %v6247 = vpop.f32.mrb[0].mxu0
  %v6248 = vadd.f32 0.0, %v6247
  %v6249 = vpop.f32.mrb[0].mxu0
  %v6250 = vpop.f32.mrb[0].mxu0
  %v6251 = vpop.f32.mrb[0].mxu0
  %6252 = vdwg.mxu0
  %v6253 = vpack.c.bf16 %v6248, %v6202
  %s6254 = scalar_lea.vmem %s7, 384
  %v6255 = vld [vmem:[%s6254] sm:$0xff]
  %v6256 = vld [vmem:[%s6254 + $0x8] sm:$0xff]
  %v6257 = vld [vmem:[%s6254 + $0x10] sm:$0xff]
  %v6258 = vld [vmem:[%s6254 + $0x18] sm:$0xff]
  %v6259 = vld [vmem:[%s6254 + $0x20] sm:$0xff]
  %v6260 = vld [vmem:[%s6254 + $0x28] sm:$0xff]
  %v6261 = vld [vmem:[%s6254 + $0x30] sm:$0xff]
  %v6262 = vld [vmem:[%s6254 + $0x38] sm:$0xff]
  %v6271 = vunpack.c.l.b16 %v6255
  %v6272 = vunpack.c.h.b16 %v6255
  %v6273 = vunpack.c.l.b16 %v6256
  %v6274 = vunpack.c.h.b16 %v6256
  %v6275 = vunpack.c.l.b16 %v6257
  %v6276 = vunpack.c.h.b16 %v6257
  %v6277 = vunpack.c.l.b16 %v6258
  %v6278 = vunpack.c.h.b16 %v6258
  %v6279 = vunpack.c.l.b16 %v6259
  %v6280 = vunpack.c.h.b16 %v6259
  %v6281 = vunpack.c.l.b16 %v6260
  %v6282 = vunpack.c.h.b16 %v6260
  %v6283 = vunpack.c.l.b16 %v6261
  %v6284 = vunpack.c.h.b16 %v6261
  %v6285 = vunpack.c.l.b16 %v6262
  %v6286 = vunpack.c.h.b16 %v6262
  %v6287 = vpack.c.b16 %v6273, %v6271
  %v6288 = vpack.c.b16 %v6274, %v6272
  %v6289 = vpack.c.b16 %v6277, %v6275
  %v6290 = vpack.c.b16 %v6278, %v6276
  %v6291 = vpack.c.b16 %v6281, %v6279
  %v6292 = vpack.c.b16 %v6282, %v6280
  %v6293 = vpack.c.b16 %v6285, %v6283
  %v6294 = vpack.c.b16 %v6286, %v6284
  %v6304 = vsel %vm658, %v6253, 0
  %6306 = vmatprep.subr.bf16.mxu0 %v6288
  %6307 = vmatpush1.bf16.msra.mxu0 %v6287
  %6308 = vmatprep.subr.bf16.mxu0 %v6290
  %6309 = vmatpush1.bf16.msra.mxu0 %v6289
  %6310 = vmatprep.subr.bf16.mxu0 %v6292
  %6311 = vmatpush1.bf16.msra.mxu0 %v6291
  %6312 = vmatprep.subr.bf16.mxu0 %v6294
  %6313 = vmatpush1.bf16.msra.mxu0 %v6293
  %6314 = vmatprep.subr.bf16.mxu0 0
  %6315 = vmatpush1.bf16.msra.mxu0 0
  %6316 = vmatprep.subr.bf16.mxu0 0
  %6317 = vmatpush1.bf16.msra.mxu0 0
  %6318 = vmatprep.subr.bf16.mxu0 0
  %6319 = vmatpush1.bf16.msra.mxu0 0
  %6320 = vmatprep.subr.bf16.mxu0 0
  %6321 = vmatpush1.bf16.msra.mxu0 0
  %6322 = vmatprep.subr.bf16.mxu0 0
  %6323 = vmatpush1.bf16.msra.mxu0 0
  %6324 = vmatprep.subr.bf16.mxu0 0
  %6325 = vmatpush1.bf16.msra.mxu0 0
  %6326 = vmatprep.subr.bf16.mxu0 0
  %6327 = vmatpush1.bf16.msra.mxu0 0
  %6328 = vmatprep.subr.bf16.mxu0 0
  %6329 = vmatpush1.bf16.msra.mxu0 0
  %6330 = vmatprep.subr.bf16.mxu0 0
  %6331 = vmatpush1.bf16.msra.mxu0 0
  %6332 = vmatprep.subr.bf16.mxu0 0
  %6333 = vmatpush1.bf16.msra.mxu0 0
  %6334 = vmatprep.subr.bf16.mxu0 0
  %6335 = vmatpush1.bf16.msra.mxu0 0
  %6336 = vmatprep.subr.bf16.mxu0 0
  %6337 = vmatpush1.bf16.msra.mxu0 0
  %6338 = vmatprep.mubr.bf16.mxu0 0
  %6339 = vmatmul.mubr.bf16.gmra.mrb[0].mxu0 %v6304
  %v6340 = vpop.f32.mrb[0].mxu0
  %v6341 = vadd.f32 0.0, %v6340
  %v6342 = vpop.f32.mrb[0].mxu0
  %v6343 = vadd.f32 0.0, %v6342
  %v6344 = vpop.f32.mrb[0].mxu0
  %v6345 = vadd.f32 0.0, %v6344
  %v6346 = vpop.f32.mrb[0].mxu0
  %v6347 = vadd.f32 0.0, %v6346
  %6348 = vdwg.mxu0
  %v6349 = vadd.f32 %v5518, %v6341
  %v6350 = vadd.f32 %v5520, %v6343
  %v6351 = vadd.f32 %v5522, %v6345
  %v6352 = vadd.f32 %v5524, %v6347
  %s6353 = scalar_lea.vmem %s4, 896
  %v6354 = vld [vmem:[%s6353] sm:$0xf]
  %v6355 = vld [vmem:[%s6353 + $0x4] sm:$0xf]
  %v6356 = vld [vmem:[%s6353 + $0x8] sm:$0xf]
  %v6357 = vld [vmem:[%s6353 + $0xc] sm:$0xf]
  %v6358 = vld [vmem:[%s6353 + $0x10] sm:$0xf]
  %v6359 = vld [vmem:[%s6353 + $0x14] sm:$0xf]
  %v6360 = vld [vmem:[%s6353 + $0x18] sm:$0xf]
  %v6361 = vld [vmem:[%s6353 + $0x1c] sm:$0xf]
  %v6362 = vld [vmem:[%s6353 + $0x20] sm:$0xf]
  %v6363 = vld [vmem:[%s6353 + $0x24] sm:$0xf]
  %v6364 = vld [vmem:[%s6353 + $0x28] sm:$0xf]
  %v6365 = vld [vmem:[%s6353 + $0x2c] sm:$0xf]
  %v6366 = vld [vmem:[%s6353 + $0x30] sm:$0xf]
  %v6367 = vld [vmem:[%s6353 + $0x34] sm:$0xf]
  %v6368 = vld [vmem:[%s6353 + $0x38] sm:$0xf]
  %v6369 = vld [vmem:[%s6353 + $0x3c] sm:$0xf]
  %v6370 = vld [vmem:[%s6353 + $0x40] sm:$0xf]
  %v6371 = vld [vmem:[%s6353 + $0x44] sm:$0xf]
  %v6372 = vld [vmem:[%s6353 + $0x48] sm:$0xf]
  %v6373 = vld [vmem:[%s6353 + $0x4c] sm:$0xf]
  %v6374 = vld [vmem:[%s6353 + $0x50] sm:$0xf]
  %v6375 = vld [vmem:[%s6353 + $0x54] sm:$0xf]
  %v6376 = vld [vmem:[%s6353 + $0x58] sm:$0xf]
  %v6377 = vld [vmem:[%s6353 + $0x5c] sm:$0xf]
  %v6378 = vld [vmem:[%s6353 + $0x60] sm:$0xf]
  %v6379 = vld [vmem:[%s6353 + $0x64] sm:$0xf]
  %v6380 = vld [vmem:[%s6353 + $0x68] sm:$0xf]
  %v6381 = vld [vmem:[%s6353 + $0x6c] sm:$0xf]
  %v6382 = vld [vmem:[%s6353 + $0x70] sm:$0xf]
  %v6383 = vld [vmem:[%s6353 + $0x74] sm:$0xf]
  %v6384 = vld [vmem:[%s6353 + $0x78] sm:$0xf]
  %v6385 = vld [vmem:[%s6353 + $0x7c] sm:$0xf]
  %v6418 = vunpack.c.l.b16 %v6354
  %v6419 = vunpack.c.l.b16 %v6355
  %v6420 = vunpack.c.l.b16 %v6356
  %v6421 = vunpack.c.l.b16 %v6357
  %v6422 = vunpack.c.l.b16 %v6358
  %v6423 = vunpack.c.l.b16 %v6359
  %v6424 = vunpack.c.l.b16 %v6360
  %v6425 = vunpack.c.l.b16 %v6361
  %v6426 = vunpack.c.l.b16 %v6362
  %v6427 = vunpack.c.l.b16 %v6363
  %v6428 = vunpack.c.l.b16 %v6364
  %v6429 = vunpack.c.l.b16 %v6365
  %v6430 = vunpack.c.l.b16 %v6366
  %v6431 = vunpack.c.l.b16 %v6367
  %v6432 = vunpack.c.l.b16 %v6368
  %v6433 = vunpack.c.l.b16 %v6369
  %v6434 = vunpack.c.l.b16 %v6370
  %v6435 = vunpack.c.l.b16 %v6371
  %v6436 = vunpack.c.l.b16 %v6372
  %v6437 = vunpack.c.l.b16 %v6373
  %v6438 = vunpack.c.l.b16 %v6374
  %v6439 = vunpack.c.l.b16 %v6375
  %v6440 = vunpack.c.l.b16 %v6376
  %v6441 = vunpack.c.l.b16 %v6377
  %v6442 = vunpack.c.l.b16 %v6378
  %v6443 = vunpack.c.l.b16 %v6379
  %v6444 = vunpack.c.l.b16 %v6380
  %v6445 = vunpack.c.l.b16 %v6381
  %v6446 = vunpack.c.l.b16 %v6382
  %v6447 = vunpack.c.l.b16 %v6383
  %v6448 = vunpack.c.l.b16 %v6384
  %v6449 = vunpack.c.l.b16 %v6385
  %v6450 = vpack.c.b16 %v6419, %v6418
  %v6451 = vpack.c.b16 %v6421, %v6420
  %v6452 = vpack.c.b16 %v6423, %v6422
  %v6453 = vpack.c.b16 %v6425, %v6424
  %v6454 = vpack.c.b16 %v6427, %v6426
  %v6455 = vpack.c.b16 %v6429, %v6428
  %v6456 = vpack.c.b16 %v6431, %v6430
  %v6457 = vpack.c.b16 %v6433, %v6432
  %v6458 = vpack.c.b16 %v6435, %v6434
  %v6459 = vpack.c.b16 %v6437, %v6436
  %v6460 = vpack.c.b16 %v6439, %v6438
  %v6461 = vpack.c.b16 %v6441, %v6440
  %v6462 = vpack.c.b16 %v6443, %v6442
  %v6463 = vpack.c.b16 %v6445, %v6444
  %v6464 = vpack.c.b16 %v6447, %v6446
  %v6465 = vpack.c.b16 %v6449, %v6448
  %6482 = vmatprep.subr.bf16.mxu0 0
  %6483 = vmatpush1.bf16.msra.mxu0 %v6450
  %6484 = vmatprep.subr.bf16.mxu0 0
  %6485 = vmatpush1.bf16.msra.mxu0 %v6451
  %6486 = vmatprep.subr.bf16.mxu0 0
  %6487 = vmatpush1.bf16.msra.mxu0 %v6452
  %6488 = vmatprep.subr.bf16.mxu0 0
  %6489 = vmatpush1.bf16.msra.mxu0 %v6453
  %6490 = vmatprep.subr.bf16.mxu0 0
  %6491 = vmatpush1.bf16.msra.mxu0 %v6454
  %6492 = vmatprep.subr.bf16.mxu0 0
  %6493 = vmatpush1.bf16.msra.mxu0 %v6455
  %6494 = vmatprep.subr.bf16.mxu0 0
  %6495 = vmatpush1.bf16.msra.mxu0 %v6456
  %6496 = vmatprep.subr.bf16.mxu0 0
  %6497 = vmatpush1.bf16.msra.mxu0 %v6457
  %6498 = vmatprep.subr.bf16.mxu0 0
  %6499 = vmatpush1.bf16.msra.mxu0 %v6458
  %6500 = vmatprep.subr.bf16.mxu0 0
  %6501 = vmatpush1.bf16.msra.mxu0 %v6459
  %6502 = vmatprep.subr.bf16.mxu0 0
  %6503 = vmatpush1.bf16.msra.mxu0 %v6460
  %6504 = vmatprep.subr.bf16.mxu0 0
  %6505 = vmatpush1.bf16.msra.mxu0 %v6461
  %6506 = vmatprep.subr.bf16.mxu0 0
  %6507 = vmatpush1.bf16.msra.mxu0 %v6462
  %6508 = vmatprep.subr.bf16.mxu0 0
  %6509 = vmatpush1.bf16.msra.mxu0 %v6463
  %6510 = vmatprep.subr.bf16.mxu0 0
  %6511 = vmatpush1.bf16.msra.mxu0 %v6464
  %6512 = vmatprep.subr.bf16.mxu0 0
  %6513 = vmatpush1.bf16.msra.mxu0 %v6465
  %6514 = vmatprep.mubr.bf16.mxu0 %v3880
  %6515 = vmatmul.mubr.bf16.gmra.mrb[0].mxu0 %v3879
  %v6516 = vpop.f32.mrb[0].mxu0
  %v6517 = vadd.f32 0.0, %v6516
  %v6518 = vpop.f32.mrb[0].mxu0
  %v6519 = vpop.f32.mrb[0].mxu0
  %v6520 = vadd.f32 0.0, %v6519
  %v6521 = vpop.f32.mrb[0].mxu0
  %6522 = vdwg.mxu0
  %s6523 = scalar_lea.vmem %s5, 896
  %v6524 = vld [vmem:[%s6523] sm:$0xf]
  %v6525 = vld [vmem:[%s6523 + $0x4] sm:$0xf]
  %v6526 = vld [vmem:[%s6523 + $0x8] sm:$0xf]
  %v6527 = vld [vmem:[%s6523 + $0xc] sm:$0xf]
  %v6528 = vld [vmem:[%s6523 + $0x10] sm:$0xf]
  %v6529 = vld [vmem:[%s6523 + $0x14] sm:$0xf]
  %v6530 = vld [vmem:[%s6523 + $0x18] sm:$0xf]
  %v6531 = vld [vmem:[%s6523 + $0x1c] sm:$0xf]
  %v6532 = vld [vmem:[%s6523 + $0x20] sm:$0xf]
  %v6533 = vld [vmem:[%s6523 + $0x24] sm:$0xf]
  %v6534 = vld [vmem:[%s6523 + $0x28] sm:$0xf]
  %v6535 = vld [vmem:[%s6523 + $0x2c] sm:$0xf]
  %v6536 = vld [vmem:[%s6523 + $0x30] sm:$0xf]
  %v6537 = vld [vmem:[%s6523 + $0x34] sm:$0xf]
  %v6538 = vld [vmem:[%s6523 + $0x38] sm:$0xf]
  %v6539 = vld [vmem:[%s6523 + $0x3c] sm:$0xf]
  %v6540 = vld [vmem:[%s6523 + $0x40] sm:$0xf]
  %v6541 = vld [vmem:[%s6523 + $0x44] sm:$0xf]
  %v6542 = vld [vmem:[%s6523 + $0x48] sm:$0xf]
  %v6543 = vld [vmem:[%s6523 + $0x4c] sm:$0xf]
  %v6544 = vld [vmem:[%s6523 + $0x50] sm:$0xf]
  %v6545 = vld [vmem:[%s6523 + $0x54] sm:$0xf]
  %v6546 = vld [vmem:[%s6523 + $0x58] sm:$0xf]
  %v6547 = vld [vmem:[%s6523 + $0x5c] sm:$0xf]
  %v6548 = vld [vmem:[%s6523 + $0x60] sm:$0xf]
  %v6549 = vld [vmem:[%s6523 + $0x64] sm:$0xf]
  %v6550 = vld [vmem:[%s6523 + $0x68] sm:$0xf]
  %v6551 = vld [vmem:[%s6523 + $0x6c] sm:$0xf]
  %v6552 = vld [vmem:[%s6523 + $0x70] sm:$0xf]
  %v6553 = vld [vmem:[%s6523 + $0x74] sm:$0xf]
  %v6554 = vld [vmem:[%s6523 + $0x78] sm:$0xf]
  %v6555 = vld [vmem:[%s6523 + $0x7c] sm:$0xf]
  %v6588 = vunpack.c.l.b16 %v6524
  %v6589 = vunpack.c.l.b16 %v6525
  %v6590 = vunpack.c.l.b16 %v6526
  %v6591 = vunpack.c.l.b16 %v6527
  %v6592 = vunpack.c.l.b16 %v6528
  %v6593 = vunpack.c.l.b16 %v6529
  %v6594 = vunpack.c.l.b16 %v6530
  %v6595 = vunpack.c.l.b16 %v6531
  %v6596 = vunpack.c.l.b16 %v6532
  %v6597 = vunpack.c.l.b16 %v6533
  %v6598 = vunpack.c.l.b16 %v6534
  %v6599 = vunpack.c.l.b16 %v6535
  %v6600 = vunpack.c.l.b16 %v6536
  %v6601 = vunpack.c.l.b16 %v6537
  %v6602 = vunpack.c.l.b16 %v6538
  %v6603 = vunpack.c.l.b16 %v6539
  %v6604 = vunpack.c.l.b16 %v6540
  %v6605 = vunpack.c.l.b16 %v6541
  %v6606 = vunpack.c.l.b16 %v6542
  %v6607 = vunpack.c.l.b16 %v6543
  %v6608 = vunpack.c.l.b16 %v6544
  %v6609 = vunpack.c.l.b16 %v6545
  %v6610 = vunpack.c.l.b16 %v6546
  %v6611 = vunpack.c.l.b16 %v6547
  %v6612 = vunpack.c.l.b16 %v6548
  %v6613 = vunpack.c.l.b16 %v6549
  %v6614 = vunpack.c.l.b16 %v6550
  %v6615 = vunpack.c.l.b16 %v6551
  %v6616 = vunpack.c.l.b16 %v6552
  %v6617 = vunpack.c.l.b16 %v6553
  %v6618 = vunpack.c.l.b16 %v6554
  %v6619 = vunpack.c.l.b16 %v6555
  %v6620 = vpack.c.b16 %v6589, %v6588
  %v6621 = vpack.c.b16 %v6591, %v6590
  %v6622 = vpack.c.b16 %v6593, %v6592
  %v6623 = vpack.c.b16 %v6595, %v6594
  %v6624 = vpack.c.b16 %v6597, %v6596
  %v6625 = vpack.c.b16 %v6599, %v6598
  %v6626 = vpack.c.b16 %v6601, %v6600
  %v6627 = vpack.c.b16 %v6603, %v6602
  %v6628 = vpack.c.b16 %v6605, %v6604
  %v6629 = vpack.c.b16 %v6607, %v6606
  %v6630 = vpack.c.b16 %v6609, %v6608
  %v6631 = vpack.c.b16 %v6611, %v6610
  %v6632 = vpack.c.b16 %v6613, %v6612
  %v6633 = vpack.c.b16 %v6615, %v6614
  %v6634 = vpack.c.b16 %v6617, %v6616
  %v6635 = vpack.c.b16 %v6619, %v6618
  %6652 = vmatprep.subr.bf16.mxu0 0
  %6653 = vmatpush1.bf16.msra.mxu0 %v6620
  %6654 = vmatprep.subr.bf16.mxu0 0
  %6655 = vmatpush1.bf16.msra.mxu0 %v6621
  %6656 = vmatprep.subr.bf16.mxu0 0
  %6657 = vmatpush1.bf16.msra.mxu0 %v6622
  %6658 = vmatprep.subr.bf16.mxu0 0
  %6659 = vmatpush1.bf16.msra.mxu0 %v6623
  %6660 = vmatprep.subr.bf16.mxu0 0
  %6661 = vmatpush1.bf16.msra.mxu0 %v6624
  %6662 = vmatprep.subr.bf16.mxu0 0
  %6663 = vmatpush1.bf16.msra.mxu0 %v6625
  %6664 = vmatprep.subr.bf16.mxu0 0
  %6665 = vmatpush1.bf16.msra.mxu0 %v6626
  %6666 = vmatprep.subr.bf16.mxu0 0
  %6667 = vmatpush1.bf16.msra.mxu0 %v6627
  %6668 = vmatprep.subr.bf16.mxu0 0
  %6669 = vmatpush1.bf16.msra.mxu0 %v6628
  %6670 = vmatprep.subr.bf16.mxu0 0
  %6671 = vmatpush1.bf16.msra.mxu0 %v6629
  %6672 = vmatprep.subr.bf16.mxu0 0
  %6673 = vmatpush1.bf16.msra.mxu0 %v6630
  %6674 = vmatprep.subr.bf16.mxu0 0
  %6675 = vmatpush1.bf16.msra.mxu0 %v6631
  %6676 = vmatprep.subr.bf16.mxu0 0
  %6677 = vmatpush1.bf16.msra.mxu0 %v6632
  %6678 = vmatprep.subr.bf16.mxu0 0
  %6679 = vmatpush1.bf16.msra.mxu0 %v6633
  %6680 = vmatprep.subr.bf16.mxu0 0
  %6681 = vmatpush1.bf16.msra.mxu0 %v6634
  %6682 = vmatprep.subr.bf16.mxu0 0
  %6683 = vmatpush1.bf16.msra.mxu0 %v6635
  %6684 = vmatprep.mubr.bf16.mxu0 %v3880
  %6685 = vmatmul.mubr.bf16.gmra.mrb[0].mxu0 %v3879
  %v6686 = vpop.f32.mrb[0].mxu0
  %v6687 = vadd.f32 0.0, %v6686
  %v6688 = vpop.f32.mrb[0].mxu0
  %v6689 = vpop.f32.mrb[0].mxu0
  %v6690 = vadd.f32 0.0, %v6689
  %v6691 = vpop.f32.mrb[0].mxu0
  %6692 = vdwg.mxu0
  %s6693 = scalar_lea.vmem %s6, 896
  %v6694 = vld [vmem:[%s6693] sm:$0xf]
  %v6695 = vld [vmem:[%s6693 + $0x4] sm:$0xf]
  %v6696 = vld [vmem:[%s6693 + $0x8] sm:$0xf]
  %v6697 = vld [vmem:[%s6693 + $0xc] sm:$0xf]
  %v6698 = vld [vmem:[%s6693 + $0x10] sm:$0xf]
  %v6699 = vld [vmem:[%s6693 + $0x14] sm:$0xf]
  %v6700 = vld [vmem:[%s6693 + $0x18] sm:$0xf]
  %v6701 = vld [vmem:[%s6693 + $0x1c] sm:$0xf]
  %v6702 = vld [vmem:[%s6693 + $0x20] sm:$0xf]
  %v6703 = vld [vmem:[%s6693 + $0x24] sm:$0xf]
  %v6704 = vld [vmem:[%s6693 + $0x28] sm:$0xf]
  %v6705 = vld [vmem:[%s6693 + $0x2c] sm:$0xf]
  %v6706 = vld [vmem:[%s6693 + $0x30] sm:$0xf]
  %v6707 = vld [vmem:[%s6693 + $0x34] sm:$0xf]
  %v6708 = vld [vmem:[%s6693 + $0x38] sm:$0xf]
  %v6709 = vld [vmem:[%s6693 + $0x3c] sm:$0xf]
  %v6710 = vld [vmem:[%s6693 + $0x40] sm:$0xf]
  %v6711 = vld [vmem:[%s6693 + $0x44] sm:$0xf]
  %v6712 = vld [vmem:[%s6693 + $0x48] sm:$0xf]
  %v6713 = vld [vmem:[%s6693 + $0x4c] sm:$0xf]
  %v6714 = vld [vmem:[%s6693 + $0x50] sm:$0xf]
  %v6715 = vld [vmem:[%s6693 + $0x54] sm:$0xf]
  %v6716 = vld [vmem:[%s6693 + $0x58] sm:$0xf]
  %v6717 = vld [vmem:[%s6693 + $0x5c] sm:$0xf]
  %v6718 = vld [vmem:[%s6693 + $0x60] sm:$0xf]
  %v6719 = vld [vmem:[%s6693 + $0x64] sm:$0xf]
  %v6720 = vld [vmem:[%s6693 + $0x68] sm:$0xf]
  %v6721 = vld [vmem:[%s6693 + $0x6c] sm:$0xf]
  %v6722 = vld [vmem:[%s6693 + $0x70] sm:$0xf]
  %v6723 = vld [vmem:[%s6693 + $0x74] sm:$0xf]
  %v6724 = vld [vmem:[%s6693 + $0x78] sm:$0xf]
  %v6725 = vld [vmem:[%s6693 + $0x7c] sm:$0xf]
  %v6758 = vunpack.c.l.b16 %v6694
  %v6759 = vunpack.c.l.b16 %v6695
  %v6760 = vunpack.c.l.b16 %v6696
  %v6761 = vunpack.c.l.b16 %v6697
  %v6762 = vunpack.c.l.b16 %v6698
  %v6763 = vunpack.c.l.b16 %v6699
  %v6764 = vunpack.c.l.b16 %v6700
  %v6765 = vunpack.c.l.b16 %v6701
  %v6766 = vunpack.c.l.b16 %v6702
  %v6767 = vunpack.c.l.b16 %v6703
  %v6768 = vunpack.c.l.b16 %v6704
  %v6769 = vunpack.c.l.b16 %v6705
  %v6770 = vunpack.c.l.b16 %v6706
  %v6771 = vunpack.c.l.b16 %v6707
  %v6772 = vunpack.c.l.b16 %v6708
  %v6773 = vunpack.c.l.b16 %v6709
  %v6774 = vunpack.c.l.b16 %v6710
  %v6775 = vunpack.c.l.b16 %v6711
  %v6776 = vunpack.c.l.b16 %v6712
  %v6777 = vunpack.c.l.b16 %v6713
  %v6778 = vunpack.c.l.b16 %v6714
  %v6779 = vunpack.c.l.b16 %v6715
  %v6780 = vunpack.c.l.b16 %v6716
  %v6781 = vunpack.c.l.b16 %v6717
  %v6782 = vunpack.c.l.b16 %v6718
  %v6783 = vunpack.c.l.b16 %v6719
  %v6784 = vunpack.c.l.b16 %v6720
  %v6785 = vunpack.c.l.b16 %v6721
  %v6786 = vunpack.c.l.b16 %v6722
  %v6787 = vunpack.c.l.b16 %v6723
  %v6788 = vunpack.c.l.b16 %v6724
  %v6789 = vunpack.c.l.b16 %v6725
  %v6790 = vpack.c.b16 %v6759, %v6758
  %v6791 = vpack.c.b16 %v6761, %v6760
  %v6792 = vpack.c.b16 %v6763, %v6762
  %v6793 = vpack.c.b16 %v6765, %v6764
  %v6794 = vpack.c.b16 %v6767, %v6766
  %v6795 = vpack.c.b16 %v6769, %v6768
  %v6796 = vpack.c.b16 %v6771, %v6770
  %v6797 = vpack.c.b16 %v6773, %v6772
  %v6798 = vpack.c.b16 %v6775, %v6774
  %v6799 = vpack.c.b16 %v6777, %v6776
  %v6800 = vpack.c.b16 %v6779, %v6778
  %v6801 = vpack.c.b16 %v6781, %v6780
  %v6802 = vpack.c.b16 %v6783, %v6782
  %v6803 = vpack.c.b16 %v6785, %v6784
  %v6804 = vpack.c.b16 %v6787, %v6786
  %v6805 = vpack.c.b16 %v6789, %v6788
  %6822 = vmatprep.subr.bf16.mxu0 0
  %6823 = vmatpush1.bf16.msra.mxu0 %v6790
  %6824 = vmatprep.subr.bf16.mxu0 0
  %6825 = vmatpush1.bf16.msra.mxu0 %v6791
  %6826 = vmatprep.subr.bf16.mxu0 0
  %6827 = vmatpush1.bf16.msra.mxu0 %v6792
  %6828 = vmatprep.subr.bf16.mxu0 0
  %6829 = vmatpush1.bf16.msra.mxu0 %v6793
  %6830 = vmatprep.subr.bf16.mxu0 0
  %6831 = vmatpush1.bf16.msra.mxu0 %v6794
  %6832 = vmatprep.subr.bf16.mxu0 0
  %6833 = vmatpush1.bf16.msra.mxu0 %v6795
  %6834 = vmatprep.subr.bf16.mxu0 0
  %6835 = vmatpush1.bf16.msra.mxu0 %v6796
  %6836 = vmatprep.subr.bf16.mxu0 0
  %6837 = vmatpush1.bf16.msra.mxu0 %v6797
  %6838 = vmatprep.subr.bf16.mxu0 0
  %6839 = vmatpush1.bf16.msra.mxu0 %v6798
  %6840 = vmatprep.subr.bf16.mxu0 0
  %6841 = vmatpush1.bf16.msra.mxu0 %v6799
  %6842 = vmatprep.subr.bf16.mxu0 0
  %6843 = vmatpush1.bf16.msra.mxu0 %v6800
  %6844 = vmatprep.subr.bf16.mxu0 0
  %6845 = vmatpush1.bf16.msra.mxu0 %v6801
  %6846 = vmatprep.subr.bf16.mxu0 0
  %6847 = vmatpush1.bf16.msra.mxu0 %v6802
  %6848 = vmatprep.subr.bf16.mxu0 0
  %6849 = vmatpush1.bf16.msra.mxu0 %v6803
  %6850 = vmatprep.subr.bf16.mxu0 0
  %6851 = vmatpush1.bf16.msra.mxu0 %v6804
  %6852 = vmatprep.subr.bf16.mxu0 0
  %6853 = vmatpush1.bf16.msra.mxu0 %v6805
  %6854 = vmatprep.mubr.bf16.mxu0 %v3880
  %6855 = vmatmul.mubr.bf16.gmra.mrb[0].mxu0 %v3879
  %v6856 = vpop.f32.mrb[0].mxu0
  %v6857 = vadd.f32 0.0, %v6856
  %v6858 = vpop.f32.mrb[0].mxu0
  %v6859 = vpop.f32.mrb[0].mxu0
  %v6860 = vadd.f32 0.0, %v6859
  %v6861 = vpop.f32.mrb[0].mxu0
  %6862 = vdwg.mxu0
  %v6863 = vpack.c.bf16 %v6517, %v6517
  %v6864 = vpack.c.bf16 %v6520, %v6520
  %v6865 = vpack.c.bf16 %v6687, %v6687
  %v6866 = vpack.c.bf16 %v6690, %v6690
  %v6867 = vpack.c.bf16 %v6857, %v6857
  %v6868 = vpack.c.bf16 %v6860, %v6860
  %v6870 = vsel %vm658, %v6863, 0
  %v6873 = vsel %vm658, %v6865, 0
  %6875 = vmatprep.subr.bf16.mxu0 0
  %6876 = vmatpush1.bf16.xpose.msra.mxu0 %v6873
  %6877 = vmatprep.subr.bf16.mxu0 0
  %6878 = vmatpush1.bf16.xpose.msra.mxu0 0
  %6879 = vmatprep.subr.bf16.mxu0 0
  %6880 = vmatpush1.bf16.xpose.msra.mxu0 0
  %6881 = vmatprep.subr.bf16.mxu0 0
  %6882 = vmatpush1.bf16.xpose.msra.mxu0 0
  %6883 = vmatprep.subr.bf16.mxu0 0
  %6884 = vmatpush1.bf16.xpose.msra.mxu0 0
  %6885 = vmatprep.subr.bf16.mxu0 0
  %6886 = vmatpush1.bf16.xpose.msra.mxu0 0
  %6887 = vmatprep.subr.bf16.mxu0 0
  %6888 = vmatpush1.bf16.xpose.msra.mxu0 0
  %6889 = vmatprep.subr.bf16.mxu0 0
  %6890 = vmatpush1.bf16.xpose.msra.mxu0 0
  %6891 = vmatprep.subr.bf16.mxu0 0
  %6892 = vmatpush1.bf16.xpose.msra.mxu0 0
  %6893 = vmatprep.subr.bf16.mxu0 0
  %6894 = vmatpush1.bf16.xpose.msra.mxu0 0
  %6895 = vmatprep.subr.bf16.mxu0 0
  %6896 = vmatpush1.bf16.xpose.msra.mxu0 0
  %6897 = vmatprep.subr.bf16.mxu0 0
  %6898 = vmatpush1.bf16.xpose.msra.mxu0 0
  %6899 = vmatprep.subr.bf16.mxu0 0
  %6900 = vmatpush1.bf16.xpose.msra.mxu0 0
  %6901 = vmatprep.subr.bf16.mxu0 0
  %6902 = vmatpush1.bf16.xpose.msra.mxu0 0
  %6903 = vmatprep.subr.bf16.mxu0 0
  %6904 = vmatpush1.bf16.xpose.msra.mxu0 0
  %6905 = vmatprep.subr.bf16.mxu0 0
  %6906 = vmatpush1.bf16.xpose.msra.mxu0 0
  %6907 = vmatprep.mubr.bf16.mxu0 0
  %6908 = vmatmul.mubr.bf16.gmra.mrb[0].mxu0 %v6870
  %v6909 = vpop.f32.mrb[0].mxu0
  %v6910 = vadd.f32 %v142, %v6909
  %v6911 = vpop.f32.mrb[0].mxu0
  %v6912 = vpop.f32.mrb[0].mxu0
  %v6913 = vpop.f32.mrb[0].mxu0
  %6914 = vdwg.mxu0
  %v6916 = vsel %vm658, %v6864, 0
  %v6919 = vsel %vm658, %v6866, 0
  %6921 = vmatprep.subr.bf16.mxu0 0
  %6922 = vmatpush1.bf16.xpose.msra.mxu0 %v6919
  %6923 = vmatprep.subr.bf16.mxu0 0
  %6924 = vmatpush1.bf16.xpose.msra.mxu0 0
  %6925 = vmatprep.subr.bf16.mxu0 0
  %6926 = vmatpush1.bf16.xpose.msra.mxu0 0
  %6927 = vmatprep.subr.bf16.mxu0 0
  %6928 = vmatpush1.bf16.xpose.msra.mxu0 0
  %6929 = vmatprep.subr.bf16.mxu0 0
  %6930 = vmatpush1.bf16.xpose.msra.mxu0 0
  %6931 = vmatprep.subr.bf16.mxu0 0
  %6932 = vmatpush1.bf16.xpose.msra.mxu0 0
  %6933 = vmatprep.subr.bf16.mxu0 0
  %6934 = vmatpush1.bf16.xpose.msra.mxu0 0
  %6935 = vmatprep.subr.bf16.mxu0 0
  %6936 = vmatpush1.bf16.xpose.msra.mxu0 0
  %6937 = vmatprep.subr.bf16.mxu0 0
  %6938 = vmatpush1.bf16.xpose.msra.mxu0 0
  %6939 = vmatprep.subr.bf16.mxu0 0
  %6940 = vmatpush1.bf16.xpose.msra.mxu0 0
  %6941 = vmatprep.subr.bf16.mxu0 0
  %6942 = vmatpush1.bf16.xpose.msra.mxu0 0
  %6943 = vmatprep.subr.bf16.mxu0 0
  %6944 = vmatpush1.bf16.xpose.msra.mxu0 0
  %6945 = vmatprep.subr.bf16.mxu0 0
  %6946 = vmatpush1.bf16.xpose.msra.mxu0 0
  %6947 = vmatprep.subr.bf16.mxu0 0
  %6948 = vmatpush1.bf16.xpose.msra.mxu0 0
  %6949 = vmatprep.subr.bf16.mxu0 0
  %6950 = vmatpush1.bf16.xpose.msra.mxu0 0
  %6951 = vmatprep.subr.bf16.mxu0 0
  %6952 = vmatpush1.bf16.xpose.msra.mxu0 0
  %6953 = vmatprep.mubr.bf16.mxu0 0
  %6954 = vmatmul.mubr.bf16.gmra.mrb[0].mxu0 %v6916
  %v6955 = vpop.f32.mrb[0].mxu0
  %v6956 = vadd.f32 %v142, %v6955
  %v6957 = vpop.f32.mrb[0].mxu0
  %v6958 = vpop.f32.mrb[0].mxu0
  %v6959 = vpop.f32.mrb[0].mxu0
  %6960 = vdwg.mxu0
  %v6961 = vsel %vm751, %v6910, -inf
  %6962 = vmax.xlane.f32.xlu0 %v6961
  %v6963 = vpop.xlane.xlu0 %6962
  %v6964 = vsel %vm751, %v6956, -inf
  %6965 = vmax.xlane.f32.xlu0 %v6964
  %v6966 = vpop.xlane.xlu0 %6965
  %v6967 = vsub.f32 %v6910, %v6963
  %v6968 = vsub.f32 %v6956, %v6966
  %v6969 = vmul.f32 %v6967, 1.442695
  %v6970 = vpow.pop %v6969
  %v6971 = vmul.f32 %v6968, 1.442695
  %v6972 = vpow.pop %v6971
  %v6973 = vsel %vm751, %v6970, 0.0
  %6974 = vadd.xlane.f32.xlu0 %v6973
  %v6975 = vpop.xlane.xlu0 %6974
  %v6976 = vsel %vm751, %v6972, 0.0
  %6977 = vadd.xlane.f32.xlu0 %v6976
  %v6978 = vpop.xlane.xlu0 %6977
  %v6979 = vrcp.pop %v6975
  %v6980 = vrcp.pop %v6978
  %v6981 = vmul.f32 %v6970, %v6979
  %v6982 = vmul.f32 %v6972, %v6980
  %s6983 = scalar_lea.vmem %s12, 48
  %6984 = vst.msk [vmem:[%s6983] sm:$0xff] %vm751, %v6981
  %6985 = vst.msk [vmem:[%s6983 + $0x8] sm:$0xff] %vm751, %v6982
  %v6986 = vpack.c.bf16 %v6981, %v6981
  %v6987 = vpack.c.bf16 %v6982, %v6982
  %v6989 = vsel %vm751, %v6986, 0
  %v6992 = vsel %vm58, %v6867, 0
  %6994 = vmatprep.subr.bf16.mxu0 0
  %6995 = vmatpush1.bf16.msra.mxu0 %v6992
  %6996 = vmatprep.subr.bf16.mxu0 0
  %6997 = vmatpush1.bf16.msra.mxu0 0
  %6998 = vmatprep.subr.bf16.mxu0 0
  %6999 = vmatpush1.bf16.msra.mxu0 0
  %7000 = vmatprep.subr.bf16.mxu0 0
  %7001 = vmatpush1.bf16.msra.mxu0 0
  %7002 = vmatprep.subr.bf16.mxu0 0
  %7003 = vmatpush1.bf16.msra.mxu0 0
  %7004 = vmatprep.subr.bf16.mxu0 0
  %7005 = vmatpush1.bf16.msra.mxu0 0
  %7006 = vmatprep.subr.bf16.mxu0 0
  %7007 = vmatpush1.bf16.msra.mxu0 0
  %7008 = vmatprep.subr.bf16.mxu0 0
  %7009 = vmatpush1.bf16.msra.mxu0 0
  %7010 = vmatprep.subr.bf16.mxu0 0
  %7011 = vmatpush1.bf16.msra.mxu0 0
  %7012 = vmatprep.subr.bf16.mxu0 0
  %7013 = vmatpush1.bf16.msra.mxu0 0
  %7014 = vmatprep.subr.bf16.mxu0 0
  %7015 = vmatpush1.bf16.msra.mxu0 0
  %7016 = vmatprep.subr.bf16.mxu0 0
  %7017 = vmatpush1.bf16.msra.mxu0 0
  %7018 = vmatprep.subr.bf16.mxu0 0
  %7019 = vmatpush1.bf16.msra.mxu0 0
  %7020 = vmatprep.subr.bf16.mxu0 0
  %7021 = vmatpush1.bf16.msra.mxu0 0
  %7022 = vmatprep.subr.bf16.mxu0 0
  %7023 = vmatpush1.bf16.msra.mxu0 0
  %7024 = vmatprep.subr.bf16.mxu0 0
  %7025 = vmatpush1.bf16.msra.mxu0 0
  %7026 = vmatprep.mubr.bf16.mxu0 0
  %7027 = vmatmul.mubr.bf16.gmra.mrb[0].mxu0 %v6989
  %v7028 = vpop.f32.mrb[0].mxu0
  %v7029 = vadd.f32 0.0, %v7028
  %v7030 = vpop.f32.mrb[0].mxu0
  %v7031 = vpop.f32.mrb[0].mxu0
  %v7032 = vpop.f32.mrb[0].mxu0
  %7033 = vdwg.mxu0
  %v7035 = vsel %vm751, %v6987, 0
  %v7038 = vsel %vm58, %v6868, 0
  %7040 = vmatprep.subr.bf16.mxu0 0
  %7041 = vmatpush1.bf16.msra.mxu0 %v7038
  %7042 = vmatprep.subr.bf16.mxu0 0
  %7043 = vmatpush1.bf16.msra.mxu0 0
  %7044 = vmatprep.subr.bf16.mxu0 0
  %7045 = vmatpush1.bf16.msra.mxu0 0
  %7046 = vmatprep.subr.bf16.mxu0 0
  %7047 = vmatpush1.bf16.msra.mxu0 0
  %7048 = vmatprep.subr.bf16.mxu0 0
  %7049 = vmatpush1.bf16.msra.mxu0 0
  %7050 = vmatprep.subr.bf16.mxu0 0
  %7051 = vmatpush1.bf16.msra.mxu0 0
  %7052 = vmatprep.subr.bf16.mxu0 0
  %7053 = vmatpush1.bf16.msra.mxu0 0
  %7054 = vmatprep.subr.bf16.mxu0 0
  %7055 = vmatpush1.bf16.msra.mxu0 0
  %7056 = vmatprep.subr.bf16.mxu0 0
  %7057 = vmatpush1.bf16.msra.mxu0 0
  %7058 = vmatprep.subr.bf16.mxu0 0
  %7059 = vmatpush1.bf16.msra.mxu0 0
  %7060 = vmatprep.subr.bf16.mxu0 0
  %7061 = vmatpush1.bf16.msra.mxu0 0
  %7062 = vmatprep.subr.bf16.mxu0 0
  %7063 = vmatpush1.bf16.msra.mxu0 0
  %7064 = vmatprep.subr.bf16.mxu0 0
  %7065 = vmatpush1.bf16.msra.mxu0 0
  %7066 = vmatprep.subr.bf16.mxu0 0
  %7067 = vmatpush1.bf16.msra.mxu0 0
  %7068 = vmatprep.subr.bf16.mxu0 0
  %7069 = vmatpush1.bf16.msra.mxu0 0
  %7070 = vmatprep.subr.bf16.mxu0 0
  %7071 = vmatpush1.bf16.msra.mxu0 0
  %7072 = vmatprep.mubr.bf16.mxu0 0
  %7073 = vmatmul.mubr.bf16.gmra.mrb[0].mxu0 %v7035
  %v7074 = vpop.f32.mrb[0].mxu0
  %v7075 = vadd.f32 0.0, %v7074
  %v7076 = vpop.f32.mrb[0].mxu0
  %v7077 = vpop.f32.mrb[0].mxu0
  %v7078 = vpop.f32.mrb[0].mxu0
  %7079 = vdwg.mxu0
  %v7080 = vpack.c.bf16 %v7075, %v7029
  %s7081 = scalar_lea.vmem %s7, 448
  %v7082 = vld [vmem:[%s7081] sm:$0xff]
  %v7083 = vld [vmem:[%s7081 + $0x8] sm:$0xff]
  %v7084 = vld [vmem:[%s7081 + $0x10] sm:$0xff]
  %v7085 = vld [vmem:[%s7081 + $0x18] sm:$0xff]
  %v7086 = vld [vmem:[%s7081 + $0x20] sm:$0xff]
  %v7087 = vld [vmem:[%s7081 + $0x28] sm:$0xff]
  %v7088 = vld [vmem:[%s7081 + $0x30] sm:$0xff]
  %v7089 = vld [vmem:[%s7081 + $0x38] sm:$0xff]
  %v7098 = vunpack.c.l.b16 %v7082
  %v7099 = vunpack.c.h.b16 %v7082
  %v7100 = vunpack.c.l.b16 %v7083
  %v7101 = vunpack.c.h.b16 %v7083
  %v7102 = vunpack.c.l.b16 %v7084
  %v7103 = vunpack.c.h.b16 %v7084
  %v7104 = vunpack.c.l.b16 %v7085
  %v7105 = vunpack.c.h.b16 %v7085
  %v7106 = vunpack.c.l.b16 %v7086
  %v7107 = vunpack.c.h.b16 %v7086
  %v7108 = vunpack.c.l.b16 %v7087
  %v7109 = vunpack.c.h.b16 %v7087
  %v7110 = vunpack.c.l.b16 %v7088
  %v7111 = vunpack.c.h.b16 %v7088
  %v7112 = vunpack.c.l.b16 %v7089
  %v7113 = vunpack.c.h.b16 %v7089
  %v7114 = vpack.c.b16 %v7100, %v7098
  %v7115 = vpack.c.b16 %v7101, %v7099
  %v7116 = vpack.c.b16 %v7104, %v7102
  %v7117 = vpack.c.b16 %v7105, %v7103
  %v7118 = vpack.c.b16 %v7108, %v7106
  %v7119 = vpack.c.b16 %v7109, %v7107
  %v7120 = vpack.c.b16 %v7112, %v7110
  %v7121 = vpack.c.b16 %v7113, %v7111
  %v7131 = vsel %vm658, %v7080, 0
  %7133 = vmatprep.subr.bf16.mxu0 %v7115
  %7134 = vmatpush1.bf16.msra.mxu0 %v7114
  %7135 = vmatprep.subr.bf16.mxu0 %v7117
  %7136 = vmatpush1.bf16.msra.mxu0 %v7116
  %7137 = vmatprep.subr.bf16.mxu0 %v7119
  %7138 = vmatpush1.bf16.msra.mxu0 %v7118
  %7139 = vmatprep.subr.bf16.mxu0 %v7121
  %7140 = vmatpush1.bf16.msra.mxu0 %v7120
  %7141 = vmatprep.subr.bf16.mxu0 0
  %7142 = vmatpush1.bf16.msra.mxu0 0
  %7143 = vmatprep.subr.bf16.mxu0 0
  %7144 = vmatpush1.bf16.msra.mxu0 0
  %7145 = vmatprep.subr.bf16.mxu0 0
  %7146 = vmatpush1.bf16.msra.mxu0 0
  %7147 = vmatprep.subr.bf16.mxu0 0
  %7148 = vmatpush1.bf16.msra.mxu0 0
  %7149 = vmatprep.subr.bf16.mxu0 0
  %7150 = vmatpush1.bf16.msra.mxu0 0
  %7151 = vmatprep.subr.bf16.mxu0 0
  %7152 = vmatpush1.bf16.msra.mxu0 0
  %7153 = vmatprep.subr.bf16.mxu0 0
  %7154 = vmatpush1.bf16.msra.mxu0 0
  %7155 = vmatprep.subr.bf16.mxu0 0
  %7156 = vmatpush1.bf16.msra.mxu0 0
  %7157 = vmatprep.subr.bf16.mxu0 0
  %7158 = vmatpush1.bf16.msra.mxu0 0
  %7159 = vmatprep.subr.bf16.mxu0 0
  %7160 = vmatpush1.bf16.msra.mxu0 0
  %7161 = vmatprep.subr.bf16.mxu0 0
  %7162 = vmatpush1.bf16.msra.mxu0 0
  %7163 = vmatprep.subr.bf16.mxu0 0
  %7164 = vmatpush1.bf16.msra.mxu0 0
  %7165 = vmatprep.mubr.bf16.mxu0 0
  %7166 = vmatmul.mubr.bf16.gmra.mrb[0].mxu0 %v7131
  %v7167 = vpop.f32.mrb[0].mxu0
  %v7168 = vadd.f32 0.0, %v7167
  %v7169 = vpop.f32.mrb[0].mxu0
  %v7170 = vadd.f32 0.0, %v7169
  %v7171 = vpop.f32.mrb[0].mxu0
  %v7172 = vadd.f32 0.0, %v7171
  %v7173 = vpop.f32.mrb[0].mxu0
  %v7174 = vadd.f32 0.0, %v7173
  %7175 = vdwg.mxu0
  %v7176 = vadd.f32 %v6349, %v7168
  %v7177 = vadd.f32 %v6350, %v7170
  %v7178 = vadd.f32 %v6351, %v7172
  %v7179 = vadd.f32 %v6352, %v7174
  %v7180 = vadd.f32 %v7176, %v3875
  %v7181 = vadd.f32 %v7177, %v3876
  %v7182 = vadd.f32 %v7178, %v3877
  %v7183 = vadd.f32 %v7179, %v3878
  %s7184 = scalar_lea.vmem %s10, 16
  %v7185 = vld [vmem:[%s7184] sm:$0x3f]
  %v7186 = vld [vmem:[%s7184 + $0x8] sm:$0x3f]
  %v7187 = vadd.f32 %v7180, %v7181
  %7188 = vadd.xlane.f32.xlu0 %v7187
  %v7189 = vpop.xlane.xlu0 %7188
  %v7190 = vadd.f32 %v7182, %v7183
  %7191 = vadd.xlane.f32.xlu0 %v7190
  %v7192 = vpop.xlane.xlu0 %7191
  %v7193 = vmul.f32 %v7189, %v3443
  %v7194 = vmul.f32 %v7192, %v3443
  %v7195 = vsub.f32 %v7180, %v7193
  %v7196 = vsub.f32 %v7181, %v7193
  %v7197 = vsub.f32 %v7182, %v7194
  %v7198 = vsub.f32 %v7183, %v7194
  %v7199 = vmul.f32 %v7195, %v7195
  %v7200 = vmul.f32 %v7196, %v7196
  %v7201 = vmul.f32 %v7197, %v7197
  %v7202 = vmul.f32 %v7198, %v7198
  %v7203 = vadd.f32 %v7199, %v7200
  %7204 = vadd.xlane.f32.xlu0 %v7203
  %v7205 = vpop.xlane.xlu0 %7204
  %v7206 = vadd.f32 %v7201, %v7202
  %7207 = vadd.xlane.f32.xlu0 %v7206
  %v7208 = vpop.xlane.xlu0 %7207
  %v7209 = vmul.f32 %v7205, %v3443
  %v7210 = vmul.f32 %v7208, %v3443
  %v7211 = vadd.f32 %v7209, 1e-06
  %v7212 = vadd.f32 %v7210, 1e-06
  %v7213 = vrsqrt.pop %v7211
  %v7214 = vrsqrt.pop %v7212
  %v7215 = vmul.f32 %v7195, %v7213
  %v7216 = vmul.f32 %v7196, %v7213
  %v7217 = vmul.f32 %v7197, %v7214
  %v7218 = vmul.f32 %v7198, %v7214
  %v7219 = vlaneseq
  %v7220 = vshrl.u32 %v7219, 7
  %v7221 = vsub.s32 0, %v7220
  %v7222 = vrot.slane %v7185, %v7221
  %v7223 = vlaneseq
  %v7224 = vshrl.u32 %v7223, 7
  %v7225 = vsub.s32 0, %v7224
  %v7226 = vrot.slane %v7186, %v7225
  %v7227 = vmul.f32 %v7215, %v7222
  %v7228 = vmul.f32 %v7216, %v7226
  %v7229 = vmul.f32 %v7217, %v7222
  %v7230 = vmul.f32 %v7218, %v7226
  %v7231 = vlaneseq
  %v7232 = vshrl.u32 %v7231, 7
  %v7233 = vsub.s32 1, %v7232
  %v7234 = vrot.slane %v7185, %v7233
  %v7235 = vlaneseq
  %v7236 = vshrl.u32 %v7235, 7
  %v7237 = vsub.s32 1, %v7236
  %v7238 = vrot.slane %v7186, %v7237
  %v7239 = vadd.f32 %v7227, %v7234
  %v7240 = vadd.f32 %v7228, %v7238
  %v7241 = vadd.f32 %v7229, %v7234
  %v7242 = vadd.f32 %v7230, %v7238
  %v7243 = vpack.c.bf16 %v7241, %v7239
  %v7244 = vpack.c.bf16 %v7242, %v7240
  %s7245 = scalar_lea.vmem %s8, 128
  %v7246 = vld [vmem:[%s7245] sm:$0xf]
  %v7247 = vld [vmem:[%s7245 + $0x4] sm:$0xf]
  %v7248 = vld [vmem:[%s7245 + $0x8] sm:$0xf]
  %v7249 = vld [vmem:[%s7245 + $0xc] sm:$0xf]
  %v7250 = vld [vmem:[%s7245 + $0x10] sm:$0xf]
  %v7251 = vld [vmem:[%s7245 + $0x14] sm:$0xf]
  %v7252 = vld [vmem:[%s7245 + $0x18] sm:$0xf]
  %v7253 = vld [vmem:[%s7245 + $0x1c] sm:$0xf]
  %v7254 = vld [vmem:[%s7245 + $0x20] sm:$0xf]
  %v7255 = vld [vmem:[%s7245 + $0x24] sm:$0xf]
  %v7256 = vld [vmem:[%s7245 + $0x28] sm:$0xf]
  %v7257 = vld [vmem:[%s7245 + $0x2c] sm:$0xf]
  %v7258 = vld [vmem:[%s7245 + $0x30] sm:$0xf]
  %v7259 = vld [vmem:[%s7245 + $0x34] sm:$0xf]
  %v7260 = vld [vmem:[%s7245 + $0x38] sm:$0xf]
  %v7261 = vld [vmem:[%s7245 + $0x3c] sm:$0xf]
  %v7262 = vld [vmem:[%s7245 + $0x40] sm:$0xf]
  %v7263 = vld [vmem:[%s7245 + $0x44] sm:$0xf]
  %v7264 = vld [vmem:[%s7245 + $0x48] sm:$0xf]
  %v7265 = vld [vmem:[%s7245 + $0x4c] sm:$0xf]
  %v7266 = vld [vmem:[%s7245 + $0x50] sm:$0xf]
  %v7267 = vld [vmem:[%s7245 + $0x54] sm:$0xf]
  %v7268 = vld [vmem:[%s7245 + $0x58] sm:$0xf]
  %v7269 = vld [vmem:[%s7245 + $0x5c] sm:$0xf]
  %v7270 = vld [vmem:[%s7245 + $0x60] sm:$0xf]
  %v7271 = vld [vmem:[%s7245 + $0x64] sm:$0xf]
  %v7272 = vld [vmem:[%s7245 + $0x68] sm:$0xf]
  %v7273 = vld [vmem:[%s7245 + $0x6c] sm:$0xf]
  %v7274 = vld [vmem:[%s7245 + $0x70] sm:$0xf]
  %v7275 = vld [vmem:[%s7245 + $0x74] sm:$0xf]
  %v7276 = vld [vmem:[%s7245 + $0x78] sm:$0xf]
  %v7277 = vld [vmem:[%s7245 + $0x7c] sm:$0xf]
  %v7278 = vlaneseq
  %v7279 = vshrl.u32 %v7278, 7
  %v7280 = vsub.s32 4, %v7279
  %v7281 = vrot.slane %v7185, %v7280
  %v7314 = vunpack.c.l.b16 %v7246
  %v7315 = vunpack.c.l.b16 %v7247
  %v7316 = vunpack.c.l.b16 %v7248
  %v7317 = vunpack.c.l.b16 %v7249
  %v7318 = vunpack.c.l.b16 %v7250
  %v7319 = vunpack.c.l.b16 %v7251
  %v7320 = vunpack.c.l.b16 %v7252
  %v7321 = vunpack.c.l.b16 %v7253
  %v7322 = vunpack.c.l.b16 %v7254
  %v7323 = vunpack.c.l.b16 %v7255
  %v7324 = vunpack.c.l.b16 %v7256
  %v7325 = vunpack.c.l.b16 %v7257
  %v7326 = vunpack.c.l.b16 %v7258
  %v7327 = vunpack.c.l.b16 %v7259
  %v7328 = vunpack.c.l.b16 %v7260
  %v7329 = vunpack.c.l.b16 %v7261
  %v7330 = vunpack.c.l.b16 %v7262
  %v7331 = vunpack.c.l.b16 %v7263
  %v7332 = vunpack.c.l.b16 %v7264
  %v7333 = vunpack.c.l.b16 %v7265
  %v7334 = vunpack.c.l.b16 %v7266
  %v7335 = vunpack.c.l.b16 %v7267
  %v7336 = vunpack.c.l.b16 %v7268
  %v7337 = vunpack.c.l.b16 %v7269
  %v7338 = vunpack.c.l.b16 %v7270
  %v7339 = vunpack.c.l.b16 %v7271
  %v7340 = vunpack.c.l.b16 %v7272
  %v7341 = vunpack.c.l.b16 %v7273
  %v7342 = vunpack.c.l.b16 %v7274
  %v7343 = vunpack.c.l.b16 %v7275
  %v7344 = vunpack.c.l.b16 %v7276
  %v7345 = vunpack.c.l.b16 %v7277
  %v7346 = vpack.c.b16 %v7315, %v7314
  %v7347 = vpack.c.b16 %v7317, %v7316
  %v7348 = vpack.c.b16 %v7319, %v7318
  %v7349 = vpack.c.b16 %v7321, %v7320
  %v7350 = vpack.c.b16 %v7323, %v7322
  %v7351 = vpack.c.b16 %v7325, %v7324
  %v7352 = vpack.c.b16 %v7327, %v7326
  %v7353 = vpack.c.b16 %v7329, %v7328
  %v7354 = vpack.c.b16 %v7331, %v7330
  %v7355 = vpack.c.b16 %v7333, %v7332
  %v7356 = vpack.c.b16 %v7335, %v7334
  %v7357 = vpack.c.b16 %v7337, %v7336
  %v7358 = vpack.c.b16 %v7339, %v7338
  %v7359 = vpack.c.b16 %v7341, %v7340
  %v7360 = vpack.c.b16 %v7343, %v7342
  %v7361 = vpack.c.b16 %v7345, %v7344
  %7378 = vmatprep.subr.bf16.mxu0 0
  %7379 = vmatpush1.bf16.msra.mxu0 %v7346
  %7380 = vmatprep.subr.bf16.mxu0 0
  %7381 = vmatpush1.bf16.msra.mxu0 %v7347
  %7382 = vmatprep.subr.bf16.mxu0 0
  %7383 = vmatpush1.bf16.msra.mxu0 %v7348
  %7384 = vmatprep.subr.bf16.mxu0 0
  %7385 = vmatpush1.bf16.msra.mxu0 %v7349
  %7386 = vmatprep.subr.bf16.mxu0 0
  %7387 = vmatpush1.bf16.msra.mxu0 %v7350
  %7388 = vmatprep.subr.bf16.mxu0 0
  %7389 = vmatpush1.bf16.msra.mxu0 %v7351
  %7390 = vmatprep.subr.bf16.mxu0 0
  %7391 = vmatpush1.bf16.msra.mxu0 %v7352
  %7392 = vmatprep.subr.bf16.mxu0 0
  %7393 = vmatpush1.bf16.msra.mxu0 %v7353
  %7394 = vmatprep.subr.bf16.mxu0 0
  %7395 = vmatpush1.bf16.msra.mxu0 %v7354
  %7396 = vmatprep.subr.bf16.mxu0 0
  %7397 = vmatpush1.bf16.msra.mxu0 %v7355
  %7398 = vmatprep.subr.bf16.mxu0 0
  %7399 = vmatpush1.bf16.msra.mxu0 %v7356
  %7400 = vmatprep.subr.bf16.mxu0 0
  %7401 = vmatpush1.bf16.msra.mxu0 %v7357
  %7402 = vmatprep.subr.bf16.mxu0 0
  %7403 = vmatpush1.bf16.msra.mxu0 %v7358
  %7404 = vmatprep.subr.bf16.mxu0 0
  %7405 = vmatpush1.bf16.msra.mxu0 %v7359
  %7406 = vmatprep.subr.bf16.mxu0 0
  %7407 = vmatpush1.bf16.msra.mxu0 %v7360
  %7408 = vmatprep.subr.bf16.mxu0 0
  %7409 = vmatpush1.bf16.msra.mxu0 %v7361
  %7410 = vmatprep.mubr.bf16.mxu0 %v7244
  %7411 = vmatmul.mubr.bf16.gmra.mrb[0].mxu0 %v7243
  %v7412 = vpop.f32.mrb[0].mxu0
  %v7413 = vadd.f32 %v7281, %v7412
  %v7414 = vpop.f32.mrb[0].mxu0
  %v7415 = vpop.f32.mrb[0].mxu0
  %v7416 = vadd.f32 %v7281, %v7415
  %v7417 = vpop.f32.mrb[0].mxu0
  %7418 = vdwg.mxu0
  %v7419 = vmax.f32 %v7413, 0.0
  %v7420 = vmax.f32 %v7416, 0.0
  %v7421 = vpack.c.bf16 %v7420, %v7419
  %s7422 = scalar_lea.vmem %s9, 128
  %v7423 = vld [vmem:[%s7422] sm:$0xff]
  %v7424 = vld [vmem:[%s7422 + $0x8] sm:$0xff]
  %v7425 = vld [vmem:[%s7422 + $0x10] sm:$0xff]
  %v7426 = vld [vmem:[%s7422 + $0x18] sm:$0xff]
  %v7427 = vld [vmem:[%s7422 + $0x20] sm:$0xff]
  %v7428 = vld [vmem:[%s7422 + $0x28] sm:$0xff]
  %v7429 = vld [vmem:[%s7422 + $0x30] sm:$0xff]
  %v7430 = vld [vmem:[%s7422 + $0x38] sm:$0xff]
  %v7431 = vld [vmem:[%s7422 + $0x40] sm:$0xff]
  %v7432 = vld [vmem:[%s7422 + $0x48] sm:$0xff]
  %v7433 = vld [vmem:[%s7422 + $0x50] sm:$0xff]
  %v7434 = vld [vmem:[%s7422 + $0x58] sm:$0xff]
  %v7435 = vld [vmem:[%s7422 + $0x60] sm:$0xff]
  %v7436 = vld [vmem:[%s7422 + $0x68] sm:$0xff]
  %v7437 = vld [vmem:[%s7422 + $0x70] sm:$0xff]
  %v7438 = vld [vmem:[%s7422 + $0x78] sm:$0xff]
  %v7439 = vlaneseq
  %v7440 = vshrl.u32 %v7439, 7
  %v7441 = vsub.s32 5, %v7440
  %v7442 = vrot.slane %v7185, %v7441
  %v7443 = vlaneseq
  %v7444 = vshrl.u32 %v7443, 7
  %v7445 = vsub.s32 5, %v7444
  %v7446 = vrot.slane %v7186, %v7445
  %v7463 = vunpack.c.l.b16 %v7423
  %v7464 = vunpack.c.h.b16 %v7423
  %v7465 = vunpack.c.l.b16 %v7424
  %v7466 = vunpack.c.h.b16 %v7424
  %v7467 = vunpack.c.l.b16 %v7425
  %v7468 = vunpack.c.h.b16 %v7425
  %v7469 = vunpack.c.l.b16 %v7426
  %v7470 = vunpack.c.h.b16 %v7426
  %v7471 = vunpack.c.l.b16 %v7427
  %v7472 = vunpack.c.h.b16 %v7427
  %v7473 = vunpack.c.l.b16 %v7428
  %v7474 = vunpack.c.h.b16 %v7428
  %v7475 = vunpack.c.l.b16 %v7429
  %v7476 = vunpack.c.h.b16 %v7429
  %v7477 = vunpack.c.l.b16 %v7430
  %v7478 = vunpack.c.h.b16 %v7430
  %v7479 = vunpack.c.l.b16 %v7431
  %v7480 = vunpack.c.h.b16 %v7431
  %v7481 = vunpack.c.l.b16 %v7432
  %v7482 = vunpack.c.h.b16 %v7432
  %v7483 = vunpack.c.l.b16 %v7433
  %v7484 = vunpack.c.h.b16 %v7433
  %v7485 = vunpack.c.l.b16 %v7434
  %v7486 = vunpack.c.h.b16 %v7434
  %v7487 = vunpack.c.l.b16 %v7435
  %v7488 = vunpack.c.h.b16 %v7435
  %v7489 = vunpack.c.l.b16 %v7436
  %v7490 = vunpack.c.h.b16 %v7436
  %v7491 = vunpack.c.l.b16 %v7437
  %v7492 = vunpack.c.h.b16 %v7437
  %v7493 = vunpack.c.l.b16 %v7438
  %v7494 = vunpack.c.h.b16 %v7438
  %v7495 = vpack.c.b16 %v7465, %v7463
  %v7496 = vpack.c.b16 %v7466, %v7464
  %v7497 = vpack.c.b16 %v7469, %v7467
  %v7498 = vpack.c.b16 %v7470, %v7468
  %v7499 = vpack.c.b16 %v7473, %v7471
  %v7500 = vpack.c.b16 %v7474, %v7472
  %v7501 = vpack.c.b16 %v7477, %v7475
  %v7502 = vpack.c.b16 %v7478, %v7476
  %v7503 = vpack.c.b16 %v7481, %v7479
  %v7504 = vpack.c.b16 %v7482, %v7480
  %v7505 = vpack.c.b16 %v7485, %v7483
  %v7506 = vpack.c.b16 %v7486, %v7484
  %v7507 = vpack.c.b16 %v7489, %v7487
  %v7508 = vpack.c.b16 %v7490, %v7488
  %v7509 = vpack.c.b16 %v7493, %v7491
  %v7510 = vpack.c.b16 %v7494, %v7492
  %7527 = vmatprep.subr.bf16.mxu0 %v7496
  %7528 = vmatpush1.bf16.msra.mxu0 %v7495
  %7529 = vmatprep.subr.bf16.mxu0 %v7498
  %7530 = vmatpush1.bf16.msra.mxu0 %v7497
  %7531 = vmatprep.subr.bf16.mxu0 %v7500
  %7532 = vmatpush1.bf16.msra.mxu0 %v7499
  %7533 = vmatprep.subr.bf16.mxu0 %v7502
  %7534 = vmatpush1.bf16.msra.mxu0 %v7501
  %7535 = vmatprep.subr.bf16.mxu0 %v7504
  %7536 = vmatpush1.bf16.msra.mxu0 %v7503
  %7537 = vmatprep.subr.bf16.mxu0 %v7506
  %7538 = vmatpush1.bf16.msra.mxu0 %v7505
  %7539 = vmatprep.subr.bf16.mxu0 %v7508
  %7540 = vmatpush1.bf16.msra.mxu0 %v7507
  %7541 = vmatprep.subr.bf16.mxu0 %v7510
  %7542 = vmatpush1.bf16.msra.mxu0 %v7509
  %7543 = vmatprep.subr.bf16.mxu0 0
  %7544 = vmatpush1.bf16.msra.mxu0 0
  %7545 = vmatprep.subr.bf16.mxu0 0
  %7546 = vmatpush1.bf16.msra.mxu0 0
  %7547 = vmatprep.subr.bf16.mxu0 0
  %7548 = vmatpush1.bf16.msra.mxu0 0
  %7549 = vmatprep.subr.bf16.mxu0 0
  %7550 = vmatpush1.bf16.msra.mxu0 0
  %7551 = vmatprep.subr.bf16.mxu0 0
  %7552 = vmatpush1.bf16.msra.mxu0 0
  %7553 = vmatprep.subr.bf16.mxu0 0
  %7554 = vmatpush1.bf16.msra.mxu0 0
  %7555 = vmatprep.subr.bf16.mxu0 0
  %7556 = vmatpush1.bf16.msra.mxu0 0
  %7557 = vmatprep.subr.bf16.mxu0 0
  %7558 = vmatpush1.bf16.msra.mxu0 0
  %7559 = vmatprep.mubr.bf16.mxu0 0
  %7560 = vmatmul.mubr.bf16.gmra.mrb[0].mxu0 %v7421
  %v7561 = vpop.f32.mrb[0].mxu0
  %v7562 = vadd.f32 %v7442, %v7561
  %v7563 = vpop.f32.mrb[0].mxu0
  %v7564 = vadd.f32 %v7446, %v7563
  %v7565 = vpop.f32.mrb[0].mxu0
  %v7566 = vadd.f32 %v7442, %v7565
  %v7567 = vpop.f32.mrb[0].mxu0
  %v7568 = vadd.f32 %v7446, %v7567
  %7569 = vdwg.mxu0
  %v7570 = vadd.f32 %v7562, %v7239
  %v7571 = vadd.f32 %v7564, %v7240
  %v7572 = vadd.f32 %v7566, %v7241
  %v7573 = vadd.f32 %v7568, %v7242
  %v7574 = vadd.f32 %v7570, %v7571
  %7575 = vadd.xlane.f32.xlu0 %v7574
  %v7576 = vpop.xlane.xlu0 %7575
  %v7577 = vadd.f32 %v7572, %v7573
  %7578 = vadd.xlane.f32.xlu0 %v7577
  %v7579 = vpop.xlane.xlu0 %7578
  %v7580 = vmul.f32 %v7576, %v3443
  %v7581 = vmul.f32 %v7579, %v3443
  %v7582 = vsub.f32 %v7570, %v7580
  %v7583 = vsub.f32 %v7571, %v7580
  %v7584 = vsub.f32 %v7572, %v7581
  %v7585 = vsub.f32 %v7573, %v7581
  %v7586 = vmul.f32 %v7582, %v7582
  %v7587 = vmul.f32 %v7583, %v7583
  %v7588 = vmul.f32 %v7584, %v7584
  %v7589 = vmul.f32 %v7585, %v7585
  %v7590 = vadd.f32 %v7586, %v7587
  %7591 = vadd.xlane.f32.xlu0 %v7590
  %v7592 = vpop.xlane.xlu0 %7591
  %v7593 = vadd.f32 %v7588, %v7589
  %7594 = vadd.xlane.f32.xlu0 %v7593
  %v7595 = vpop.xlane.xlu0 %7594
  %v7596 = vmul.f32 %v7592, %v3443
  %v7597 = vmul.f32 %v7595, %v3443
  %v7598 = vadd.f32 %v7596, 1e-06
  %v7599 = vadd.f32 %v7597, 1e-06
  %v7600 = vrsqrt.pop %v7598
  %v7601 = vrsqrt.pop %v7599
  %v7602 = vmul.f32 %v7582, %v7600
  %v7603 = vmul.f32 %v7583, %v7600
  %v7604 = vmul.f32 %v7584, %v7601
  %v7605 = vmul.f32 %v7585, %v7601
  %v7606 = vlaneseq
  %v7607 = vshrl.u32 %v7606, 7
  %v7608 = vsub.s32 2, %v7607
  %v7609 = vrot.slane %v7185, %v7608
  %v7610 = vlaneseq
  %v7611 = vshrl.u32 %v7610, 7
  %v7612 = vsub.s32 2, %v7611
  %v7613 = vrot.slane %v7186, %v7612
  %v7614 = vmul.f32 %v7602, %v7609
  %v7615 = vmul.f32 %v7603, %v7613
  %v7616 = vmul.f32 %v7604, %v7609
  %v7617 = vmul.f32 %v7605, %v7613
  %v7618 = vlaneseq
  %v7619 = vshrl.u32 %v7618, 7
  %v7620 = vsub.s32 3, %v7619
  %v7621 = vrot.slane %v7185, %v7620
  %v7622 = vlaneseq
  %v7623 = vshrl.u32 %v7622, 7
  %v7624 = vsub.s32 3, %v7623
  %v7625 = vrot.slane %v7186, %v7624
  %v7626 = vadd.f32 %v7614, %v7621
  %v7627 = vadd.f32 %v7615, %v7625
  %v7628 = vadd.f32 %v7616, %v7621
  %v7629 = vadd.f32 %v7617, %v7625
  %7630 = vst [vmem:[%s11] sm:$0xff] %v7626
  %7631 = vst [vmem:[%s11 + $0x8] sm:$0xff] %v7627
  %7632 = vst [vmem:[%s11 + $0x10] sm:$0xff] %v7628
  %7633 = vst [vmem:[%s11 + $0x18] sm:$0xff] %v7629
  // Predicated region
  $region46: #{saits_forward.2} parent=0 // pred_check
    _
  $region47: #{saits_forward.2} parent=0 // pred_check_branch
    %7635 = sbr.rel (0) target = $region49
  $region48: #{saits_forward.2} parent=0 // pred_region
    _
  $region49: #{saits_forward.2} parent=0 // pred_fallthru
    _
  // Predicated region
  $region50: #{saits_forward.2} parent=0 // pred_check
    _
  $region51: #{saits_forward.2} parent=0 // pred_check_branch
    %7637 = sbr.rel (0) target = $region53
  $region52: #{saits_forward.2} parent=0 // pred_region
    _
  $region53: #{saits_forward.2} parent=0 // pred_fallthru
    _
  // Predicated region
  $region54: #{saits_forward.2} parent=0 // pred_check
    _
  $region55: #{saits_forward.2} parent=0 // pred_check_branch
    %7639 = sbr.rel (0) target = $region57
  $region56: #{saits_forward.2} parent=0 // pred_region
    _
  $region57: #{saits_forward.2} parent=0 // pred_fallthru
    _
  // Predicated region
  $region58: #{saits_forward.2} parent=0 // pred_check
    _
  $region59: #{saits_forward.2} parent=0 // pred_check_branch
    %7641 = sbr.rel (0) target = $region61
  $region60: #{saits_forward.2} parent=0 // pred_region
    _
  $region61: #{saits_forward.2} parent=0 // pred_fallthru
    _

</llo_original>
